<compile_context>
chip_gen: v7x
topology: tpu7x:2x2x1
jax: 0.10.0
libtpu: 0.0.40
codegen_flags: <defaults>
</compile_context>

<pallas_src>
import jax
import jax.numpy as jnp
from jax.experimental import pallas as pl
from jax.experimental.pallas import tpu as pltpu

D_IN, D_H1, D_H2 = 3072, 1024, 512
N_OUT_PAD = 128  # final layer padded from 1 -> 128 lanes for lane-dense stores


def _disc_fused_kernel(x_ref, w1_ref, b1_ref, w2_ref, b2_ref, w3_ref, b3_ref,
                       o_ref):
    """Fused  sigmoid(lrelu(lrelu(x@W1+b1)@W2+b2)@W3+b3)  for one M tile."""
    # Layer 1: (tm, 3072) @ (3072, 1024), f32 accumulation on the MXU.
    # x arrives f32 and is cast to bf16 here (no wrapper-side recast pass).
    h = jnp.dot(x_ref[...].astype(jnp.bfloat16), w1_ref[...],
                preferred_element_type=jnp.float32)
    h = h + b1_ref[...]                     # (1, 1024) broadcasts over rows
    h = jnp.maximum(h, 0.2 * h)             # LeakyReLU(0.2), 2 VPU ops

    # Layer 2: (tm, 1024) @ (1024, 512)
    h = jnp.dot(h.astype(jnp.bfloat16), w2_ref[...],
                preferred_element_type=jnp.float32)
    h = h + b2_ref[...]
    h = jnp.maximum(h, 0.2 * h)

    # Layer 3 (lane-padded to 128): (tm, 512) @ (512, 128)
    h = jnp.dot(h.astype(jnp.bfloat16), w3_ref[...],
                preferred_element_type=jnp.float32)
    h = h + b3_ref[...]
    o_ref[...] = jax.nn.sigmoid(h)          # EUP; padded lanes sliced off later


def _resident_spec(shape):
    """Constant-index block that is DMA'd once and kept single-buffered."""
    return pl.BlockSpec(shape, lambda i: (0, 0), pipeline_mode=pl.Buffered(1))


def prepare_discriminator_params(params):
    """One-time prep: bf16 matmul weights, f32 (1,N) biases, L3 lane-padded."""
    (w1, b1), (w2, b2), (w3, b3) = params
    w1b = w1.astype(jnp.bfloat16)
    w2b = w2.astype(jnp.bfloat16)
    w3p = jnp.zeros((D_H2, N_OUT_PAD), jnp.bfloat16).at[:, :1].set(
        w3.astype(jnp.bfloat16))
    b1r = b1.reshape(1, D_H1).astype(jnp.float32)
    b2r = b2.reshape(1, D_H2).astype(jnp.float32)
    b3p = jnp.zeros((1, N_OUT_PAD), jnp.float32).at[:, :1].set(
        b3.reshape(1, 1).astype(jnp.float32))
    return (w1b, b1r, w2b, b2r, w3p, b3p)


def discriminator_forward(x, prepared_params):
    """x: [B, 3072] float32 -> [B, 1] float32 in (0, 1)."""
    w1b, b1r, w2b, b2r, w3p, b3p = prepared_params
    B = x.shape[0]
    assert x.shape[1] == D_IN

    # Adaptive M tiling: target 512-row tiles, cap pad waste at <=7 rows,
    # guarantee >=2 tiles whenever m8 >= 16 (feed both v7x TensorCores).
    m8 = max(8, pl.cdiv(B, 8) * 8)
    n_tiles = pl.cdiv(m8, 512)
    if m8 >= 16:
        n_tiles = max(n_tiles, 2)
    tm = pl.cdiv(pl.cdiv(m8, n_tiles), 8) * 8
    m_pad = n_tiles * tm

    # Pad only remainder rows; x stays in its native dtype (cast in-kernel).
    x_in = x if m_pad == B else jnp.pad(x, ((0, m_pad - B), (0, 0)))

    out = pl.pallas_call(
        _disc_fused_kernel,
        out_shape=jax.ShapeDtypeStruct((m_pad, N_OUT_PAD), jnp.float32),
        grid_spec=pltpu.PrefetchScalarGridSpec(
            num_scalar_prefetch=0,
            grid=(n_tiles,),
            in_specs=[
                pl.BlockSpec((tm, D_IN), lambda i: (i, 0)),   # x tile (f32)
                _resident_spec((D_IN, D_H1)),                 # W1 bf16
                _resident_spec((1, D_H1)),                    # b1 f32
                _resident_spec((D_H1, D_H2)),                 # W2 bf16
                _resident_spec((1, D_H2)),                    # b2 f32
                _resident_spec((D_H2, N_OUT_PAD)),            # W3 bf16 (padded)
                _resident_spec((1, N_OUT_PAD)),               # b3 f32 (padded)
            ],
            out_specs=pl.BlockSpec((tm, N_OUT_PAD), lambda i: (i, 0)),
        ),
        compiler_params=pltpu.CompilerParams(
            dimension_semantics=("parallel",),   # M tiles shard across TCs
            vmem_limit_bytes=40 * 1024 * 1024,
        ),
    )(x_in, w1b, b1r, w2b, b2r, w3p, b3p)

    return out[:B, :1]


# TODO(synk): optional int8 weight path for v5e/v6e small-batch latency is not
# implemented (not portable to v7x's int-free MXU).


def init_discriminator_params(key):
    """Deterministic synthetic parameters matching the module's shapes."""
    dims = [(D_IN, D_H1), (D_H1, D_H2), (D_H2, 1)]
    params = []
    for i, (fan_in, fan_out) in enumerate(dims):
        kw, kb, key = jax.random.split(jax.random.fold_in(key, i), 3)
        bound = 1.0 / jnp.sqrt(fan_in)   # PyTorch nn.Linear default init scale
        w = jax.random.uniform(kw, (fan_in, fan_out), jnp.float32,
                               minval=-bound, maxval=bound)
        b = jax.random.uniform(kb, (fan_out,), jnp.float32,
                               minval=-bound, maxval=bound)
        params.append((w, b))
    return params


def _reference_forward(x, params):
    """Pure f32 reference (kernel uses bf16 MXU inputs -> looser tolerance)."""
    (w1, b1), (w2, b2), (w3, b3) = params
    h = x @ w1 + b1
    h = jnp.where(h >= 0, h, 0.2 * h)
    h = h @ w2 + b2
    h = jnp.where(h >= 0, h, 0.2 * h)
    return jax.nn.sigmoid(h @ w3 + b3)


if __name__ == "__main__":
    key = jax.random.PRNGKey(0)
    kx, kp = jax.random.split(key)

    B = 2
    x = jax.random.normal(kx, (B, D_IN), dtype=jnp.float32)
    params = init_discriminator_params(kp)
    prepared = prepare_discriminator_params(params)   # one-time weight prep

    y = discriminator_forward(x, prepared)
    y = jax.block_until_ready(y)

    y_ref = _reference_forward(x, params)
    assert y.shape == (B, 1)
    # bf16 matmul inputs vs f32 reference -> allow ~1e-2 scale differences.
    assert jnp.allclose(y, y_ref, atol=2e-2, rtol=2e-2), "mismatch vs reference"

    print("KERNEL_OK")
</pallas_src>

<mosaic_0001>
module attributes {stable_mosaic.version = 11 : i64} {
  func.func @_disc_fused_kernel(%arg0: i32, %arg1: memref<8x3072xf32, #tpu.memory_space<vmem>>, %arg2: memref<3072x1024xbf16, #tpu.memory_space<vmem>>, %arg3: memref<1x1024xf32, #tpu.memory_space<vmem>>, %arg4: memref<1024x512xbf16, #tpu.memory_space<vmem>>, %arg5: memref<1x512xf32, #tpu.memory_space<vmem>>, %arg6: memref<512x128xbf16, #tpu.memory_space<vmem>>, %arg7: memref<1x128xf32, #tpu.memory_space<vmem>>, %arg8: memref<8x128xf32, #tpu.memory_space<vmem>>) attributes {dimension_semantics = [#tpu.dimension_semantics<parallel>], iteration_bounds = array<i64: 1>, scalar_prefetch = 0 : i64, scratch_operands = 0 : i64, tpu.core_type = #tpu.core_type<tc>, window_params = [{transform_indices = @transform_0, window_bounds = array<i64: 8, 3072>}, {pipeline_mode = #tpu.pipeline_mode<synchronous>, transform_indices = @transform_1, window_bounds = array<i64: 3072, 1024>}, {pipeline_mode = #tpu.pipeline_mode<synchronous>, transform_indices = @transform_2, window_bounds = array<i64: 1, 1024>}, {pipeline_mode = #tpu.pipeline_mode<synchronous>, transform_indices = @transform_3, window_bounds = array<i64: 1024, 512>}, {pipeline_mode = #tpu.pipeline_mode<synchronous>, transform_indices = @transform_4, window_bounds = array<i64: 1, 512>}, {pipeline_mode = #tpu.pipeline_mode<synchronous>, transform_indices = @transform_5, window_bounds = array<i64: 512, 128>}, {pipeline_mode = #tpu.pipeline_mode<synchronous>, transform_indices = @transform_6, window_bounds = array<i64: 1, 128>}, {transform_indices = @transform_7, window_bounds = array<i64: 8, 128>}]} {
    %c0 = arith.constant 0 : index
    %c0_0 = arith.constant 0 : index
    %0 = vector.load %arg1[%c0, %c0_0] : memref<8x3072xf32, #tpu.memory_space<vmem>>, vector<8x3072xf32>
    %1 = arith.truncf %0 : vector<8x3072xf32> to vector<8x3072xbf16>
    %c0_1 = arith.constant 0 : index
    %c0_2 = arith.constant 0 : index
    %2 = vector.load %arg2[%c0_1, %c0_2] : memref<3072x1024xbf16, #tpu.memory_space<vmem>>, vector<3072x1024xbf16>
    %cst = arith.constant dense<0.000000e+00> : vector<8x1024xf32>
    %3 = tpu.matmul %1, %2, %cst {dimension_numbers = #tpu.dot_dimension_numbers<[1], [0], [0], [1], [0, 0, 1, 1], [], []>} : vector<8x3072xbf16>, vector<3072x1024xbf16>, vector<8x1024xf32> -> vector<8x1024xf32>
    %c0_3 = arith.constant 0 : index
    %c0_4 = arith.constant 0 : index
    %4 = vector.load %arg3[%c0_3, %c0_4] : memref<1x1024xf32, #tpu.memory_space<vmem>>, vector<1x1024xf32>
    %5 = vector.broadcast %4 : vector<1x1024xf32> to vector<8x1024xf32>
    %6 = arith.addf %3, %5 : vector<8x1024xf32>
    %cst_5 = arith.constant 2.000000e-01 : f32
    %7 = vector.broadcast %cst_5 : f32 to vector<8x1024xf32>
    %8 = arith.mulf %7, %6 : vector<8x1024xf32>
    %9 = arith.maximumf %6, %8 : vector<8x1024xf32>
    %10 = arith.truncf %9 : vector<8x1024xf32> to vector<8x1024xbf16>
    %c0_6 = arith.constant 0 : index
    %c0_7 = arith.constant 0 : index
    %11 = vector.load %arg4[%c0_6, %c0_7] : memref<1024x512xbf16, #tpu.memory_space<vmem>>, vector<1024x512xbf16>
    %cst_8 = arith.constant dense<0.000000e+00> : vector<8x512xf32>
    %12 = tpu.matmul %10, %11, %cst_8 {dimension_numbers = #tpu.dot_dimension_numbers<[1], [0], [0], [1], [0, 0, 1, 1], [], []>} : vector<8x1024xbf16>, vector<1024x512xbf16>, vector<8x512xf32> -> vector<8x512xf32>
    %c0_9 = arith.constant 0 : index
    %c0_10 = arith.constant 0 : index
    %13 = vector.load %arg5[%c0_9, %c0_10] : memref<1x512xf32, #tpu.memory_space<vmem>>, vector<1x512xf32>
    %14 = vector.broadcast %13 : vector<1x512xf32> to vector<8x512xf32>
    %15 = arith.addf %12, %14 : vector<8x512xf32>
    %cst_11 = arith.constant 2.000000e-01 : f32
    %16 = vector.broadcast %cst_11 : f32 to vector<8x512xf32>
    %17 = arith.mulf %16, %15 : vector<8x512xf32>
    %18 = arith.maximumf %15, %17 : vector<8x512xf32>
    %19 = arith.truncf %18 : vector<8x512xf32> to vector<8x512xbf16>
    %c0_12 = arith.constant 0 : index
    %c0_13 = arith.constant 0 : index
    %20 = vector.load %arg6[%c0_12, %c0_13] : memref<512x128xbf16, #tpu.memory_space<vmem>>, vector<512x128xbf16>
    %cst_14 = arith.constant dense<0.000000e+00> : vector<8x128xf32>
    %21 = tpu.matmul %19, %20, %cst_14 {dimension_numbers = #tpu.dot_dimension_numbers<[1], [0], [0], [1], [0, 0, 1, 1], [], []>} : vector<8x512xbf16>, vector<512x128xbf16>, vector<8x128xf32> -> vector<8x128xf32>
    %c0_15 = arith.constant 0 : index
    %c0_16 = arith.constant 0 : index
    %22 = vector.load %arg7[%c0_15, %c0_16] : memref<1x128xf32, #tpu.memory_space<vmem>>, vector<1x128xf32>
    %23 = vector.broadcast %22 : vector<1x128xf32> to vector<8x128xf32>
    %24 = arith.addf %21, %23 : vector<8x128xf32>
    %25 = arith.negf %24 : vector<8x128xf32>
    %26 = math.exp %25 : vector<8x128xf32>
    %cst_17 = arith.constant 1.000000e+00 : f32
    %27 = vector.broadcast %cst_17 : f32 to vector<8x128xf32>
    %28 = arith.addf %27, %26 : vector<8x128xf32>
    %29 = arith.divf %27, %28 : vector<8x128xf32>
    %c0_18 = arith.constant 0 : index
    %c0_19 = arith.constant 0 : index
    %30 = vector.load %arg8[%c0_18, %c0_19] : memref<8x128xf32, #tpu.memory_space<vmem>>, vector<8x128xf32>
    tpu.vector_store %arg8[%c0_18, %c0_19], %29 {strides = array<i32>} : memref<8x128xf32, #tpu.memory_space<vmem>>, vector<8x128xf32>,
    return
  }
  func.func @transform_0(%arg0: i32) -> (i32, i32) {
    %c0_i32 = arith.constant 0 : i32
    %c0_i32_0 = arith.constant 0 : i32
    return %arg0, %c0_i32 : i32, i32
  }
  func.func @transform_1(%arg0: i32) -> (i32, i32) {
    %c0_i32 = arith.constant 0 : i32
    %c0_i32_0 = arith.constant 0 : i32
    %c0_i32_1 = arith.constant 0 : i32
    return %c0_i32, %c0_i32_0 : i32, i32
  }
  func.func @transform_2(%arg0: i32) -> (i32, i32) {
    %c0_i32 = arith.constant 0 : i32
    %c0_i32_0 = arith.constant 0 : i32
    %c0_i32_1 = arith.constant 0 : i32
    return %c0_i32, %c0_i32_0 : i32, i32
  }
  func.func @transform_3(%arg0: i32) -> (i32, i32) {
    %c0_i32 = arith.constant 0 : i32
    %c0_i32_0 = arith.constant 0 : i32
    %c0_i32_1 = arith.constant 0 : i32
    return %c0_i32, %c0_i32_0 : i32, i32
  }
  func.func @transform_4(%arg0: i32) -> (i32, i32) {
    %c0_i32 = arith.constant 0 : i32
    %c0_i32_0 = arith.constant 0 : i32
    %c0_i32_1 = arith.constant 0 : i32
    return %c0_i32, %c0_i32_0 : i32, i32
  }
  func.func @transform_5(%arg0: i32) -> (i32, i32) {
    %c0_i32 = arith.constant 0 : i32
    %c0_i32_0 = arith.constant 0 : i32
    %c0_i32_1 = arith.constant 0 : i32
    return %c0_i32, %c0_i32_0 : i32, i32
  }
  func.func @transform_6(%arg0: i32) -> (i32, i32) {
    %c0_i32 = arith.constant 0 : i32
    %c0_i32_0 = arith.constant 0 : i32
    %c0_i32_1 = arith.constant 0 : i32
    return %c0_i32, %c0_i32_0 : i32, i32
  }
  func.func @transform_7(%arg0: i32) -> (i32, i32) {
    %c0_i32 = arith.constant 0 : i32
    %c0_i32_0 = arith.constant 0 : i32
    return %arg0, %c0_i32 : i32, i32
  }
}

</mosaic_0001>

<llo_original>
// kernel: tpu_custom_call.1
$region0: #{tpu_custom_call.1}
  #allocation0 [shape = 'u32[]', space=smem, size = 0x4, offset = 0x4, fixed_abs, tag = 'smem constant byte address 0x4 - core index']
  #allocation1 [shape = 'u32[144,128]{1,0:T(1,128)}', space=vmem, size = 0x12000, scoped, tag = 'internal scratch']
  %s0 = inlined_call_operand.hbm [shape: f32[8,3072], index: 0, kind: input, shape index: {}]
  %s1 = inlined_call_operand.hbm [shape: bf16[3072,1024], index: 1, kind: input, shape index: {}]
  %s2 = inlined_call_operand.hbm [shape: f32[1,1024], index: 2, kind: input, shape index: {}]
  %s3 = inlined_call_operand.hbm [shape: bf16[1024,512], index: 3, kind: input, shape index: {}]
  %s4 = inlined_call_operand.hbm [shape: f32[1,512], index: 4, kind: input, shape index: {}]
  %s5 = inlined_call_operand.hbm [shape: bf16[512,128], index: 5, kind: input, shape index: {}]
  %s6 = inlined_call_operand.hbm [shape: f32[1,128], index: 6, kind: input, shape index: {}]
  %s7 = inlined_call_operand.hbm [shape: f32[8,128], index: 7, kind: output, shape index: {}]
  %s8 = sld [smem:[#allocation0]]
  $region66: #{tpu_custom_call.1} parent=0
    _
  %s10 = ssub.s32 1, %s8
  %s11 = scalar_select 0, %s10, %s8
  $region1: #{tpu_custom_call.1} parent=0
    #allocation2 [shape = 'u8[98304]{0}', space=vmem, size = 0x18000, scoped, tag = 'input window, operand 0, single buffered']
    #allocation3 [shape = 's32[1]{0}', space=sflag, size = 0x4, scoped, tag = 'scoped memory for tpu_custom_call.1']
    #allocation4 [shape = 's32[1]{0}', space=sflag, size = 0x4, scoped, tag = 'scoped memory for tpu_custom_call.1']
    #allocation5 [shape = 'u8[6291456]{0}', space=vmem, size = 0x600000, scoped, tag = 'input window, operand 1, single buffered']
    #allocation6 [shape = 's32[1]{0}', space=sflag, size = 0x4, scoped, tag = 'scoped memory for tpu_custom_call.1']
    #allocation7 [shape = 'u8[4096]{0}', space=vmem, size = 0x1000, scoped, tag = 'input window, operand 2, single buffered']
    #allocation8 [shape = 'u8[1048576]{0}', space=vmem, size = 0x100000, scoped, tag = 'input window, operand 3, single buffered']
    #allocation9 [shape = 's32[1]{0}', space=sflag, size = 0x4, scoped, tag = 'scoped memory for tpu_custom_call.1']
    #allocation10 [shape = 'u8[2048]{0}', space=vmem, size = 0x800, scoped, tag = 'input window, operand 4, single buffered']
    #allocation11 [shape = 'u8[131072]{0}', space=vmem, size = 0x20000, scoped, tag = 'input window, operand 5, single buffered']
    #allocation12 [shape = 's32[1]{0}', space=sflag, size = 0x4, scoped, tag = 'scoped memory for tpu_custom_call.1']
    #allocation13 [shape = 'u8[512]{0}', space=vmem, size = 0x400, scoped, tag = 'input window, operand 6, single buffered']
    #allocation14 [shape = 'u8[4096]{0}', space=vmem, size = 0x1000, scoped, tag = 'output window, operand 0, single buffered']
    %12 = vsyncpa [#allocation3], 0
    %13 = vsyncpa [#allocation6], 0
    %14 = vsyncpa [#allocation9], 0
    %15 = vsyncpa [#allocation12], 0
    %16 = vsyncpa [#allocation4], 0
    // Predicated region
    $region2: #{tpu_custom_call.1} parent=1 // pred_check
      _
    $region3: #{tpu_custom_call.1} parent=1 // pred_check_branch
      %18 = sbr.rel (0) target = $region5
    $region4: #{tpu_custom_call.1} parent=1 // pred_region
      %s20 = ssub.s32 3072, 3072
      %21 = vsyncadd [#allocation3], %s20
      %s23 = sshll.u32 [#allocation2], 4
      %s24 = int_to_ptr.vmem [resolvable:$true] %s23
      %26 = dma.hbm_to_vmem [thread:$0]  %s0, 3072, %s24, [#allocation3]
    $region5: #{tpu_custom_call.1} parent=1 // pred_fallthru
      _
    // Predicated region
    $region6: #{tpu_custom_call.1} parent=1 // pred_check
      _
    $region7: #{tpu_custom_call.1} parent=1 // pred_check_branch
      %28 = sbr.rel (0) target = $region9
    $region8: #{tpu_custom_call.1} parent=1 // pred_region
      %s30 = ssub.s32 196608, 196608
      %31 = vsyncadd [#allocation6], %s30
      %s32 = sshll.u32 [#allocation5], 4
      %s33 = int_to_ptr.vmem [resolvable:$true] %s32
      %38 = dma.hbm_to_vmem [thread:$0]  %s1, 196608, %s33, [#allocation6], 512, 512, 32
    $region9: #{tpu_custom_call.1} parent=1 // pred_fallthru
      _
    // Predicated region
    $region10: #{tpu_custom_call.1} parent=1 // pred_check
      _
    $region11: #{tpu_custom_call.1} parent=1 // pred_check_branch
      %40 = sbr.rel (0) target = $region13
    $region12: #{tpu_custom_call.1} parent=1 // pred_region
      %s42 = ssub.s32 128, 128
      %43 = vsyncadd [#allocation6], %s42
      %s45 = sshll.u32 [#allocation7], 4
      %s46 = int_to_ptr.vmem [resolvable:$true] %s45
      %48 = dma.hbm_to_vmem [thread:$0]  %s2, 128, %s46, [#allocation6]
    $region13: #{tpu_custom_call.1} parent=1 // pred_fallthru
      _
    // Predicated region
    $region14: #{tpu_custom_call.1} parent=1 // pred_check
      _
    $region15: #{tpu_custom_call.1} parent=1 // pred_check_branch
      %50 = sbr.rel (0) target = $region17
    $region16: #{tpu_custom_call.1} parent=1 // pred_region
      %s52 = ssub.s32 32768, 32768
      %53 = vsyncadd [#allocation9], %s52
      %s54 = sshll.u32 [#allocation8], 4
      %s55 = int_to_ptr.vmem [resolvable:$true] %s54
      %60 = dma.hbm_to_vmem [thread:$0]  %s3, 32768, %s55, [#allocation9], 256, 256, 16
    $region17: #{tpu_custom_call.1} parent=1 // pred_fallthru
      _
    // Predicated region
    $region18: #{tpu_custom_call.1} parent=1 // pred_check
      _
    $region19: #{tpu_custom_call.1} parent=1 // pred_check_branch
      %62 = sbr.rel (0) target = $region21
    $region20: #{tpu_custom_call.1} parent=1 // pred_region
      %s64 = ssub.s32 64, 64
      %65 = vsyncadd [#allocation9], %s64
      %s67 = sshll.u32 [#allocation10], 4
      %s68 = int_to_ptr.vmem [resolvable:$true] %s67
      %70 = dma.hbm_to_vmem [thread:$0]  %s4, 64, %s68, [#allocation9]
    $region21: #{tpu_custom_call.1} parent=1 // pred_fallthru
      _
    // Predicated region
    $region22: #{tpu_custom_call.1} parent=1 // pred_check
      _
    $region23: #{tpu_custom_call.1} parent=1 // pred_check_branch
      %72 = sbr.rel (0) target = $region25
    $region24: #{tpu_custom_call.1} parent=1 // pred_region
      %s74 = ssub.s32 4096, 4096
      %75 = vsyncadd [#allocation12], %s74
      %s76 = sshll.u32 [#allocation11], 4
      %s77 = int_to_ptr.vmem [resolvable:$true] %s76
      %82 = dma.hbm_to_vmem [thread:$0]  %s5, 4096, %s77, [#allocation12], 64, 64, 4
    $region25: #{tpu_custom_call.1} parent=1 // pred_fallthru
      _
    // Predicated region
    $region26: #{tpu_custom_call.1} parent=1 // pred_check
      _
    $region27: #{tpu_custom_call.1} parent=1 // pred_check_branch
      %84 = sbr.rel (0) target = $region29
    $region28: #{tpu_custom_call.1} parent=1 // pred_region
      %s86 = ssub.s32 16, 16
      %87 = vsyncadd [#allocation12], %s86
      %s89 = sshll.u32 [#allocation13], 4
      %s90 = int_to_ptr.vmem [resolvable:$true] %s89
      %92 = dma.hbm_to_vmem [thread:$0]  %s6, 16, %s90, [#allocation12]
    $region29: #{tpu_custom_call.1} parent=1 // pred_fallthru
      _
    // Predicated region
    $region30: #{tpu_custom_call.1} parent=1 // pred_check
      _
    $region31: #{tpu_custom_call.1} parent=1 // pred_check_branch
      %94 = sbr.rel (0) target = $region33
    $region32: #{tpu_custom_call.1} parent=1 // pred_region
      %95 = dma.done [#allocation3], 3072
    $region33: #{tpu_custom_call.1} parent=1 // pred_fallthru
      _
    // Predicated region
    $region34: #{tpu_custom_call.1} parent=1 // pred_check
      _
    $region35: #{tpu_custom_call.1} parent=1 // pred_check_branch
      %97 = sbr.rel (0) target = $region37
    $region36: #{tpu_custom_call.1} parent=1 // pred_region
      %98 = dma.done [#allocation6], 196608
    $region37: #{tpu_custom_call.1} parent=1 // pred_fallthru
      _
    // Predicated region
    $region38: #{tpu_custom_call.1} parent=1 // pred_check
      _
    $region39: #{tpu_custom_call.1} parent=1 // pred_check_branch
      %100 = sbr.rel (0) target = $region41
    $region40: #{tpu_custom_call.1} parent=1 // pred_region
      %101 = dma.done [#allocation6], 128
    $region41: #{tpu_custom_call.1} parent=1 // pred_fallthru
      _
    // Predicated region
    $region42: #{tpu_custom_call.1} parent=1 // pred_check
      _
    $region43: #{tpu_custom_call.1} parent=1 // pred_check_branch
      %103 = sbr.rel (0) target = $region45
    $region44: #{tpu_custom_call.1} parent=1 // pred_region
      %104 = dma.done [#allocation9], 32768
    $region45: #{tpu_custom_call.1} parent=1 // pred_fallthru
      _
    // Predicated region
    $region46: #{tpu_custom_call.1} parent=1 // pred_check
      _
    $region47: #{tpu_custom_call.1} parent=1 // pred_check_branch
      %106 = sbr.rel (0) target = $region49
    $region48: #{tpu_custom_call.1} parent=1 // pred_region
      %107 = dma.done [#allocation9], 64
    $region49: #{tpu_custom_call.1} parent=1 // pred_fallthru
      _
    // Predicated region
    $region50: #{tpu_custom_call.1} parent=1 // pred_check
      _
    $region51: #{tpu_custom_call.1} parent=1 // pred_check_branch
      %109 = sbr.rel (0) target = $region53
    $region52: #{tpu_custom_call.1} parent=1 // pred_region
      %110 = dma.done [#allocation12], 4096
    $region53: #{tpu_custom_call.1} parent=1 // pred_fallthru
      _
    // Predicated region
    $region54: #{tpu_custom_call.1} parent=1 // pred_check
      _
    $region55: #{tpu_custom_call.1} parent=1 // pred_check_branch
      %112 = sbr.rel (0) target = $region57
    $region56: #{tpu_custom_call.1} parent=1 // pred_region
      %113 = dma.done [#allocation12], 16
    $region57: #{tpu_custom_call.1} parent=1 // pred_fallthru
      _
    %v115 = vld [vmem:[#allocation2] sm:$0xff]
    %v116 = vld [vmem:[#allocation2 + $0x8] sm:$0xff]
    %v117 = vld [vmem:[#allocation2 + $0x10] sm:$0xff]
    %v118 = vld [vmem:[#allocation2 + $0x18] sm:$0xff]
    %v119 = vld [vmem:[#allocation2 + $0x20] sm:$0xff]
    %v120 = vld [vmem:[#allocation2 + $0x28] sm:$0xff]
    %v121 = vld [vmem:[#allocation2 + $0x30] sm:$0xff]
    %v122 = vld [vmem:[#allocation2 + $0x38] sm:$0xff]
    %v123 = vld [vmem:[#allocation2 + $0x40] sm:$0xff]
    %v124 = vld [vmem:[#allocation2 + $0x48] sm:$0xff]
    %v125 = vld [vmem:[#allocation2 + $0x50] sm:$0xff]
    %v126 = vld [vmem:[#allocation2 + $0x58] sm:$0xff]
    %v127 = vld [vmem:[#allocation2 + $0x60] sm:$0xff]
    %v128 = vld [vmem:[#allocation2 + $0x68] sm:$0xff]
    %v129 = vld [vmem:[#allocation2 + $0x70] sm:$0xff]
    %v130 = vld [vmem:[#allocation2 + $0x78] sm:$0xff]
    %v131 = vld [vmem:[#allocation2 + $0x80] sm:$0xff]
    %v132 = vld [vmem:[#allocation2 + $0x88] sm:$0xff]
    %v133 = vld [vmem:[#allocation2 + $0x90] sm:$0xff]
    %v134 = vld [vmem:[#allocation2 + $0x98] sm:$0xff]
    %v135 = vld [vmem:[#allocation2 + $0xa0] sm:$0xff]
    %v136 = vld [vmem:[#allocation2 + $0xa8] sm:$0xff]
    %v137 = vld [vmem:[#allocation2 + $0xb0] sm:$0xff]
    %v138 = vld [vmem:[#allocation2 + $0xb8] sm:$0xff]
    %v139 = vpack.c.bf16 %v115, %v115
    %v140 = vpack.c.bf16 %v116, %v116
    %v141 = vpack.c.bf16 %v117, %v117
    %v142 = vpack.c.bf16 %v118, %v118
    %v143 = vpack.c.bf16 %v119, %v119
    %v144 = vpack.c.bf16 %v120, %v120
    %v145 = vpack.c.bf16 %v121, %v121
    %v146 = vpack.c.bf16 %v122, %v122
    %v147 = vpack.c.bf16 %v123, %v123
    %v148 = vpack.c.bf16 %v124, %v124
    %v149 = vpack.c.bf16 %v125, %v125
    %v150 = vpack.c.bf16 %v126, %v126
    %v151 = vpack.c.bf16 %v127, %v127
    %v152 = vpack.c.bf16 %v128, %v128
    %v153 = vpack.c.bf16 %v129, %v129
    %v154 = vpack.c.bf16 %v130, %v130
    %v155 = vpack.c.bf16 %v131, %v131
    %v156 = vpack.c.bf16 %v132, %v132
    %v157 = vpack.c.bf16 %v133, %v133
    %v158 = vpack.c.bf16 %v134, %v134
    %v159 = vpack.c.bf16 %v135, %v135
    %v160 = vpack.c.bf16 %v136, %v136
    %v161 = vpack.c.bf16 %v137, %v137
    %v162 = vpack.c.bf16 %v138, %v138
    %v163 = vld [vmem:[#allocation5] sm:$0xff]
    %v164 = vld [vmem:[#allocation5 + $0x8] sm:$0xff]
    %v165 = vld [vmem:[#allocation5 + $0x10] sm:$0xff]
    %v166 = vld [vmem:[#allocation5 + $0x18] sm:$0xff]
    %v167 = vld [vmem:[#allocation5 + $0x20] sm:$0xff]
    %v168 = vld [vmem:[#allocation5 + $0x28] sm:$0xff]
    %v169 = vld [vmem:[#allocation5 + $0x30] sm:$0xff]
    %v170 = vld [vmem:[#allocation5 + $0x38] sm:$0xff]
    %v171 = vld [vmem:[#allocation5 + $0x40] sm:$0xff]
    %v172 = vld [vmem:[#allocation5 + $0x48] sm:$0xff]
    %v173 = vld [vmem:[#allocation5 + $0x50] sm:$0xff]
    %v174 = vld [vmem:[#allocation5 + $0x58] sm:$0xff]
    %v175 = vld [vmem:[#allocation5 + $0x60] sm:$0xff]
    %v176 = vld [vmem:[#allocation5 + $0x68] sm:$0xff]
    %v177 = vld [vmem:[#allocation5 + $0x70] sm:$0xff]
    %v178 = vld [vmem:[#allocation5 + $0x78] sm:$0xff]
    %v179 = vld [vmem:[#allocation5 + $0x80] sm:$0xff]
    %v180 = vld [vmem:[#allocation5 + $0x88] sm:$0xff]
    %v181 = vld [vmem:[#allocation5 + $0x90] sm:$0xff]
    %v182 = vld [vmem:[#allocation5 + $0x98] sm:$0xff]
    %v183 = vld [vmem:[#allocation5 + $0xa0] sm:$0xff]
    %v184 = vld [vmem:[#allocation5 + $0xa8] sm:$0xff]
    %v185 = vld [vmem:[#allocation5 + $0xb0] sm:$0xff]
    %v186 = vld [vmem:[#allocation5 + $0xb8] sm:$0xff]
    %v187 = vld [vmem:[#allocation5 + $0xc0] sm:$0xff]
    %v188 = vld [vmem:[#allocation5 + $0xc8] sm:$0xff]
    %v189 = vld [vmem:[#allocation5 + $0xd0] sm:$0xff]
    %v190 = vld [vmem:[#allocation5 + $0xd8] sm:$0xff]
    %v191 = vld [vmem:[#allocation5 + $0xe0] sm:$0xff]
    %v192 = vld [vmem:[#allocation5 + $0xe8] sm:$0xff]
    %v193 = vld [vmem:[#allocation5 + $0xf0] sm:$0xff]
    %v194 = vld [vmem:[#allocation5 + $0xf8] sm:$0xff]
    %v195 = vld [vmem:[#allocation5 + $0x100] sm:$0xff]
    %v196 = vld [vmem:[#allocation5 + $0x108] sm:$0xff]
    %v197 = vld [vmem:[#allocation5 + $0x110] sm:$0xff]
    %v198 = vld [vmem:[#allocation5 + $0x118] sm:$0xff]
    %v199 = vld [vmem:[#allocation5 + $0x120] sm:$0xff]
    %v200 = vld [vmem:[#allocation5 + $0x128] sm:$0xff]
    %v201 = vld [vmem:[#allocation5 + $0x130] sm:$0xff]
    %v202 = vld [vmem:[#allocation5 + $0x138] sm:$0xff]
    %v203 = vld [vmem:[#allocation5 + $0x140] sm:$0xff]
    %v204 = vld [vmem:[#allocation5 + $0x148] sm:$0xff]
    %v205 = vld [vmem:[#allocation5 + $0x150] sm:$0xff]
    %v206 = vld [vmem:[#allocation5 + $0x158] sm:$0xff]
    %v207 = vld [vmem:[#allocation5 + $0x160] sm:$0xff]
    %v208 = vld [vmem:[#allocation5 + $0x168] sm:$0xff]
    %v209 = vld [vmem:[#allocation5 + $0x170] sm:$0xff]
    %v210 = vld [vmem:[#allocation5 + $0x178] sm:$0xff]
    %v211 = vld [vmem:[#allocation5 + $0x180] sm:$0xff]
    %v212 = vld [vmem:[#allocation5 + $0x188] sm:$0xff]
    %v213 = vld [vmem:[#allocation5 + $0x190] sm:$0xff]
    %v214 = vld [vmem:[#allocation5 + $0x198] sm:$0xff]
    %v215 = vld [vmem:[#allocation5 + $0x1a0] sm:$0xff]
    %v216 = vld [vmem:[#allocation5 + $0x1a8] sm:$0xff]
    %v217 = vld [vmem:[#allocation5 + $0x1b0] sm:$0xff]
    %v218 = vld [vmem:[#allocation5 + $0x1b8] sm:$0xff]
    %v219 = vld [vmem:[#allocation5 + $0x1c0] sm:$0xff]
    %v220 = vld [vmem:[#allocation5 + $0x1c8] sm:$0xff]
    %v221 = vld [vmem:[#allocation5 + $0x1d0] sm:$0xff]
    %v222 = vld [vmem:[#allocation5 + $0x1d8] sm:$0xff]
    %v223 = vld [vmem:[#allocation5 + $0x1e0] sm:$0xff]
    %v224 = vld [vmem:[#allocation5 + $0x1e8] sm:$0xff]
    %v225 = vld [vmem:[#allocation5 + $0x1f0] sm:$0xff]
    %v226 = vld [vmem:[#allocation5 + $0x1f8] sm:$0xff]
    %v227 = vld [vmem:[#allocation5 + $0x200] sm:$0xff]
    %v228 = vld [vmem:[#allocation5 + $0x208] sm:$0xff]
    %v229 = vld [vmem:[#allocation5 + $0x210] sm:$0xff]
    %v230 = vld [vmem:[#allocation5 + $0x218] sm:$0xff]
    %v231 = vld [vmem:[#allocation5 + $0x220] sm:$0xff]
    %v232 = vld [vmem:[#allocation5 + $0x228] sm:$0xff]
    %v233 = vld [vmem:[#allocation5 + $0x230] sm:$0xff]
    %v234 = vld [vmem:[#allocation5 + $0x238] sm:$0xff]
    %v235 = vld [vmem:[#allocation5 + $0x240] sm:$0xff]
    %v236 = vld [vmem:[#allocation5 + $0x248] sm:$0xff]
    %v237 = vld [vmem:[#allocation5 + $0x250] sm:$0xff]
    %v238 = vld [vmem:[#allocation5 + $0x258] sm:$0xff]
    %v239 = vld [vmem:[#allocation5 + $0x260] sm:$0xff]
    %v240 = vld [vmem:[#allocation5 + $0x268] sm:$0xff]
    %v241 = vld [vmem:[#allocation5 + $0x270] sm:$0xff]
    %v242 = vld [vmem:[#allocation5 + $0x278] sm:$0xff]
    %v243 = vld [vmem:[#allocation5 + $0x280] sm:$0xff]
    %v244 = vld [vmem:[#allocation5 + $0x288] sm:$0xff]
    %v245 = vld [vmem:[#allocation5 + $0x290] sm:$0xff]
    %v246 = vld [vmem:[#allocation5 + $0x298] sm:$0xff]
    %v247 = vld [vmem:[#allocation5 + $0x2a0] sm:$0xff]
    %v248 = vld [vmem:[#allocation5 + $0x2a8] sm:$0xff]
    %v249 = vld [vmem:[#allocation5 + $0x2b0] sm:$0xff]
    %v250 = vld [vmem:[#allocation5 + $0x2b8] sm:$0xff]
    %v251 = vld [vmem:[#allocation5 + $0x2c0] sm:$0xff]
    %v252 = vld [vmem:[#allocation5 + $0x2c8] sm:$0xff]
    %v253 = vld [vmem:[#allocation5 + $0x2d0] sm:$0xff]
    %v254 = vld [vmem:[#allocation5 + $0x2d8] sm:$0xff]
    %v255 = vld [vmem:[#allocation5 + $0x2e0] sm:$0xff]
    %v256 = vld [vmem:[#allocation5 + $0x2e8] sm:$0xff]
    %v257 = vld [vmem:[#allocation5 + $0x2f0] sm:$0xff]
    %v258 = vld [vmem:[#allocation5 + $0x2f8] sm:$0xff]
    %v259 = vld [vmem:[#allocation5 + $0x300] sm:$0xff]
    %v260 = vld [vmem:[#allocation5 + $0x308] sm:$0xff]
    %v261 = vld [vmem:[#allocation5 + $0x310] sm:$0xff]
    %v262 = vld [vmem:[#allocation5 + $0x318] sm:$0xff]
    %v263 = vld [vmem:[#allocation5 + $0x320] sm:$0xff]
    %v264 = vld [vmem:[#allocation5 + $0x328] sm:$0xff]
    %v265 = vld [vmem:[#allocation5 + $0x330] sm:$0xff]
    %v266 = vld [vmem:[#allocation5 + $0x338] sm:$0xff]
    %v267 = vld [vmem:[#allocation5 + $0x340] sm:$0xff]
    %v268 = vld [vmem:[#allocation5 + $0x348] sm:$0xff]
    %v269 = vld [vmem:[#allocation5 + $0x350] sm:$0xff]
    %v270 = vld [vmem:[#allocation5 + $0x358] sm:$0xff]
    %v271 = vld [vmem:[#allocation5 + $0x360] sm:$0xff]
    %v272 = vld [vmem:[#allocation5 + $0x368] sm:$0xff]
    %v273 = vld [vmem:[#allocation5 + $0x370] sm:$0xff]
    %v274 = vld [vmem:[#allocation5 + $0x378] sm:$0xff]
    %v275 = vld [vmem:[#allocation5 + $0x380] sm:$0xff]
    %v276 = vld [vmem:[#allocation5 + $0x388] sm:$0xff]
    %v277 = vld [vmem:[#allocation5 + $0x390] sm:$0xff]
    %v278 = vld [vmem:[#allocation5 + $0x398] sm:$0xff]
    %v279 = vld [vmem:[#allocation5 + $0x3a0] sm:$0xff]
    %v280 = vld [vmem:[#allocation5 + $0x3a8] sm:$0xff]
    %v281 = vld [vmem:[#allocation5 + $0x3b0] sm:$0xff]
    %v282 = vld [vmem:[#allocation5 + $0x3b8] sm:$0xff]
    %v283 = vld [vmem:[#allocation5 + $0x3c0] sm:$0xff]
    %v284 = vld [vmem:[#allocation5 + $0x3c8] sm:$0xff]
    %v285 = vld [vmem:[#allocation5 + $0x3d0] sm:$0xff]
    %v286 = vld [vmem:[#allocation5 + $0x3d8] sm:$0xff]
    %v287 = vld [vmem:[#allocation5 + $0x3e0] sm:$0xff]
    %v288 = vld [vmem:[#allocation5 + $0x3e8] sm:$0xff]
    %v289 = vld [vmem:[#allocation5 + $0x3f0] sm:$0xff]
    %v290 = vld [vmem:[#allocation5 + $0x3f8] sm:$0xff]
    %v291 = vld [vmem:[#allocation5 + $0x400] sm:$0xff]
    %v292 = vld [vmem:[#allocation5 + $0x408] sm:$0xff]
    %v293 = vld [vmem:[#allocation5 + $0x410] sm:$0xff]
    %v294 = vld [vmem:[#allocation5 + $0x418] sm:$0xff]
    %v295 = vld [vmem:[#allocation5 + $0x420] sm:$0xff]
    %v296 = vld [vmem:[#allocation5 + $0x428] sm:$0xff]
    %v297 = vld [vmem:[#allocation5 + $0x430] sm:$0xff]
    %v298 = vld [vmem:[#allocation5 + $0x438] sm:$0xff]
    %v299 = vld [vmem:[#allocation5 + $0x440] sm:$0xff]
    %v300 = vld [vmem:[#allocation5 + $0x448] sm:$0xff]
    %v301 = vld [vmem:[#allocation5 + $0x450] sm:$0xff]
    %v302 = vld [vmem:[#allocation5 + $0x458] sm:$0xff]
    %v303 = vld [vmem:[#allocation5 + $0x460] sm:$0xff]
    %v304 = vld [vmem:[#allocation5 + $0x468] sm:$0xff]
    %v305 = vld [vmem:[#allocation5 + $0x470] sm:$0xff]
    %v306 = vld [vmem:[#allocation5 + $0x478] sm:$0xff]
    %v307 = vld [vmem:[#allocation5 + $0x480] sm:$0xff]
    %v308 = vld [vmem:[#allocation5 + $0x488] sm:$0xff]
    %v309 = vld [vmem:[#allocation5 + $0x490] sm:$0xff]
    %v310 = vld [vmem:[#allocation5 + $0x498] sm:$0xff]
    %v311 = vld [vmem:[#allocation5 + $0x4a0] sm:$0xff]
    %v312 = vld [vmem:[#allocation5 + $0x4a8] sm:$0xff]
    %v313 = vld [vmem:[#allocation5 + $0x4b0] sm:$0xff]
    %v314 = vld [vmem:[#allocation5 + $0x4b8] sm:$0xff]
    %v315 = vld [vmem:[#allocation5 + $0x4c0] sm:$0xff]
    %v316 = vld [vmem:[#allocation5 + $0x4c8] sm:$0xff]
    %v317 = vld [vmem:[#allocation5 + $0x4d0] sm:$0xff]
    %v318 = vld [vmem:[#allocation5 + $0x4d8] sm:$0xff]
    %v319 = vld [vmem:[#allocation5 + $0x4e0] sm:$0xff]
    %v320 = vld [vmem:[#allocation5 + $0x4e8] sm:$0xff]
    %v321 = vld [vmem:[#allocation5 + $0x4f0] sm:$0xff]
    %v322 = vld [vmem:[#allocation5 + $0x4f8] sm:$0xff]
    %v323 = vld [vmem:[#allocation5 + $0x500] sm:$0xff]
    %v324 = vld [vmem:[#allocation5 + $0x508] sm:$0xff]
    %v325 = vld [vmem:[#allocation5 + $0x510] sm:$0xff]
    %v326 = vld [vmem:[#allocation5 + $0x518] sm:$0xff]
    %v327 = vld [vmem:[#allocation5 + $0x520] sm:$0xff]
    %v328 = vld [vmem:[#allocation5 + $0x528] sm:$0xff]
    %v329 = vld [vmem:[#allocation5 + $0x530] sm:$0xff]
    %v330 = vld [vmem:[#allocation5 + $0x538] sm:$0xff]
    %v331 = vld [vmem:[#allocation5 + $0x540] sm:$0xff]
    %v332 = vld [vmem:[#allocation5 + $0x548] sm:$0xff]
    %v333 = vld [vmem:[#allocation5 + $0x550] sm:$0xff]
    %v334 = vld [vmem:[#allocation5 + $0x558] sm:$0xff]
    %v335 = vld [vmem:[#allocation5 + $0x560] sm:$0xff]
    %v336 = vld [vmem:[#allocation5 + $0x568] sm:$0xff]
    %v337 = vld [vmem:[#allocation5 + $0x570] sm:$0xff]
    %v338 = vld [vmem:[#allocation5 + $0x578] sm:$0xff]
    %v339 = vld [vmem:[#allocation5 + $0x580] sm:$0xff]
    %v340 = vld [vmem:[#allocation5 + $0x588] sm:$0xff]
    %v341 = vld [vmem:[#allocation5 + $0x590] sm:$0xff]
    %v342 = vld [vmem:[#allocation5 + $0x598] sm:$0xff]
    %v343 = vld [vmem:[#allocation5 + $0x5a0] sm:$0xff]
    %v344 = vld [vmem:[#allocation5 + $0x5a8] sm:$0xff]
    %v345 = vld [vmem:[#allocation5 + $0x5b0] sm:$0xff]
    %v346 = vld [vmem:[#allocation5 + $0x5b8] sm:$0xff]
    %v347 = vld [vmem:[#allocation5 + $0x5c0] sm:$0xff]
    %v348 = vld [vmem:[#allocation5 + $0x5c8] sm:$0xff]
    %v349 = vld [vmem:[#allocation5 + $0x5d0] sm:$0xff]
    %v350 = vld [vmem:[#allocation5 + $0x5d8] sm:$0xff]
    %v351 = vld [vmem:[#allocation5 + $0x5e0] sm:$0xff]
    %v352 = vld [vmem:[#allocation5 + $0x5e8] sm:$0xff]
    %v353 = vld [vmem:[#allocation5 + $0x5f0] sm:$0xff]
    %v354 = vld [vmem:[#allocation5 + $0x5f8] sm:$0xff]
    %v355 = vld [vmem:[#allocation5 + $0x600] sm:$0xff]
    %v356 = vld [vmem:[#allocation5 + $0x608] sm:$0xff]
    %v357 = vld [vmem:[#allocation5 + $0x610] sm:$0xff]
    %v358 = vld [vmem:[#allocation5 + $0x618] sm:$0xff]
    %v359 = vld [vmem:[#allocation5 + $0x620] sm:$0xff]
    %v360 = vld [vmem:[#allocation5 + $0x628] sm:$0xff]
    %v361 = vld [vmem:[#allocation5 + $0x630] sm:$0xff]
    %v362 = vld [vmem:[#allocation5 + $0x638] sm:$0xff]
    %v363 = vld [vmem:[#allocation5 + $0x640] sm:$0xff]
    %v364 = vld [vmem:[#allocation5 + $0x648] sm:$0xff]
    %v365 = vld [vmem:[#allocation5 + $0x650] sm:$0xff]
    %v366 = vld [vmem:[#allocation5 + $0x658] sm:$0xff]
    %v367 = vld [vmem:[#allocation5 + $0x660] sm:$0xff]
    %v368 = vld [vmem:[#allocation5 + $0x668] sm:$0xff]
    %v369 = vld [vmem:[#allocation5 + $0x670] sm:$0xff]
    %v370 = vld [vmem:[#allocation5 + $0x678] sm:$0xff]
    %v371 = vld [vmem:[#allocation5 + $0x680] sm:$0xff]
    %v372 = vld [vmem:[#allocation5 + $0x688] sm:$0xff]
    %v373 = vld [vmem:[#allocation5 + $0x690] sm:$0xff]
    %v374 = vld [vmem:[#allocation5 + $0x698] sm:$0xff]
    %v375 = vld [vmem:[#allocation5 + $0x6a0] sm:$0xff]
    %v376 = vld [vmem:[#allocation5 + $0x6a8] sm:$0xff]
    %v377 = vld [vmem:[#allocation5 + $0x6b0] sm:$0xff]
    %v378 = vld [vmem:[#allocation5 + $0x6b8] sm:$0xff]
    %v379 = vld [vmem:[#allocation5 + $0x6c0] sm:$0xff]
    %v380 = vld [vmem:[#allocation5 + $0x6c8] sm:$0xff]
    %v381 = vld [vmem:[#allocation5 + $0x6d0] sm:$0xff]
    %v382 = vld [vmem:[#allocation5 + $0x6d8] sm:$0xff]
    %v383 = vld [vmem:[#allocation5 + $0x6e0] sm:$0xff]
    %v384 = vld [vmem:[#allocation5 + $0x6e8] sm:$0xff]
    %v385 = vld [vmem:[#allocation5 + $0x6f0] sm:$0xff]
    %v386 = vld [vmem:[#allocation5 + $0x6f8] sm:$0xff]
    %v387 = vld [vmem:[#allocation5 + $0x700] sm:$0xff]
    %v388 = vld [vmem:[#allocation5 + $0x708] sm:$0xff]
    %v389 = vld [vmem:[#allocation5 + $0x710] sm:$0xff]
    %v390 = vld [vmem:[#allocation5 + $0x718] sm:$0xff]
    %v391 = vld [vmem:[#allocation5 + $0x720] sm:$0xff]
    %v392 = vld [vmem:[#allocation5 + $0x728] sm:$0xff]
    %v393 = vld [vmem:[#allocation5 + $0x730] sm:$0xff]
    %v394 = vld [vmem:[#allocation5 + $0x738] sm:$0xff]
    %v395 = vld [vmem:[#allocation5 + $0x740] sm:$0xff]
    %v396 = vld [vmem:[#allocation5 + $0x748] sm:$0xff]
    %v397 = vld [vmem:[#allocation5 + $0x750] sm:$0xff]
    %v398 = vld [vmem:[#allocation5 + $0x758] sm:$0xff]
    %v399 = vld [vmem:[#allocation5 + $0x760] sm:$0xff]
    %v400 = vld [vmem:[#allocation5 + $0x768] sm:$0xff]
    %v401 = vld [vmem:[#allocation5 + $0x770] sm:$0xff]
    %v402 = vld [vmem:[#allocation5 + $0x778] sm:$0xff]
    %v403 = vld [vmem:[#allocation5 + $0x780] sm:$0xff]
    %v404 = vld [vmem:[#allocation5 + $0x788] sm:$0xff]
    %v405 = vld [vmem:[#allocation5 + $0x790] sm:$0xff]
    %v406 = vld [vmem:[#allocation5 + $0x798] sm:$0xff]
    %v407 = vld [vmem:[#allocation5 + $0x7a0] sm:$0xff]
    %v408 = vld [vmem:[#allocation5 + $0x7a8] sm:$0xff]
    %v409 = vld [vmem:[#allocation5 + $0x7b0] sm:$0xff]
    %v410 = vld [vmem:[#allocation5 + $0x7b8] sm:$0xff]
    %v411 = vld [vmem:[#allocation5 + $0x7c0] sm:$0xff]
    %v412 = vld [vmem:[#allocation5 + $0x7c8] sm:$0xff]
    %v413 = vld [vmem:[#allocation5 + $0x7d0] sm:$0xff]
    %v414 = vld [vmem:[#allocation5 + $0x7d8] sm:$0xff]
    %v415 = vld [vmem:[#allocation5 + $0x7e0] sm:$0xff]
    %v416 = vld [vmem:[#allocation5 + $0x7e8] sm:$0xff]
    %v417 = vld [vmem:[#allocation5 + $0x7f0] sm:$0xff]
    %v418 = vld [vmem:[#allocation5 + $0x7f8] sm:$0xff]
    %v419 = vld [vmem:[#allocation5 + $0x800] sm:$0xff]
    %v420 = vld [vmem:[#allocation5 + $0x808] sm:$0xff]
    %v421 = vld [vmem:[#allocation5 + $0x810] sm:$0xff]
    %v422 = vld [vmem:[#allocation5 + $0x818] sm:$0xff]
    %v423 = vld [vmem:[#allocation5 + $0x820] sm:$0xff]
    %v424 = vld [vmem:[#allocation5 + $0x828] sm:$0xff]
    %v425 = vld [vmem:[#allocation5 + $0x830] sm:$0xff]
    %v426 = vld [vmem:[#allocation5 + $0x838] sm:$0xff]
    %v427 = vld [vmem:[#allocation5 + $0x840] sm:$0xff]
    %v428 = vld [vmem:[#allocation5 + $0x848] sm:$0xff]
    %v429 = vld [vmem:[#allocation5 + $0x850] sm:$0xff]
    %v430 = vld [vmem:[#allocation5 + $0x858] sm:$0xff]
    %v431 = vld [vmem:[#allocation5 + $0x860] sm:$0xff]
    %v432 = vld [vmem:[#allocation5 + $0x868] sm:$0xff]
    %v433 = vld [vmem:[#allocation5 + $0x870] sm:$0xff]
    %v434 = vld [vmem:[#allocation5 + $0x878] sm:$0xff]
    %v435 = vld [vmem:[#allocation5 + $0x880] sm:$0xff]
    %v436 = vld [vmem:[#allocation5 + $0x888] sm:$0xff]
    %v437 = vld [vmem:[#allocation5 + $0x890] sm:$0xff]
    %v438 = vld [vmem:[#allocation5 + $0x898] sm:$0xff]
    %v439 = vld [vmem:[#allocation5 + $0x8a0] sm:$0xff]
    %v440 = vld [vmem:[#allocation5 + $0x8a8] sm:$0xff]
    %v441 = vld [vmem:[#allocation5 + $0x8b0] sm:$0xff]
    %v442 = vld [vmem:[#allocation5 + $0x8b8] sm:$0xff]
    %v443 = vld [vmem:[#allocation5 + $0x8c0] sm:$0xff]
    %v444 = vld [vmem:[#allocation5 + $0x8c8] sm:$0xff]
    %v445 = vld [vmem:[#allocation5 + $0x8d0] sm:$0xff]
    %v446 = vld [vmem:[#allocation5 + $0x8d8] sm:$0xff]
    %v447 = vld [vmem:[#allocation5 + $0x8e0] sm:$0xff]
    %v448 = vld [vmem:[#allocation5 + $0x8e8] sm:$0xff]
    %v449 = vld [vmem:[#allocation5 + $0x8f0] sm:$0xff]
    %v450 = vld [vmem:[#allocation5 + $0x8f8] sm:$0xff]
    %v451 = vld [vmem:[#allocation5 + $0x900] sm:$0xff]
    %v452 = vld [vmem:[#allocation5 + $0x908] sm:$0xff]
    %v453 = vld [vmem:[#allocation5 + $0x910] sm:$0xff]
    %v454 = vld [vmem:[#allocation5 + $0x918] sm:$0xff]
    %v455 = vld [vmem:[#allocation5 + $0x920] sm:$0xff]
    %v456 = vld [vmem:[#allocation5 + $0x928] sm:$0xff]
    %v457 = vld [vmem:[#allocation5 + $0x930] sm:$0xff]
    %v458 = vld [vmem:[#allocation5 + $0x938] sm:$0xff]
    %v459 = vld [vmem:[#allocation5 + $0x940] sm:$0xff]
    %v460 = vld [vmem:[#allocation5 + $0x948] sm:$0xff]
    %v461 = vld [vmem:[#allocation5 + $0x950] sm:$0xff]
    %v462 = vld [vmem:[#allocation5 + $0x958] sm:$0xff]
    %v463 = vld [vmem:[#allocation5 + $0x960] sm:$0xff]
    %v464 = vld [vmem:[#allocation5 + $0x968] sm:$0xff]
    %v465 = vld [vmem:[#allocation5 + $0x970] sm:$0xff]
    %v466 = vld [vmem:[#allocation5 + $0x978] sm:$0xff]
    %v467 = vld [vmem:[#allocation5 + $0x980] sm:$0xff]
    %v468 = vld [vmem:[#allocation5 + $0x988] sm:$0xff]
    %v469 = vld [vmem:[#allocation5 + $0x990] sm:$0xff]
    %v470 = vld [vmem:[#allocation5 + $0x998] sm:$0xff]
    %v471 = vld [vmem:[#allocation5 + $0x9a0] sm:$0xff]
    %v472 = vld [vmem:[#allocation5 + $0x9a8] sm:$0xff]
    %v473 = vld [vmem:[#allocation5 + $0x9b0] sm:$0xff]
    %v474 = vld [vmem:[#allocation5 + $0x9b8] sm:$0xff]
    %v475 = vld [vmem:[#allocation5 + $0x9c0] sm:$0xff]
    %v476 = vld [vmem:[#allocation5 + $0x9c8] sm:$0xff]
    %v477 = vld [vmem:[#allocation5 + $0x9d0] sm:$0xff]
    %v478 = vld [vmem:[#allocation5 + $0x9d8] sm:$0xff]
    %v479 = vld [vmem:[#allocation5 + $0x9e0] sm:$0xff]
    %v480 = vld [vmem:[#allocation5 + $0x9e8] sm:$0xff]
    %v481 = vld [vmem:[#allocation5 + $0x9f0] sm:$0xff]
    %v482 = vld [vmem:[#allocation5 + $0x9f8] sm:$0xff]
    %v483 = vld [vmem:[#allocation5 + $0xa00] sm:$0xff]
    %v484 = vld [vmem:[#allocation5 + $0xa08] sm:$0xff]
    %v485 = vld [vmem:[#allocation5 + $0xa10] sm:$0xff]
    %v486 = vld [vmem:[#allocation5 + $0xa18] sm:$0xff]
    %v487 = vld [vmem:[#allocation5 + $0xa20] sm:$0xff]
    %v488 = vld [vmem:[#allocation5 + $0xa28] sm:$0xff]
    %v489 = vld [vmem:[#allocation5 + $0xa30] sm:$0xff]
    %v490 = vld [vmem:[#allocation5 + $0xa38] sm:$0xff]
    %v491 = vld [vmem:[#allocation5 + $0xa40] sm:$0xff]
    %v492 = vld [vmem:[#allocation5 + $0xa48] sm:$0xff]
    %v493 = vld [vmem:[#allocation5 + $0xa50] sm:$0xff]
    %v494 = vld [vmem:[#allocation5 + $0xa58] sm:$0xff]
    %v495 = vld [vmem:[#allocation5 + $0xa60] sm:$0xff]
    %v496 = vld [vmem:[#allocation5 + $0xa68] sm:$0xff]
    %v497 = vld [vmem:[#allocation5 + $0xa70] sm:$0xff]
    %v498 = vld [vmem:[#allocation5 + $0xa78] sm:$0xff]
    %v499 = vld [vmem:[#allocation5 + $0xa80] sm:$0xff]
    %v500 = vld [vmem:[#allocation5 + $0xa88] sm:$0xff]
    %v501 = vld [vmem:[#allocation5 + $0xa90] sm:$0xff]
    %v502 = vld [vmem:[#allocation5 + $0xa98] sm:$0xff]
    %v503 = vld [vmem:[#allocation5 + $0xaa0] sm:$0xff]
    %v504 = vld [vmem:[#allocation5 + $0xaa8] sm:$0xff]
    %v505 = vld [vmem:[#allocation5 + $0xab0] sm:$0xff]
    %v506 = vld [vmem:[#allocation5 + $0xab8] sm:$0xff]
    %v507 = vld [vmem:[#allocation5 + $0xac0] sm:$0xff]
    %v508 = vld [vmem:[#allocation5 + $0xac8] sm:$0xff]
    %v509 = vld [vmem:[#allocation5 + $0xad0] sm:$0xff]
    %v510 = vld [vmem:[#allocation5 + $0xad8] sm:$0xff]
    %v511 = vld [vmem:[#allocation5 + $0xae0] sm:$0xff]
    %v512 = vld [vmem:[#allocation5 + $0xae8] sm:$0xff]
    %v513 = vld [vmem:[#allocation5 + $0xaf0] sm:$0xff]
    %v514 = vld [vmem:[#allocation5 + $0xaf8] sm:$0xff]
    %v515 = vld [vmem:[#allocation5 + $0xb00] sm:$0xff]
    %v516 = vld [vmem:[#allocation5 + $0xb08] sm:$0xff]
    %v517 = vld [vmem:[#allocation5 + $0xb10] sm:$0xff]
    %v518 = vld [vmem:[#allocation5 + $0xb18] sm:$0xff]
    %v519 = vld [vmem:[#allocation5 + $0xb20] sm:$0xff]
    %v520 = vld [vmem:[#allocation5 + $0xb28] sm:$0xff]
    %v521 = vld [vmem:[#allocation5 + $0xb30] sm:$0xff]
    %v522 = vld [vmem:[#allocation5 + $0xb38] sm:$0xff]
    %v523 = vld [vmem:[#allocation5 + $0xb40] sm:$0xff]
    %v524 = vld [vmem:[#allocation5 + $0xb48] sm:$0xff]
    %v525 = vld [vmem:[#allocation5 + $0xb50] sm:$0xff]
    %v526 = vld [vmem:[#allocation5 + $0xb58] sm:$0xff]
    %v527 = vld [vmem:[#allocation5 + $0xb60] sm:$0xff]
    %v528 = vld [vmem:[#allocation5 + $0xb68] sm:$0xff]
    %v529 = vld [vmem:[#allocation5 + $0xb70] sm:$0xff]
    %v530 = vld [vmem:[#allocation5 + $0xb78] sm:$0xff]
    %v531 = vld [vmem:[#allocation5 + $0xb80] sm:$0xff]
    %v532 = vld [vmem:[#allocation5 + $0xb88] sm:$0xff]
    %v533 = vld [vmem:[#allocation5 + $0xb90] sm:$0xff]
    %v534 = vld [vmem:[#allocation5 + $0xb98] sm:$0xff]
    %v535 = vld [vmem:[#allocation5 + $0xba0] sm:$0xff]
    %v536 = vld [vmem:[#allocation5 + $0xba8] sm:$0xff]
    %v537 = vld [vmem:[#allocation5 + $0xbb0] sm:$0xff]
    %v538 = vld [vmem:[#allocation5 + $0xbb8] sm:$0xff]
    %v539 = vld [vmem:[#allocation5 + $0xbc0] sm:$0xff]
    %v540 = vld [vmem:[#allocation5 + $0xbc8] sm:$0xff]
    %v541 = vld [vmem:[#allocation5 + $0xbd0] sm:$0xff]
    %v542 = vld [vmem:[#allocation5 + $0xbd8] sm:$0xff]
    %v543 = vld [vmem:[#allocation5 + $0xbe0] sm:$0xff]
    %v544 = vld [vmem:[#allocation5 + $0xbe8] sm:$0xff]
    %v545 = vld [vmem:[#allocation5 + $0xbf0] sm:$0xff]
    %v546 = vld [vmem:[#allocation5 + $0xbf8] sm:$0xff]
    %v547 = vld [vmem:[#allocation5 + $0xc00] sm:$0xff]
    %v548 = vld [vmem:[#allocation5 + $0xc08] sm:$0xff]
    %v549 = vld [vmem:[#allocation5 + $0xc10] sm:$0xff]
    %v550 = vld [vmem:[#allocation5 + $0xc18] sm:$0xff]
    %v551 = vld [vmem:[#allocation5 + $0xc20] sm:$0xff]
    %v552 = vld [vmem:[#allocation5 + $0xc28] sm:$0xff]
    %v553 = vld [vmem:[#allocation5 + $0xc30] sm:$0xff]
    %v554 = vld [vmem:[#allocation5 + $0xc38] sm:$0xff]
    %v555 = vld [vmem:[#allocation5 + $0xc40] sm:$0xff]
    %v556 = vld [vmem:[#allocation5 + $0xc48] sm:$0xff]
    %v557 = vld [vmem:[#allocation5 + $0xc50] sm:$0xff]
    %v558 = vld [vmem:[#allocation5 + $0xc58] sm:$0xff]
    %v559 = vld [vmem:[#allocation5 + $0xc60] sm:$0xff]
    %v560 = vld [vmem:[#allocation5 + $0xc68] sm:$0xff]
    %v561 = vld [vmem:[#allocation5 + $0xc70] sm:$0xff]
    %v562 = vld [vmem:[#allocation5 + $0xc78] sm:$0xff]
    %v563 = vld [vmem:[#allocation5 + $0xc80] sm:$0xff]
    %v564 = vld [vmem:[#allocation5 + $0xc88] sm:$0xff]
    %v565 = vld [vmem:[#allocation5 + $0xc90] sm:$0xff]
    %v566 = vld [vmem:[#allocation5 + $0xc98] sm:$0xff]
    %v567 = vld [vmem:[#allocation5 + $0xca0] sm:$0xff]
    %v568 = vld [vmem:[#allocation5 + $0xca8] sm:$0xff]
    %v569 = vld [vmem:[#allocation5 + $0xcb0] sm:$0xff]
    %v570 = vld [vmem:[#allocation5 + $0xcb8] sm:$0xff]
    %v571 = vld [vmem:[#allocation5 + $0xcc0] sm:$0xff]
    %v572 = vld [vmem:[#allocation5 + $0xcc8] sm:$0xff]
    %v573 = vld [vmem:[#allocation5 + $0xcd0] sm:$0xff]
    %v574 = vld [vmem:[#allocation5 + $0xcd8] sm:$0xff]
    %v575 = vld [vmem:[#allocation5 + $0xce0] sm:$0xff]
    %v576 = vld [vmem:[#allocation5 + $0xce8] sm:$0xff]
    %v577 = vld [vmem:[#allocation5 + $0xcf0] sm:$0xff]
    %v578 = vld [vmem:[#allocation5 + $0xcf8] sm:$0xff]
    %v579 = vld [vmem:[#allocation5 + $0xd00] sm:$0xff]
    %v580 = vld [vmem:[#allocation5 + $0xd08] sm:$0xff]
    %v581 = vld [vmem:[#allocation5 + $0xd10] sm:$0xff]
    %v582 = vld [vmem:[#allocation5 + $0xd18] sm:$0xff]
    %v583 = vld [vmem:[#allocation5 + $0xd20] sm:$0xff]
    %v584 = vld [vmem:[#allocation5 + $0xd28] sm:$0xff]
    %v585 = vld [vmem:[#allocation5 + $0xd30] sm:$0xff]
    %v586 = vld [vmem:[#allocation5 + $0xd38] sm:$0xff]
    %v587 = vld [vmem:[#allocation5 + $0xd40] sm:$0xff]
    %v588 = vld [vmem:[#allocation5 + $0xd48] sm:$0xff]
    %v589 = vld [vmem:[#allocation5 + $0xd50] sm:$0xff]
    %v590 = vld [vmem:[#allocation5 + $0xd58] sm:$0xff]
    %v591 = vld [vmem:[#allocation5 + $0xd60] sm:$0xff]
    %v592 = vld [vmem:[#allocation5 + $0xd68] sm:$0xff]
    %v593 = vld [vmem:[#allocation5 + $0xd70] sm:$0xff]
    %v594 = vld [vmem:[#allocation5 + $0xd78] sm:$0xff]
    %v595 = vld [vmem:[#allocation5 + $0xd80] sm:$0xff]
    %v596 = vld [vmem:[#allocation5 + $0xd88] sm:$0xff]
    %v597 = vld [vmem:[#allocation5 + $0xd90] sm:$0xff]
    %v598 = vld [vmem:[#allocation5 + $0xd98] sm:$0xff]
    %v599 = vld [vmem:[#allocation5 + $0xda0] sm:$0xff]
    %v600 = vld [vmem:[#allocation5 + $0xda8] sm:$0xff]
    %v601 = vld [vmem:[#allocation5 + $0xdb0] sm:$0xff]
    %v602 = vld [vmem:[#allocation5 + $0xdb8] sm:$0xff]
    %v603 = vld [vmem:[#allocation5 + $0xdc0] sm:$0xff]
    %v604 = vld [vmem:[#allocation5 + $0xdc8] sm:$0xff]
    %v605 = vld [vmem:[#allocation5 + $0xdd0] sm:$0xff]
    %v606 = vld [vmem:[#allocation5 + $0xdd8] sm:$0xff]
    %v607 = vld [vmem:[#allocation5 + $0xde0] sm:$0xff]
    %v608 = vld [vmem:[#allocation5 + $0xde8] sm:$0xff]
    %v609 = vld [vmem:[#allocation5 + $0xdf0] sm:$0xff]
    %v610 = vld [vmem:[#allocation5 + $0xdf8] sm:$0xff]
    %v611 = vld [vmem:[#allocation5 + $0xe00] sm:$0xff]
    %v612 = vld [vmem:[#allocation5 + $0xe08] sm:$0xff]
    %v613 = vld [vmem:[#allocation5 + $0xe10] sm:$0xff]
    %v614 = vld [vmem:[#allocation5 + $0xe18] sm:$0xff]
    %v615 = vld [vmem:[#allocation5 + $0xe20] sm:$0xff]
    %v616 = vld [vmem:[#allocation5 + $0xe28] sm:$0xff]
    %v617 = vld [vmem:[#allocation5 + $0xe30] sm:$0xff]
    %v618 = vld [vmem:[#allocation5 + $0xe38] sm:$0xff]
    %v619 = vld [vmem:[#allocation5 + $0xe40] sm:$0xff]
    %v620 = vld [vmem:[#allocation5 + $0xe48] sm:$0xff]
    %v621 = vld [vmem:[#allocation5 + $0xe50] sm:$0xff]
    %v622 = vld [vmem:[#allocation5 + $0xe58] sm:$0xff]
    %v623 = vld [vmem:[#allocation5 + $0xe60] sm:$0xff]
    %v624 = vld [vmem:[#allocation5 + $0xe68] sm:$0xff]
    %v625 = vld [vmem:[#allocation5 + $0xe70] sm:$0xff]
    %v626 = vld [vmem:[#allocation5 + $0xe78] sm:$0xff]
    %v627 = vld [vmem:[#allocation5 + $0xe80] sm:$0xff]
    %v628 = vld [vmem:[#allocation5 + $0xe88] sm:$0xff]
    %v629 = vld [vmem:[#allocation5 + $0xe90] sm:$0xff]
    %v630 = vld [vmem:[#allocation5 + $0xe98] sm:$0xff]
    %v631 = vld [vmem:[#allocation5 + $0xea0] sm:$0xff]
    %v632 = vld [vmem:[#allocation5 + $0xea8] sm:$0xff]
    %v633 = vld [vmem:[#allocation5 + $0xeb0] sm:$0xff]
    %v634 = vld [vmem:[#allocation5 + $0xeb8] sm:$0xff]
    %v635 = vld [vmem:[#allocation5 + $0xec0] sm:$0xff]
    %v636 = vld [vmem:[#allocation5 + $0xec8] sm:$0xff]
    %v637 = vld [vmem:[#allocation5 + $0xed0] sm:$0xff]
    %v638 = vld [vmem:[#allocation5 + $0xed8] sm:$0xff]
    %v639 = vld [vmem:[#allocation5 + $0xee0] sm:$0xff]
    %v640 = vld [vmem:[#allocation5 + $0xee8] sm:$0xff]
    %v641 = vld [vmem:[#allocation5 + $0xef0] sm:$0xff]
    %v642 = vld [vmem:[#allocation5 + $0xef8] sm:$0xff]
    %v643 = vld [vmem:[#allocation5 + $0xf00] sm:$0xff]
    %v644 = vld [vmem:[#allocation5 + $0xf08] sm:$0xff]
    %v645 = vld [vmem:[#allocation5 + $0xf10] sm:$0xff]
    %v646 = vld [vmem:[#allocation5 + $0xf18] sm:$0xff]
    %v647 = vld [vmem:[#allocation5 + $0xf20] sm:$0xff]
    %v648 = vld [vmem:[#allocation5 + $0xf28] sm:$0xff]
    %v649 = vld [vmem:[#allocation5 + $0xf30] sm:$0xff]
    %v650 = vld [vmem:[#allocation5 + $0xf38] sm:$0xff]
    %v651 = vld [vmem:[#allocation5 + $0xf40] sm:$0xff]
    %v652 = vld [vmem:[#allocation5 + $0xf48] sm:$0xff]
    %v653 = vld [vmem:[#allocation5 + $0xf50] sm:$0xff]
    %v654 = vld [vmem:[#allocation5 + $0xf58] sm:$0xff]
    %v655 = vld [vmem:[#allocation5 + $0xf60] sm:$0xff]
    %v656 = vld [vmem:[#allocation5 + $0xf68] sm:$0xff]
    %v657 = vld [vmem:[#allocation5 + $0xf70] sm:$0xff]
    %v658 = vld [vmem:[#allocation5 + $0xf78] sm:$0xff]
    %v659 = vld [vmem:[#allocation5 + $0xf80] sm:$0xff]
    %v660 = vld [vmem:[#allocation5 + $0xf88] sm:$0xff]
    %v661 = vld [vmem:[#allocation5 + $0xf90] sm:$0xff]
    %v662 = vld [vmem:[#allocation5 + $0xf98] sm:$0xff]
    %v663 = vld [vmem:[#allocation5 + $0xfa0] sm:$0xff]
    %v664 = vld [vmem:[#allocation5 + $0xfa8] sm:$0xff]
    %v665 = vld [vmem:[#allocation5 + $0xfb0] sm:$0xff]
    %v666 = vld [vmem:[#allocation5 + $0xfb8] sm:$0xff]
    %v667 = vld [vmem:[#allocation5 + $0xfc0] sm:$0xff]
    %v668 = vld [vmem:[#allocation5 + $0xfc8] sm:$0xff]
    %v669 = vld [vmem:[#allocation5 + $0xfd0] sm:$0xff]
    %v670 = vld [vmem:[#allocation5 + $0xfd8] sm:$0xff]
    %v671 = vld [vmem:[#allocation5 + $0xfe0] sm:$0xff]
    %v672 = vld [vmem:[#allocation5 + $0xfe8] sm:$0xff]
    %v673 = vld [vmem:[#allocation5 + $0xff0] sm:$0xff]
    %v674 = vld [vmem:[#allocation5 + $0xff8] sm:$0xff]
    %v675 = vld [vmem:[#allocation5 + $0x1000] sm:$0xff]
    %v676 = vld [vmem:[#allocation5 + $0x1008] sm:$0xff]
    %v677 = vld [vmem:[#allocation5 + $0x1010] sm:$0xff]
    %v678 = vld [vmem:[#allocation5 + $0x1018] sm:$0xff]
    %v679 = vld [vmem:[#allocation5 + $0x1020] sm:$0xff]
    %v680 = vld [vmem:[#allocation5 + $0x1028] sm:$0xff]
    %v681 = vld [vmem:[#allocation5 + $0x1030] sm:$0xff]
    %v682 = vld [vmem:[#allocation5 + $0x1038] sm:$0xff]
    %v683 = vld [vmem:[#allocation5 + $0x1040] sm:$0xff]
    %v684 = vld [vmem:[#allocation5 + $0x1048] sm:$0xff]
    %v685 = vld [vmem:[#allocation5 + $0x1050] sm:$0xff]
    %v686 = vld [vmem:[#allocation5 + $0x1058] sm:$0xff]
    %v687 = vld [vmem:[#allocation5 + $0x1060] sm:$0xff]
    %v688 = vld [vmem:[#allocation5 + $0x1068] sm:$0xff]
    %v689 = vld [vmem:[#allocation5 + $0x1070] sm:$0xff]
    %v690 = vld [vmem:[#allocation5 + $0x1078] sm:$0xff]
    %v691 = vld [vmem:[#allocation5 + $0x1080] sm:$0xff]
    %v692 = vld [vmem:[#allocation5 + $0x1088] sm:$0xff]
    %v693 = vld [vmem:[#allocation5 + $0x1090] sm:$0xff]
    %v694 = vld [vmem:[#allocation5 + $0x1098] sm:$0xff]
    %v695 = vld [vmem:[#allocation5 + $0x10a0] sm:$0xff]
    %v696 = vld [vmem:[#allocation5 + $0x10a8] sm:$0xff]
    %v697 = vld [vmem:[#allocation5 + $0x10b0] sm:$0xff]
    %v698 = vld [vmem:[#allocation5 + $0x10b8] sm:$0xff]
    %v699 = vld [vmem:[#allocation5 + $0x10c0] sm:$0xff]
    %v700 = vld [vmem:[#allocation5 + $0x10c8] sm:$0xff]
    %v701 = vld [vmem:[#allocation5 + $0x10d0] sm:$0xff]
    %v702 = vld [vmem:[#allocation5 + $0x10d8] sm:$0xff]
    %v703 = vld [vmem:[#allocation5 + $0x10e0] sm:$0xff]
    %v704 = vld [vmem:[#allocation5 + $0x10e8] sm:$0xff]
    %v705 = vld [vmem:[#allocation5 + $0x10f0] sm:$0xff]
    %v706 = vld [vmem:[#allocation5 + $0x10f8] sm:$0xff]
    %v707 = vld [vmem:[#allocation5 + $0x1100] sm:$0xff]
    %v708 = vld [vmem:[#allocation5 + $0x1108] sm:$0xff]
    %v709 = vld [vmem:[#allocation5 + $0x1110] sm:$0xff]
    %v710 = vld [vmem:[#allocation5 + $0x1118] sm:$0xff]
    %v711 = vld [vmem:[#allocation5 + $0x1120] sm:$0xff]
    %v712 = vld [vmem:[#allocation5 + $0x1128] sm:$0xff]
    %v713 = vld [vmem:[#allocation5 + $0x1130] sm:$0xff]
    %v714 = vld [vmem:[#allocation5 + $0x1138] sm:$0xff]
    %v715 = vld [vmem:[#allocation5 + $0x1140] sm:$0xff]
    %v716 = vld [vmem:[#allocation5 + $0x1148] sm:$0xff]
    %v717 = vld [vmem:[#allocation5 + $0x1150] sm:$0xff]
    %v718 = vld [vmem:[#allocation5 + $0x1158] sm:$0xff]
    %v719 = vld [vmem:[#allocation5 + $0x1160] sm:$0xff]
    %v720 = vld [vmem:[#allocation5 + $0x1168] sm:$0xff]
    %v721 = vld [vmem:[#allocation5 + $0x1170] sm:$0xff]
    %v722 = vld [vmem:[#allocation5 + $0x1178] sm:$0xff]
    %v723 = vld [vmem:[#allocation5 + $0x1180] sm:$0xff]
    %v724 = vld [vmem:[#allocation5 + $0x1188] sm:$0xff]
    %v725 = vld [vmem:[#allocation5 + $0x1190] sm:$0xff]
    %v726 = vld [vmem:[#allocation5 + $0x1198] sm:$0xff]
    %v727 = vld [vmem:[#allocation5 + $0x11a0] sm:$0xff]
    %v728 = vld [vmem:[#allocation5 + $0x11a8] sm:$0xff]
    %v729 = vld [vmem:[#allocation5 + $0x11b0] sm:$0xff]
    %v730 = vld [vmem:[#allocation5 + $0x11b8] sm:$0xff]
    %v731 = vld [vmem:[#allocation5 + $0x11c0] sm:$0xff]
    %v732 = vld [vmem:[#allocation5 + $0x11c8] sm:$0xff]
    %v733 = vld [vmem:[#allocation5 + $0x11d0] sm:$0xff]
    %v734 = vld [vmem:[#allocation5 + $0x11d8] sm:$0xff]
    %v735 = vld [vmem:[#allocation5 + $0x11e0] sm:$0xff]
    %v736 = vld [vmem:[#allocation5 + $0x11e8] sm:$0xff]
    %v737 = vld [vmem:[#allocation5 + $0x11f0] sm:$0xff]
    %v738 = vld [vmem:[#allocation5 + $0x11f8] sm:$0xff]
    %v739 = vld [vmem:[#allocation5 + $0x1200] sm:$0xff]
    %v740 = vld [vmem:[#allocation5 + $0x1208] sm:$0xff]
    %v741 = vld [vmem:[#allocation5 + $0x1210] sm:$0xff]
    %v742 = vld [vmem:[#allocation5 + $0x1218] sm:$0xff]
    %v743 = vld [vmem:[#allocation5 + $0x1220] sm:$0xff]
    %v744 = vld [vmem:[#allocation5 + $0x1228] sm:$0xff]
    %v745 = vld [vmem:[#allocation5 + $0x1230] sm:$0xff]
    %v746 = vld [vmem:[#allocation5 + $0x1238] sm:$0xff]
    %v747 = vld [vmem:[#allocation5 + $0x1240] sm:$0xff]
    %v748 = vld [vmem:[#allocation5 + $0x1248] sm:$0xff]
    %v749 = vld [vmem:[#allocation5 + $0x1250] sm:$0xff]
    %v750 = vld [vmem:[#allocation5 + $0x1258] sm:$0xff]
    %v751 = vld [vmem:[#allocation5 + $0x1260] sm:$0xff]
    %v752 = vld [vmem:[#allocation5 + $0x1268] sm:$0xff]
    %v753 = vld [vmem:[#allocation5 + $0x1270] sm:$0xff]
    %v754 = vld [vmem:[#allocation5 + $0x1278] sm:$0xff]
    %v755 = vld [vmem:[#allocation5 + $0x1280] sm:$0xff]
    %v756 = vld [vmem:[#allocation5 + $0x1288] sm:$0xff]
    %v757 = vld [vmem:[#allocation5 + $0x1290] sm:$0xff]
    %v758 = vld [vmem:[#allocation5 + $0x1298] sm:$0xff]
    %v759 = vld [vmem:[#allocation5 + $0x12a0] sm:$0xff]
    %v760 = vld [vmem:[#allocation5 + $0x12a8] sm:$0xff]
    %v761 = vld [vmem:[#allocation5 + $0x12b0] sm:$0xff]
    %v762 = vld [vmem:[#allocation5 + $0x12b8] sm:$0xff]
    %v763 = vld [vmem:[#allocation5 + $0x12c0] sm:$0xff]
    %v764 = vld [vmem:[#allocation5 + $0x12c8] sm:$0xff]
    %v765 = vld [vmem:[#allocation5 + $0x12d0] sm:$0xff]
    %v766 = vld [vmem:[#allocation5 + $0x12d8] sm:$0xff]
    %v767 = vld [vmem:[#allocation5 + $0x12e0] sm:$0xff]
    %v768 = vld [vmem:[#allocation5 + $0x12e8] sm:$0xff]
    %v769 = vld [vmem:[#allocation5 + $0x12f0] sm:$0xff]
    %v770 = vld [vmem:[#allocation5 + $0x12f8] sm:$0xff]
    %v771 = vld [vmem:[#allocation5 + $0x1300] sm:$0xff]
    %v772 = vld [vmem:[#allocation5 + $0x1308] sm:$0xff]
    %v773 = vld [vmem:[#allocation5 + $0x1310] sm:$0xff]
    %v774 = vld [vmem:[#allocation5 + $0x1318] sm:$0xff]
    %v775 = vld [vmem:[#allocation5 + $0x1320] sm:$0xff]
    %v776 = vld [vmem:[#allocation5 + $0x1328] sm:$0xff]
    %v777 = vld [vmem:[#allocation5 + $0x1330] sm:$0xff]
    %v778 = vld [vmem:[#allocation5 + $0x1338] sm:$0xff]
    %v779 = vld [vmem:[#allocation5 + $0x1340] sm:$0xff]
    %v780 = vld [vmem:[#allocation5 + $0x1348] sm:$0xff]
    %v781 = vld [vmem:[#allocation5 + $0x1350] sm:$0xff]
    %v782 = vld [vmem:[#allocation5 + $0x1358] sm:$0xff]
    %v783 = vld [vmem:[#allocation5 + $0x1360] sm:$0xff]
    %v784 = vld [vmem:[#allocation5 + $0x1368] sm:$0xff]
    %v785 = vld [vmem:[#allocation5 + $0x1370] sm:$0xff]
    %v786 = vld [vmem:[#allocation5 + $0x1378] sm:$0xff]
    %v787 = vld [vmem:[#allocation5 + $0x1380] sm:$0xff]
    %v788 = vld [vmem:[#allocation5 + $0x1388] sm:$0xff]
    %v789 = vld [vmem:[#allocation5 + $0x1390] sm:$0xff]
    %v790 = vld [vmem:[#allocation5 + $0x1398] sm:$0xff]
    %v791 = vld [vmem:[#allocation5 + $0x13a0] sm:$0xff]
    %v792 = vld [vmem:[#allocation5 + $0x13a8] sm:$0xff]
    %v793 = vld [vmem:[#allocation5 + $0x13b0] sm:$0xff]
    %v794 = vld [vmem:[#allocation5 + $0x13b8] sm:$0xff]
    %v795 = vld [vmem:[#allocation5 + $0x13c0] sm:$0xff]
    %v796 = vld [vmem:[#allocation5 + $0x13c8] sm:$0xff]
    %v797 = vld [vmem:[#allocation5 + $0x13d0] sm:$0xff]
    %v798 = vld [vmem:[#allocation5 + $0x13d8] sm:$0xff]
    %v799 = vld [vmem:[#allocation5 + $0x13e0] sm:$0xff]
    %v800 = vld [vmem:[#allocation5 + $0x13e8] sm:$0xff]
    %v801 = vld [vmem:[#allocation5 + $0x13f0] sm:$0xff]
    %v802 = vld [vmem:[#allocation5 + $0x13f8] sm:$0xff]
    %v803 = vld [vmem:[#allocation5 + $0x1400] sm:$0xff]
    %v804 = vld [vmem:[#allocation5 + $0x1408] sm:$0xff]
    %v805 = vld [vmem:[#allocation5 + $0x1410] sm:$0xff]
    %v806 = vld [vmem:[#allocation5 + $0x1418] sm:$0xff]
    %v807 = vld [vmem:[#allocation5 + $0x1420] sm:$0xff]
    %v808 = vld [vmem:[#allocation5 + $0x1428] sm:$0xff]
    %v809 = vld [vmem:[#allocation5 + $0x1430] sm:$0xff]
    %v810 = vld [vmem:[#allocation5 + $0x1438] sm:$0xff]
    %v811 = vld [vmem:[#allocation5 + $0x1440] sm:$0xff]
    %v812 = vld [vmem:[#allocation5 + $0x1448] sm:$0xff]
    %v813 = vld [vmem:[#allocation5 + $0x1450] sm:$0xff]
    %v814 = vld [vmem:[#allocation5 + $0x1458] sm:$0xff]
    %v815 = vld [vmem:[#allocation5 + $0x1460] sm:$0xff]
    %v816 = vld [vmem:[#allocation5 + $0x1468] sm:$0xff]
    %v817 = vld [vmem:[#allocation5 + $0x1470] sm:$0xff]
    %v818 = vld [vmem:[#allocation5 + $0x1478] sm:$0xff]
    %v819 = vld [vmem:[#allocation5 + $0x1480] sm:$0xff]
    %v820 = vld [vmem:[#allocation5 + $0x1488] sm:$0xff]
    %v821 = vld [vmem:[#allocation5 + $0x1490] sm:$0xff]
    %v822 = vld [vmem:[#allocation5 + $0x1498] sm:$0xff]
    %v823 = vld [vmem:[#allocation5 + $0x14a0] sm:$0xff]
    %v824 = vld [vmem:[#allocation5 + $0x14a8] sm:$0xff]
    %v825 = vld [vmem:[#allocation5 + $0x14b0] sm:$0xff]
    %v826 = vld [vmem:[#allocation5 + $0x14b8] sm:$0xff]
    %v827 = vld [vmem:[#allocation5 + $0x14c0] sm:$0xff]
    %v828 = vld [vmem:[#allocation5 + $0x14c8] sm:$0xff]
    %v829 = vld [vmem:[#allocation5 + $0x14d0] sm:$0xff]
    %v830 = vld [vmem:[#allocation5 + $0x14d8] sm:$0xff]
    %v831 = vld [vmem:[#allocation5 + $0x14e0] sm:$0xff]
    %v832 = vld [vmem:[#allocation5 + $0x14e8] sm:$0xff]
    %v833 = vld [vmem:[#allocation5 + $0x14f0] sm:$0xff]
    %v834 = vld [vmem:[#allocation5 + $0x14f8] sm:$0xff]
    %v835 = vld [vmem:[#allocation5 + $0x1500] sm:$0xff]
    %v836 = vld [vmem:[#allocation5 + $0x1508] sm:$0xff]
    %v837 = vld [vmem:[#allocation5 + $0x1510] sm:$0xff]
    %v838 = vld [vmem:[#allocation5 + $0x1518] sm:$0xff]
    %v839 = vld [vmem:[#allocation5 + $0x1520] sm:$0xff]
    %v840 = vld [vmem:[#allocation5 + $0x1528] sm:$0xff]
    %v841 = vld [vmem:[#allocation5 + $0x1530] sm:$0xff]
    %v842 = vld [vmem:[#allocation5 + $0x1538] sm:$0xff]
    %v843 = vld [vmem:[#allocation5 + $0x1540] sm:$0xff]
    %v844 = vld [vmem:[#allocation5 + $0x1548] sm:$0xff]
    %v845 = vld [vmem:[#allocation5 + $0x1550] sm:$0xff]
    %v846 = vld [vmem:[#allocation5 + $0x1558] sm:$0xff]
    %v847 = vld [vmem:[#allocation5 + $0x1560] sm:$0xff]
    %v848 = vld [vmem:[#allocation5 + $0x1568] sm:$0xff]
    %v849 = vld [vmem:[#allocation5 + $0x1570] sm:$0xff]
    %v850 = vld [vmem:[#allocation5 + $0x1578] sm:$0xff]
    %v851 = vld [vmem:[#allocation5 + $0x1580] sm:$0xff]
    %v852 = vld [vmem:[#allocation5 + $0x1588] sm:$0xff]
    %v853 = vld [vmem:[#allocation5 + $0x1590] sm:$0xff]
    %v854 = vld [vmem:[#allocation5 + $0x1598] sm:$0xff]
    %v855 = vld [vmem:[#allocation5 + $0x15a0] sm:$0xff]
    %v856 = vld [vmem:[#allocation5 + $0x15a8] sm:$0xff]
    %v857 = vld [vmem:[#allocation5 + $0x15b0] sm:$0xff]
    %v858 = vld [vmem:[#allocation5 + $0x15b8] sm:$0xff]
    %v859 = vld [vmem:[#allocation5 + $0x15c0] sm:$0xff]
    %v860 = vld [vmem:[#allocation5 + $0x15c8] sm:$0xff]
    %v861 = vld [vmem:[#allocation5 + $0x15d0] sm:$0xff]
    %v862 = vld [vmem:[#allocation5 + $0x15d8] sm:$0xff]
    %v863 = vld [vmem:[#allocation5 + $0x15e0] sm:$0xff]
    %v864 = vld [vmem:[#allocation5 + $0x15e8] sm:$0xff]
    %v865 = vld [vmem:[#allocation5 + $0x15f0] sm:$0xff]
    %v866 = vld [vmem:[#allocation5 + $0x15f8] sm:$0xff]
    %v867 = vld [vmem:[#allocation5 + $0x1600] sm:$0xff]
    %v868 = vld [vmem:[#allocation5 + $0x1608] sm:$0xff]
    %v869 = vld [vmem:[#allocation5 + $0x1610] sm:$0xff]
    %v870 = vld [vmem:[#allocation5 + $0x1618] sm:$0xff]
    %v871 = vld [vmem:[#allocation5 + $0x1620] sm:$0xff]
    %v872 = vld [vmem:[#allocation5 + $0x1628] sm:$0xff]
    %v873 = vld [vmem:[#allocation5 + $0x1630] sm:$0xff]
    %v874 = vld [vmem:[#allocation5 + $0x1638] sm:$0xff]
    %v875 = vld [vmem:[#allocation5 + $0x1640] sm:$0xff]
    %v876 = vld [vmem:[#allocation5 + $0x1648] sm:$0xff]
    %v877 = vld [vmem:[#allocation5 + $0x1650] sm:$0xff]
    %v878 = vld [vmem:[#allocation5 + $0x1658] sm:$0xff]
    %v879 = vld [vmem:[#allocation5 + $0x1660] sm:$0xff]
    %v880 = vld [vmem:[#allocation5 + $0x1668] sm:$0xff]
    %v881 = vld [vmem:[#allocation5 + $0x1670] sm:$0xff]
    %v882 = vld [vmem:[#allocation5 + $0x1678] sm:$0xff]
    %v883 = vld [vmem:[#allocation5 + $0x1680] sm:$0xff]
    %v884 = vld [vmem:[#allocation5 + $0x1688] sm:$0xff]
    %v885 = vld [vmem:[#allocation5 + $0x1690] sm:$0xff]
    %v886 = vld [vmem:[#allocation5 + $0x1698] sm:$0xff]
    %v887 = vld [vmem:[#allocation5 + $0x16a0] sm:$0xff]
    %v888 = vld [vmem:[#allocation5 + $0x16a8] sm:$0xff]
    %v889 = vld [vmem:[#allocation5 + $0x16b0] sm:$0xff]
    %v890 = vld [vmem:[#allocation5 + $0x16b8] sm:$0xff]
    %v891 = vld [vmem:[#allocation5 + $0x16c0] sm:$0xff]
    %v892 = vld [vmem:[#allocation5 + $0x16c8] sm:$0xff]
    %v893 = vld [vmem:[#allocation5 + $0x16d0] sm:$0xff]
    %v894 = vld [vmem:[#allocation5 + $0x16d8] sm:$0xff]
    %v895 = vld [vmem:[#allocation5 + $0x16e0] sm:$0xff]
    %v896 = vld [vmem:[#allocation5 + $0x16e8] sm:$0xff]
    %v897 = vld [vmem:[#allocation5 + $0x16f0] sm:$0xff]
    %v898 = vld [vmem:[#allocation5 + $0x16f8] sm:$0xff]
    %v899 = vld [vmem:[#allocation5 + $0x1700] sm:$0xff]
    %v900 = vld [vmem:[#allocation5 + $0x1708] sm:$0xff]
    %v901 = vld [vmem:[#allocation5 + $0x1710] sm:$0xff]
    %v902 = vld [vmem:[#allocation5 + $0x1718] sm:$0xff]
    %v903 = vld [vmem:[#allocation5 + $0x1720] sm:$0xff]
    %v904 = vld [vmem:[#allocation5 + $0x1728] sm:$0xff]
    %v905 = vld [vmem:[#allocation5 + $0x1730] sm:$0xff]
    %v906 = vld [vmem:[#allocation5 + $0x1738] sm:$0xff]
    %v907 = vld [vmem:[#allocation5 + $0x1740] sm:$0xff]
    %v908 = vld [vmem:[#allocation5 + $0x1748] sm:$0xff]
    %v909 = vld [vmem:[#allocation5 + $0x1750] sm:$0xff]
    %v910 = vld [vmem:[#allocation5 + $0x1758] sm:$0xff]
    %v911 = vld [vmem:[#allocation5 + $0x1760] sm:$0xff]
    %v912 = vld [vmem:[#allocation5 + $0x1768] sm:$0xff]
    %v913 = vld [vmem:[#allocation5 + $0x1770] sm:$0xff]
    %v914 = vld [vmem:[#allocation5 + $0x1778] sm:$0xff]
    %v915 = vld [vmem:[#allocation5 + $0x1780] sm:$0xff]
    %v916 = vld [vmem:[#allocation5 + $0x1788] sm:$0xff]
    %v917 = vld [vmem:[#allocation5 + $0x1790] sm:$0xff]
    %v918 = vld [vmem:[#allocation5 + $0x1798] sm:$0xff]
    %v919 = vld [vmem:[#allocation5 + $0x17a0] sm:$0xff]
    %v920 = vld [vmem:[#allocation5 + $0x17a8] sm:$0xff]
    %v921 = vld [vmem:[#allocation5 + $0x17b0] sm:$0xff]
    %v922 = vld [vmem:[#allocation5 + $0x17b8] sm:$0xff]
    %v923 = vld [vmem:[#allocation5 + $0x17c0] sm:$0xff]
    %v924 = vld [vmem:[#allocation5 + $0x17c8] sm:$0xff]
    %v925 = vld [vmem:[#allocation5 + $0x17d0] sm:$0xff]
    %v926 = vld [vmem:[#allocation5 + $0x17d8] sm:$0xff]
    %v927 = vld [vmem:[#allocation5 + $0x17e0] sm:$0xff]
    %v928 = vld [vmem:[#allocation5 + $0x17e8] sm:$0xff]
    %v929 = vld [vmem:[#allocation5 + $0x17f0] sm:$0xff]
    %v930 = vld [vmem:[#allocation5 + $0x17f8] sm:$0xff]
    %v931 = vld [vmem:[#allocation5 + $0x1800] sm:$0xff]
    %v932 = vld [vmem:[#allocation5 + $0x1808] sm:$0xff]
    %v933 = vld [vmem:[#allocation5 + $0x1810] sm:$0xff]
    %v934 = vld [vmem:[#allocation5 + $0x1818] sm:$0xff]
    %v935 = vld [vmem:[#allocation5 + $0x1820] sm:$0xff]
    %v936 = vld [vmem:[#allocation5 + $0x1828] sm:$0xff]
    %v937 = vld [vmem:[#allocation5 + $0x1830] sm:$0xff]
    %v938 = vld [vmem:[#allocation5 + $0x1838] sm:$0xff]
    %v939 = vld [vmem:[#allocation5 + $0x1840] sm:$0xff]
    %v940 = vld [vmem:[#allocation5 + $0x1848] sm:$0xff]
    %v941 = vld [vmem:[#allocation5 + $0x1850] sm:$0xff]
    %v942 = vld [vmem:[#allocation5 + $0x1858] sm:$0xff]
    %v943 = vld [vmem:[#allocation5 + $0x1860] sm:$0xff]
    %v944 = vld [vmem:[#allocation5 + $0x1868] sm:$0xff]
    %v945 = vld [vmem:[#allocation5 + $0x1870] sm:$0xff]
    %v946 = vld [vmem:[#allocation5 + $0x1878] sm:$0xff]
    %v947 = vld [vmem:[#allocation5 + $0x1880] sm:$0xff]
    %v948 = vld [vmem:[#allocation5 + $0x1888] sm:$0xff]
    %v949 = vld [vmem:[#allocation5 + $0x1890] sm:$0xff]
    %v950 = vld [vmem:[#allocation5 + $0x1898] sm:$0xff]
    %v951 = vld [vmem:[#allocation5 + $0x18a0] sm:$0xff]
    %v952 = vld [vmem:[#allocation5 + $0x18a8] sm:$0xff]
    %v953 = vld [vmem:[#allocation5 + $0x18b0] sm:$0xff]
    %v954 = vld [vmem:[#allocation5 + $0x18b8] sm:$0xff]
    %v955 = vld [vmem:[#allocation5 + $0x18c0] sm:$0xff]
    %v956 = vld [vmem:[#allocation5 + $0x18c8] sm:$0xff]
    %v957 = vld [vmem:[#allocation5 + $0x18d0] sm:$0xff]
    %v958 = vld [vmem:[#allocation5 + $0x18d8] sm:$0xff]
    %v959 = vld [vmem:[#allocation5 + $0x18e0] sm:$0xff]
    %v960 = vld [vmem:[#allocation5 + $0x18e8] sm:$0xff]
    %v961 = vld [vmem:[#allocation5 + $0x18f0] sm:$0xff]
    %v962 = vld [vmem:[#allocation5 + $0x18f8] sm:$0xff]
    %v963 = vld [vmem:[#allocation5 + $0x1900] sm:$0xff]
    %v964 = vld [vmem:[#allocation5 + $0x1908] sm:$0xff]
    %v965 = vld [vmem:[#allocation5 + $0x1910] sm:$0xff]
    %v966 = vld [vmem:[#allocation5 + $0x1918] sm:$0xff]
    %v967 = vld [vmem:[#allocation5 + $0x1920] sm:$0xff]
    %v968 = vld [vmem:[#allocation5 + $0x1928] sm:$0xff]
    %v969 = vld [vmem:[#allocation5 + $0x1930] sm:$0xff]
    %v970 = vld [vmem:[#allocation5 + $0x1938] sm:$0xff]
    %v971 = vld [vmem:[#allocation5 + $0x1940] sm:$0xff]
    %v972 = vld [vmem:[#allocation5 + $0x1948] sm:$0xff]
    %v973 = vld [vmem:[#allocation5 + $0x1950] sm:$0xff]
    %v974 = vld [vmem:[#allocation5 + $0x1958] sm:$0xff]
    %v975 = vld [vmem:[#allocation5 + $0x1960] sm:$0xff]
    %v976 = vld [vmem:[#allocation5 + $0x1968] sm:$0xff]
    %v977 = vld [vmem:[#allocation5 + $0x1970] sm:$0xff]
    %v978 = vld [vmem:[#allocation5 + $0x1978] sm:$0xff]
    %v979 = vld [vmem:[#allocation5 + $0x1980] sm:$0xff]
    %v980 = vld [vmem:[#allocation5 + $0x1988] sm:$0xff]
    %v981 = vld [vmem:[#allocation5 + $0x1990] sm:$0xff]
    %v982 = vld [vmem:[#allocation5 + $0x1998] sm:$0xff]
    %v983 = vld [vmem:[#allocation5 + $0x19a0] sm:$0xff]
    %v984 = vld [vmem:[#allocation5 + $0x19a8] sm:$0xff]
    %v985 = vld [vmem:[#allocation5 + $0x19b0] sm:$0xff]
    %v986 = vld [vmem:[#allocation5 + $0x19b8] sm:$0xff]
    %v987 = vld [vmem:[#allocation5 + $0x19c0] sm:$0xff]
    %v988 = vld [vmem:[#allocation5 + $0x19c8] sm:$0xff]
    %v989 = vld [vmem:[#allocation5 + $0x19d0] sm:$0xff]
    %v990 = vld [vmem:[#allocation5 + $0x19d8] sm:$0xff]
    %v991 = vld [vmem:[#allocation5 + $0x19e0] sm:$0xff]
    %v992 = vld [vmem:[#allocation5 + $0x19e8] sm:$0xff]
    %v993 = vld [vmem:[#allocation5 + $0x19f0] sm:$0xff]
    %v994 = vld [vmem:[#allocation5 + $0x19f8] sm:$0xff]
    %v995 = vld [vmem:[#allocation5 + $0x1a00] sm:$0xff]
    %v996 = vld [vmem:[#allocation5 + $0x1a08] sm:$0xff]
    %v997 = vld [vmem:[#allocation5 + $0x1a10] sm:$0xff]
    %v998 = vld [vmem:[#allocation5 + $0x1a18] sm:$0xff]
    %v999 = vld [vmem:[#allocation5 + $0x1a20] sm:$0xff]
    %v1000 = vld [vmem:[#allocation5 + $0x1a28] sm:$0xff]
    %v1001 = vld [vmem:[#allocation5 + $0x1a30] sm:$0xff]
    %v1002 = vld [vmem:[#allocation5 + $0x1a38] sm:$0xff]
    %v1003 = vld [vmem:[#allocation5 + $0x1a40] sm:$0xff]
    %v1004 = vld [vmem:[#allocation5 + $0x1a48] sm:$0xff]
    %v1005 = vld [vmem:[#allocation5 + $0x1a50] sm:$0xff]
    %v1006 = vld [vmem:[#allocation5 + $0x1a58] sm:$0xff]
    %v1007 = vld [vmem:[#allocation5 + $0x1a60] sm:$0xff]
    %v1008 = vld [vmem:[#allocation5 + $0x1a68] sm:$0xff]
    %v1009 = vld [vmem:[#allocation5 + $0x1a70] sm:$0xff]
    %v1010 = vld [vmem:[#allocation5 + $0x1a78] sm:$0xff]
    %v1011 = vld [vmem:[#allocation5 + $0x1a80] sm:$0xff]
    %v1012 = vld [vmem:[#allocation5 + $0x1a88] sm:$0xff]
    %v1013 = vld [vmem:[#allocation5 + $0x1a90] sm:$0xff]
    %v1014 = vld [vmem:[#allocation5 + $0x1a98] sm:$0xff]
    %v1015 = vld [vmem:[#allocation5 + $0x1aa0] sm:$0xff]
    %v1016 = vld [vmem:[#allocation5 + $0x1aa8] sm:$0xff]
    %v1017 = vld [vmem:[#allocation5 + $0x1ab0] sm:$0xff]
    %v1018 = vld [vmem:[#allocation5 + $0x1ab8] sm:$0xff]
    %v1019 = vld [vmem:[#allocation5 + $0x1ac0] sm:$0xff]
    %v1020 = vld [vmem:[#allocation5 + $0x1ac8] sm:$0xff]
    %v1021 = vld [vmem:[#allocation5 + $0x1ad0] sm:$0xff]
    %v1022 = vld [vmem:[#allocation5 + $0x1ad8] sm:$0xff]
    %v1023 = vld [vmem:[#allocation5 + $0x1ae0] sm:$0xff]
    %v1024 = vld [vmem:[#allocation5 + $0x1ae8] sm:$0xff]
    %v1025 = vld [vmem:[#allocation5 + $0x1af0] sm:$0xff]
    %v1026 = vld [vmem:[#allocation5 + $0x1af8] sm:$0xff]
    %v1027 = vld [vmem:[#allocation5 + $0x1b00] sm:$0xff]
    %v1028 = vld [vmem:[#allocation5 + $0x1b08] sm:$0xff]
    %v1029 = vld [vmem:[#allocation5 + $0x1b10] sm:$0xff]
    %v1030 = vld [vmem:[#allocation5 + $0x1b18] sm:$0xff]
    %v1031 = vld [vmem:[#allocation5 + $0x1b20] sm:$0xff]
    %v1032 = vld [vmem:[#allocation5 + $0x1b28] sm:$0xff]
    %v1033 = vld [vmem:[#allocation5 + $0x1b30] sm:$0xff]
    %v1034 = vld [vmem:[#allocation5 + $0x1b38] sm:$0xff]
    %v1035 = vld [vmem:[#allocation5 + $0x1b40] sm:$0xff]
    %v1036 = vld [vmem:[#allocation5 + $0x1b48] sm:$0xff]
    %v1037 = vld [vmem:[#allocation5 + $0x1b50] sm:$0xff]
    %v1038 = vld [vmem:[#allocation5 + $0x1b58] sm:$0xff]
    %v1039 = vld [vmem:[#allocation5 + $0x1b60] sm:$0xff]
    %v1040 = vld [vmem:[#allocation5 + $0x1b68] sm:$0xff]
    %v1041 = vld [vmem:[#allocation5 + $0x1b70] sm:$0xff]
    %v1042 = vld [vmem:[#allocation5 + $0x1b78] sm:$0xff]
    %v1043 = vld [vmem:[#allocation5 + $0x1b80] sm:$0xff]
    %v1044 = vld [vmem:[#allocation5 + $0x1b88] sm:$0xff]
    %v1045 = vld [vmem:[#allocation5 + $0x1b90] sm:$0xff]
    %v1046 = vld [vmem:[#allocation5 + $0x1b98] sm:$0xff]
    %v1047 = vld [vmem:[#allocation5 + $0x1ba0] sm:$0xff]
    %v1048 = vld [vmem:[#allocation5 + $0x1ba8] sm:$0xff]
    %v1049 = vld [vmem:[#allocation5 + $0x1bb0] sm:$0xff]
    %v1050 = vld [vmem:[#allocation5 + $0x1bb8] sm:$0xff]
    %v1051 = vld [vmem:[#allocation5 + $0x1bc0] sm:$0xff]
    %v1052 = vld [vmem:[#allocation5 + $0x1bc8] sm:$0xff]
    %v1053 = vld [vmem:[#allocation5 + $0x1bd0] sm:$0xff]
    %v1054 = vld [vmem:[#allocation5 + $0x1bd8] sm:$0xff]
    %v1055 = vld [vmem:[#allocation5 + $0x1be0] sm:$0xff]
    %v1056 = vld [vmem:[#allocation5 + $0x1be8] sm:$0xff]
    %v1057 = vld [vmem:[#allocation5 + $0x1bf0] sm:$0xff]
    %v1058 = vld [vmem:[#allocation5 + $0x1bf8] sm:$0xff]
    %v1059 = vld [vmem:[#allocation5 + $0x1c00] sm:$0xff]
    %v1060 = vld [vmem:[#allocation5 + $0x1c08] sm:$0xff]
    %v1061 = vld [vmem:[#allocation5 + $0x1c10] sm:$0xff]
    %v1062 = vld [vmem:[#allocation5 + $0x1c18] sm:$0xff]
    %v1063 = vld [vmem:[#allocation5 + $0x1c20] sm:$0xff]
    %v1064 = vld [vmem:[#allocation5 + $0x1c28] sm:$0xff]
    %v1065 = vld [vmem:[#allocation5 + $0x1c30] sm:$0xff]
    %v1066 = vld [vmem:[#allocation5 + $0x1c38] sm:$0xff]
    %v1067 = vld [vmem:[#allocation5 + $0x1c40] sm:$0xff]
    %v1068 = vld [vmem:[#allocation5 + $0x1c48] sm:$0xff]
    %v1069 = vld [vmem:[#allocation5 + $0x1c50] sm:$0xff]
    %v1070 = vld [vmem:[#allocation5 + $0x1c58] sm:$0xff]
    %v1071 = vld [vmem:[#allocation5 + $0x1c60] sm:$0xff]
    %v1072 = vld [vmem:[#allocation5 + $0x1c68] sm:$0xff]
    %v1073 = vld [vmem:[#allocation5 + $0x1c70] sm:$0xff]
    %v1074 = vld [vmem:[#allocation5 + $0x1c78] sm:$0xff]
    %v1075 = vld [vmem:[#allocation5 + $0x1c80] sm:$0xff]
    %v1076 = vld [vmem:[#allocation5 + $0x1c88] sm:$0xff]
    %v1077 = vld [vmem:[#allocation5 + $0x1c90] sm:$0xff]
    %v1078 = vld [vmem:[#allocation5 + $0x1c98] sm:$0xff]
    %v1079 = vld [vmem:[#allocation5 + $0x1ca0] sm:$0xff]
    %v1080 = vld [vmem:[#allocation5 + $0x1ca8] sm:$0xff]
    %v1081 = vld [vmem:[#allocation5 + $0x1cb0] sm:$0xff]
    %v1082 = vld [vmem:[#allocation5 + $0x1cb8] sm:$0xff]
    %v1083 = vld [vmem:[#allocation5 + $0x1cc0] sm:$0xff]
    %v1084 = vld [vmem:[#allocation5 + $0x1cc8] sm:$0xff]
    %v1085 = vld [vmem:[#allocation5 + $0x1cd0] sm:$0xff]
    %v1086 = vld [vmem:[#allocation5 + $0x1cd8] sm:$0xff]
    %v1087 = vld [vmem:[#allocation5 + $0x1ce0] sm:$0xff]
    %v1088 = vld [vmem:[#allocation5 + $0x1ce8] sm:$0xff]
    %v1089 = vld [vmem:[#allocation5 + $0x1cf0] sm:$0xff]
    %v1090 = vld [vmem:[#allocation5 + $0x1cf8] sm:$0xff]
    %v1091 = vld [vmem:[#allocation5 + $0x1d00] sm:$0xff]
    %v1092 = vld [vmem:[#allocation5 + $0x1d08] sm:$0xff]
    %v1093 = vld [vmem:[#allocation5 + $0x1d10] sm:$0xff]
    %v1094 = vld [vmem:[#allocation5 + $0x1d18] sm:$0xff]
    %v1095 = vld [vmem:[#allocation5 + $0x1d20] sm:$0xff]
    %v1096 = vld [vmem:[#allocation5 + $0x1d28] sm:$0xff]
    %v1097 = vld [vmem:[#allocation5 + $0x1d30] sm:$0xff]
    %v1098 = vld [vmem:[#allocation5 + $0x1d38] sm:$0xff]
    %v1099 = vld [vmem:[#allocation5 + $0x1d40] sm:$0xff]
    %v1100 = vld [vmem:[#allocation5 + $0x1d48] sm:$0xff]
    %v1101 = vld [vmem:[#allocation5 + $0x1d50] sm:$0xff]
    %v1102 = vld [vmem:[#allocation5 + $0x1d58] sm:$0xff]
    %v1103 = vld [vmem:[#allocation5 + $0x1d60] sm:$0xff]
    %v1104 = vld [vmem:[#allocation5 + $0x1d68] sm:$0xff]
    %v1105 = vld [vmem:[#allocation5 + $0x1d70] sm:$0xff]
    %v1106 = vld [vmem:[#allocation5 + $0x1d78] sm:$0xff]
    %v1107 = vld [vmem:[#allocation5 + $0x1d80] sm:$0xff]
    %v1108 = vld [vmem:[#allocation5 + $0x1d88] sm:$0xff]
    %v1109 = vld [vmem:[#allocation5 + $0x1d90] sm:$0xff]
    %v1110 = vld [vmem:[#allocation5 + $0x1d98] sm:$0xff]
    %v1111 = vld [vmem:[#allocation5 + $0x1da0] sm:$0xff]
    %v1112 = vld [vmem:[#allocation5 + $0x1da8] sm:$0xff]
    %v1113 = vld [vmem:[#allocation5 + $0x1db0] sm:$0xff]
    %v1114 = vld [vmem:[#allocation5 + $0x1db8] sm:$0xff]
    %v1115 = vld [vmem:[#allocation5 + $0x1dc0] sm:$0xff]
    %v1116 = vld [vmem:[#allocation5 + $0x1dc8] sm:$0xff]
    %v1117 = vld [vmem:[#allocation5 + $0x1dd0] sm:$0xff]
    %v1118 = vld [vmem:[#allocation5 + $0x1dd8] sm:$0xff]
    %v1119 = vld [vmem:[#allocation5 + $0x1de0] sm:$0xff]
    %v1120 = vld [vmem:[#allocation5 + $0x1de8] sm:$0xff]
    %v1121 = vld [vmem:[#allocation5 + $0x1df0] sm:$0xff]
    %v1122 = vld [vmem:[#allocation5 + $0x1df8] sm:$0xff]
    %v1123 = vld [vmem:[#allocation5 + $0x1e00] sm:$0xff]
    %v1124 = vld [vmem:[#allocation5 + $0x1e08] sm:$0xff]
    %v1125 = vld [vmem:[#allocation5 + $0x1e10] sm:$0xff]
    %v1126 = vld [vmem:[#allocation5 + $0x1e18] sm:$0xff]
    %v1127 = vld [vmem:[#allocation5 + $0x1e20] sm:$0xff]
    %v1128 = vld [vmem:[#allocation5 + $0x1e28] sm:$0xff]
    %v1129 = vld [vmem:[#allocation5 + $0x1e30] sm:$0xff]
    %v1130 = vld [vmem:[#allocation5 + $0x1e38] sm:$0xff]
    %v1131 = vld [vmem:[#allocation5 + $0x1e40] sm:$0xff]
    %v1132 = vld [vmem:[#allocation5 + $0x1e48] sm:$0xff]
    %v1133 = vld [vmem:[#allocation5 + $0x1e50] sm:$0xff]
    %v1134 = vld [vmem:[#allocation5 + $0x1e58] sm:$0xff]
    %v1135 = vld [vmem:[#allocation5 + $0x1e60] sm:$0xff]
    %v1136 = vld [vmem:[#allocation5 + $0x1e68] sm:$0xff]
    %v1137 = vld [vmem:[#allocation5 + $0x1e70] sm:$0xff]
    %v1138 = vld [vmem:[#allocation5 + $0x1e78] sm:$0xff]
    %v1139 = vld [vmem:[#allocation5 + $0x1e80] sm:$0xff]
    %v1140 = vld [vmem:[#allocation5 + $0x1e88] sm:$0xff]
    %v1141 = vld [vmem:[#allocation5 + $0x1e90] sm:$0xff]
    %v1142 = vld [vmem:[#allocation5 + $0x1e98] sm:$0xff]
    %v1143 = vld [vmem:[#allocation5 + $0x1ea0] sm:$0xff]
    %v1144 = vld [vmem:[#allocation5 + $0x1ea8] sm:$0xff]
    %v1145 = vld [vmem:[#allocation5 + $0x1eb0] sm:$0xff]
    %v1146 = vld [vmem:[#allocation5 + $0x1eb8] sm:$0xff]
    %v1147 = vld [vmem:[#allocation5 + $0x1ec0] sm:$0xff]
    %v1148 = vld [vmem:[#allocation5 + $0x1ec8] sm:$0xff]
    %v1149 = vld [vmem:[#allocation5 + $0x1ed0] sm:$0xff]
    %v1150 = vld [vmem:[#allocation5 + $0x1ed8] sm:$0xff]
    %v1151 = vld [vmem:[#allocation5 + $0x1ee0] sm:$0xff]
    %v1152 = vld [vmem:[#allocation5 + $0x1ee8] sm:$0xff]
    %v1153 = vld [vmem:[#allocation5 + $0x1ef0] sm:$0xff]
    %v1154 = vld [vmem:[#allocation5 + $0x1ef8] sm:$0xff]
    %v1155 = vld [vmem:[#allocation5 + $0x1f00] sm:$0xff]
    %v1156 = vld [vmem:[#allocation5 + $0x1f08] sm:$0xff]
    %v1157 = vld [vmem:[#allocation5 + $0x1f10] sm:$0xff]
    %v1158 = vld [vmem:[#allocation5 + $0x1f18] sm:$0xff]
    %v1159 = vld [vmem:[#allocation5 + $0x1f20] sm:$0xff]
    %v1160 = vld [vmem:[#allocation5 + $0x1f28] sm:$0xff]
    %v1161 = vld [vmem:[#allocation5 + $0x1f30] sm:$0xff]
    %v1162 = vld [vmem:[#allocation5 + $0x1f38] sm:$0xff]
    %v1163 = vld [vmem:[#allocation5 + $0x1f40] sm:$0xff]
    %v1164 = vld [vmem:[#allocation5 + $0x1f48] sm:$0xff]
    %v1165 = vld [vmem:[#allocation5 + $0x1f50] sm:$0xff]
    %v1166 = vld [vmem:[#allocation5 + $0x1f58] sm:$0xff]
    %v1167 = vld [vmem:[#allocation5 + $0x1f60] sm:$0xff]
    %v1168 = vld [vmem:[#allocation5 + $0x1f68] sm:$0xff]
    %v1169 = vld [vmem:[#allocation5 + $0x1f70] sm:$0xff]
    %v1170 = vld [vmem:[#allocation5 + $0x1f78] sm:$0xff]
    %v1171 = vld [vmem:[#allocation5 + $0x1f80] sm:$0xff]
    %v1172 = vld [vmem:[#allocation5 + $0x1f88] sm:$0xff]
    %v1173 = vld [vmem:[#allocation5 + $0x1f90] sm:$0xff]
    %v1174 = vld [vmem:[#allocation5 + $0x1f98] sm:$0xff]
    %v1175 = vld [vmem:[#allocation5 + $0x1fa0] sm:$0xff]
    %v1176 = vld [vmem:[#allocation5 + $0x1fa8] sm:$0xff]
    %v1177 = vld [vmem:[#allocation5 + $0x1fb0] sm:$0xff]
    %v1178 = vld [vmem:[#allocation5 + $0x1fb8] sm:$0xff]
    %v1179 = vld [vmem:[#allocation5 + $0x1fc0] sm:$0xff]
    %v1180 = vld [vmem:[#allocation5 + $0x1fc8] sm:$0xff]
    %v1181 = vld [vmem:[#allocation5 + $0x1fd0] sm:$0xff]
    %v1182 = vld [vmem:[#allocation5 + $0x1fd8] sm:$0xff]
    %v1183 = vld [vmem:[#allocation5 + $0x1fe0] sm:$0xff]
    %v1184 = vld [vmem:[#allocation5 + $0x1fe8] sm:$0xff]
    %v1185 = vld [vmem:[#allocation5 + $0x1ff0] sm:$0xff]
    %v1186 = vld [vmem:[#allocation5 + $0x1ff8] sm:$0xff]
    %v1187 = vld [vmem:[#allocation5 + $0x2000] sm:$0xff]
    %v1188 = vld [vmem:[#allocation5 + $0x2008] sm:$0xff]
    %v1189 = vld [vmem:[#allocation5 + $0x2010] sm:$0xff]
    %v1190 = vld [vmem:[#allocation5 + $0x2018] sm:$0xff]
    %v1191 = vld [vmem:[#allocation5 + $0x2020] sm:$0xff]
    %v1192 = vld [vmem:[#allocation5 + $0x2028] sm:$0xff]
    %v1193 = vld [vmem:[#allocation5 + $0x2030] sm:$0xff]
    %v1194 = vld [vmem:[#allocation5 + $0x2038] sm:$0xff]
    %v1195 = vld [vmem:[#allocation5 + $0x2040] sm:$0xff]
    %v1196 = vld [vmem:[#allocation5 + $0x2048] sm:$0xff]
    %v1197 = vld [vmem:[#allocation5 + $0x2050] sm:$0xff]
    %v1198 = vld [vmem:[#allocation5 + $0x2058] sm:$0xff]
    %v1199 = vld [vmem:[#allocation5 + $0x2060] sm:$0xff]
    %v1200 = vld [vmem:[#allocation5 + $0x2068] sm:$0xff]
    %v1201 = vld [vmem:[#allocation5 + $0x2070] sm:$0xff]
    %v1202 = vld [vmem:[#allocation5 + $0x2078] sm:$0xff]
    %v1203 = vld [vmem:[#allocation5 + $0x2080] sm:$0xff]
    %v1204 = vld [vmem:[#allocation5 + $0x2088] sm:$0xff]
    %v1205 = vld [vmem:[#allocation5 + $0x2090] sm:$0xff]
    %v1206 = vld [vmem:[#allocation5 + $0x2098] sm:$0xff]
    %v1207 = vld [vmem:[#allocation5 + $0x20a0] sm:$0xff]
    %v1208 = vld [vmem:[#allocation5 + $0x20a8] sm:$0xff]
    %v1209 = vld [vmem:[#allocation5 + $0x20b0] sm:$0xff]
    %v1210 = vld [vmem:[#allocation5 + $0x20b8] sm:$0xff]
    %v1211 = vld [vmem:[#allocation5 + $0x20c0] sm:$0xff]
    %v1212 = vld [vmem:[#allocation5 + $0x20c8] sm:$0xff]
    %v1213 = vld [vmem:[#allocation5 + $0x20d0] sm:$0xff]
    %v1214 = vld [vmem:[#allocation5 + $0x20d8] sm:$0xff]
    %v1215 = vld [vmem:[#allocation5 + $0x20e0] sm:$0xff]
    %v1216 = vld [vmem:[#allocation5 + $0x20e8] sm:$0xff]
    %v1217 = vld [vmem:[#allocation5 + $0x20f0] sm:$0xff]
    %v1218 = vld [vmem:[#allocation5 + $0x20f8] sm:$0xff]
    %v1219 = vld [vmem:[#allocation5 + $0x2100] sm:$0xff]
    %v1220 = vld [vmem:[#allocation5 + $0x2108] sm:$0xff]
    %v1221 = vld [vmem:[#allocation5 + $0x2110] sm:$0xff]
    %v1222 = vld [vmem:[#allocation5 + $0x2118] sm:$0xff]
    %v1223 = vld [vmem:[#allocation5 + $0x2120] sm:$0xff]
    %v1224 = vld [vmem:[#allocation5 + $0x2128] sm:$0xff]
    %v1225 = vld [vmem:[#allocation5 + $0x2130] sm:$0xff]
    %v1226 = vld [vmem:[#allocation5 + $0x2138] sm:$0xff]
    %v1227 = vld [vmem:[#allocation5 + $0x2140] sm:$0xff]
    %v1228 = vld [vmem:[#allocation5 + $0x2148] sm:$0xff]
    %v1229 = vld [vmem:[#allocation5 + $0x2150] sm:$0xff]
    %v1230 = vld [vmem:[#allocation5 + $0x2158] sm:$0xff]
    %v1231 = vld [vmem:[#allocation5 + $0x2160] sm:$0xff]
    %v1232 = vld [vmem:[#allocation5 + $0x2168] sm:$0xff]
    %v1233 = vld [vmem:[#allocation5 + $0x2170] sm:$0xff]
    %v1234 = vld [vmem:[#allocation5 + $0x2178] sm:$0xff]
    %v1235 = vld [vmem:[#allocation5 + $0x2180] sm:$0xff]
    %v1236 = vld [vmem:[#allocation5 + $0x2188] sm:$0xff]
    %v1237 = vld [vmem:[#allocation5 + $0x2190] sm:$0xff]
    %v1238 = vld [vmem:[#allocation5 + $0x2198] sm:$0xff]
    %v1239 = vld [vmem:[#allocation5 + $0x21a0] sm:$0xff]
    %v1240 = vld [vmem:[#allocation5 + $0x21a8] sm:$0xff]
    %v1241 = vld [vmem:[#allocation5 + $0x21b0] sm:$0xff]
    %v1242 = vld [vmem:[#allocation5 + $0x21b8] sm:$0xff]
    %v1243 = vld [vmem:[#allocation5 + $0x21c0] sm:$0xff]
    %v1244 = vld [vmem:[#allocation5 + $0x21c8] sm:$0xff]
    %v1245 = vld [vmem:[#allocation5 + $0x21d0] sm:$0xff]
    %v1246 = vld [vmem:[#allocation5 + $0x21d8] sm:$0xff]
    %v1247 = vld [vmem:[#allocation5 + $0x21e0] sm:$0xff]
    %v1248 = vld [vmem:[#allocation5 + $0x21e8] sm:$0xff]
    %v1249 = vld [vmem:[#allocation5 + $0x21f0] sm:$0xff]
    %v1250 = vld [vmem:[#allocation5 + $0x21f8] sm:$0xff]
    %v1251 = vld [vmem:[#allocation5 + $0x2200] sm:$0xff]
    %v1252 = vld [vmem:[#allocation5 + $0x2208] sm:$0xff]
    %v1253 = vld [vmem:[#allocation5 + $0x2210] sm:$0xff]
    %v1254 = vld [vmem:[#allocation5 + $0x2218] sm:$0xff]
    %v1255 = vld [vmem:[#allocation5 + $0x2220] sm:$0xff]
    %v1256 = vld [vmem:[#allocation5 + $0x2228] sm:$0xff]
    %v1257 = vld [vmem:[#allocation5 + $0x2230] sm:$0xff]
    %v1258 = vld [vmem:[#allocation5 + $0x2238] sm:$0xff]
    %v1259 = vld [vmem:[#allocation5 + $0x2240] sm:$0xff]
    %v1260 = vld [vmem:[#allocation5 + $0x2248] sm:$0xff]
    %v1261 = vld [vmem:[#allocation5 + $0x2250] sm:$0xff]
    %v1262 = vld [vmem:[#allocation5 + $0x2258] sm:$0xff]
    %v1263 = vld [vmem:[#allocation5 + $0x2260] sm:$0xff]
    %v1264 = vld [vmem:[#allocation5 + $0x2268] sm:$0xff]
    %v1265 = vld [vmem:[#allocation5 + $0x2270] sm:$0xff]
    %v1266 = vld [vmem:[#allocation5 + $0x2278] sm:$0xff]
    %v1267 = vld [vmem:[#allocation5 + $0x2280] sm:$0xff]
    %v1268 = vld [vmem:[#allocation5 + $0x2288] sm:$0xff]
    %v1269 = vld [vmem:[#allocation5 + $0x2290] sm:$0xff]
    %v1270 = vld [vmem:[#allocation5 + $0x2298] sm:$0xff]
    %v1271 = vld [vmem:[#allocation5 + $0x22a0] sm:$0xff]
    %v1272 = vld [vmem:[#allocation5 + $0x22a8] sm:$0xff]
    %v1273 = vld [vmem:[#allocation5 + $0x22b0] sm:$0xff]
    %v1274 = vld [vmem:[#allocation5 + $0x22b8] sm:$0xff]
    %v1275 = vld [vmem:[#allocation5 + $0x22c0] sm:$0xff]
    %v1276 = vld [vmem:[#allocation5 + $0x22c8] sm:$0xff]
    %v1277 = vld [vmem:[#allocation5 + $0x22d0] sm:$0xff]
    %v1278 = vld [vmem:[#allocation5 + $0x22d8] sm:$0xff]
    %v1279 = vld [vmem:[#allocation5 + $0x22e0] sm:$0xff]
    %v1280 = vld [vmem:[#allocation5 + $0x22e8] sm:$0xff]
    %v1281 = vld [vmem:[#allocation5 + $0x22f0] sm:$0xff]
    %v1282 = vld [vmem:[#allocation5 + $0x22f8] sm:$0xff]
    %v1283 = vld [vmem:[#allocation5 + $0x2300] sm:$0xff]
    %v1284 = vld [vmem:[#allocation5 + $0x2308] sm:$0xff]
    %v1285 = vld [vmem:[#allocation5 + $0x2310] sm:$0xff]
    %v1286 = vld [vmem:[#allocation5 + $0x2318] sm:$0xff]
    %v1287 = vld [vmem:[#allocation5 + $0x2320] sm:$0xff]
    %v1288 = vld [vmem:[#allocation5 + $0x2328] sm:$0xff]
    %v1289 = vld [vmem:[#allocation5 + $0x2330] sm:$0xff]
    %v1290 = vld [vmem:[#allocation5 + $0x2338] sm:$0xff]
    %v1291 = vld [vmem:[#allocation5 + $0x2340] sm:$0xff]
    %v1292 = vld [vmem:[#allocation5 + $0x2348] sm:$0xff]
    %v1293 = vld [vmem:[#allocation5 + $0x2350] sm:$0xff]
    %v1294 = vld [vmem:[#allocation5 + $0x2358] sm:$0xff]
    %v1295 = vld [vmem:[#allocation5 + $0x2360] sm:$0xff]
    %v1296 = vld [vmem:[#allocation5 + $0x2368] sm:$0xff]
    %v1297 = vld [vmem:[#allocation5 + $0x2370] sm:$0xff]
    %v1298 = vld [vmem:[#allocation5 + $0x2378] sm:$0xff]
    %v1299 = vld [vmem:[#allocation5 + $0x2380] sm:$0xff]
    %v1300 = vld [vmem:[#allocation5 + $0x2388] sm:$0xff]
    %v1301 = vld [vmem:[#allocation5 + $0x2390] sm:$0xff]
    %v1302 = vld [vmem:[#allocation5 + $0x2398] sm:$0xff]
    %v1303 = vld [vmem:[#allocation5 + $0x23a0] sm:$0xff]
    %v1304 = vld [vmem:[#allocation5 + $0x23a8] sm:$0xff]
    %v1305 = vld [vmem:[#allocation5 + $0x23b0] sm:$0xff]
    %v1306 = vld [vmem:[#allocation5 + $0x23b8] sm:$0xff]
    %v1307 = vld [vmem:[#allocation5 + $0x23c0] sm:$0xff]
    %v1308 = vld [vmem:[#allocation5 + $0x23c8] sm:$0xff]
    %v1309 = vld [vmem:[#allocation5 + $0x23d0] sm:$0xff]
    %v1310 = vld [vmem:[#allocation5 + $0x23d8] sm:$0xff]
    %v1311 = vld [vmem:[#allocation5 + $0x23e0] sm:$0xff]
    %v1312 = vld [vmem:[#allocation5 + $0x23e8] sm:$0xff]
    %v1313 = vld [vmem:[#allocation5 + $0x23f0] sm:$0xff]
    %v1314 = vld [vmem:[#allocation5 + $0x23f8] sm:$0xff]
    %v1315 = vld [vmem:[#allocation5 + $0x2400] sm:$0xff]
    %v1316 = vld [vmem:[#allocation5 + $0x2408] sm:$0xff]
    %v1317 = vld [vmem:[#allocation5 + $0x2410] sm:$0xff]
    %v1318 = vld [vmem:[#allocation5 + $0x2418] sm:$0xff]
    %v1319 = vld [vmem:[#allocation5 + $0x2420] sm:$0xff]
    %v1320 = vld [vmem:[#allocation5 + $0x2428] sm:$0xff]
    %v1321 = vld [vmem:[#allocation5 + $0x2430] sm:$0xff]
    %v1322 = vld [vmem:[#allocation5 + $0x2438] sm:$0xff]
    %v1323 = vld [vmem:[#allocation5 + $0x2440] sm:$0xff]
    %v1324 = vld [vmem:[#allocation5 + $0x2448] sm:$0xff]
    %v1325 = vld [vmem:[#allocation5 + $0x2450] sm:$0xff]
    %v1326 = vld [vmem:[#allocation5 + $0x2458] sm:$0xff]
    %v1327 = vld [vmem:[#allocation5 + $0x2460] sm:$0xff]
    %v1328 = vld [vmem:[#allocation5 + $0x2468] sm:$0xff]
    %v1329 = vld [vmem:[#allocation5 + $0x2470] sm:$0xff]
    %v1330 = vld [vmem:[#allocation5 + $0x2478] sm:$0xff]
    %v1331 = vld [vmem:[#allocation5 + $0x2480] sm:$0xff]
    %v1332 = vld [vmem:[#allocation5 + $0x2488] sm:$0xff]
    %v1333 = vld [vmem:[#allocation5 + $0x2490] sm:$0xff]
    %v1334 = vld [vmem:[#allocation5 + $0x2498] sm:$0xff]
    %v1335 = vld [vmem:[#allocation5 + $0x24a0] sm:$0xff]
    %v1336 = vld [vmem:[#allocation5 + $0x24a8] sm:$0xff]
    %v1337 = vld [vmem:[#allocation5 + $0x24b0] sm:$0xff]
    %v1338 = vld [vmem:[#allocation5 + $0x24b8] sm:$0xff]
    %v1339 = vld [vmem:[#allocation5 + $0x24c0] sm:$0xff]
    %v1340 = vld [vmem:[#allocation5 + $0x24c8] sm:$0xff]
    %v1341 = vld [vmem:[#allocation5 + $0x24d0] sm:$0xff]
    %v1342 = vld [vmem:[#allocation5 + $0x24d8] sm:$0xff]
    %v1343 = vld [vmem:[#allocation5 + $0x24e0] sm:$0xff]
    %v1344 = vld [vmem:[#allocation5 + $0x24e8] sm:$0xff]
    %v1345 = vld [vmem:[#allocation5 + $0x24f0] sm:$0xff]
    %v1346 = vld [vmem:[#allocation5 + $0x24f8] sm:$0xff]
    %v1347 = vld [vmem:[#allocation5 + $0x2500] sm:$0xff]
    %v1348 = vld [vmem:[#allocation5 + $0x2508] sm:$0xff]
    %v1349 = vld [vmem:[#allocation5 + $0x2510] sm:$0xff]
    %v1350 = vld [vmem:[#allocation5 + $0x2518] sm:$0xff]
    %v1351 = vld [vmem:[#allocation5 + $0x2520] sm:$0xff]
    %v1352 = vld [vmem:[#allocation5 + $0x2528] sm:$0xff]
    %v1353 = vld [vmem:[#allocation5 + $0x2530] sm:$0xff]
    %v1354 = vld [vmem:[#allocation5 + $0x2538] sm:$0xff]
    %v1355 = vld [vmem:[#allocation5 + $0x2540] sm:$0xff]
    %v1356 = vld [vmem:[#allocation5 + $0x2548] sm:$0xff]
    %v1357 = vld [vmem:[#allocation5 + $0x2550] sm:$0xff]
    %v1358 = vld [vmem:[#allocation5 + $0x2558] sm:$0xff]
    %v1359 = vld [vmem:[#allocation5 + $0x2560] sm:$0xff]
    %v1360 = vld [vmem:[#allocation5 + $0x2568] sm:$0xff]
    %v1361 = vld [vmem:[#allocation5 + $0x2570] sm:$0xff]
    %v1362 = vld [vmem:[#allocation5 + $0x2578] sm:$0xff]
    %v1363 = vld [vmem:[#allocation5 + $0x2580] sm:$0xff]
    %v1364 = vld [vmem:[#allocation5 + $0x2588] sm:$0xff]
    %v1365 = vld [vmem:[#allocation5 + $0x2590] sm:$0xff]
    %v1366 = vld [vmem:[#allocation5 + $0x2598] sm:$0xff]
    %v1367 = vld [vmem:[#allocation5 + $0x25a0] sm:$0xff]
    %v1368 = vld [vmem:[#allocation5 + $0x25a8] sm:$0xff]
    %v1369 = vld [vmem:[#allocation5 + $0x25b0] sm:$0xff]
    %v1370 = vld [vmem:[#allocation5 + $0x25b8] sm:$0xff]
    %v1371 = vld [vmem:[#allocation5 + $0x25c0] sm:$0xff]
    %v1372 = vld [vmem:[#allocation5 + $0x25c8] sm:$0xff]
    %v1373 = vld [vmem:[#allocation5 + $0x25d0] sm:$0xff]
    %v1374 = vld [vmem:[#allocation5 + $0x25d8] sm:$0xff]
    %v1375 = vld [vmem:[#allocation5 + $0x25e0] sm:$0xff]
    %v1376 = vld [vmem:[#allocation5 + $0x25e8] sm:$0xff]
    %v1377 = vld [vmem:[#allocation5 + $0x25f0] sm:$0xff]
    %v1378 = vld [vmem:[#allocation5 + $0x25f8] sm:$0xff]
    %v1379 = vld [vmem:[#allocation5 + $0x2600] sm:$0xff]
    %v1380 = vld [vmem:[#allocation5 + $0x2608] sm:$0xff]
    %v1381 = vld [vmem:[#allocation5 + $0x2610] sm:$0xff]
    %v1382 = vld [vmem:[#allocation5 + $0x2618] sm:$0xff]
    %v1383 = vld [vmem:[#allocation5 + $0x2620] sm:$0xff]
    %v1384 = vld [vmem:[#allocation5 + $0x2628] sm:$0xff]
    %v1385 = vld [vmem:[#allocation5 + $0x2630] sm:$0xff]
    %v1386 = vld [vmem:[#allocation5 + $0x2638] sm:$0xff]
    %v1387 = vld [vmem:[#allocation5 + $0x2640] sm:$0xff]
    %v1388 = vld [vmem:[#allocation5 + $0x2648] sm:$0xff]
    %v1389 = vld [vmem:[#allocation5 + $0x2650] sm:$0xff]
    %v1390 = vld [vmem:[#allocation5 + $0x2658] sm:$0xff]
    %v1391 = vld [vmem:[#allocation5 + $0x2660] sm:$0xff]
    %v1392 = vld [vmem:[#allocation5 + $0x2668] sm:$0xff]
    %v1393 = vld [vmem:[#allocation5 + $0x2670] sm:$0xff]
    %v1394 = vld [vmem:[#allocation5 + $0x2678] sm:$0xff]
    %v1395 = vld [vmem:[#allocation5 + $0x2680] sm:$0xff]
    %v1396 = vld [vmem:[#allocation5 + $0x2688] sm:$0xff]
    %v1397 = vld [vmem:[#allocation5 + $0x2690] sm:$0xff]
    %v1398 = vld [vmem:[#allocation5 + $0x2698] sm:$0xff]
    %v1399 = vld [vmem:[#allocation5 + $0x26a0] sm:$0xff]
    %v1400 = vld [vmem:[#allocation5 + $0x26a8] sm:$0xff]
    %v1401 = vld [vmem:[#allocation5 + $0x26b0] sm:$0xff]
    %v1402 = vld [vmem:[#allocation5 + $0x26b8] sm:$0xff]
    %v1403 = vld [vmem:[#allocation5 + $0x26c0] sm:$0xff]
    %v1404 = vld [vmem:[#allocation5 + $0x26c8] sm:$0xff]
    %v1405 = vld [vmem:[#allocation5 + $0x26d0] sm:$0xff]
    %v1406 = vld [vmem:[#allocation5 + $0x26d8] sm:$0xff]
    %v1407 = vld [vmem:[#allocation5 + $0x26e0] sm:$0xff]
    %v1408 = vld [vmem:[#allocation5 + $0x26e8] sm:$0xff]
    %v1409 = vld [vmem:[#allocation5 + $0x26f0] sm:$0xff]
    %v1410 = vld [vmem:[#allocation5 + $0x26f8] sm:$0xff]
    %v1411 = vld [vmem:[#allocation5 + $0x2700] sm:$0xff]
    %v1412 = vld [vmem:[#allocation5 + $0x2708] sm:$0xff]
    %v1413 = vld [vmem:[#allocation5 + $0x2710] sm:$0xff]
    %v1414 = vld [vmem:[#allocation5 + $0x2718] sm:$0xff]
    %v1415 = vld [vmem:[#allocation5 + $0x2720] sm:$0xff]
    %v1416 = vld [vmem:[#allocation5 + $0x2728] sm:$0xff]
    %v1417 = vld [vmem:[#allocation5 + $0x2730] sm:$0xff]
    %v1418 = vld [vmem:[#allocation5 + $0x2738] sm:$0xff]
    %v1419 = vld [vmem:[#allocation5 + $0x2740] sm:$0xff]
    %v1420 = vld [vmem:[#allocation5 + $0x2748] sm:$0xff]
    %v1421 = vld [vmem:[#allocation5 + $0x2750] sm:$0xff]
    %v1422 = vld [vmem:[#allocation5 + $0x2758] sm:$0xff]
    %v1423 = vld [vmem:[#allocation5 + $0x2760] sm:$0xff]
    %v1424 = vld [vmem:[#allocation5 + $0x2768] sm:$0xff]
    %v1425 = vld [vmem:[#allocation5 + $0x2770] sm:$0xff]
    %v1426 = vld [vmem:[#allocation5 + $0x2778] sm:$0xff]
    %v1427 = vld [vmem:[#allocation5 + $0x2780] sm:$0xff]
    %v1428 = vld [vmem:[#allocation5 + $0x2788] sm:$0xff]
    %v1429 = vld [vmem:[#allocation5 + $0x2790] sm:$0xff]
    %v1430 = vld [vmem:[#allocation5 + $0x2798] sm:$0xff]
    %v1431 = vld [vmem:[#allocation5 + $0x27a0] sm:$0xff]
    %v1432 = vld [vmem:[#allocation5 + $0x27a8] sm:$0xff]
    %v1433 = vld [vmem:[#allocation5 + $0x27b0] sm:$0xff]
    %v1434 = vld [vmem:[#allocation5 + $0x27b8] sm:$0xff]
    %v1435 = vld [vmem:[#allocation5 + $0x27c0] sm:$0xff]
    %v1436 = vld [vmem:[#allocation5 + $0x27c8] sm:$0xff]
    %v1437 = vld [vmem:[#allocation5 + $0x27d0] sm:$0xff]
    %v1438 = vld [vmem:[#allocation5 + $0x27d8] sm:$0xff]
    %v1439 = vld [vmem:[#allocation5 + $0x27e0] sm:$0xff]
    %v1440 = vld [vmem:[#allocation5 + $0x27e8] sm:$0xff]
    %v1441 = vld [vmem:[#allocation5 + $0x27f0] sm:$0xff]
    %v1442 = vld [vmem:[#allocation5 + $0x27f8] sm:$0xff]
    %v1443 = vld [vmem:[#allocation5 + $0x2800] sm:$0xff]
    %v1444 = vld [vmem:[#allocation5 + $0x2808] sm:$0xff]
    %v1445 = vld [vmem:[#allocation5 + $0x2810] sm:$0xff]
    %v1446 = vld [vmem:[#allocation5 + $0x2818] sm:$0xff]
    %v1447 = vld [vmem:[#allocation5 + $0x2820] sm:$0xff]
    %v1448 = vld [vmem:[#allocation5 + $0x2828] sm:$0xff]
    %v1449 = vld [vmem:[#allocation5 + $0x2830] sm:$0xff]
    %v1450 = vld [vmem:[#allocation5 + $0x2838] sm:$0xff]
    %v1451 = vld [vmem:[#allocation5 + $0x2840] sm:$0xff]
    %v1452 = vld [vmem:[#allocation5 + $0x2848] sm:$0xff]
    %v1453 = vld [vmem:[#allocation5 + $0x2850] sm:$0xff]
    %v1454 = vld [vmem:[#allocation5 + $0x2858] sm:$0xff]
    %v1455 = vld [vmem:[#allocation5 + $0x2860] sm:$0xff]
    %v1456 = vld [vmem:[#allocation5 + $0x2868] sm:$0xff]
    %v1457 = vld [vmem:[#allocation5 + $0x2870] sm:$0xff]
    %v1458 = vld [vmem:[#allocation5 + $0x2878] sm:$0xff]
    %v1459 = vld [vmem:[#allocation5 + $0x2880] sm:$0xff]
    %v1460 = vld [vmem:[#allocation5 + $0x2888] sm:$0xff]
    %v1461 = vld [vmem:[#allocation5 + $0x2890] sm:$0xff]
    %v1462 = vld [vmem:[#allocation5 + $0x2898] sm:$0xff]
    %v1463 = vld [vmem:[#allocation5 + $0x28a0] sm:$0xff]
    %v1464 = vld [vmem:[#allocation5 + $0x28a8] sm:$0xff]
    %v1465 = vld [vmem:[#allocation5 + $0x28b0] sm:$0xff]
    %v1466 = vld [vmem:[#allocation5 + $0x28b8] sm:$0xff]
    %v1467 = vld [vmem:[#allocation5 + $0x28c0] sm:$0xff]
    %v1468 = vld [vmem:[#allocation5 + $0x28c8] sm:$0xff]
    %v1469 = vld [vmem:[#allocation5 + $0x28d0] sm:$0xff]
    %v1470 = vld [vmem:[#allocation5 + $0x28d8] sm:$0xff]
    %v1471 = vld [vmem:[#allocation5 + $0x28e0] sm:$0xff]
    %v1472 = vld [vmem:[#allocation5 + $0x28e8] sm:$0xff]
    %v1473 = vld [vmem:[#allocation5 + $0x28f0] sm:$0xff]
    %v1474 = vld [vmem:[#allocation5 + $0x28f8] sm:$0xff]
    %v1475 = vld [vmem:[#allocation5 + $0x2900] sm:$0xff]
    %v1476 = vld [vmem:[#allocation5 + $0x2908] sm:$0xff]
    %v1477 = vld [vmem:[#allocation5 + $0x2910] sm:$0xff]
    %v1478 = vld [vmem:[#allocation5 + $0x2918] sm:$0xff]
    %v1479 = vld [vmem:[#allocation5 + $0x2920] sm:$0xff]
    %v1480 = vld [vmem:[#allocation5 + $0x2928] sm:$0xff]
    %v1481 = vld [vmem:[#allocation5 + $0x2930] sm:$0xff]
    %v1482 = vld [vmem:[#allocation5 + $0x2938] sm:$0xff]
    %v1483 = vld [vmem:[#allocation5 + $0x2940] sm:$0xff]
    %v1484 = vld [vmem:[#allocation5 + $0x2948] sm:$0xff]
    %v1485 = vld [vmem:[#allocation5 + $0x2950] sm:$0xff]
    %v1486 = vld [vmem:[#allocation5 + $0x2958] sm:$0xff]
    %v1487 = vld [vmem:[#allocation5 + $0x2960] sm:$0xff]
    %v1488 = vld [vmem:[#allocation5 + $0x2968] sm:$0xff]
    %v1489 = vld [vmem:[#allocation5 + $0x2970] sm:$0xff]
    %v1490 = vld [vmem:[#allocation5 + $0x2978] sm:$0xff]
    %v1491 = vld [vmem:[#allocation5 + $0x2980] sm:$0xff]
    %v1492 = vld [vmem:[#allocation5 + $0x2988] sm:$0xff]
    %v1493 = vld [vmem:[#allocation5 + $0x2990] sm:$0xff]
    %v1494 = vld [vmem:[#allocation5 + $0x2998] sm:$0xff]
    %v1495 = vld [vmem:[#allocation5 + $0x29a0] sm:$0xff]
    %v1496 = vld [vmem:[#allocation5 + $0x29a8] sm:$0xff]
    %v1497 = vld [vmem:[#allocation5 + $0x29b0] sm:$0xff]
    %v1498 = vld [vmem:[#allocation5 + $0x29b8] sm:$0xff]
    %v1499 = vld [vmem:[#allocation5 + $0x29c0] sm:$0xff]
    %v1500 = vld [vmem:[#allocation5 + $0x29c8] sm:$0xff]
    %v1501 = vld [vmem:[#allocation5 + $0x29d0] sm:$0xff]
    %v1502 = vld [vmem:[#allocation5 + $0x29d8] sm:$0xff]
    %v1503 = vld [vmem:[#allocation5 + $0x29e0] sm:$0xff]
    %v1504 = vld [vmem:[#allocation5 + $0x29e8] sm:$0xff]
    %v1505 = vld [vmem:[#allocation5 + $0x29f0] sm:$0xff]
    %v1506 = vld [vmem:[#allocation5 + $0x29f8] sm:$0xff]
    %v1507 = vld [vmem:[#allocation5 + $0x2a00] sm:$0xff]
    %v1508 = vld [vmem:[#allocation5 + $0x2a08] sm:$0xff]
    %v1509 = vld [vmem:[#allocation5 + $0x2a10] sm:$0xff]
    %v1510 = vld [vmem:[#allocation5 + $0x2a18] sm:$0xff]
    %v1511 = vld [vmem:[#allocation5 + $0x2a20] sm:$0xff]
    %v1512 = vld [vmem:[#allocation5 + $0x2a28] sm:$0xff]
    %v1513 = vld [vmem:[#allocation5 + $0x2a30] sm:$0xff]
    %v1514 = vld [vmem:[#allocation5 + $0x2a38] sm:$0xff]
    %v1515 = vld [vmem:[#allocation5 + $0x2a40] sm:$0xff]
    %v1516 = vld [vmem:[#allocation5 + $0x2a48] sm:$0xff]
    %v1517 = vld [vmem:[#allocation5 + $0x2a50] sm:$0xff]
    %v1518 = vld [vmem:[#allocation5 + $0x2a58] sm:$0xff]
    %v1519 = vld [vmem:[#allocation5 + $0x2a60] sm:$0xff]
    %v1520 = vld [vmem:[#allocation5 + $0x2a68] sm:$0xff]
    %v1521 = vld [vmem:[#allocation5 + $0x2a70] sm:$0xff]
    %v1522 = vld [vmem:[#allocation5 + $0x2a78] sm:$0xff]
    %v1523 = vld [vmem:[#allocation5 + $0x2a80] sm:$0xff]
    %v1524 = vld [vmem:[#allocation5 + $0x2a88] sm:$0xff]
    %v1525 = vld [vmem:[#allocation5 + $0x2a90] sm:$0xff]
    %v1526 = vld [vmem:[#allocation5 + $0x2a98] sm:$0xff]
    %v1527 = vld [vmem:[#allocation5 + $0x2aa0] sm:$0xff]
    %v1528 = vld [vmem:[#allocation5 + $0x2aa8] sm:$0xff]
    %v1529 = vld [vmem:[#allocation5 + $0x2ab0] sm:$0xff]
    %v1530 = vld [vmem:[#allocation5 + $0x2ab8] sm:$0xff]
    %v1531 = vld [vmem:[#allocation5 + $0x2ac0] sm:$0xff]
    %v1532 = vld [vmem:[#allocation5 + $0x2ac8] sm:$0xff]
    %v1533 = vld [vmem:[#allocation5 + $0x2ad0] sm:$0xff]
    %v1534 = vld [vmem:[#allocation5 + $0x2ad8] sm:$0xff]
    %v1535 = vld [vmem:[#allocation5 + $0x2ae0] sm:$0xff]
    %v1536 = vld [vmem:[#allocation5 + $0x2ae8] sm:$0xff]
    %v1537 = vld [vmem:[#allocation5 + $0x2af0] sm:$0xff]
    %v1538 = vld [vmem:[#allocation5 + $0x2af8] sm:$0xff]
    %v1539 = vld [vmem:[#allocation5 + $0x2b00] sm:$0xff]
    %v1540 = vld [vmem:[#allocation5 + $0x2b08] sm:$0xff]
    %v1541 = vld [vmem:[#allocation5 + $0x2b10] sm:$0xff]
    %v1542 = vld [vmem:[#allocation5 + $0x2b18] sm:$0xff]
    %v1543 = vld [vmem:[#allocation5 + $0x2b20] sm:$0xff]
    %v1544 = vld [vmem:[#allocation5 + $0x2b28] sm:$0xff]
    %v1545 = vld [vmem:[#allocation5 + $0x2b30] sm:$0xff]
    %v1546 = vld [vmem:[#allocation5 + $0x2b38] sm:$0xff]
    %v1547 = vld [vmem:[#allocation5 + $0x2b40] sm:$0xff]
    %v1548 = vld [vmem:[#allocation5 + $0x2b48] sm:$0xff]
    %v1549 = vld [vmem:[#allocation5 + $0x2b50] sm:$0xff]
    %v1550 = vld [vmem:[#allocation5 + $0x2b58] sm:$0xff]
    %v1551 = vld [vmem:[#allocation5 + $0x2b60] sm:$0xff]
    %v1552 = vld [vmem:[#allocation5 + $0x2b68] sm:$0xff]
    %v1553 = vld [vmem:[#allocation5 + $0x2b70] sm:$0xff]
    %v1554 = vld [vmem:[#allocation5 + $0x2b78] sm:$0xff]
    %v1555 = vld [vmem:[#allocation5 + $0x2b80] sm:$0xff]
    %v1556 = vld [vmem:[#allocation5 + $0x2b88] sm:$0xff]
    %v1557 = vld [vmem:[#allocation5 + $0x2b90] sm:$0xff]
    %v1558 = vld [vmem:[#allocation5 + $0x2b98] sm:$0xff]
    %v1559 = vld [vmem:[#allocation5 + $0x2ba0] sm:$0xff]
    %v1560 = vld [vmem:[#allocation5 + $0x2ba8] sm:$0xff]
    %v1561 = vld [vmem:[#allocation5 + $0x2bb0] sm:$0xff]
    %v1562 = vld [vmem:[#allocation5 + $0x2bb8] sm:$0xff]
    %v1563 = vld [vmem:[#allocation5 + $0x2bc0] sm:$0xff]
    %v1564 = vld [vmem:[#allocation5 + $0x2bc8] sm:$0xff]
    %v1565 = vld [vmem:[#allocation5 + $0x2bd0] sm:$0xff]
    %v1566 = vld [vmem:[#allocation5 + $0x2bd8] sm:$0xff]
    %v1567 = vld [vmem:[#allocation5 + $0x2be0] sm:$0xff]
    %v1568 = vld [vmem:[#allocation5 + $0x2be8] sm:$0xff]
    %v1569 = vld [vmem:[#allocation5 + $0x2bf0] sm:$0xff]
    %v1570 = vld [vmem:[#allocation5 + $0x2bf8] sm:$0xff]
    %v1571 = vld [vmem:[#allocation5 + $0x2c00] sm:$0xff]
    %v1572 = vld [vmem:[#allocation5 + $0x2c08] sm:$0xff]
    %v1573 = vld [vmem:[#allocation5 + $0x2c10] sm:$0xff]
    %v1574 = vld [vmem:[#allocation5 + $0x2c18] sm:$0xff]
    %v1575 = vld [vmem:[#allocation5 + $0x2c20] sm:$0xff]
    %v1576 = vld [vmem:[#allocation5 + $0x2c28] sm:$0xff]
    %v1577 = vld [vmem:[#allocation5 + $0x2c30] sm:$0xff]
    %v1578 = vld [vmem:[#allocation5 + $0x2c38] sm:$0xff]
    %v1579 = vld [vmem:[#allocation5 + $0x2c40] sm:$0xff]
    %v1580 = vld [vmem:[#allocation5 + $0x2c48] sm:$0xff]
    %v1581 = vld [vmem:[#allocation5 + $0x2c50] sm:$0xff]
    %v1582 = vld [vmem:[#allocation5 + $0x2c58] sm:$0xff]
    %v1583 = vld [vmem:[#allocation5 + $0x2c60] sm:$0xff]
    %v1584 = vld [vmem:[#allocation5 + $0x2c68] sm:$0xff]
    %v1585 = vld [vmem:[#allocation5 + $0x2c70] sm:$0xff]
    %v1586 = vld [vmem:[#allocation5 + $0x2c78] sm:$0xff]
    %v1587 = vld [vmem:[#allocation5 + $0x2c80] sm:$0xff]
    %v1588 = vld [vmem:[#allocation5 + $0x2c88] sm:$0xff]
    %v1589 = vld [vmem:[#allocation5 + $0x2c90] sm:$0xff]
    %v1590 = vld [vmem:[#allocation5 + $0x2c98] sm:$0xff]
    %v1591 = vld [vmem:[#allocation5 + $0x2ca0] sm:$0xff]
    %v1592 = vld [vmem:[#allocation5 + $0x2ca8] sm:$0xff]
    %v1593 = vld [vmem:[#allocation5 + $0x2cb0] sm:$0xff]
    %v1594 = vld [vmem:[#allocation5 + $0x2cb8] sm:$0xff]
    %v1595 = vld [vmem:[#allocation5 + $0x2cc0] sm:$0xff]
    %v1596 = vld [vmem:[#allocation5 + $0x2cc8] sm:$0xff]
    %v1597 = vld [vmem:[#allocation5 + $0x2cd0] sm:$0xff]
    %v1598 = vld [vmem:[#allocation5 + $0x2cd8] sm:$0xff]
    %v1599 = vld [vmem:[#allocation5 + $0x2ce0] sm:$0xff]
    %v1600 = vld [vmem:[#allocation5 + $0x2ce8] sm:$0xff]
    %v1601 = vld [vmem:[#allocation5 + $0x2cf0] sm:$0xff]
    %v1602 = vld [vmem:[#allocation5 + $0x2cf8] sm:$0xff]
    %v1603 = vld [vmem:[#allocation5 + $0x2d00] sm:$0xff]
    %v1604 = vld [vmem:[#allocation5 + $0x2d08] sm:$0xff]
    %v1605 = vld [vmem:[#allocation5 + $0x2d10] sm:$0xff]
    %v1606 = vld [vmem:[#allocation5 + $0x2d18] sm:$0xff]
    %v1607 = vld [vmem:[#allocation5 + $0x2d20] sm:$0xff]
    %v1608 = vld [vmem:[#allocation5 + $0x2d28] sm:$0xff]
    %v1609 = vld [vmem:[#allocation5 + $0x2d30] sm:$0xff]
    %v1610 = vld [vmem:[#allocation5 + $0x2d38] sm:$0xff]
    %v1611 = vld [vmem:[#allocation5 + $0x2d40] sm:$0xff]
    %v1612 = vld [vmem:[#allocation5 + $0x2d48] sm:$0xff]
    %v1613 = vld [vmem:[#allocation5 + $0x2d50] sm:$0xff]
    %v1614 = vld [vmem:[#allocation5 + $0x2d58] sm:$0xff]
    %v1615 = vld [vmem:[#allocation5 + $0x2d60] sm:$0xff]
    %v1616 = vld [vmem:[#allocation5 + $0x2d68] sm:$0xff]
    %v1617 = vld [vmem:[#allocation5 + $0x2d70] sm:$0xff]
    %v1618 = vld [vmem:[#allocation5 + $0x2d78] sm:$0xff]
    %v1619 = vld [vmem:[#allocation5 + $0x2d80] sm:$0xff]
    %v1620 = vld [vmem:[#allocation5 + $0x2d88] sm:$0xff]
    %v1621 = vld [vmem:[#allocation5 + $0x2d90] sm:$0xff]
    %v1622 = vld [vmem:[#allocation5 + $0x2d98] sm:$0xff]
    %v1623 = vld [vmem:[#allocation5 + $0x2da0] sm:$0xff]
    %v1624 = vld [vmem:[#allocation5 + $0x2da8] sm:$0xff]
    %v1625 = vld [vmem:[#allocation5 + $0x2db0] sm:$0xff]
    %v1626 = vld [vmem:[#allocation5 + $0x2db8] sm:$0xff]
    %v1627 = vld [vmem:[#allocation5 + $0x2dc0] sm:$0xff]
    %v1628 = vld [vmem:[#allocation5 + $0x2dc8] sm:$0xff]
    %v1629 = vld [vmem:[#allocation5 + $0x2dd0] sm:$0xff]
    %v1630 = vld [vmem:[#allocation5 + $0x2dd8] sm:$0xff]
    %v1631 = vld [vmem:[#allocation5 + $0x2de0] sm:$0xff]
    %v1632 = vld [vmem:[#allocation5 + $0x2de8] sm:$0xff]
    %v1633 = vld [vmem:[#allocation5 + $0x2df0] sm:$0xff]
    %v1634 = vld [vmem:[#allocation5 + $0x2df8] sm:$0xff]
    %v1635 = vld [vmem:[#allocation5 + $0x2e00] sm:$0xff]
    %v1636 = vld [vmem:[#allocation5 + $0x2e08] sm:$0xff]
    %v1637 = vld [vmem:[#allocation5 + $0x2e10] sm:$0xff]
    %v1638 = vld [vmem:[#allocation5 + $0x2e18] sm:$0xff]
    %v1639 = vld [vmem:[#allocation5 + $0x2e20] sm:$0xff]
    %v1640 = vld [vmem:[#allocation5 + $0x2e28] sm:$0xff]
    %v1641 = vld [vmem:[#allocation5 + $0x2e30] sm:$0xff]
    %v1642 = vld [vmem:[#allocation5 + $0x2e38] sm:$0xff]
    %v1643 = vld [vmem:[#allocation5 + $0x2e40] sm:$0xff]
    %v1644 = vld [vmem:[#allocation5 + $0x2e48] sm:$0xff]
    %v1645 = vld [vmem:[#allocation5 + $0x2e50] sm:$0xff]
    %v1646 = vld [vmem:[#allocation5 + $0x2e58] sm:$0xff]
    %v1647 = vld [vmem:[#allocation5 + $0x2e60] sm:$0xff]
    %v1648 = vld [vmem:[#allocation5 + $0x2e68] sm:$0xff]
    %v1649 = vld [vmem:[#allocation5 + $0x2e70] sm:$0xff]
    %v1650 = vld [vmem:[#allocation5 + $0x2e78] sm:$0xff]
    %v1651 = vld [vmem:[#allocation5 + $0x2e80] sm:$0xff]
    %v1652 = vld [vmem:[#allocation5 + $0x2e88] sm:$0xff]
    %v1653 = vld [vmem:[#allocation5 + $0x2e90] sm:$0xff]
    %v1654 = vld [vmem:[#allocation5 + $0x2e98] sm:$0xff]
    %v1655 = vld [vmem:[#allocation5 + $0x2ea0] sm:$0xff]
    %v1656 = vld [vmem:[#allocation5 + $0x2ea8] sm:$0xff]
    %v1657 = vld [vmem:[#allocation5 + $0x2eb0] sm:$0xff]
    %v1658 = vld [vmem:[#allocation5 + $0x2eb8] sm:$0xff]
    %v1659 = vld [vmem:[#allocation5 + $0x2ec0] sm:$0xff]
    %v1660 = vld [vmem:[#allocation5 + $0x2ec8] sm:$0xff]
    %v1661 = vld [vmem:[#allocation5 + $0x2ed0] sm:$0xff]
    %v1662 = vld [vmem:[#allocation5 + $0x2ed8] sm:$0xff]
    %v1663 = vld [vmem:[#allocation5 + $0x2ee0] sm:$0xff]
    %v1664 = vld [vmem:[#allocation5 + $0x2ee8] sm:$0xff]
    %v1665 = vld [vmem:[#allocation5 + $0x2ef0] sm:$0xff]
    %v1666 = vld [vmem:[#allocation5 + $0x2ef8] sm:$0xff]
    %v1667 = vld [vmem:[#allocation5 + $0x2f00] sm:$0xff]
    %v1668 = vld [vmem:[#allocation5 + $0x2f08] sm:$0xff]
    %v1669 = vld [vmem:[#allocation5 + $0x2f10] sm:$0xff]
    %v1670 = vld [vmem:[#allocation5 + $0x2f18] sm:$0xff]
    %v1671 = vld [vmem:[#allocation5 + $0x2f20] sm:$0xff]
    %v1672 = vld [vmem:[#allocation5 + $0x2f28] sm:$0xff]
    %v1673 = vld [vmem:[#allocation5 + $0x2f30] sm:$0xff]
    %v1674 = vld [vmem:[#allocation5 + $0x2f38] sm:$0xff]
    %v1675 = vld [vmem:[#allocation5 + $0x2f40] sm:$0xff]
    %v1676 = vld [vmem:[#allocation5 + $0x2f48] sm:$0xff]
    %v1677 = vld [vmem:[#allocation5 + $0x2f50] sm:$0xff]
    %v1678 = vld [vmem:[#allocation5 + $0x2f58] sm:$0xff]
    %v1679 = vld [vmem:[#allocation5 + $0x2f60] sm:$0xff]
    %v1680 = vld [vmem:[#allocation5 + $0x2f68] sm:$0xff]
    %v1681 = vld [vmem:[#allocation5 + $0x2f70] sm:$0xff]
    %v1682 = vld [vmem:[#allocation5 + $0x2f78] sm:$0xff]
    %v1683 = vld [vmem:[#allocation5 + $0x2f80] sm:$0xff]
    %v1684 = vld [vmem:[#allocation5 + $0x2f88] sm:$0xff]
    %v1685 = vld [vmem:[#allocation5 + $0x2f90] sm:$0xff]
    %v1686 = vld [vmem:[#allocation5 + $0x2f98] sm:$0xff]
    %v1687 = vld [vmem:[#allocation5 + $0x2fa0] sm:$0xff]
    %v1688 = vld [vmem:[#allocation5 + $0x2fa8] sm:$0xff]
    %v1689 = vld [vmem:[#allocation5 + $0x2fb0] sm:$0xff]
    %v1690 = vld [vmem:[#allocation5 + $0x2fb8] sm:$0xff]
    %v1691 = vld [vmem:[#allocation5 + $0x2fc0] sm:$0xff]
    %v1692 = vld [vmem:[#allocation5 + $0x2fc8] sm:$0xff]
    %v1693 = vld [vmem:[#allocation5 + $0x2fd0] sm:$0xff]
    %v1694 = vld [vmem:[#allocation5 + $0x2fd8] sm:$0xff]
    %v1695 = vld [vmem:[#allocation5 + $0x2fe0] sm:$0xff]
    %v1696 = vld [vmem:[#allocation5 + $0x2fe8] sm:$0xff]
    %v1697 = vld [vmem:[#allocation5 + $0x2ff0] sm:$0xff]
    %v1698 = vld [vmem:[#allocation5 + $0x2ff8] sm:$0xff]
    %v1699 = vld [vmem:[#allocation7] sm:$0xff]
    %v1701 = vlaneseq
    %v1702 = vshrl.u32 %v1701, 7
    %v1703 = vsub.s32 0, %v1702
    %v1704 = vrot.slane %v1699, %v1703
    %v1705 = vlaneseq
    %v1706 = vshrl.u32 %v1705, 7
    %v1707 = vsub.s32 1, %v1706
    %v1708 = vrot.slane %v1699, %v1707
    %v1709 = vlaneseq
    %v1710 = vshrl.u32 %v1709, 7
    %v1711 = vsub.s32 2, %v1710
    %v1712 = vrot.slane %v1699, %v1711
    %v1713 = vlaneseq
    %v1714 = vshrl.u32 %v1713, 7
    %v1715 = vsub.s32 3, %v1714
    %v1716 = vrot.slane %v1699, %v1715
    %v1717 = vlaneseq
    %v1718 = vshrl.u32 %v1717, 7
    %v1719 = vsub.s32 4, %v1718
    %v1720 = vrot.slane %v1699, %v1719
    %v1721 = vlaneseq
    %v1722 = vshrl.u32 %v1721, 7
    %v1723 = vsub.s32 5, %v1722
    %v1724 = vrot.slane %v1699, %v1723
    %v1725 = vlaneseq
    %v1726 = vshrl.u32 %v1725, 7
    %v1727 = vsub.s32 6, %v1726
    %v1728 = vrot.slane %v1699, %v1727
    %v1729 = vlaneseq
    %v1730 = vshrl.u32 %v1729, 7
    %v1731 = vsub.s32 7, %v1730
    %v1732 = vrot.slane %v1699, %v1731
    %v3277 = vunpack.c.l.b16 %v163
    %v3278 = vunpack.c.h.b16 %v163
    %v3279 = vunpack.c.l.b16 %v164
    %v3280 = vunpack.c.h.b16 %v164
    %v3281 = vunpack.c.l.b16 %v165
    %v3282 = vunpack.c.h.b16 %v165
    %v3283 = vunpack.c.l.b16 %v166
    %v3284 = vunpack.c.h.b16 %v166
    %v3285 = vunpack.c.l.b16 %v167
    %v3286 = vunpack.c.h.b16 %v167
    %v3287 = vunpack.c.l.b16 %v168
    %v3288 = vunpack.c.h.b16 %v168
    %v3289 = vunpack.c.l.b16 %v169
    %v3290 = vunpack.c.h.b16 %v169
    %v3291 = vunpack.c.l.b16 %v170
    %v3292 = vunpack.c.h.b16 %v170
    %v3293 = vunpack.c.l.b16 %v171
    %v3294 = vunpack.c.h.b16 %v171
    %v3295 = vunpack.c.l.b16 %v172
    %v3296 = vunpack.c.h.b16 %v172
    %v3297 = vunpack.c.l.b16 %v173
    %v3298 = vunpack.c.h.b16 %v173
    %v3299 = vunpack.c.l.b16 %v174
    %v3300 = vunpack.c.h.b16 %v174
    %v3301 = vunpack.c.l.b16 %v175
    %v3302 = vunpack.c.h.b16 %v175
    %v3303 = vunpack.c.l.b16 %v176
    %v3304 = vunpack.c.h.b16 %v176
    %v3305 = vunpack.c.l.b16 %v177
    %v3306 = vunpack.c.h.b16 %v177
    %v3307 = vunpack.c.l.b16 %v178
    %v3308 = vunpack.c.h.b16 %v178
    %v3309 = vunpack.c.l.b16 %v179
    %v3310 = vunpack.c.h.b16 %v179
    %v3311 = vunpack.c.l.b16 %v180
    %v3312 = vunpack.c.h.b16 %v180
    %v3313 = vunpack.c.l.b16 %v181
    %v3314 = vunpack.c.h.b16 %v181
    %v3315 = vunpack.c.l.b16 %v182
    %v3316 = vunpack.c.h.b16 %v182
    %v3317 = vunpack.c.l.b16 %v183
    %v3318 = vunpack.c.h.b16 %v183
    %v3319 = vunpack.c.l.b16 %v184
    %v3320 = vunpack.c.h.b16 %v184
    %v3321 = vunpack.c.l.b16 %v185
    %v3322 = vunpack.c.h.b16 %v185
    %v3323 = vunpack.c.l.b16 %v186
    %v3324 = vunpack.c.h.b16 %v186
    %v3325 = vunpack.c.l.b16 %v187
    %v3326 = vunpack.c.h.b16 %v187
    %v3327 = vunpack.c.l.b16 %v188
    %v3328 = vunpack.c.h.b16 %v188
    %v3329 = vunpack.c.l.b16 %v189
    %v3330 = vunpack.c.h.b16 %v189
    %v3331 = vunpack.c.l.b16 %v190
    %v3332 = vunpack.c.h.b16 %v190
    %v3333 = vunpack.c.l.b16 %v191
    %v3334 = vunpack.c.h.b16 %v191
    %v3335 = vunpack.c.l.b16 %v192
    %v3336 = vunpack.c.h.b16 %v192
    %v3337 = vunpack.c.l.b16 %v193
    %v3338 = vunpack.c.h.b16 %v193
    %v3339 = vunpack.c.l.b16 %v194
    %v3340 = vunpack.c.h.b16 %v194
    %v3341 = vunpack.c.l.b16 %v195
    %v3342 = vunpack.c.h.b16 %v195
    %v3343 = vunpack.c.l.b16 %v196
    %v3344 = vunpack.c.h.b16 %v196
    %v3345 = vunpack.c.l.b16 %v197
    %v3346 = vunpack.c.h.b16 %v197
    %v3347 = vunpack.c.l.b16 %v198
    %v3348 = vunpack.c.h.b16 %v198
    %v3349 = vunpack.c.l.b16 %v199
    %v3350 = vunpack.c.h.b16 %v199
    %v3351 = vunpack.c.l.b16 %v200
    %v3352 = vunpack.c.h.b16 %v200
    %v3353 = vunpack.c.l.b16 %v201
    %v3354 = vunpack.c.h.b16 %v201
    %v3355 = vunpack.c.l.b16 %v202
    %v3356 = vunpack.c.h.b16 %v202
    %v3357 = vunpack.c.l.b16 %v203
    %v3358 = vunpack.c.h.b16 %v203
    %v3359 = vunpack.c.l.b16 %v204
    %v3360 = vunpack.c.h.b16 %v204
    %v3361 = vunpack.c.l.b16 %v205
    %v3362 = vunpack.c.h.b16 %v205
    %v3363 = vunpack.c.l.b16 %v206
    %v3364 = vunpack.c.h.b16 %v206
    %v3365 = vunpack.c.l.b16 %v207
    %v3366 = vunpack.c.h.b16 %v207
    %v3367 = vunpack.c.l.b16 %v208
    %v3368 = vunpack.c.h.b16 %v208
    %v3369 = vunpack.c.l.b16 %v209
    %v3370 = vunpack.c.h.b16 %v209
    %v3371 = vunpack.c.l.b16 %v210
    %v3372 = vunpack.c.h.b16 %v210
    %v3373 = vunpack.c.l.b16 %v211
    %v3374 = vunpack.c.h.b16 %v211
    %v3375 = vunpack.c.l.b16 %v212
    %v3376 = vunpack.c.h.b16 %v212
    %v3377 = vunpack.c.l.b16 %v213
    %v3378 = vunpack.c.h.b16 %v213
    %v3379 = vunpack.c.l.b16 %v214
    %v3380 = vunpack.c.h.b16 %v214
    %v3381 = vunpack.c.l.b16 %v215
    %v3382 = vunpack.c.h.b16 %v215
    %v3383 = vunpack.c.l.b16 %v216
    %v3384 = vunpack.c.h.b16 %v216
    %v3385 = vunpack.c.l.b16 %v217
    %v3386 = vunpack.c.h.b16 %v217
    %v3387 = vunpack.c.l.b16 %v218
    %v3388 = vunpack.c.h.b16 %v218
    %v3389 = vunpack.c.l.b16 %v219
    %v3390 = vunpack.c.h.b16 %v219
    %v3391 = vunpack.c.l.b16 %v220
    %v3392 = vunpack.c.h.b16 %v220
    %v3393 = vunpack.c.l.b16 %v221
    %v3394 = vunpack.c.h.b16 %v221
    %v3395 = vunpack.c.l.b16 %v222
    %v3396 = vunpack.c.h.b16 %v222
    %v3397 = vunpack.c.l.b16 %v223
    %v3398 = vunpack.c.h.b16 %v223
    %v3399 = vunpack.c.l.b16 %v224
    %v3400 = vunpack.c.h.b16 %v224
    %v3401 = vunpack.c.l.b16 %v225
    %v3402 = vunpack.c.h.b16 %v225
    %v3403 = vunpack.c.l.b16 %v226
    %v3404 = vunpack.c.h.b16 %v226
    %v3405 = vunpack.c.l.b16 %v227
    %v3406 = vunpack.c.h.b16 %v227
    %v3407 = vunpack.c.l.b16 %v228
    %v3408 = vunpack.c.h.b16 %v228
    %v3409 = vunpack.c.l.b16 %v229
    %v3410 = vunpack.c.h.b16 %v229
    %v3411 = vunpack.c.l.b16 %v230
    %v3412 = vunpack.c.h.b16 %v230
    %v3413 = vunpack.c.l.b16 %v231
    %v3414 = vunpack.c.h.b16 %v231
    %v3415 = vunpack.c.l.b16 %v232
    %v3416 = vunpack.c.h.b16 %v232
    %v3417 = vunpack.c.l.b16 %v233
    %v3418 = vunpack.c.h.b16 %v233
    %v3419 = vunpack.c.l.b16 %v234
    %v3420 = vunpack.c.h.b16 %v234
    %v3421 = vunpack.c.l.b16 %v235
    %v3422 = vunpack.c.h.b16 %v235
    %v3423 = vunpack.c.l.b16 %v236
    %v3424 = vunpack.c.h.b16 %v236
    %v3425 = vunpack.c.l.b16 %v237
    %v3426 = vunpack.c.h.b16 %v237
    %v3427 = vunpack.c.l.b16 %v238
    %v3428 = vunpack.c.h.b16 %v238
    %v3429 = vunpack.c.l.b16 %v239
    %v3430 = vunpack.c.h.b16 %v239
    %v3431 = vunpack.c.l.b16 %v240
    %v3432 = vunpack.c.h.b16 %v240
    %v3433 = vunpack.c.l.b16 %v241
    %v3434 = vunpack.c.h.b16 %v241
    %v3435 = vunpack.c.l.b16 %v242
    %v3436 = vunpack.c.h.b16 %v242
    %v3437 = vunpack.c.l.b16 %v243
    %v3438 = vunpack.c.h.b16 %v243
    %v3439 = vunpack.c.l.b16 %v244
    %v3440 = vunpack.c.h.b16 %v244
    %v3441 = vunpack.c.l.b16 %v245
    %v3442 = vunpack.c.h.b16 %v245
    %v3443 = vunpack.c.l.b16 %v246
    %v3444 = vunpack.c.h.b16 %v246
    %v3445 = vunpack.c.l.b16 %v247
    %v3446 = vunpack.c.h.b16 %v247
    %v3447 = vunpack.c.l.b16 %v248
    %v3448 = vunpack.c.h.b16 %v248
    %v3449 = vunpack.c.l.b16 %v249
    %v3450 = vunpack.c.h.b16 %v249
    %v3451 = vunpack.c.l.b16 %v250
    %v3452 = vunpack.c.h.b16 %v250
    %v3453 = vunpack.c.l.b16 %v251
    %v3454 = vunpack.c.h.b16 %v251
    %v3455 = vunpack.c.l.b16 %v252
    %v3456 = vunpack.c.h.b16 %v252
    %v3457 = vunpack.c.l.b16 %v253
    %v3458 = vunpack.c.h.b16 %v253
    %v3459 = vunpack.c.l.b16 %v254
    %v3460 = vunpack.c.h.b16 %v254
    %v3461 = vunpack.c.l.b16 %v255
    %v3462 = vunpack.c.h.b16 %v255
    %v3463 = vunpack.c.l.b16 %v256
    %v3464 = vunpack.c.h.b16 %v256
    %v3465 = vunpack.c.l.b16 %v257
    %v3466 = vunpack.c.h.b16 %v257
    %v3467 = vunpack.c.l.b16 %v258
    %v3468 = vunpack.c.h.b16 %v258
    %v3469 = vunpack.c.l.b16 %v259
    %v3470 = vunpack.c.h.b16 %v259
    %v3471 = vunpack.c.l.b16 %v260
    %v3472 = vunpack.c.h.b16 %v260
    %v3473 = vunpack.c.l.b16 %v261
    %v3474 = vunpack.c.h.b16 %v261
    %v3475 = vunpack.c.l.b16 %v262
    %v3476 = vunpack.c.h.b16 %v262
    %v3477 = vunpack.c.l.b16 %v263
    %v3478 = vunpack.c.h.b16 %v263
    %v3479 = vunpack.c.l.b16 %v264
    %v3480 = vunpack.c.h.b16 %v264
    %v3481 = vunpack.c.l.b16 %v265
    %v3482 = vunpack.c.h.b16 %v265
    %v3483 = vunpack.c.l.b16 %v266
    %v3484 = vunpack.c.h.b16 %v266
    %v3485 = vunpack.c.l.b16 %v267
    %v3486 = vunpack.c.h.b16 %v267
    %v3487 = vunpack.c.l.b16 %v268
    %v3488 = vunpack.c.h.b16 %v268
    %v3489 = vunpack.c.l.b16 %v269
    %v3490 = vunpack.c.h.b16 %v269
    %v3491 = vunpack.c.l.b16 %v270
    %v3492 = vunpack.c.h.b16 %v270
    %v3493 = vunpack.c.l.b16 %v271
    %v3494 = vunpack.c.h.b16 %v271
    %v3495 = vunpack.c.l.b16 %v272
    %v3496 = vunpack.c.h.b16 %v272
    %v3497 = vunpack.c.l.b16 %v273
    %v3498 = vunpack.c.h.b16 %v273
    %v3499 = vunpack.c.l.b16 %v274
    %v3500 = vunpack.c.h.b16 %v274
    %v3501 = vunpack.c.l.b16 %v275
    %v3502 = vunpack.c.h.b16 %v275
    %v3503 = vunpack.c.l.b16 %v276
    %v3504 = vunpack.c.h.b16 %v276
    %v3505 = vunpack.c.l.b16 %v277
    %v3506 = vunpack.c.h.b16 %v277
    %v3507 = vunpack.c.l.b16 %v278
    %v3508 = vunpack.c.h.b16 %v278
    %v3509 = vunpack.c.l.b16 %v279
    %v3510 = vunpack.c.h.b16 %v279
    %v3511 = vunpack.c.l.b16 %v280
    %v3512 = vunpack.c.h.b16 %v280
    %v3513 = vunpack.c.l.b16 %v281
    %v3514 = vunpack.c.h.b16 %v281
    %v3515 = vunpack.c.l.b16 %v282
    %v3516 = vunpack.c.h.b16 %v282
    %v3517 = vunpack.c.l.b16 %v283
    %v3518 = vunpack.c.h.b16 %v283
    %v3519 = vunpack.c.l.b16 %v284
    %v3520 = vunpack.c.h.b16 %v284
    %v3521 = vunpack.c.l.b16 %v285
    %v3522 = vunpack.c.h.b16 %v285
    %v3523 = vunpack.c.l.b16 %v286
    %v3524 = vunpack.c.h.b16 %v286
    %v3525 = vunpack.c.l.b16 %v287
    %v3526 = vunpack.c.h.b16 %v287
    %v3527 = vunpack.c.l.b16 %v288
    %v3528 = vunpack.c.h.b16 %v288
    %v3529 = vunpack.c.l.b16 %v289
    %v3530 = vunpack.c.h.b16 %v289
    %v3531 = vunpack.c.l.b16 %v290
    %v3532 = vunpack.c.h.b16 %v290
    %v3533 = vunpack.c.l.b16 %v291
    %v3534 = vunpack.c.h.b16 %v291
    %v3535 = vunpack.c.l.b16 %v292
    %v3536 = vunpack.c.h.b16 %v292
    %v3537 = vunpack.c.l.b16 %v293
    %v3538 = vunpack.c.h.b16 %v293
    %v3539 = vunpack.c.l.b16 %v294
    %v3540 = vunpack.c.h.b16 %v294
    %v3541 = vunpack.c.l.b16 %v295
    %v3542 = vunpack.c.h.b16 %v295
    %v3543 = vunpack.c.l.b16 %v296
    %v3544 = vunpack.c.h.b16 %v296
    %v3545 = vunpack.c.l.b16 %v297
    %v3546 = vunpack.c.h.b16 %v297
    %v3547 = vunpack.c.l.b16 %v298
    %v3548 = vunpack.c.h.b16 %v298
    %v3549 = vunpack.c.l.b16 %v299
    %v3550 = vunpack.c.h.b16 %v299
    %v3551 = vunpack.c.l.b16 %v300
    %v3552 = vunpack.c.h.b16 %v300
    %v3553 = vunpack.c.l.b16 %v301
    %v3554 = vunpack.c.h.b16 %v301
    %v3555 = vunpack.c.l.b16 %v302
    %v3556 = vunpack.c.h.b16 %v302
    %v3557 = vunpack.c.l.b16 %v303
    %v3558 = vunpack.c.h.b16 %v303
    %v3559 = vunpack.c.l.b16 %v304
    %v3560 = vunpack.c.h.b16 %v304
    %v3561 = vunpack.c.l.b16 %v305
    %v3562 = vunpack.c.h.b16 %v305
    %v3563 = vunpack.c.l.b16 %v306
    %v3564 = vunpack.c.h.b16 %v306
    %v3565 = vunpack.c.l.b16 %v307
    %v3566 = vunpack.c.h.b16 %v307
    %v3567 = vunpack.c.l.b16 %v308
    %v3568 = vunpack.c.h.b16 %v308
    %v3569 = vunpack.c.l.b16 %v309
    %v3570 = vunpack.c.h.b16 %v309
    %v3571 = vunpack.c.l.b16 %v310
    %v3572 = vunpack.c.h.b16 %v310
    %v3573 = vunpack.c.l.b16 %v311
    %v3574 = vunpack.c.h.b16 %v311
    %v3575 = vunpack.c.l.b16 %v312
    %v3576 = vunpack.c.h.b16 %v312
    %v3577 = vunpack.c.l.b16 %v313
    %v3578 = vunpack.c.h.b16 %v313
    %v3579 = vunpack.c.l.b16 %v314
    %v3580 = vunpack.c.h.b16 %v314
    %v3581 = vunpack.c.l.b16 %v315
    %v3582 = vunpack.c.h.b16 %v315
    %v3583 = vunpack.c.l.b16 %v316
    %v3584 = vunpack.c.h.b16 %v316
    %v3585 = vunpack.c.l.b16 %v317
    %v3586 = vunpack.c.h.b16 %v317
    %v3587 = vunpack.c.l.b16 %v318
    %v3588 = vunpack.c.h.b16 %v318
    %v3589 = vunpack.c.l.b16 %v319
    %v3590 = vunpack.c.h.b16 %v319
    %v3591 = vunpack.c.l.b16 %v320
    %v3592 = vunpack.c.h.b16 %v320
    %v3593 = vunpack.c.l.b16 %v321
    %v3594 = vunpack.c.h.b16 %v321
    %v3595 = vunpack.c.l.b16 %v322
    %v3596 = vunpack.c.h.b16 %v322
    %v3597 = vunpack.c.l.b16 %v323
    %v3598 = vunpack.c.h.b16 %v323
    %v3599 = vunpack.c.l.b16 %v324
    %v3600 = vunpack.c.h.b16 %v324
    %v3601 = vunpack.c.l.b16 %v325
    %v3602 = vunpack.c.h.b16 %v325
    %v3603 = vunpack.c.l.b16 %v326
    %v3604 = vunpack.c.h.b16 %v326
    %v3605 = vunpack.c.l.b16 %v327
    %v3606 = vunpack.c.h.b16 %v327
    %v3607 = vunpack.c.l.b16 %v328
    %v3608 = vunpack.c.h.b16 %v328
    %v3609 = vunpack.c.l.b16 %v329
    %v3610 = vunpack.c.h.b16 %v329
    %v3611 = vunpack.c.l.b16 %v330
    %v3612 = vunpack.c.h.b16 %v330
    %v3613 = vunpack.c.l.b16 %v331
    %v3614 = vunpack.c.h.b16 %v331
    %v3615 = vunpack.c.l.b16 %v332
    %v3616 = vunpack.c.h.b16 %v332
    %v3617 = vunpack.c.l.b16 %v333
    %v3618 = vunpack.c.h.b16 %v333
    %v3619 = vunpack.c.l.b16 %v334
    %v3620 = vunpack.c.h.b16 %v334
    %v3621 = vunpack.c.l.b16 %v335
    %v3622 = vunpack.c.h.b16 %v335
    %v3623 = vunpack.c.l.b16 %v336
    %v3624 = vunpack.c.h.b16 %v336
    %v3625 = vunpack.c.l.b16 %v337
    %v3626 = vunpack.c.h.b16 %v337
    %v3627 = vunpack.c.l.b16 %v338
    %v3628 = vunpack.c.h.b16 %v338
    %v3629 = vunpack.c.l.b16 %v339
    %v3630 = vunpack.c.h.b16 %v339
    %v3631 = vunpack.c.l.b16 %v340
    %v3632 = vunpack.c.h.b16 %v340
    %v3633 = vunpack.c.l.b16 %v341
    %v3634 = vunpack.c.h.b16 %v341
    %v3635 = vunpack.c.l.b16 %v342
    %v3636 = vunpack.c.h.b16 %v342
    %v3637 = vunpack.c.l.b16 %v343
    %v3638 = vunpack.c.h.b16 %v343
    %v3639 = vunpack.c.l.b16 %v344
    %v3640 = vunpack.c.h.b16 %v344
    %v3641 = vunpack.c.l.b16 %v345
    %v3642 = vunpack.c.h.b16 %v345
    %v3643 = vunpack.c.l.b16 %v346
    %v3644 = vunpack.c.h.b16 %v346
    %v3645 = vunpack.c.l.b16 %v347
    %v3646 = vunpack.c.h.b16 %v347
    %v3647 = vunpack.c.l.b16 %v348
    %v3648 = vunpack.c.h.b16 %v348
    %v3649 = vunpack.c.l.b16 %v349
    %v3650 = vunpack.c.h.b16 %v349
    %v3651 = vunpack.c.l.b16 %v350
    %v3652 = vunpack.c.h.b16 %v350
    %v3653 = vunpack.c.l.b16 %v351
    %v3654 = vunpack.c.h.b16 %v351
    %v3655 = vunpack.c.l.b16 %v352
    %v3656 = vunpack.c.h.b16 %v352
    %v3657 = vunpack.c.l.b16 %v353
    %v3658 = vunpack.c.h.b16 %v353
    %v3659 = vunpack.c.l.b16 %v354
    %v3660 = vunpack.c.h.b16 %v354
    %v3661 = vunpack.c.l.b16 %v355
    %v3662 = vunpack.c.h.b16 %v355
    %v3663 = vunpack.c.l.b16 %v356
    %v3664 = vunpack.c.h.b16 %v356
    %v3665 = vunpack.c.l.b16 %v357
    %v3666 = vunpack.c.h.b16 %v357
    %v3667 = vunpack.c.l.b16 %v358
    %v3668 = vunpack.c.h.b16 %v358
    %v3669 = vunpack.c.l.b16 %v359
    %v3670 = vunpack.c.h.b16 %v359
    %v3671 = vunpack.c.l.b16 %v360
    %v3672 = vunpack.c.h.b16 %v360
    %v3673 = vunpack.c.l.b16 %v361
    %v3674 = vunpack.c.h.b16 %v361
    %v3675 = vunpack.c.l.b16 %v362
    %v3676 = vunpack.c.h.b16 %v362
    %v3677 = vunpack.c.l.b16 %v363
    %v3678 = vunpack.c.h.b16 %v363
    %v3679 = vunpack.c.l.b16 %v364
    %v3680 = vunpack.c.h.b16 %v364
    %v3681 = vunpack.c.l.b16 %v365
    %v3682 = vunpack.c.h.b16 %v365
    %v3683 = vunpack.c.l.b16 %v366
    %v3684 = vunpack.c.h.b16 %v366
    %v3685 = vunpack.c.l.b16 %v367
    %v3686 = vunpack.c.h.b16 %v367
    %v3687 = vunpack.c.l.b16 %v368
    %v3688 = vunpack.c.h.b16 %v368
    %v3689 = vunpack.c.l.b16 %v369
    %v3690 = vunpack.c.h.b16 %v369
    %v3691 = vunpack.c.l.b16 %v370
    %v3692 = vunpack.c.h.b16 %v370
    %v3693 = vunpack.c.l.b16 %v371
    %v3694 = vunpack.c.h.b16 %v371
    %v3695 = vunpack.c.l.b16 %v372
    %v3696 = vunpack.c.h.b16 %v372
    %v3697 = vunpack.c.l.b16 %v373
    %v3698 = vunpack.c.h.b16 %v373
    %v3699 = vunpack.c.l.b16 %v374
    %v3700 = vunpack.c.h.b16 %v374
    %v3701 = vunpack.c.l.b16 %v375
    %v3702 = vunpack.c.h.b16 %v375
    %v3703 = vunpack.c.l.b16 %v376
    %v3704 = vunpack.c.h.b16 %v376
    %v3705 = vunpack.c.l.b16 %v377
    %v3706 = vunpack.c.h.b16 %v377
    %v3707 = vunpack.c.l.b16 %v378
    %v3708 = vunpack.c.h.b16 %v378
    %v3709 = vunpack.c.l.b16 %v379
    %v3710 = vunpack.c.h.b16 %v379
    %v3711 = vunpack.c.l.b16 %v380
    %v3712 = vunpack.c.h.b16 %v380
    %v3713 = vunpack.c.l.b16 %v381
    %v3714 = vunpack.c.h.b16 %v381
    %v3715 = vunpack.c.l.b16 %v382
    %v3716 = vunpack.c.h.b16 %v382
    %v3717 = vunpack.c.l.b16 %v383
    %v3718 = vunpack.c.h.b16 %v383
    %v3719 = vunpack.c.l.b16 %v384
    %v3720 = vunpack.c.h.b16 %v384
    %v3721 = vunpack.c.l.b16 %v385
    %v3722 = vunpack.c.h.b16 %v385
    %v3723 = vunpack.c.l.b16 %v386
    %v3724 = vunpack.c.h.b16 %v386
    %v3725 = vunpack.c.l.b16 %v387
    %v3726 = vunpack.c.h.b16 %v387
    %v3727 = vunpack.c.l.b16 %v388
    %v3728 = vunpack.c.h.b16 %v388
    %v3729 = vunpack.c.l.b16 %v389
    %v3730 = vunpack.c.h.b16 %v389
    %v3731 = vunpack.c.l.b16 %v390
    %v3732 = vunpack.c.h.b16 %v390
    %v3733 = vunpack.c.l.b16 %v391
    %v3734 = vunpack.c.h.b16 %v391
    %v3735 = vunpack.c.l.b16 %v392
    %v3736 = vunpack.c.h.b16 %v392
    %v3737 = vunpack.c.l.b16 %v393
    %v3738 = vunpack.c.h.b16 %v393
    %v3739 = vunpack.c.l.b16 %v394
    %v3740 = vunpack.c.h.b16 %v394
    %v3741 = vunpack.c.l.b16 %v395
    %v3742 = vunpack.c.h.b16 %v395
    %v3743 = vunpack.c.l.b16 %v396
    %v3744 = vunpack.c.h.b16 %v396
    %v3745 = vunpack.c.l.b16 %v397
    %v3746 = vunpack.c.h.b16 %v397
    %v3747 = vunpack.c.l.b16 %v398
    %v3748 = vunpack.c.h.b16 %v398
    %v3749 = vunpack.c.l.b16 %v399
    %v3750 = vunpack.c.h.b16 %v399
    %v3751 = vunpack.c.l.b16 %v400
    %v3752 = vunpack.c.h.b16 %v400
    %v3753 = vunpack.c.l.b16 %v401
    %v3754 = vunpack.c.h.b16 %v401
    %v3755 = vunpack.c.l.b16 %v402
    %v3756 = vunpack.c.h.b16 %v402
    %v3757 = vunpack.c.l.b16 %v403
    %v3758 = vunpack.c.h.b16 %v403
    %v3759 = vunpack.c.l.b16 %v404
    %v3760 = vunpack.c.h.b16 %v404
    %v3761 = vunpack.c.l.b16 %v405
    %v3762 = vunpack.c.h.b16 %v405
    %v3763 = vunpack.c.l.b16 %v406
    %v3764 = vunpack.c.h.b16 %v406
    %v3765 = vunpack.c.l.b16 %v407
    %v3766 = vunpack.c.h.b16 %v407
    %v3767 = vunpack.c.l.b16 %v408
    %v3768 = vunpack.c.h.b16 %v408
    %v3769 = vunpack.c.l.b16 %v409
    %v3770 = vunpack.c.h.b16 %v409
    %v3771 = vunpack.c.l.b16 %v410
    %v3772 = vunpack.c.h.b16 %v410
    %v3773 = vunpack.c.l.b16 %v411
    %v3774 = vunpack.c.h.b16 %v411
    %v3775 = vunpack.c.l.b16 %v412
    %v3776 = vunpack.c.h.b16 %v412
    %v3777 = vunpack.c.l.b16 %v413
    %v3778 = vunpack.c.h.b16 %v413
    %v3779 = vunpack.c.l.b16 %v414
    %v3780 = vunpack.c.h.b16 %v414
    %v3781 = vunpack.c.l.b16 %v415
    %v3782 = vunpack.c.h.b16 %v415
    %v3783 = vunpack.c.l.b16 %v416
    %v3784 = vunpack.c.h.b16 %v416
    %v3785 = vunpack.c.l.b16 %v417
    %v3786 = vunpack.c.h.b16 %v417
    %v3787 = vunpack.c.l.b16 %v418
    %v3788 = vunpack.c.h.b16 %v418
    %v3789 = vunpack.c.l.b16 %v419
    %v3790 = vunpack.c.h.b16 %v419
    %v3791 = vunpack.c.l.b16 %v420
    %v3792 = vunpack.c.h.b16 %v420
    %v3793 = vunpack.c.l.b16 %v421
    %v3794 = vunpack.c.h.b16 %v421
    %v3795 = vunpack.c.l.b16 %v422
    %v3796 = vunpack.c.h.b16 %v422
    %v3797 = vunpack.c.l.b16 %v423
    %v3798 = vunpack.c.h.b16 %v423
    %v3799 = vunpack.c.l.b16 %v424
    %v3800 = vunpack.c.h.b16 %v424
    %v3801 = vunpack.c.l.b16 %v425
    %v3802 = vunpack.c.h.b16 %v425
    %v3803 = vunpack.c.l.b16 %v426
    %v3804 = vunpack.c.h.b16 %v426
    %v3805 = vunpack.c.l.b16 %v427
    %v3806 = vunpack.c.h.b16 %v427
    %v3807 = vunpack.c.l.b16 %v428
    %v3808 = vunpack.c.h.b16 %v428
    %v3809 = vunpack.c.l.b16 %v429
    %v3810 = vunpack.c.h.b16 %v429
    %v3811 = vunpack.c.l.b16 %v430
    %v3812 = vunpack.c.h.b16 %v430
    %v3813 = vunpack.c.l.b16 %v431
    %v3814 = vunpack.c.h.b16 %v431
    %v3815 = vunpack.c.l.b16 %v432
    %v3816 = vunpack.c.h.b16 %v432
    %v3817 = vunpack.c.l.b16 %v433
    %v3818 = vunpack.c.h.b16 %v433
    %v3819 = vunpack.c.l.b16 %v434
    %v3820 = vunpack.c.h.b16 %v434
    %v3821 = vunpack.c.l.b16 %v435
    %v3822 = vunpack.c.h.b16 %v435
    %v3823 = vunpack.c.l.b16 %v436
    %v3824 = vunpack.c.h.b16 %v436
    %v3825 = vunpack.c.l.b16 %v437
    %v3826 = vunpack.c.h.b16 %v437
    %v3827 = vunpack.c.l.b16 %v438
    %v3828 = vunpack.c.h.b16 %v438
    %v3829 = vunpack.c.l.b16 %v439
    %v3830 = vunpack.c.h.b16 %v439
    %v3831 = vunpack.c.l.b16 %v440
    %v3832 = vunpack.c.h.b16 %v440
    %v3833 = vunpack.c.l.b16 %v441
    %v3834 = vunpack.c.h.b16 %v441
    %v3835 = vunpack.c.l.b16 %v442
    %v3836 = vunpack.c.h.b16 %v442
    %v3837 = vunpack.c.l.b16 %v443
    %v3838 = vunpack.c.h.b16 %v443
    %v3839 = vunpack.c.l.b16 %v444
    %v3840 = vunpack.c.h.b16 %v444
    %v3841 = vunpack.c.l.b16 %v445
    %v3842 = vunpack.c.h.b16 %v445
    %v3843 = vunpack.c.l.b16 %v446
    %v3844 = vunpack.c.h.b16 %v446
    %v3845 = vunpack.c.l.b16 %v447
    %v3846 = vunpack.c.h.b16 %v447
    %v3847 = vunpack.c.l.b16 %v448
    %v3848 = vunpack.c.h.b16 %v448
    %v3849 = vunpack.c.l.b16 %v449
    %v3850 = vunpack.c.h.b16 %v449
    %v3851 = vunpack.c.l.b16 %v450
    %v3852 = vunpack.c.h.b16 %v450
    %v3853 = vunpack.c.l.b16 %v451
    %v3854 = vunpack.c.h.b16 %v451
    %v3855 = vunpack.c.l.b16 %v452
    %v3856 = vunpack.c.h.b16 %v452
    %v3857 = vunpack.c.l.b16 %v453
    %v3858 = vunpack.c.h.b16 %v453
    %v3859 = vunpack.c.l.b16 %v454
    %v3860 = vunpack.c.h.b16 %v454
    %v3861 = vunpack.c.l.b16 %v455
    %v3862 = vunpack.c.h.b16 %v455
    %v3863 = vunpack.c.l.b16 %v456
    %v3864 = vunpack.c.h.b16 %v456
    %v3865 = vunpack.c.l.b16 %v457
    %v3866 = vunpack.c.h.b16 %v457
    %v3867 = vunpack.c.l.b16 %v458
    %v3868 = vunpack.c.h.b16 %v458
    %v3869 = vunpack.c.l.b16 %v459
    %v3870 = vunpack.c.h.b16 %v459
    %v3871 = vunpack.c.l.b16 %v460
    %v3872 = vunpack.c.h.b16 %v460
    %v3873 = vunpack.c.l.b16 %v461
    %v3874 = vunpack.c.h.b16 %v461
    %v3875 = vunpack.c.l.b16 %v462
    %v3876 = vunpack.c.h.b16 %v462
    %v3877 = vunpack.c.l.b16 %v463
    %v3878 = vunpack.c.h.b16 %v463
    %v3879 = vunpack.c.l.b16 %v464
    %v3880 = vunpack.c.h.b16 %v464
    %v3881 = vunpack.c.l.b16 %v465
    %v3882 = vunpack.c.h.b16 %v465
    %v3883 = vunpack.c.l.b16 %v466
    %v3884 = vunpack.c.h.b16 %v466
    %v3885 = vunpack.c.l.b16 %v467
    %v3886 = vunpack.c.h.b16 %v467
    %v3887 = vunpack.c.l.b16 %v468
    %v3888 = vunpack.c.h.b16 %v468
    %v3889 = vunpack.c.l.b16 %v469
    %v3890 = vunpack.c.h.b16 %v469
    %v3891 = vunpack.c.l.b16 %v470
    %v3892 = vunpack.c.h.b16 %v470
    %v3893 = vunpack.c.l.b16 %v471
    %v3894 = vunpack.c.h.b16 %v471
    %v3895 = vunpack.c.l.b16 %v472
    %v3896 = vunpack.c.h.b16 %v472
    %v3897 = vunpack.c.l.b16 %v473
    %v3898 = vunpack.c.h.b16 %v473
    %v3899 = vunpack.c.l.b16 %v474
    %v3900 = vunpack.c.h.b16 %v474
    %v3901 = vunpack.c.l.b16 %v475
    %v3902 = vunpack.c.h.b16 %v475
    %v3903 = vunpack.c.l.b16 %v476
    %v3904 = vunpack.c.h.b16 %v476
    %v3905 = vunpack.c.l.b16 %v477
    %v3906 = vunpack.c.h.b16 %v477
    %v3907 = vunpack.c.l.b16 %v478
    %v3908 = vunpack.c.h.b16 %v478
    %v3909 = vunpack.c.l.b16 %v479
    %v3910 = vunpack.c.h.b16 %v479
    %v3911 = vunpack.c.l.b16 %v480
    %v3912 = vunpack.c.h.b16 %v480
    %v3913 = vunpack.c.l.b16 %v481
    %v3914 = vunpack.c.h.b16 %v481
    %v3915 = vunpack.c.l.b16 %v482
    %v3916 = vunpack.c.h.b16 %v482
    %v3917 = vunpack.c.l.b16 %v483
    %v3918 = vunpack.c.h.b16 %v483
    %v3919 = vunpack.c.l.b16 %v484
    %v3920 = vunpack.c.h.b16 %v484
    %v3921 = vunpack.c.l.b16 %v485
    %v3922 = vunpack.c.h.b16 %v485
    %v3923 = vunpack.c.l.b16 %v486
    %v3924 = vunpack.c.h.b16 %v486
    %v3925 = vunpack.c.l.b16 %v487
    %v3926 = vunpack.c.h.b16 %v487
    %v3927 = vunpack.c.l.b16 %v488
    %v3928 = vunpack.c.h.b16 %v488
    %v3929 = vunpack.c.l.b16 %v489
    %v3930 = vunpack.c.h.b16 %v489
    %v3931 = vunpack.c.l.b16 %v490
    %v3932 = vunpack.c.h.b16 %v490
    %v3933 = vunpack.c.l.b16 %v491
    %v3934 = vunpack.c.h.b16 %v491
    %v3935 = vunpack.c.l.b16 %v492
    %v3936 = vunpack.c.h.b16 %v492
    %v3937 = vunpack.c.l.b16 %v493
    %v3938 = vunpack.c.h.b16 %v493
    %v3939 = vunpack.c.l.b16 %v494
    %v3940 = vunpack.c.h.b16 %v494
    %v3941 = vunpack.c.l.b16 %v495
    %v3942 = vunpack.c.h.b16 %v495
    %v3943 = vunpack.c.l.b16 %v496
    %v3944 = vunpack.c.h.b16 %v496
    %v3945 = vunpack.c.l.b16 %v497
    %v3946 = vunpack.c.h.b16 %v497
    %v3947 = vunpack.c.l.b16 %v498
    %v3948 = vunpack.c.h.b16 %v498
    %v3949 = vunpack.c.l.b16 %v499
    %v3950 = vunpack.c.h.b16 %v499
    %v3951 = vunpack.c.l.b16 %v500
    %v3952 = vunpack.c.h.b16 %v500
    %v3953 = vunpack.c.l.b16 %v501
    %v3954 = vunpack.c.h.b16 %v501
    %v3955 = vunpack.c.l.b16 %v502
    %v3956 = vunpack.c.h.b16 %v502
    %v3957 = vunpack.c.l.b16 %v503
    %v3958 = vunpack.c.h.b16 %v503
    %v3959 = vunpack.c.l.b16 %v504
    %v3960 = vunpack.c.h.b16 %v504
    %v3961 = vunpack.c.l.b16 %v505
    %v3962 = vunpack.c.h.b16 %v505
    %v3963 = vunpack.c.l.b16 %v506
    %v3964 = vunpack.c.h.b16 %v506
    %v3965 = vunpack.c.l.b16 %v507
    %v3966 = vunpack.c.h.b16 %v507
    %v3967 = vunpack.c.l.b16 %v508
    %v3968 = vunpack.c.h.b16 %v508
    %v3969 = vunpack.c.l.b16 %v509
    %v3970 = vunpack.c.h.b16 %v509
    %v3971 = vunpack.c.l.b16 %v510
    %v3972 = vunpack.c.h.b16 %v510
    %v3973 = vunpack.c.l.b16 %v511
    %v3974 = vunpack.c.h.b16 %v511
    %v3975 = vunpack.c.l.b16 %v512
    %v3976 = vunpack.c.h.b16 %v512
    %v3977 = vunpack.c.l.b16 %v513
    %v3978 = vunpack.c.h.b16 %v513
    %v3979 = vunpack.c.l.b16 %v514
    %v3980 = vunpack.c.h.b16 %v514
    %v3981 = vunpack.c.l.b16 %v515
    %v3982 = vunpack.c.h.b16 %v515
    %v3983 = vunpack.c.l.b16 %v516
    %v3984 = vunpack.c.h.b16 %v516
    %v3985 = vunpack.c.l.b16 %v517
    %v3986 = vunpack.c.h.b16 %v517
    %v3987 = vunpack.c.l.b16 %v518
    %v3988 = vunpack.c.h.b16 %v518
    %v3989 = vunpack.c.l.b16 %v519
    %v3990 = vunpack.c.h.b16 %v519
    %v3991 = vunpack.c.l.b16 %v520
    %v3992 = vunpack.c.h.b16 %v520
    %v3993 = vunpack.c.l.b16 %v521
    %v3994 = vunpack.c.h.b16 %v521
    %v3995 = vunpack.c.l.b16 %v522
    %v3996 = vunpack.c.h.b16 %v522
    %v3997 = vunpack.c.l.b16 %v523
    %v3998 = vunpack.c.h.b16 %v523
    %v3999 = vunpack.c.l.b16 %v524
    %v4000 = vunpack.c.h.b16 %v524
    %v4001 = vunpack.c.l.b16 %v525
    %v4002 = vunpack.c.h.b16 %v525
    %v4003 = vunpack.c.l.b16 %v526
    %v4004 = vunpack.c.h.b16 %v526
    %v4005 = vunpack.c.l.b16 %v527
    %v4006 = vunpack.c.h.b16 %v527
    %v4007 = vunpack.c.l.b16 %v528
    %v4008 = vunpack.c.h.b16 %v528
    %v4009 = vunpack.c.l.b16 %v529
    %v4010 = vunpack.c.h.b16 %v529
    %v4011 = vunpack.c.l.b16 %v530
    %v4012 = vunpack.c.h.b16 %v530
    %v4013 = vunpack.c.l.b16 %v531
    %v4014 = vunpack.c.h.b16 %v531
    %v4015 = vunpack.c.l.b16 %v532
    %v4016 = vunpack.c.h.b16 %v532
    %v4017 = vunpack.c.l.b16 %v533
    %v4018 = vunpack.c.h.b16 %v533
    %v4019 = vunpack.c.l.b16 %v534
    %v4020 = vunpack.c.h.b16 %v534
    %v4021 = vunpack.c.l.b16 %v535
    %v4022 = vunpack.c.h.b16 %v535
    %v4023 = vunpack.c.l.b16 %v536
    %v4024 = vunpack.c.h.b16 %v536
    %v4025 = vunpack.c.l.b16 %v537
    %v4026 = vunpack.c.h.b16 %v537
    %v4027 = vunpack.c.l.b16 %v538
    %v4028 = vunpack.c.h.b16 %v538
    %v4029 = vunpack.c.l.b16 %v539
    %v4030 = vunpack.c.h.b16 %v539
    %v4031 = vunpack.c.l.b16 %v540
    %v4032 = vunpack.c.h.b16 %v540
    %v4033 = vunpack.c.l.b16 %v541
    %v4034 = vunpack.c.h.b16 %v541
    %v4035 = vunpack.c.l.b16 %v542
    %v4036 = vunpack.c.h.b16 %v542
    %v4037 = vunpack.c.l.b16 %v543
    %v4038 = vunpack.c.h.b16 %v543
    %v4039 = vunpack.c.l.b16 %v544
    %v4040 = vunpack.c.h.b16 %v544
    %v4041 = vunpack.c.l.b16 %v545
    %v4042 = vunpack.c.h.b16 %v545
    %v4043 = vunpack.c.l.b16 %v546
    %v4044 = vunpack.c.h.b16 %v546
    %v4045 = vunpack.c.l.b16 %v547
    %v4046 = vunpack.c.h.b16 %v547
    %v4047 = vunpack.c.l.b16 %v548
    %v4048 = vunpack.c.h.b16 %v548
    %v4049 = vunpack.c.l.b16 %v549
    %v4050 = vunpack.c.h.b16 %v549
    %v4051 = vunpack.c.l.b16 %v550
    %v4052 = vunpack.c.h.b16 %v550
    %v4053 = vunpack.c.l.b16 %v551
    %v4054 = vunpack.c.h.b16 %v551
    %v4055 = vunpack.c.l.b16 %v552
    %v4056 = vunpack.c.h.b16 %v552
    %v4057 = vunpack.c.l.b16 %v553
    %v4058 = vunpack.c.h.b16 %v553
    %v4059 = vunpack.c.l.b16 %v554
    %v4060 = vunpack.c.h.b16 %v554
    %v4061 = vunpack.c.l.b16 %v555
    %v4062 = vunpack.c.h.b16 %v555
    %v4063 = vunpack.c.l.b16 %v556
    %v4064 = vunpack.c.h.b16 %v556
    %v4065 = vunpack.c.l.b16 %v557
    %v4066 = vunpack.c.h.b16 %v557
    %v4067 = vunpack.c.l.b16 %v558
    %v4068 = vunpack.c.h.b16 %v558
    %v4069 = vunpack.c.l.b16 %v559
    %v4070 = vunpack.c.h.b16 %v559
    %v4071 = vunpack.c.l.b16 %v560
    %v4072 = vunpack.c.h.b16 %v560
    %v4073 = vunpack.c.l.b16 %v561
    %v4074 = vunpack.c.h.b16 %v561
    %v4075 = vunpack.c.l.b16 %v562
    %v4076 = vunpack.c.h.b16 %v562
    %v4077 = vunpack.c.l.b16 %v563
    %v4078 = vunpack.c.h.b16 %v563
    %v4079 = vunpack.c.l.b16 %v564
    %v4080 = vunpack.c.h.b16 %v564
    %v4081 = vunpack.c.l.b16 %v565
    %v4082 = vunpack.c.h.b16 %v565
    %v4083 = vunpack.c.l.b16 %v566
    %v4084 = vunpack.c.h.b16 %v566
    %v4085 = vunpack.c.l.b16 %v567
    %v4086 = vunpack.c.h.b16 %v567
    %v4087 = vunpack.c.l.b16 %v568
    %v4088 = vunpack.c.h.b16 %v568
    %v4089 = vunpack.c.l.b16 %v569
    %v4090 = vunpack.c.h.b16 %v569
    %v4091 = vunpack.c.l.b16 %v570
    %v4092 = vunpack.c.h.b16 %v570
    %v4093 = vunpack.c.l.b16 %v571
    %v4094 = vunpack.c.h.b16 %v571
    %v4095 = vunpack.c.l.b16 %v572
    %v4096 = vunpack.c.h.b16 %v572
    %v4097 = vunpack.c.l.b16 %v573
    %v4098 = vunpack.c.h.b16 %v573
    %v4099 = vunpack.c.l.b16 %v574
    %v4100 = vunpack.c.h.b16 %v574
    %v4101 = vunpack.c.l.b16 %v575
    %v4102 = vunpack.c.h.b16 %v575
    %v4103 = vunpack.c.l.b16 %v576
    %v4104 = vunpack.c.h.b16 %v576
    %v4105 = vunpack.c.l.b16 %v577
    %v4106 = vunpack.c.h.b16 %v577
    %v4107 = vunpack.c.l.b16 %v578
    %v4108 = vunpack.c.h.b16 %v578
    %v4109 = vunpack.c.l.b16 %v579
    %v4110 = vunpack.c.h.b16 %v579
    %v4111 = vunpack.c.l.b16 %v580
    %v4112 = vunpack.c.h.b16 %v580
    %v4113 = vunpack.c.l.b16 %v581
    %v4114 = vunpack.c.h.b16 %v581
    %v4115 = vunpack.c.l.b16 %v582
    %v4116 = vunpack.c.h.b16 %v582
    %v4117 = vunpack.c.l.b16 %v583
    %v4118 = vunpack.c.h.b16 %v583
    %v4119 = vunpack.c.l.b16 %v584
    %v4120 = vunpack.c.h.b16 %v584
    %v4121 = vunpack.c.l.b16 %v585
    %v4122 = vunpack.c.h.b16 %v585
    %v4123 = vunpack.c.l.b16 %v586
    %v4124 = vunpack.c.h.b16 %v586
    %v4125 = vunpack.c.l.b16 %v587
    %v4126 = vunpack.c.h.b16 %v587
    %v4127 = vunpack.c.l.b16 %v588
    %v4128 = vunpack.c.h.b16 %v588
    %v4129 = vunpack.c.l.b16 %v589
    %v4130 = vunpack.c.h.b16 %v589
    %v4131 = vunpack.c.l.b16 %v590
    %v4132 = vunpack.c.h.b16 %v590
    %v4133 = vunpack.c.l.b16 %v591
    %v4134 = vunpack.c.h.b16 %v591
    %v4135 = vunpack.c.l.b16 %v592
    %v4136 = vunpack.c.h.b16 %v592
    %v4137 = vunpack.c.l.b16 %v593
    %v4138 = vunpack.c.h.b16 %v593
    %v4139 = vunpack.c.l.b16 %v594
    %v4140 = vunpack.c.h.b16 %v594
    %v4141 = vunpack.c.l.b16 %v595
    %v4142 = vunpack.c.h.b16 %v595
    %v4143 = vunpack.c.l.b16 %v596
    %v4144 = vunpack.c.h.b16 %v596
    %v4145 = vunpack.c.l.b16 %v597
    %v4146 = vunpack.c.h.b16 %v597
    %v4147 = vunpack.c.l.b16 %v598
    %v4148 = vunpack.c.h.b16 %v598
    %v4149 = vunpack.c.l.b16 %v599
    %v4150 = vunpack.c.h.b16 %v599
    %v4151 = vunpack.c.l.b16 %v600
    %v4152 = vunpack.c.h.b16 %v600
    %v4153 = vunpack.c.l.b16 %v601
    %v4154 = vunpack.c.h.b16 %v601
    %v4155 = vunpack.c.l.b16 %v602
    %v4156 = vunpack.c.h.b16 %v602
    %v4157 = vunpack.c.l.b16 %v603
    %v4158 = vunpack.c.h.b16 %v603
    %v4159 = vunpack.c.l.b16 %v604
    %v4160 = vunpack.c.h.b16 %v604
    %v4161 = vunpack.c.l.b16 %v605
    %v4162 = vunpack.c.h.b16 %v605
    %v4163 = vunpack.c.l.b16 %v606
    %v4164 = vunpack.c.h.b16 %v606
    %v4165 = vunpack.c.l.b16 %v607
    %v4166 = vunpack.c.h.b16 %v607
    %v4167 = vunpack.c.l.b16 %v608
    %v4168 = vunpack.c.h.b16 %v608
    %v4169 = vunpack.c.l.b16 %v609
    %v4170 = vunpack.c.h.b16 %v609
    %v4171 = vunpack.c.l.b16 %v610
    %v4172 = vunpack.c.h.b16 %v610
    %v4173 = vunpack.c.l.b16 %v611
    %v4174 = vunpack.c.h.b16 %v611
    %v4175 = vunpack.c.l.b16 %v612
    %v4176 = vunpack.c.h.b16 %v612
    %v4177 = vunpack.c.l.b16 %v613
    %v4178 = vunpack.c.h.b16 %v613
    %v4179 = vunpack.c.l.b16 %v614
    %v4180 = vunpack.c.h.b16 %v614
    %v4181 = vunpack.c.l.b16 %v615
    %v4182 = vunpack.c.h.b16 %v615
    %v4183 = vunpack.c.l.b16 %v616
    %v4184 = vunpack.c.h.b16 %v616
    %v4185 = vunpack.c.l.b16 %v617
    %v4186 = vunpack.c.h.b16 %v617
    %v4187 = vunpack.c.l.b16 %v618
    %v4188 = vunpack.c.h.b16 %v618
    %v4189 = vunpack.c.l.b16 %v619
    %v4190 = vunpack.c.h.b16 %v619
    %v4191 = vunpack.c.l.b16 %v620
    %v4192 = vunpack.c.h.b16 %v620
    %v4193 = vunpack.c.l.b16 %v621
    %v4194 = vunpack.c.h.b16 %v621
    %v4195 = vunpack.c.l.b16 %v622
    %v4196 = vunpack.c.h.b16 %v622
    %v4197 = vunpack.c.l.b16 %v623
    %v4198 = vunpack.c.h.b16 %v623
    %v4199 = vunpack.c.l.b16 %v624
    %v4200 = vunpack.c.h.b16 %v624
    %v4201 = vunpack.c.l.b16 %v625
    %v4202 = vunpack.c.h.b16 %v625
    %v4203 = vunpack.c.l.b16 %v626
    %v4204 = vunpack.c.h.b16 %v626
    %v4205 = vunpack.c.l.b16 %v627
    %v4206 = vunpack.c.h.b16 %v627
    %v4207 = vunpack.c.l.b16 %v628
    %v4208 = vunpack.c.h.b16 %v628
    %v4209 = vunpack.c.l.b16 %v629
    %v4210 = vunpack.c.h.b16 %v629
    %v4211 = vunpack.c.l.b16 %v630
    %v4212 = vunpack.c.h.b16 %v630
    %v4213 = vunpack.c.l.b16 %v631
    %v4214 = vunpack.c.h.b16 %v631
    %v4215 = vunpack.c.l.b16 %v632
    %v4216 = vunpack.c.h.b16 %v632
    %v4217 = vunpack.c.l.b16 %v633
    %v4218 = vunpack.c.h.b16 %v633
    %v4219 = vunpack.c.l.b16 %v634
    %v4220 = vunpack.c.h.b16 %v634
    %v4221 = vunpack.c.l.b16 %v635
    %v4222 = vunpack.c.h.b16 %v635
    %v4223 = vunpack.c.l.b16 %v636
    %v4224 = vunpack.c.h.b16 %v636
    %v4225 = vunpack.c.l.b16 %v637
    %v4226 = vunpack.c.h.b16 %v637
    %v4227 = vunpack.c.l.b16 %v638
    %v4228 = vunpack.c.h.b16 %v638
    %v4229 = vunpack.c.l.b16 %v639
    %v4230 = vunpack.c.h.b16 %v639
    %v4231 = vunpack.c.l.b16 %v640
    %v4232 = vunpack.c.h.b16 %v640
    %v4233 = vunpack.c.l.b16 %v641
    %v4234 = vunpack.c.h.b16 %v641
    %v4235 = vunpack.c.l.b16 %v642
    %v4236 = vunpack.c.h.b16 %v642
    %v4237 = vunpack.c.l.b16 %v643
    %v4238 = vunpack.c.h.b16 %v643
    %v4239 = vunpack.c.l.b16 %v644
    %v4240 = vunpack.c.h.b16 %v644
    %v4241 = vunpack.c.l.b16 %v645
    %v4242 = vunpack.c.h.b16 %v645
    %v4243 = vunpack.c.l.b16 %v646
    %v4244 = vunpack.c.h.b16 %v646
    %v4245 = vunpack.c.l.b16 %v647
    %v4246 = vunpack.c.h.b16 %v647
    %v4247 = vunpack.c.l.b16 %v648
    %v4248 = vunpack.c.h.b16 %v648
    %v4249 = vunpack.c.l.b16 %v649
    %v4250 = vunpack.c.h.b16 %v649
    %v4251 = vunpack.c.l.b16 %v650
    %v4252 = vunpack.c.h.b16 %v650
    %v4253 = vunpack.c.l.b16 %v651
    %v4254 = vunpack.c.h.b16 %v651
    %v4255 = vunpack.c.l.b16 %v652
    %v4256 = vunpack.c.h.b16 %v652
    %v4257 = vunpack.c.l.b16 %v653
    %v4258 = vunpack.c.h.b16 %v653
    %v4259 = vunpack.c.l.b16 %v654
    %v4260 = vunpack.c.h.b16 %v654
    %v4261 = vunpack.c.l.b16 %v655
    %v4262 = vunpack.c.h.b16 %v655
    %v4263 = vunpack.c.l.b16 %v656
    %v4264 = vunpack.c.h.b16 %v656
    %v4265 = vunpack.c.l.b16 %v657
    %v4266 = vunpack.c.h.b16 %v657
    %v4267 = vunpack.c.l.b16 %v658
    %v4268 = vunpack.c.h.b16 %v658
    %v4269 = vunpack.c.l.b16 %v659
    %v4270 = vunpack.c.h.b16 %v659
    %v4271 = vunpack.c.l.b16 %v660
    %v4272 = vunpack.c.h.b16 %v660
    %v4273 = vunpack.c.l.b16 %v661
    %v4274 = vunpack.c.h.b16 %v661
    %v4275 = vunpack.c.l.b16 %v662
    %v4276 = vunpack.c.h.b16 %v662
    %v4277 = vunpack.c.l.b16 %v663
    %v4278 = vunpack.c.h.b16 %v663
    %v4279 = vunpack.c.l.b16 %v664
    %v4280 = vunpack.c.h.b16 %v664
    %v4281 = vunpack.c.l.b16 %v665
    %v4282 = vunpack.c.h.b16 %v665
    %v4283 = vunpack.c.l.b16 %v666
    %v4284 = vunpack.c.h.b16 %v666
    %v4285 = vunpack.c.l.b16 %v667
    %v4286 = vunpack.c.h.b16 %v667
    %v4287 = vunpack.c.l.b16 %v668
    %v4288 = vunpack.c.h.b16 %v668
    %v4289 = vunpack.c.l.b16 %v669
    %v4290 = vunpack.c.h.b16 %v669
    %v4291 = vunpack.c.l.b16 %v670
    %v4292 = vunpack.c.h.b16 %v670
    %v4293 = vunpack.c.l.b16 %v671
    %v4294 = vunpack.c.h.b16 %v671
    %v4295 = vunpack.c.l.b16 %v672
    %v4296 = vunpack.c.h.b16 %v672
    %v4297 = vunpack.c.l.b16 %v673
    %v4298 = vunpack.c.h.b16 %v673
    %v4299 = vunpack.c.l.b16 %v674
    %v4300 = vunpack.c.h.b16 %v674
    %v4301 = vunpack.c.l.b16 %v675
    %v4302 = vunpack.c.h.b16 %v675
    %v4303 = vunpack.c.l.b16 %v676
    %v4304 = vunpack.c.h.b16 %v676
    %v4305 = vunpack.c.l.b16 %v677
    %v4306 = vunpack.c.h.b16 %v677
    %v4307 = vunpack.c.l.b16 %v678
    %v4308 = vunpack.c.h.b16 %v678
    %v4309 = vunpack.c.l.b16 %v679
    %v4310 = vunpack.c.h.b16 %v679
    %v4311 = vunpack.c.l.b16 %v680
    %v4312 = vunpack.c.h.b16 %v680
    %v4313 = vunpack.c.l.b16 %v681
    %v4314 = vunpack.c.h.b16 %v681
    %v4315 = vunpack.c.l.b16 %v682
    %v4316 = vunpack.c.h.b16 %v682
    %v4317 = vunpack.c.l.b16 %v683
    %v4318 = vunpack.c.h.b16 %v683
    %v4319 = vunpack.c.l.b16 %v684
    %v4320 = vunpack.c.h.b16 %v684
    %v4321 = vunpack.c.l.b16 %v685
    %v4322 = vunpack.c.h.b16 %v685
    %v4323 = vunpack.c.l.b16 %v686
    %v4324 = vunpack.c.h.b16 %v686
    %v4325 = vunpack.c.l.b16 %v687
    %v4326 = vunpack.c.h.b16 %v687
    %v4327 = vunpack.c.l.b16 %v688
    %v4328 = vunpack.c.h.b16 %v688
    %v4329 = vunpack.c.l.b16 %v689
    %v4330 = vunpack.c.h.b16 %v689
    %v4331 = vunpack.c.l.b16 %v690
    %v4332 = vunpack.c.h.b16 %v690
    %v4333 = vunpack.c.l.b16 %v691
    %v4334 = vunpack.c.h.b16 %v691
    %v4335 = vunpack.c.l.b16 %v692
    %v4336 = vunpack.c.h.b16 %v692
    %v4337 = vunpack.c.l.b16 %v693
    %v4338 = vunpack.c.h.b16 %v693
    %v4339 = vunpack.c.l.b16 %v694
    %v4340 = vunpack.c.h.b16 %v694
    %v4341 = vunpack.c.l.b16 %v695
    %v4342 = vunpack.c.h.b16 %v695
    %v4343 = vunpack.c.l.b16 %v696
    %v4344 = vunpack.c.h.b16 %v696
    %v4345 = vunpack.c.l.b16 %v697
    %v4346 = vunpack.c.h.b16 %v697
    %v4347 = vunpack.c.l.b16 %v698
    %v4348 = vunpack.c.h.b16 %v698
    %v4349 = vunpack.c.l.b16 %v699
    %v4350 = vunpack.c.h.b16 %v699
    %v4351 = vunpack.c.l.b16 %v700
    %v4352 = vunpack.c.h.b16 %v700
    %v4353 = vunpack.c.l.b16 %v701
    %v4354 = vunpack.c.h.b16 %v701
    %v4355 = vunpack.c.l.b16 %v702
    %v4356 = vunpack.c.h.b16 %v702
    %v4357 = vunpack.c.l.b16 %v703
    %v4358 = vunpack.c.h.b16 %v703
    %v4359 = vunpack.c.l.b16 %v704
    %v4360 = vunpack.c.h.b16 %v704
    %v4361 = vunpack.c.l.b16 %v705
    %v4362 = vunpack.c.h.b16 %v705
    %v4363 = vunpack.c.l.b16 %v706
    %v4364 = vunpack.c.h.b16 %v706
    %v4365 = vunpack.c.l.b16 %v707
    %v4366 = vunpack.c.h.b16 %v707
    %v4367 = vunpack.c.l.b16 %v708
    %v4368 = vunpack.c.h.b16 %v708
    %v4369 = vunpack.c.l.b16 %v709
    %v4370 = vunpack.c.h.b16 %v709
    %v4371 = vunpack.c.l.b16 %v710
    %v4372 = vunpack.c.h.b16 %v710
    %v4373 = vunpack.c.l.b16 %v711
    %v4374 = vunpack.c.h.b16 %v711
    %v4375 = vunpack.c.l.b16 %v712
    %v4376 = vunpack.c.h.b16 %v712
    %v4377 = vunpack.c.l.b16 %v713
    %v4378 = vunpack.c.h.b16 %v713
    %v4379 = vunpack.c.l.b16 %v714
    %v4380 = vunpack.c.h.b16 %v714
    %v4381 = vunpack.c.l.b16 %v715
    %v4382 = vunpack.c.h.b16 %v715
    %v4383 = vunpack.c.l.b16 %v716
    %v4384 = vunpack.c.h.b16 %v716
    %v4385 = vunpack.c.l.b16 %v717
    %v4386 = vunpack.c.h.b16 %v717
    %v4387 = vunpack.c.l.b16 %v718
    %v4388 = vunpack.c.h.b16 %v718
    %v4389 = vunpack.c.l.b16 %v719
    %v4390 = vunpack.c.h.b16 %v719
    %v4391 = vunpack.c.l.b16 %v720
    %v4392 = vunpack.c.h.b16 %v720
    %v4393 = vunpack.c.l.b16 %v721
    %v4394 = vunpack.c.h.b16 %v721
    %v4395 = vunpack.c.l.b16 %v722
    %v4396 = vunpack.c.h.b16 %v722
    %v4397 = vunpack.c.l.b16 %v723
    %v4398 = vunpack.c.h.b16 %v723
    %v4399 = vunpack.c.l.b16 %v724
    %v4400 = vunpack.c.h.b16 %v724
    %v4401 = vunpack.c.l.b16 %v725
    %v4402 = vunpack.c.h.b16 %v725
    %v4403 = vunpack.c.l.b16 %v726
    %v4404 = vunpack.c.h.b16 %v726
    %v4405 = vunpack.c.l.b16 %v727
    %v4406 = vunpack.c.h.b16 %v727
    %v4407 = vunpack.c.l.b16 %v728
    %v4408 = vunpack.c.h.b16 %v728
    %v4409 = vunpack.c.l.b16 %v729
    %v4410 = vunpack.c.h.b16 %v729
    %v4411 = vunpack.c.l.b16 %v730
    %v4412 = vunpack.c.h.b16 %v730
    %v4413 = vunpack.c.l.b16 %v731
    %v4414 = vunpack.c.h.b16 %v731
    %v4415 = vunpack.c.l.b16 %v732
    %v4416 = vunpack.c.h.b16 %v732
    %v4417 = vunpack.c.l.b16 %v733
    %v4418 = vunpack.c.h.b16 %v733
    %v4419 = vunpack.c.l.b16 %v734
    %v4420 = vunpack.c.h.b16 %v734
    %v4421 = vunpack.c.l.b16 %v735
    %v4422 = vunpack.c.h.b16 %v735
    %v4423 = vunpack.c.l.b16 %v736
    %v4424 = vunpack.c.h.b16 %v736
    %v4425 = vunpack.c.l.b16 %v737
    %v4426 = vunpack.c.h.b16 %v737
    %v4427 = vunpack.c.l.b16 %v738
    %v4428 = vunpack.c.h.b16 %v738
    %v4429 = vunpack.c.l.b16 %v739
    %v4430 = vunpack.c.h.b16 %v739
    %v4431 = vunpack.c.l.b16 %v740
    %v4432 = vunpack.c.h.b16 %v740
    %v4433 = vunpack.c.l.b16 %v741
    %v4434 = vunpack.c.h.b16 %v741
    %v4435 = vunpack.c.l.b16 %v742
    %v4436 = vunpack.c.h.b16 %v742
    %v4437 = vunpack.c.l.b16 %v743
    %v4438 = vunpack.c.h.b16 %v743
    %v4439 = vunpack.c.l.b16 %v744
    %v4440 = vunpack.c.h.b16 %v744
    %v4441 = vunpack.c.l.b16 %v745
    %v4442 = vunpack.c.h.b16 %v745
    %v4443 = vunpack.c.l.b16 %v746
    %v4444 = vunpack.c.h.b16 %v746
    %v4445 = vunpack.c.l.b16 %v747
    %v4446 = vunpack.c.h.b16 %v747
    %v4447 = vunpack.c.l.b16 %v748
    %v4448 = vunpack.c.h.b16 %v748
    %v4449 = vunpack.c.l.b16 %v749
    %v4450 = vunpack.c.h.b16 %v749
    %v4451 = vunpack.c.l.b16 %v750
    %v4452 = vunpack.c.h.b16 %v750
    %v4453 = vunpack.c.l.b16 %v751
    %v4454 = vunpack.c.h.b16 %v751
    %v4455 = vunpack.c.l.b16 %v752
    %v4456 = vunpack.c.h.b16 %v752
    %v4457 = vunpack.c.l.b16 %v753
    %v4458 = vunpack.c.h.b16 %v753
    %v4459 = vunpack.c.l.b16 %v754
    %v4460 = vunpack.c.h.b16 %v754
    %v4461 = vunpack.c.l.b16 %v755
    %v4462 = vunpack.c.h.b16 %v755
    %v4463 = vunpack.c.l.b16 %v756
    %v4464 = vunpack.c.h.b16 %v756
    %v4465 = vunpack.c.l.b16 %v757
    %v4466 = vunpack.c.h.b16 %v757
    %v4467 = vunpack.c.l.b16 %v758
    %v4468 = vunpack.c.h.b16 %v758
    %v4469 = vunpack.c.l.b16 %v759
    %v4470 = vunpack.c.h.b16 %v759
    %v4471 = vunpack.c.l.b16 %v760
    %v4472 = vunpack.c.h.b16 %v760
    %v4473 = vunpack.c.l.b16 %v761
    %v4474 = vunpack.c.h.b16 %v761
    %v4475 = vunpack.c.l.b16 %v762
    %v4476 = vunpack.c.h.b16 %v762
    %v4477 = vunpack.c.l.b16 %v763
    %v4478 = vunpack.c.h.b16 %v763
    %v4479 = vunpack.c.l.b16 %v764
    %v4480 = vunpack.c.h.b16 %v764
    %v4481 = vunpack.c.l.b16 %v765
    %v4482 = vunpack.c.h.b16 %v765
    %v4483 = vunpack.c.l.b16 %v766
    %v4484 = vunpack.c.h.b16 %v766
    %v4485 = vunpack.c.l.b16 %v767
    %v4486 = vunpack.c.h.b16 %v767
    %v4487 = vunpack.c.l.b16 %v768
    %v4488 = vunpack.c.h.b16 %v768
    %v4489 = vunpack.c.l.b16 %v769
    %v4490 = vunpack.c.h.b16 %v769
    %v4491 = vunpack.c.l.b16 %v770
    %v4492 = vunpack.c.h.b16 %v770
    %v4493 = vunpack.c.l.b16 %v771
    %v4494 = vunpack.c.h.b16 %v771
    %v4495 = vunpack.c.l.b16 %v772
    %v4496 = vunpack.c.h.b16 %v772
    %v4497 = vunpack.c.l.b16 %v773
    %v4498 = vunpack.c.h.b16 %v773
    %v4499 = vunpack.c.l.b16 %v774
    %v4500 = vunpack.c.h.b16 %v774
    %v4501 = vunpack.c.l.b16 %v775
    %v4502 = vunpack.c.h.b16 %v775
    %v4503 = vunpack.c.l.b16 %v776
    %v4504 = vunpack.c.h.b16 %v776
    %v4505 = vunpack.c.l.b16 %v777
    %v4506 = vunpack.c.h.b16 %v777
    %v4507 = vunpack.c.l.b16 %v778
    %v4508 = vunpack.c.h.b16 %v778
    %v4509 = vunpack.c.l.b16 %v779
    %v4510 = vunpack.c.h.b16 %v779
    %v4511 = vunpack.c.l.b16 %v780
    %v4512 = vunpack.c.h.b16 %v780
    %v4513 = vunpack.c.l.b16 %v781
    %v4514 = vunpack.c.h.b16 %v781
    %v4515 = vunpack.c.l.b16 %v782
    %v4516 = vunpack.c.h.b16 %v782
    %v4517 = vunpack.c.l.b16 %v783
    %v4518 = vunpack.c.h.b16 %v783
    %v4519 = vunpack.c.l.b16 %v784
    %v4520 = vunpack.c.h.b16 %v784
    %v4521 = vunpack.c.l.b16 %v785
    %v4522 = vunpack.c.h.b16 %v785
    %v4523 = vunpack.c.l.b16 %v786
    %v4524 = vunpack.c.h.b16 %v786
    %v4525 = vunpack.c.l.b16 %v787
    %v4526 = vunpack.c.h.b16 %v787
    %v4527 = vunpack.c.l.b16 %v788
    %v4528 = vunpack.c.h.b16 %v788
    %v4529 = vunpack.c.l.b16 %v789
    %v4530 = vunpack.c.h.b16 %v789
    %v4531 = vunpack.c.l.b16 %v790
    %v4532 = vunpack.c.h.b16 %v790
    %v4533 = vunpack.c.l.b16 %v791
    %v4534 = vunpack.c.h.b16 %v791
    %v4535 = vunpack.c.l.b16 %v792
    %v4536 = vunpack.c.h.b16 %v792
    %v4537 = vunpack.c.l.b16 %v793
    %v4538 = vunpack.c.h.b16 %v793
    %v4539 = vunpack.c.l.b16 %v794
    %v4540 = vunpack.c.h.b16 %v794
    %v4541 = vunpack.c.l.b16 %v795
    %v4542 = vunpack.c.h.b16 %v795
    %v4543 = vunpack.c.l.b16 %v796
    %v4544 = vunpack.c.h.b16 %v796
    %v4545 = vunpack.c.l.b16 %v797
    %v4546 = vunpack.c.h.b16 %v797
    %v4547 = vunpack.c.l.b16 %v798
    %v4548 = vunpack.c.h.b16 %v798
    %v4549 = vunpack.c.l.b16 %v799
    %v4550 = vunpack.c.h.b16 %v799
    %v4551 = vunpack.c.l.b16 %v800
    %v4552 = vunpack.c.h.b16 %v800
    %v4553 = vunpack.c.l.b16 %v801
    %v4554 = vunpack.c.h.b16 %v801
    %v4555 = vunpack.c.l.b16 %v802
    %v4556 = vunpack.c.h.b16 %v802
    %v4557 = vunpack.c.l.b16 %v803
    %v4558 = vunpack.c.h.b16 %v803
    %v4559 = vunpack.c.l.b16 %v804
    %v4560 = vunpack.c.h.b16 %v804
    %v4561 = vunpack.c.l.b16 %v805
    %v4562 = vunpack.c.h.b16 %v805
    %v4563 = vunpack.c.l.b16 %v806
    %v4564 = vunpack.c.h.b16 %v806
    %v4565 = vunpack.c.l.b16 %v807
    %v4566 = vunpack.c.h.b16 %v807
    %v4567 = vunpack.c.l.b16 %v808
    %v4568 = vunpack.c.h.b16 %v808
    %v4569 = vunpack.c.l.b16 %v809
    %v4570 = vunpack.c.h.b16 %v809
    %v4571 = vunpack.c.l.b16 %v810
    %v4572 = vunpack.c.h.b16 %v810
    %v4573 = vunpack.c.l.b16 %v811
    %v4574 = vunpack.c.h.b16 %v811
    %v4575 = vunpack.c.l.b16 %v812
    %v4576 = vunpack.c.h.b16 %v812
    %v4577 = vunpack.c.l.b16 %v813
    %v4578 = vunpack.c.h.b16 %v813
    %v4579 = vunpack.c.l.b16 %v814
    %v4580 = vunpack.c.h.b16 %v814
    %v4581 = vunpack.c.l.b16 %v815
    %v4582 = vunpack.c.h.b16 %v815
    %v4583 = vunpack.c.l.b16 %v816
    %v4584 = vunpack.c.h.b16 %v816
    %v4585 = vunpack.c.l.b16 %v817
    %v4586 = vunpack.c.h.b16 %v817
    %v4587 = vunpack.c.l.b16 %v818
    %v4588 = vunpack.c.h.b16 %v818
    %v4589 = vunpack.c.l.b16 %v819
    %v4590 = vunpack.c.h.b16 %v819
    %v4591 = vunpack.c.l.b16 %v820
    %v4592 = vunpack.c.h.b16 %v820
    %v4593 = vunpack.c.l.b16 %v821
    %v4594 = vunpack.c.h.b16 %v821
    %v4595 = vunpack.c.l.b16 %v822
    %v4596 = vunpack.c.h.b16 %v822
    %v4597 = vunpack.c.l.b16 %v823
    %v4598 = vunpack.c.h.b16 %v823
    %v4599 = vunpack.c.l.b16 %v824
    %v4600 = vunpack.c.h.b16 %v824
    %v4601 = vunpack.c.l.b16 %v825
    %v4602 = vunpack.c.h.b16 %v825
    %v4603 = vunpack.c.l.b16 %v826
    %v4604 = vunpack.c.h.b16 %v826
    %v4605 = vunpack.c.l.b16 %v827
    %v4606 = vunpack.c.h.b16 %v827
    %v4607 = vunpack.c.l.b16 %v828
    %v4608 = vunpack.c.h.b16 %v828
    %v4609 = vunpack.c.l.b16 %v829
    %v4610 = vunpack.c.h.b16 %v829
    %v4611 = vunpack.c.l.b16 %v830
    %v4612 = vunpack.c.h.b16 %v830
    %v4613 = vunpack.c.l.b16 %v831
    %v4614 = vunpack.c.h.b16 %v831
    %v4615 = vunpack.c.l.b16 %v832
    %v4616 = vunpack.c.h.b16 %v832
    %v4617 = vunpack.c.l.b16 %v833
    %v4618 = vunpack.c.h.b16 %v833
    %v4619 = vunpack.c.l.b16 %v834
    %v4620 = vunpack.c.h.b16 %v834
    %v4621 = vunpack.c.l.b16 %v835
    %v4622 = vunpack.c.h.b16 %v835
    %v4623 = vunpack.c.l.b16 %v836
    %v4624 = vunpack.c.h.b16 %v836
    %v4625 = vunpack.c.l.b16 %v837
    %v4626 = vunpack.c.h.b16 %v837
    %v4627 = vunpack.c.l.b16 %v838
    %v4628 = vunpack.c.h.b16 %v838
    %v4629 = vunpack.c.l.b16 %v839
    %v4630 = vunpack.c.h.b16 %v839
    %v4631 = vunpack.c.l.b16 %v840
    %v4632 = vunpack.c.h.b16 %v840
    %v4633 = vunpack.c.l.b16 %v841
    %v4634 = vunpack.c.h.b16 %v841
    %v4635 = vunpack.c.l.b16 %v842
    %v4636 = vunpack.c.h.b16 %v842
    %v4637 = vunpack.c.l.b16 %v843
    %v4638 = vunpack.c.h.b16 %v843
    %v4639 = vunpack.c.l.b16 %v844
    %v4640 = vunpack.c.h.b16 %v844
    %v4641 = vunpack.c.l.b16 %v845
    %v4642 = vunpack.c.h.b16 %v845
    %v4643 = vunpack.c.l.b16 %v846
    %v4644 = vunpack.c.h.b16 %v846
    %v4645 = vunpack.c.l.b16 %v847
    %v4646 = vunpack.c.h.b16 %v847
    %v4647 = vunpack.c.l.b16 %v848
    %v4648 = vunpack.c.h.b16 %v848
    %v4649 = vunpack.c.l.b16 %v849
    %v4650 = vunpack.c.h.b16 %v849
    %v4651 = vunpack.c.l.b16 %v850
    %v4652 = vunpack.c.h.b16 %v850
    %v4653 = vunpack.c.l.b16 %v851
    %v4654 = vunpack.c.h.b16 %v851
    %v4655 = vunpack.c.l.b16 %v852
    %v4656 = vunpack.c.h.b16 %v852
    %v4657 = vunpack.c.l.b16 %v853
    %v4658 = vunpack.c.h.b16 %v853
    %v4659 = vunpack.c.l.b16 %v854
    %v4660 = vunpack.c.h.b16 %v854
    %v4661 = vunpack.c.l.b16 %v855
    %v4662 = vunpack.c.h.b16 %v855
    %v4663 = vunpack.c.l.b16 %v856
    %v4664 = vunpack.c.h.b16 %v856
    %v4665 = vunpack.c.l.b16 %v857
    %v4666 = vunpack.c.h.b16 %v857
    %v4667 = vunpack.c.l.b16 %v858
    %v4668 = vunpack.c.h.b16 %v858
    %v4669 = vunpack.c.l.b16 %v859
    %v4670 = vunpack.c.h.b16 %v859
    %v4671 = vunpack.c.l.b16 %v860
    %v4672 = vunpack.c.h.b16 %v860
    %v4673 = vunpack.c.l.b16 %v861
    %v4674 = vunpack.c.h.b16 %v861
    %v4675 = vunpack.c.l.b16 %v862
    %v4676 = vunpack.c.h.b16 %v862
    %v4677 = vunpack.c.l.b16 %v863
    %v4678 = vunpack.c.h.b16 %v863
    %v4679 = vunpack.c.l.b16 %v864
    %v4680 = vunpack.c.h.b16 %v864
    %v4681 = vunpack.c.l.b16 %v865
    %v4682 = vunpack.c.h.b16 %v865
    %v4683 = vunpack.c.l.b16 %v866
    %v4684 = vunpack.c.h.b16 %v866
    %v4685 = vunpack.c.l.b16 %v867
    %v4686 = vunpack.c.h.b16 %v867
    %v4687 = vunpack.c.l.b16 %v868
    %v4688 = vunpack.c.h.b16 %v868
    %v4689 = vunpack.c.l.b16 %v869
    %v4690 = vunpack.c.h.b16 %v869
    %v4691 = vunpack.c.l.b16 %v870
    %v4692 = vunpack.c.h.b16 %v870
    %v4693 = vunpack.c.l.b16 %v871
    %v4694 = vunpack.c.h.b16 %v871
    %v4695 = vunpack.c.l.b16 %v872
    %v4696 = vunpack.c.h.b16 %v872
    %v4697 = vunpack.c.l.b16 %v873
    %v4698 = vunpack.c.h.b16 %v873
    %v4699 = vunpack.c.l.b16 %v874
    %v4700 = vunpack.c.h.b16 %v874
    %v4701 = vunpack.c.l.b16 %v875
    %v4702 = vunpack.c.h.b16 %v875
    %v4703 = vunpack.c.l.b16 %v876
    %v4704 = vunpack.c.h.b16 %v876
    %v4705 = vunpack.c.l.b16 %v877
    %v4706 = vunpack.c.h.b16 %v877
    %v4707 = vunpack.c.l.b16 %v878
    %v4708 = vunpack.c.h.b16 %v878
    %v4709 = vunpack.c.l.b16 %v879
    %v4710 = vunpack.c.h.b16 %v879
    %v4711 = vunpack.c.l.b16 %v880
    %v4712 = vunpack.c.h.b16 %v880
    %v4713 = vunpack.c.l.b16 %v881
    %v4714 = vunpack.c.h.b16 %v881
    %v4715 = vunpack.c.l.b16 %v882
    %v4716 = vunpack.c.h.b16 %v882
    %v4717 = vunpack.c.l.b16 %v883
    %v4718 = vunpack.c.h.b16 %v883
    %v4719 = vunpack.c.l.b16 %v884
    %v4720 = vunpack.c.h.b16 %v884
    %v4721 = vunpack.c.l.b16 %v885
    %v4722 = vunpack.c.h.b16 %v885
    %v4723 = vunpack.c.l.b16 %v886
    %v4724 = vunpack.c.h.b16 %v886
    %v4725 = vunpack.c.l.b16 %v887
    %v4726 = vunpack.c.h.b16 %v887
    %v4727 = vunpack.c.l.b16 %v888
    %v4728 = vunpack.c.h.b16 %v888
    %v4729 = vunpack.c.l.b16 %v889
    %v4730 = vunpack.c.h.b16 %v889
    %v4731 = vunpack.c.l.b16 %v890
    %v4732 = vunpack.c.h.b16 %v890
    %v4733 = vunpack.c.l.b16 %v891
    %v4734 = vunpack.c.h.b16 %v891
    %v4735 = vunpack.c.l.b16 %v892
    %v4736 = vunpack.c.h.b16 %v892
    %v4737 = vunpack.c.l.b16 %v893
    %v4738 = vunpack.c.h.b16 %v893
    %v4739 = vunpack.c.l.b16 %v894
    %v4740 = vunpack.c.h.b16 %v894
    %v4741 = vunpack.c.l.b16 %v895
    %v4742 = vunpack.c.h.b16 %v895
    %v4743 = vunpack.c.l.b16 %v896
    %v4744 = vunpack.c.h.b16 %v896
    %v4745 = vunpack.c.l.b16 %v897
    %v4746 = vunpack.c.h.b16 %v897
    %v4747 = vunpack.c.l.b16 %v898
    %v4748 = vunpack.c.h.b16 %v898
    %v4749 = vunpack.c.l.b16 %v899
    %v4750 = vunpack.c.h.b16 %v899
    %v4751 = vunpack.c.l.b16 %v900
    %v4752 = vunpack.c.h.b16 %v900
    %v4753 = vunpack.c.l.b16 %v901
    %v4754 = vunpack.c.h.b16 %v901
    %v4755 = vunpack.c.l.b16 %v902
    %v4756 = vunpack.c.h.b16 %v902
    %v4757 = vunpack.c.l.b16 %v903
    %v4758 = vunpack.c.h.b16 %v903
    %v4759 = vunpack.c.l.b16 %v904
    %v4760 = vunpack.c.h.b16 %v904
    %v4761 = vunpack.c.l.b16 %v905
    %v4762 = vunpack.c.h.b16 %v905
    %v4763 = vunpack.c.l.b16 %v906
    %v4764 = vunpack.c.h.b16 %v906
    %v4765 = vunpack.c.l.b16 %v907
    %v4766 = vunpack.c.h.b16 %v907
    %v4767 = vunpack.c.l.b16 %v908
    %v4768 = vunpack.c.h.b16 %v908
    %v4769 = vunpack.c.l.b16 %v909
    %v4770 = vunpack.c.h.b16 %v909
    %v4771 = vunpack.c.l.b16 %v910
    %v4772 = vunpack.c.h.b16 %v910
    %v4773 = vunpack.c.l.b16 %v911
    %v4774 = vunpack.c.h.b16 %v911
    %v4775 = vunpack.c.l.b16 %v912
    %v4776 = vunpack.c.h.b16 %v912
    %v4777 = vunpack.c.l.b16 %v913
    %v4778 = vunpack.c.h.b16 %v913
    %v4779 = vunpack.c.l.b16 %v914
    %v4780 = vunpack.c.h.b16 %v914
    %v4781 = vunpack.c.l.b16 %v915
    %v4782 = vunpack.c.h.b16 %v915
    %v4783 = vunpack.c.l.b16 %v916
    %v4784 = vunpack.c.h.b16 %v916
    %v4785 = vunpack.c.l.b16 %v917
    %v4786 = vunpack.c.h.b16 %v917
    %v4787 = vunpack.c.l.b16 %v918
    %v4788 = vunpack.c.h.b16 %v918
    %v4789 = vunpack.c.l.b16 %v919
    %v4790 = vunpack.c.h.b16 %v919
    %v4791 = vunpack.c.l.b16 %v920
    %v4792 = vunpack.c.h.b16 %v920
    %v4793 = vunpack.c.l.b16 %v921
    %v4794 = vunpack.c.h.b16 %v921
    %v4795 = vunpack.c.l.b16 %v922
    %v4796 = vunpack.c.h.b16 %v922
    %v4797 = vunpack.c.l.b16 %v923
    %v4798 = vunpack.c.h.b16 %v923
    %v4799 = vunpack.c.l.b16 %v924
    %v4800 = vunpack.c.h.b16 %v924
    %v4801 = vunpack.c.l.b16 %v925
    %v4802 = vunpack.c.h.b16 %v925
    %v4803 = vunpack.c.l.b16 %v926
    %v4804 = vunpack.c.h.b16 %v926
    %v4805 = vunpack.c.l.b16 %v927
    %v4806 = vunpack.c.h.b16 %v927
    %v4807 = vunpack.c.l.b16 %v928
    %v4808 = vunpack.c.h.b16 %v928
    %v4809 = vunpack.c.l.b16 %v929
    %v4810 = vunpack.c.h.b16 %v929
    %v4811 = vunpack.c.l.b16 %v930
    %v4812 = vunpack.c.h.b16 %v930
    %v4813 = vunpack.c.l.b16 %v931
    %v4814 = vunpack.c.h.b16 %v931
    %v4815 = vunpack.c.l.b16 %v932
    %v4816 = vunpack.c.h.b16 %v932
    %v4817 = vunpack.c.l.b16 %v933
    %v4818 = vunpack.c.h.b16 %v933
    %v4819 = vunpack.c.l.b16 %v934
    %v4820 = vunpack.c.h.b16 %v934
    %v4821 = vunpack.c.l.b16 %v935
    %v4822 = vunpack.c.h.b16 %v935
    %v4823 = vunpack.c.l.b16 %v936
    %v4824 = vunpack.c.h.b16 %v936
    %v4825 = vunpack.c.l.b16 %v937
    %v4826 = vunpack.c.h.b16 %v937
    %v4827 = vunpack.c.l.b16 %v938
    %v4828 = vunpack.c.h.b16 %v938
    %v4829 = vunpack.c.l.b16 %v939
    %v4830 = vunpack.c.h.b16 %v939
    %v4831 = vunpack.c.l.b16 %v940
    %v4832 = vunpack.c.h.b16 %v940
    %v4833 = vunpack.c.l.b16 %v941
    %v4834 = vunpack.c.h.b16 %v941
    %v4835 = vunpack.c.l.b16 %v942
    %v4836 = vunpack.c.h.b16 %v942
    %v4837 = vunpack.c.l.b16 %v943
    %v4838 = vunpack.c.h.b16 %v943
    %v4839 = vunpack.c.l.b16 %v944
    %v4840 = vunpack.c.h.b16 %v944
    %v4841 = vunpack.c.l.b16 %v945
    %v4842 = vunpack.c.h.b16 %v945
    %v4843 = vunpack.c.l.b16 %v946
    %v4844 = vunpack.c.h.b16 %v946
    %v4845 = vunpack.c.l.b16 %v947
    %v4846 = vunpack.c.h.b16 %v947
    %v4847 = vunpack.c.l.b16 %v948
    %v4848 = vunpack.c.h.b16 %v948
    %v4849 = vunpack.c.l.b16 %v949
    %v4850 = vunpack.c.h.b16 %v949
    %v4851 = vunpack.c.l.b16 %v950
    %v4852 = vunpack.c.h.b16 %v950
    %v4853 = vunpack.c.l.b16 %v951
    %v4854 = vunpack.c.h.b16 %v951
    %v4855 = vunpack.c.l.b16 %v952
    %v4856 = vunpack.c.h.b16 %v952
    %v4857 = vunpack.c.l.b16 %v953
    %v4858 = vunpack.c.h.b16 %v953
    %v4859 = vunpack.c.l.b16 %v954
    %v4860 = vunpack.c.h.b16 %v954
    %v4861 = vunpack.c.l.b16 %v955
    %v4862 = vunpack.c.h.b16 %v955
    %v4863 = vunpack.c.l.b16 %v956
    %v4864 = vunpack.c.h.b16 %v956
    %v4865 = vunpack.c.l.b16 %v957
    %v4866 = vunpack.c.h.b16 %v957
    %v4867 = vunpack.c.l.b16 %v958
    %v4868 = vunpack.c.h.b16 %v958
    %v4869 = vunpack.c.l.b16 %v959
    %v4870 = vunpack.c.h.b16 %v959
    %v4871 = vunpack.c.l.b16 %v960
    %v4872 = vunpack.c.h.b16 %v960
    %v4873 = vunpack.c.l.b16 %v961
    %v4874 = vunpack.c.h.b16 %v961
    %v4875 = vunpack.c.l.b16 %v962
    %v4876 = vunpack.c.h.b16 %v962
    %v4877 = vunpack.c.l.b16 %v963
    %v4878 = vunpack.c.h.b16 %v963
    %v4879 = vunpack.c.l.b16 %v964
    %v4880 = vunpack.c.h.b16 %v964
    %v4881 = vunpack.c.l.b16 %v965
    %v4882 = vunpack.c.h.b16 %v965
    %v4883 = vunpack.c.l.b16 %v966
    %v4884 = vunpack.c.h.b16 %v966
    %v4885 = vunpack.c.l.b16 %v967
    %v4886 = vunpack.c.h.b16 %v967
    %v4887 = vunpack.c.l.b16 %v968
    %v4888 = vunpack.c.h.b16 %v968
    %v4889 = vunpack.c.l.b16 %v969
    %v4890 = vunpack.c.h.b16 %v969
    %v4891 = vunpack.c.l.b16 %v970
    %v4892 = vunpack.c.h.b16 %v970
    %v4893 = vunpack.c.l.b16 %v971
    %v4894 = vunpack.c.h.b16 %v971
    %v4895 = vunpack.c.l.b16 %v972
    %v4896 = vunpack.c.h.b16 %v972
    %v4897 = vunpack.c.l.b16 %v973
    %v4898 = vunpack.c.h.b16 %v973
    %v4899 = vunpack.c.l.b16 %v974
    %v4900 = vunpack.c.h.b16 %v974
    %v4901 = vunpack.c.l.b16 %v975
    %v4902 = vunpack.c.h.b16 %v975
    %v4903 = vunpack.c.l.b16 %v976
    %v4904 = vunpack.c.h.b16 %v976
    %v4905 = vunpack.c.l.b16 %v977
    %v4906 = vunpack.c.h.b16 %v977
    %v4907 = vunpack.c.l.b16 %v978
    %v4908 = vunpack.c.h.b16 %v978
    %v4909 = vunpack.c.l.b16 %v979
    %v4910 = vunpack.c.h.b16 %v979
    %v4911 = vunpack.c.l.b16 %v980
    %v4912 = vunpack.c.h.b16 %v980
    %v4913 = vunpack.c.l.b16 %v981
    %v4914 = vunpack.c.h.b16 %v981
    %v4915 = vunpack.c.l.b16 %v982
    %v4916 = vunpack.c.h.b16 %v982
    %v4917 = vunpack.c.l.b16 %v983
    %v4918 = vunpack.c.h.b16 %v983
    %v4919 = vunpack.c.l.b16 %v984
    %v4920 = vunpack.c.h.b16 %v984
    %v4921 = vunpack.c.l.b16 %v985
    %v4922 = vunpack.c.h.b16 %v985
    %v4923 = vunpack.c.l.b16 %v986
    %v4924 = vunpack.c.h.b16 %v986
    %v4925 = vunpack.c.l.b16 %v987
    %v4926 = vunpack.c.h.b16 %v987
    %v4927 = vunpack.c.l.b16 %v988
    %v4928 = vunpack.c.h.b16 %v988
    %v4929 = vunpack.c.l.b16 %v989
    %v4930 = vunpack.c.h.b16 %v989
    %v4931 = vunpack.c.l.b16 %v990
    %v4932 = vunpack.c.h.b16 %v990
    %v4933 = vunpack.c.l.b16 %v991
    %v4934 = vunpack.c.h.b16 %v991
    %v4935 = vunpack.c.l.b16 %v992
    %v4936 = vunpack.c.h.b16 %v992
    %v4937 = vunpack.c.l.b16 %v993
    %v4938 = vunpack.c.h.b16 %v993
    %v4939 = vunpack.c.l.b16 %v994
    %v4940 = vunpack.c.h.b16 %v994
    %v4941 = vunpack.c.l.b16 %v995
    %v4942 = vunpack.c.h.b16 %v995
    %v4943 = vunpack.c.l.b16 %v996
    %v4944 = vunpack.c.h.b16 %v996
    %v4945 = vunpack.c.l.b16 %v997
    %v4946 = vunpack.c.h.b16 %v997
    %v4947 = vunpack.c.l.b16 %v998
    %v4948 = vunpack.c.h.b16 %v998
    %v4949 = vunpack.c.l.b16 %v999
    %v4950 = vunpack.c.h.b16 %v999
    %v4951 = vunpack.c.l.b16 %v1000
    %v4952 = vunpack.c.h.b16 %v1000
    %v4953 = vunpack.c.l.b16 %v1001
    %v4954 = vunpack.c.h.b16 %v1001
    %v4955 = vunpack.c.l.b16 %v1002
    %v4956 = vunpack.c.h.b16 %v1002
    %v4957 = vunpack.c.l.b16 %v1003
    %v4958 = vunpack.c.h.b16 %v1003
    %v4959 = vunpack.c.l.b16 %v1004
    %v4960 = vunpack.c.h.b16 %v1004
    %v4961 = vunpack.c.l.b16 %v1005
    %v4962 = vunpack.c.h.b16 %v1005
    %v4963 = vunpack.c.l.b16 %v1006
    %v4964 = vunpack.c.h.b16 %v1006
    %v4965 = vunpack.c.l.b16 %v1007
    %v4966 = vunpack.c.h.b16 %v1007
    %v4967 = vunpack.c.l.b16 %v1008
    %v4968 = vunpack.c.h.b16 %v1008
    %v4969 = vunpack.c.l.b16 %v1009
    %v4970 = vunpack.c.h.b16 %v1009
    %v4971 = vunpack.c.l.b16 %v1010
    %v4972 = vunpack.c.h.b16 %v1010
    %v4973 = vunpack.c.l.b16 %v1011
    %v4974 = vunpack.c.h.b16 %v1011
    %v4975 = vunpack.c.l.b16 %v1012
    %v4976 = vunpack.c.h.b16 %v1012
    %v4977 = vunpack.c.l.b16 %v1013
    %v4978 = vunpack.c.h.b16 %v1013
    %v4979 = vunpack.c.l.b16 %v1014
    %v4980 = vunpack.c.h.b16 %v1014
    %v4981 = vunpack.c.l.b16 %v1015
    %v4982 = vunpack.c.h.b16 %v1015
    %v4983 = vunpack.c.l.b16 %v1016
    %v4984 = vunpack.c.h.b16 %v1016
    %v4985 = vunpack.c.l.b16 %v1017
    %v4986 = vunpack.c.h.b16 %v1017
    %v4987 = vunpack.c.l.b16 %v1018
    %v4988 = vunpack.c.h.b16 %v1018
    %v4989 = vunpack.c.l.b16 %v1019
    %v4990 = vunpack.c.h.b16 %v1019
    %v4991 = vunpack.c.l.b16 %v1020
    %v4992 = vunpack.c.h.b16 %v1020
    %v4993 = vunpack.c.l.b16 %v1021
    %v4994 = vunpack.c.h.b16 %v1021
    %v4995 = vunpack.c.l.b16 %v1022
    %v4996 = vunpack.c.h.b16 %v1022
    %v4997 = vunpack.c.l.b16 %v1023
    %v4998 = vunpack.c.h.b16 %v1023
    %v4999 = vunpack.c.l.b16 %v1024
    %v5000 = vunpack.c.h.b16 %v1024
    %v5001 = vunpack.c.l.b16 %v1025
    %v5002 = vunpack.c.h.b16 %v1025
    %v5003 = vunpack.c.l.b16 %v1026
    %v5004 = vunpack.c.h.b16 %v1026
    %v5005 = vunpack.c.l.b16 %v1027
    %v5006 = vunpack.c.h.b16 %v1027
    %v5007 = vunpack.c.l.b16 %v1028
    %v5008 = vunpack.c.h.b16 %v1028
    %v5009 = vunpack.c.l.b16 %v1029
    %v5010 = vunpack.c.h.b16 %v1029
    %v5011 = vunpack.c.l.b16 %v1030
    %v5012 = vunpack.c.h.b16 %v1030
    %v5013 = vunpack.c.l.b16 %v1031
    %v5014 = vunpack.c.h.b16 %v1031
    %v5015 = vunpack.c.l.b16 %v1032
    %v5016 = vunpack.c.h.b16 %v1032
    %v5017 = vunpack.c.l.b16 %v1033
    %v5018 = vunpack.c.h.b16 %v1033
    %v5019 = vunpack.c.l.b16 %v1034
    %v5020 = vunpack.c.h.b16 %v1034
    %v5021 = vunpack.c.l.b16 %v1035
    %v5022 = vunpack.c.h.b16 %v1035
    %v5023 = vunpack.c.l.b16 %v1036
    %v5024 = vunpack.c.h.b16 %v1036
    %v5025 = vunpack.c.l.b16 %v1037
    %v5026 = vunpack.c.h.b16 %v1037
    %v5027 = vunpack.c.l.b16 %v1038
    %v5028 = vunpack.c.h.b16 %v1038
    %v5029 = vunpack.c.l.b16 %v1039
    %v5030 = vunpack.c.h.b16 %v1039
    %v5031 = vunpack.c.l.b16 %v1040
    %v5032 = vunpack.c.h.b16 %v1040
    %v5033 = vunpack.c.l.b16 %v1041
    %v5034 = vunpack.c.h.b16 %v1041
    %v5035 = vunpack.c.l.b16 %v1042
    %v5036 = vunpack.c.h.b16 %v1042
    %v5037 = vunpack.c.l.b16 %v1043
    %v5038 = vunpack.c.h.b16 %v1043
    %v5039 = vunpack.c.l.b16 %v1044
    %v5040 = vunpack.c.h.b16 %v1044
    %v5041 = vunpack.c.l.b16 %v1045
    %v5042 = vunpack.c.h.b16 %v1045
    %v5043 = vunpack.c.l.b16 %v1046
    %v5044 = vunpack.c.h.b16 %v1046
    %v5045 = vunpack.c.l.b16 %v1047
    %v5046 = vunpack.c.h.b16 %v1047
    %v5047 = vunpack.c.l.b16 %v1048
    %v5048 = vunpack.c.h.b16 %v1048
    %v5049 = vunpack.c.l.b16 %v1049
    %v5050 = vunpack.c.h.b16 %v1049
    %v5051 = vunpack.c.l.b16 %v1050
    %v5052 = vunpack.c.h.b16 %v1050
    %v5053 = vunpack.c.l.b16 %v1051
    %v5054 = vunpack.c.h.b16 %v1051
    %v5055 = vunpack.c.l.b16 %v1052
    %v5056 = vunpack.c.h.b16 %v1052
    %v5057 = vunpack.c.l.b16 %v1053
    %v5058 = vunpack.c.h.b16 %v1053
    %v5059 = vunpack.c.l.b16 %v1054
    %v5060 = vunpack.c.h.b16 %v1054
    %v5061 = vunpack.c.l.b16 %v1055
    %v5062 = vunpack.c.h.b16 %v1055
    %v5063 = vunpack.c.l.b16 %v1056
    %v5064 = vunpack.c.h.b16 %v1056
    %v5065 = vunpack.c.l.b16 %v1057
    %v5066 = vunpack.c.h.b16 %v1057
    %v5067 = vunpack.c.l.b16 %v1058
    %v5068 = vunpack.c.h.b16 %v1058
    %v5069 = vunpack.c.l.b16 %v1059
    %v5070 = vunpack.c.h.b16 %v1059
    %v5071 = vunpack.c.l.b16 %v1060
    %v5072 = vunpack.c.h.b16 %v1060
    %v5073 = vunpack.c.l.b16 %v1061
    %v5074 = vunpack.c.h.b16 %v1061
    %v5075 = vunpack.c.l.b16 %v1062
    %v5076 = vunpack.c.h.b16 %v1062
    %v5077 = vunpack.c.l.b16 %v1063
    %v5078 = vunpack.c.h.b16 %v1063
    %v5079 = vunpack.c.l.b16 %v1064
    %v5080 = vunpack.c.h.b16 %v1064
    %v5081 = vunpack.c.l.b16 %v1065
    %v5082 = vunpack.c.h.b16 %v1065
    %v5083 = vunpack.c.l.b16 %v1066
    %v5084 = vunpack.c.h.b16 %v1066
    %v5085 = vunpack.c.l.b16 %v1067
    %v5086 = vunpack.c.h.b16 %v1067
    %v5087 = vunpack.c.l.b16 %v1068
    %v5088 = vunpack.c.h.b16 %v1068
    %v5089 = vunpack.c.l.b16 %v1069
    %v5090 = vunpack.c.h.b16 %v1069
    %v5091 = vunpack.c.l.b16 %v1070
    %v5092 = vunpack.c.h.b16 %v1070
    %v5093 = vunpack.c.l.b16 %v1071
    %v5094 = vunpack.c.h.b16 %v1071
    %v5095 = vunpack.c.l.b16 %v1072
    %v5096 = vunpack.c.h.b16 %v1072
    %v5097 = vunpack.c.l.b16 %v1073
    %v5098 = vunpack.c.h.b16 %v1073
    %v5099 = vunpack.c.l.b16 %v1074
    %v5100 = vunpack.c.h.b16 %v1074
    %v5101 = vunpack.c.l.b16 %v1075
    %v5102 = vunpack.c.h.b16 %v1075
    %v5103 = vunpack.c.l.b16 %v1076
    %v5104 = vunpack.c.h.b16 %v1076
    %v5105 = vunpack.c.l.b16 %v1077
    %v5106 = vunpack.c.h.b16 %v1077
    %v5107 = vunpack.c.l.b16 %v1078
    %v5108 = vunpack.c.h.b16 %v1078
    %v5109 = vunpack.c.l.b16 %v1079
    %v5110 = vunpack.c.h.b16 %v1079
    %v5111 = vunpack.c.l.b16 %v1080
    %v5112 = vunpack.c.h.b16 %v1080
    %v5113 = vunpack.c.l.b16 %v1081
    %v5114 = vunpack.c.h.b16 %v1081
    %v5115 = vunpack.c.l.b16 %v1082
    %v5116 = vunpack.c.h.b16 %v1082
    %v5117 = vunpack.c.l.b16 %v1083
    %v5118 = vunpack.c.h.b16 %v1083
    %v5119 = vunpack.c.l.b16 %v1084
    %v5120 = vunpack.c.h.b16 %v1084
    %v5121 = vunpack.c.l.b16 %v1085
    %v5122 = vunpack.c.h.b16 %v1085
    %v5123 = vunpack.c.l.b16 %v1086
    %v5124 = vunpack.c.h.b16 %v1086
    %v5125 = vunpack.c.l.b16 %v1087
    %v5126 = vunpack.c.h.b16 %v1087
    %v5127 = vunpack.c.l.b16 %v1088
    %v5128 = vunpack.c.h.b16 %v1088
    %v5129 = vunpack.c.l.b16 %v1089
    %v5130 = vunpack.c.h.b16 %v1089
    %v5131 = vunpack.c.l.b16 %v1090
    %v5132 = vunpack.c.h.b16 %v1090
    %v5133 = vunpack.c.l.b16 %v1091
    %v5134 = vunpack.c.h.b16 %v1091
    %v5135 = vunpack.c.l.b16 %v1092
    %v5136 = vunpack.c.h.b16 %v1092
    %v5137 = vunpack.c.l.b16 %v1093
    %v5138 = vunpack.c.h.b16 %v1093
    %v5139 = vunpack.c.l.b16 %v1094
    %v5140 = vunpack.c.h.b16 %v1094
    %v5141 = vunpack.c.l.b16 %v1095
    %v5142 = vunpack.c.h.b16 %v1095
    %v5143 = vunpack.c.l.b16 %v1096
    %v5144 = vunpack.c.h.b16 %v1096
    %v5145 = vunpack.c.l.b16 %v1097
    %v5146 = vunpack.c.h.b16 %v1097
    %v5147 = vunpack.c.l.b16 %v1098
    %v5148 = vunpack.c.h.b16 %v1098
    %v5149 = vunpack.c.l.b16 %v1099
    %v5150 = vunpack.c.h.b16 %v1099
    %v5151 = vunpack.c.l.b16 %v1100
    %v5152 = vunpack.c.h.b16 %v1100
    %v5153 = vunpack.c.l.b16 %v1101
    %v5154 = vunpack.c.h.b16 %v1101
    %v5155 = vunpack.c.l.b16 %v1102
    %v5156 = vunpack.c.h.b16 %v1102
    %v5157 = vunpack.c.l.b16 %v1103
    %v5158 = vunpack.c.h.b16 %v1103
    %v5159 = vunpack.c.l.b16 %v1104
    %v5160 = vunpack.c.h.b16 %v1104
    %v5161 = vunpack.c.l.b16 %v1105
    %v5162 = vunpack.c.h.b16 %v1105
    %v5163 = vunpack.c.l.b16 %v1106
    %v5164 = vunpack.c.h.b16 %v1106
    %v5165 = vunpack.c.l.b16 %v1107
    %v5166 = vunpack.c.h.b16 %v1107
    %v5167 = vunpack.c.l.b16 %v1108
    %v5168 = vunpack.c.h.b16 %v1108
    %v5169 = vunpack.c.l.b16 %v1109
    %v5170 = vunpack.c.h.b16 %v1109
    %v5171 = vunpack.c.l.b16 %v1110
    %v5172 = vunpack.c.h.b16 %v1110
    %v5173 = vunpack.c.l.b16 %v1111
    %v5174 = vunpack.c.h.b16 %v1111
    %v5175 = vunpack.c.l.b16 %v1112
    %v5176 = vunpack.c.h.b16 %v1112
    %v5177 = vunpack.c.l.b16 %v1113
    %v5178 = vunpack.c.h.b16 %v1113
    %v5179 = vunpack.c.l.b16 %v1114
    %v5180 = vunpack.c.h.b16 %v1114
    %v5181 = vunpack.c.l.b16 %v1115
    %v5182 = vunpack.c.h.b16 %v1115
    %v5183 = vunpack.c.l.b16 %v1116
    %v5184 = vunpack.c.h.b16 %v1116
    %v5185 = vunpack.c.l.b16 %v1117
    %v5186 = vunpack.c.h.b16 %v1117
    %v5187 = vunpack.c.l.b16 %v1118
    %v5188 = vunpack.c.h.b16 %v1118
    %v5189 = vunpack.c.l.b16 %v1119
    %v5190 = vunpack.c.h.b16 %v1119
    %v5191 = vunpack.c.l.b16 %v1120
    %v5192 = vunpack.c.h.b16 %v1120
    %v5193 = vunpack.c.l.b16 %v1121
    %v5194 = vunpack.c.h.b16 %v1121
    %v5195 = vunpack.c.l.b16 %v1122
    %v5196 = vunpack.c.h.b16 %v1122
    %v5197 = vunpack.c.l.b16 %v1123
    %v5198 = vunpack.c.h.b16 %v1123
    %v5199 = vunpack.c.l.b16 %v1124
    %v5200 = vunpack.c.h.b16 %v1124
    %v5201 = vunpack.c.l.b16 %v1125
    %v5202 = vunpack.c.h.b16 %v1125
    %v5203 = vunpack.c.l.b16 %v1126
    %v5204 = vunpack.c.h.b16 %v1126
    %v5205 = vunpack.c.l.b16 %v1127
    %v5206 = vunpack.c.h.b16 %v1127
    %v5207 = vunpack.c.l.b16 %v1128
    %v5208 = vunpack.c.h.b16 %v1128
    %v5209 = vunpack.c.l.b16 %v1129
    %v5210 = vunpack.c.h.b16 %v1129
    %v5211 = vunpack.c.l.b16 %v1130
    %v5212 = vunpack.c.h.b16 %v1130
    %v5213 = vunpack.c.l.b16 %v1131
    %v5214 = vunpack.c.h.b16 %v1131
    %v5215 = vunpack.c.l.b16 %v1132
    %v5216 = vunpack.c.h.b16 %v1132
    %v5217 = vunpack.c.l.b16 %v1133
    %v5218 = vunpack.c.h.b16 %v1133
    %v5219 = vunpack.c.l.b16 %v1134
    %v5220 = vunpack.c.h.b16 %v1134
    %v5221 = vunpack.c.l.b16 %v1135
    %v5222 = vunpack.c.h.b16 %v1135
    %v5223 = vunpack.c.l.b16 %v1136
    %v5224 = vunpack.c.h.b16 %v1136
    %v5225 = vunpack.c.l.b16 %v1137
    %v5226 = vunpack.c.h.b16 %v1137
    %v5227 = vunpack.c.l.b16 %v1138
    %v5228 = vunpack.c.h.b16 %v1138
    %v5229 = vunpack.c.l.b16 %v1139
    %v5230 = vunpack.c.h.b16 %v1139
    %v5231 = vunpack.c.l.b16 %v1140
    %v5232 = vunpack.c.h.b16 %v1140
    %v5233 = vunpack.c.l.b16 %v1141
    %v5234 = vunpack.c.h.b16 %v1141
    %v5235 = vunpack.c.l.b16 %v1142
    %v5236 = vunpack.c.h.b16 %v1142
    %v5237 = vunpack.c.l.b16 %v1143
    %v5238 = vunpack.c.h.b16 %v1143
    %v5239 = vunpack.c.l.b16 %v1144
    %v5240 = vunpack.c.h.b16 %v1144
    %v5241 = vunpack.c.l.b16 %v1145
    %v5242 = vunpack.c.h.b16 %v1145
    %v5243 = vunpack.c.l.b16 %v1146
    %v5244 = vunpack.c.h.b16 %v1146
    %v5245 = vunpack.c.l.b16 %v1147
    %v5246 = vunpack.c.h.b16 %v1147
    %v5247 = vunpack.c.l.b16 %v1148
    %v5248 = vunpack.c.h.b16 %v1148
    %v5249 = vunpack.c.l.b16 %v1149
    %v5250 = vunpack.c.h.b16 %v1149
    %v5251 = vunpack.c.l.b16 %v1150
    %v5252 = vunpack.c.h.b16 %v1150
    %v5253 = vunpack.c.l.b16 %v1151
    %v5254 = vunpack.c.h.b16 %v1151
    %v5255 = vunpack.c.l.b16 %v1152
    %v5256 = vunpack.c.h.b16 %v1152
    %v5257 = vunpack.c.l.b16 %v1153
    %v5258 = vunpack.c.h.b16 %v1153
    %v5259 = vunpack.c.l.b16 %v1154
    %v5260 = vunpack.c.h.b16 %v1154
    %v5261 = vunpack.c.l.b16 %v1155
    %v5262 = vunpack.c.h.b16 %v1155
    %v5263 = vunpack.c.l.b16 %v1156
    %v5264 = vunpack.c.h.b16 %v1156
    %v5265 = vunpack.c.l.b16 %v1157
    %v5266 = vunpack.c.h.b16 %v1157
    %v5267 = vunpack.c.l.b16 %v1158
    %v5268 = vunpack.c.h.b16 %v1158
    %v5269 = vunpack.c.l.b16 %v1159
    %v5270 = vunpack.c.h.b16 %v1159
    %v5271 = vunpack.c.l.b16 %v1160
    %v5272 = vunpack.c.h.b16 %v1160
    %v5273 = vunpack.c.l.b16 %v1161
    %v5274 = vunpack.c.h.b16 %v1161
    %v5275 = vunpack.c.l.b16 %v1162
    %v5276 = vunpack.c.h.b16 %v1162
    %v5277 = vunpack.c.l.b16 %v1163
    %v5278 = vunpack.c.h.b16 %v1163
    %v5279 = vunpack.c.l.b16 %v1164
    %v5280 = vunpack.c.h.b16 %v1164
    %v5281 = vunpack.c.l.b16 %v1165
    %v5282 = vunpack.c.h.b16 %v1165
    %v5283 = vunpack.c.l.b16 %v1166
    %v5284 = vunpack.c.h.b16 %v1166
    %v5285 = vunpack.c.l.b16 %v1167
    %v5286 = vunpack.c.h.b16 %v1167
    %v5287 = vunpack.c.l.b16 %v1168
    %v5288 = vunpack.c.h.b16 %v1168
    %v5289 = vunpack.c.l.b16 %v1169
    %v5290 = vunpack.c.h.b16 %v1169
    %v5291 = vunpack.c.l.b16 %v1170
    %v5292 = vunpack.c.h.b16 %v1170
    %v5293 = vunpack.c.l.b16 %v1171
    %v5294 = vunpack.c.h.b16 %v1171
    %v5295 = vunpack.c.l.b16 %v1172
    %v5296 = vunpack.c.h.b16 %v1172
    %v5297 = vunpack.c.l.b16 %v1173
    %v5298 = vunpack.c.h.b16 %v1173
    %v5299 = vunpack.c.l.b16 %v1174
    %v5300 = vunpack.c.h.b16 %v1174
    %v5301 = vunpack.c.l.b16 %v1175
    %v5302 = vunpack.c.h.b16 %v1175
    %v5303 = vunpack.c.l.b16 %v1176
    %v5304 = vunpack.c.h.b16 %v1176
    %v5305 = vunpack.c.l.b16 %v1177
    %v5306 = vunpack.c.h.b16 %v1177
    %v5307 = vunpack.c.l.b16 %v1178
    %v5308 = vunpack.c.h.b16 %v1178
    %v5309 = vunpack.c.l.b16 %v1179
    %v5310 = vunpack.c.h.b16 %v1179
    %v5311 = vunpack.c.l.b16 %v1180
    %v5312 = vunpack.c.h.b16 %v1180
    %v5313 = vunpack.c.l.b16 %v1181
    %v5314 = vunpack.c.h.b16 %v1181
    %v5315 = vunpack.c.l.b16 %v1182
    %v5316 = vunpack.c.h.b16 %v1182
    %v5317 = vunpack.c.l.b16 %v1183
    %v5318 = vunpack.c.h.b16 %v1183
    %v5319 = vunpack.c.l.b16 %v1184
    %v5320 = vunpack.c.h.b16 %v1184
    %v5321 = vunpack.c.l.b16 %v1185
    %v5322 = vunpack.c.h.b16 %v1185
    %v5323 = vunpack.c.l.b16 %v1186
    %v5324 = vunpack.c.h.b16 %v1186
    %v5325 = vunpack.c.l.b16 %v1187
    %v5326 = vunpack.c.h.b16 %v1187
    %v5327 = vunpack.c.l.b16 %v1188
    %v5328 = vunpack.c.h.b16 %v1188
    %v5329 = vunpack.c.l.b16 %v1189
    %v5330 = vunpack.c.h.b16 %v1189
    %v5331 = vunpack.c.l.b16 %v1190
    %v5332 = vunpack.c.h.b16 %v1190
    %v5333 = vunpack.c.l.b16 %v1191
    %v5334 = vunpack.c.h.b16 %v1191
    %v5335 = vunpack.c.l.b16 %v1192
    %v5336 = vunpack.c.h.b16 %v1192
    %v5337 = vunpack.c.l.b16 %v1193
    %v5338 = vunpack.c.h.b16 %v1193
    %v5339 = vunpack.c.l.b16 %v1194
    %v5340 = vunpack.c.h.b16 %v1194
    %v5341 = vunpack.c.l.b16 %v1195
    %v5342 = vunpack.c.h.b16 %v1195
    %v5343 = vunpack.c.l.b16 %v1196
    %v5344 = vunpack.c.h.b16 %v1196
    %v5345 = vunpack.c.l.b16 %v1197
    %v5346 = vunpack.c.h.b16 %v1197
    %v5347 = vunpack.c.l.b16 %v1198
    %v5348 = vunpack.c.h.b16 %v1198
    %v5349 = vunpack.c.l.b16 %v1199
    %v5350 = vunpack.c.h.b16 %v1199
    %v5351 = vunpack.c.l.b16 %v1200
    %v5352 = vunpack.c.h.b16 %v1200
    %v5353 = vunpack.c.l.b16 %v1201
    %v5354 = vunpack.c.h.b16 %v1201
    %v5355 = vunpack.c.l.b16 %v1202
    %v5356 = vunpack.c.h.b16 %v1202
    %v5357 = vunpack.c.l.b16 %v1203
    %v5358 = vunpack.c.h.b16 %v1203
    %v5359 = vunpack.c.l.b16 %v1204
    %v5360 = vunpack.c.h.b16 %v1204
    %v5361 = vunpack.c.l.b16 %v1205
    %v5362 = vunpack.c.h.b16 %v1205
    %v5363 = vunpack.c.l.b16 %v1206
    %v5364 = vunpack.c.h.b16 %v1206
    %v5365 = vunpack.c.l.b16 %v1207
    %v5366 = vunpack.c.h.b16 %v1207
    %v5367 = vunpack.c.l.b16 %v1208
    %v5368 = vunpack.c.h.b16 %v1208
    %v5369 = vunpack.c.l.b16 %v1209
    %v5370 = vunpack.c.h.b16 %v1209
    %v5371 = vunpack.c.l.b16 %v1210
    %v5372 = vunpack.c.h.b16 %v1210
    %v5373 = vunpack.c.l.b16 %v1211
    %v5374 = vunpack.c.h.b16 %v1211
    %v5375 = vunpack.c.l.b16 %v1212
    %v5376 = vunpack.c.h.b16 %v1212
    %v5377 = vunpack.c.l.b16 %v1213
    %v5378 = vunpack.c.h.b16 %v1213
    %v5379 = vunpack.c.l.b16 %v1214
    %v5380 = vunpack.c.h.b16 %v1214
    %v5381 = vunpack.c.l.b16 %v1215
    %v5382 = vunpack.c.h.b16 %v1215
    %v5383 = vunpack.c.l.b16 %v1216
    %v5384 = vunpack.c.h.b16 %v1216
    %v5385 = vunpack.c.l.b16 %v1217
    %v5386 = vunpack.c.h.b16 %v1217
    %v5387 = vunpack.c.l.b16 %v1218
    %v5388 = vunpack.c.h.b16 %v1218
    %v5389 = vunpack.c.l.b16 %v1219
    %v5390 = vunpack.c.h.b16 %v1219
    %v5391 = vunpack.c.l.b16 %v1220
    %v5392 = vunpack.c.h.b16 %v1220
    %v5393 = vunpack.c.l.b16 %v1221
    %v5394 = vunpack.c.h.b16 %v1221
    %v5395 = vunpack.c.l.b16 %v1222
    %v5396 = vunpack.c.h.b16 %v1222
    %v5397 = vunpack.c.l.b16 %v1223
    %v5398 = vunpack.c.h.b16 %v1223
    %v5399 = vunpack.c.l.b16 %v1224
    %v5400 = vunpack.c.h.b16 %v1224
    %v5401 = vunpack.c.l.b16 %v1225
    %v5402 = vunpack.c.h.b16 %v1225
    %v5403 = vunpack.c.l.b16 %v1226
    %v5404 = vunpack.c.h.b16 %v1226
    %v5405 = vunpack.c.l.b16 %v1227
    %v5406 = vunpack.c.h.b16 %v1227
    %v5407 = vunpack.c.l.b16 %v1228
    %v5408 = vunpack.c.h.b16 %v1228
    %v5409 = vunpack.c.l.b16 %v1229
    %v5410 = vunpack.c.h.b16 %v1229
    %v5411 = vunpack.c.l.b16 %v1230
    %v5412 = vunpack.c.h.b16 %v1230
    %v5413 = vunpack.c.l.b16 %v1231
    %v5414 = vunpack.c.h.b16 %v1231
    %v5415 = vunpack.c.l.b16 %v1232
    %v5416 = vunpack.c.h.b16 %v1232
    %v5417 = vunpack.c.l.b16 %v1233
    %v5418 = vunpack.c.h.b16 %v1233
    %v5419 = vunpack.c.l.b16 %v1234
    %v5420 = vunpack.c.h.b16 %v1234
    %v5421 = vunpack.c.l.b16 %v1235
    %v5422 = vunpack.c.h.b16 %v1235
    %v5423 = vunpack.c.l.b16 %v1236
    %v5424 = vunpack.c.h.b16 %v1236
    %v5425 = vunpack.c.l.b16 %v1237
    %v5426 = vunpack.c.h.b16 %v1237
    %v5427 = vunpack.c.l.b16 %v1238
    %v5428 = vunpack.c.h.b16 %v1238
    %v5429 = vunpack.c.l.b16 %v1239
    %v5430 = vunpack.c.h.b16 %v1239
    %v5431 = vunpack.c.l.b16 %v1240
    %v5432 = vunpack.c.h.b16 %v1240
    %v5433 = vunpack.c.l.b16 %v1241
    %v5434 = vunpack.c.h.b16 %v1241
    %v5435 = vunpack.c.l.b16 %v1242
    %v5436 = vunpack.c.h.b16 %v1242
    %v5437 = vunpack.c.l.b16 %v1243
    %v5438 = vunpack.c.h.b16 %v1243
    %v5439 = vunpack.c.l.b16 %v1244
    %v5440 = vunpack.c.h.b16 %v1244
    %v5441 = vunpack.c.l.b16 %v1245
    %v5442 = vunpack.c.h.b16 %v1245
    %v5443 = vunpack.c.l.b16 %v1246
    %v5444 = vunpack.c.h.b16 %v1246
    %v5445 = vunpack.c.l.b16 %v1247
    %v5446 = vunpack.c.h.b16 %v1247
    %v5447 = vunpack.c.l.b16 %v1248
    %v5448 = vunpack.c.h.b16 %v1248
    %v5449 = vunpack.c.l.b16 %v1249
    %v5450 = vunpack.c.h.b16 %v1249
    %v5451 = vunpack.c.l.b16 %v1250
    %v5452 = vunpack.c.h.b16 %v1250
    %v5453 = vunpack.c.l.b16 %v1251
    %v5454 = vunpack.c.h.b16 %v1251
    %v5455 = vunpack.c.l.b16 %v1252
    %v5456 = vunpack.c.h.b16 %v1252
    %v5457 = vunpack.c.l.b16 %v1253
    %v5458 = vunpack.c.h.b16 %v1253
    %v5459 = vunpack.c.l.b16 %v1254
    %v5460 = vunpack.c.h.b16 %v1254
    %v5461 = vunpack.c.l.b16 %v1255
    %v5462 = vunpack.c.h.b16 %v1255
    %v5463 = vunpack.c.l.b16 %v1256
    %v5464 = vunpack.c.h.b16 %v1256
    %v5465 = vunpack.c.l.b16 %v1257
    %v5466 = vunpack.c.h.b16 %v1257
    %v5467 = vunpack.c.l.b16 %v1258
    %v5468 = vunpack.c.h.b16 %v1258
    %v5469 = vunpack.c.l.b16 %v1259
    %v5470 = vunpack.c.h.b16 %v1259
    %v5471 = vunpack.c.l.b16 %v1260
    %v5472 = vunpack.c.h.b16 %v1260
    %v5473 = vunpack.c.l.b16 %v1261
    %v5474 = vunpack.c.h.b16 %v1261
    %v5475 = vunpack.c.l.b16 %v1262
    %v5476 = vunpack.c.h.b16 %v1262
    %v5477 = vunpack.c.l.b16 %v1263
    %v5478 = vunpack.c.h.b16 %v1263
    %v5479 = vunpack.c.l.b16 %v1264
    %v5480 = vunpack.c.h.b16 %v1264
    %v5481 = vunpack.c.l.b16 %v1265
    %v5482 = vunpack.c.h.b16 %v1265
    %v5483 = vunpack.c.l.b16 %v1266
    %v5484 = vunpack.c.h.b16 %v1266
    %v5485 = vunpack.c.l.b16 %v1267
    %v5486 = vunpack.c.h.b16 %v1267
    %v5487 = vunpack.c.l.b16 %v1268
    %v5488 = vunpack.c.h.b16 %v1268
    %v5489 = vunpack.c.l.b16 %v1269
    %v5490 = vunpack.c.h.b16 %v1269
    %v5491 = vunpack.c.l.b16 %v1270
    %v5492 = vunpack.c.h.b16 %v1270
    %v5493 = vunpack.c.l.b16 %v1271
    %v5494 = vunpack.c.h.b16 %v1271
    %v5495 = vunpack.c.l.b16 %v1272
    %v5496 = vunpack.c.h.b16 %v1272
    %v5497 = vunpack.c.l.b16 %v1273
    %v5498 = vunpack.c.h.b16 %v1273
    %v5499 = vunpack.c.l.b16 %v1274
    %v5500 = vunpack.c.h.b16 %v1274
    %v5501 = vunpack.c.l.b16 %v1275
    %v5502 = vunpack.c.h.b16 %v1275
    %v5503 = vunpack.c.l.b16 %v1276
    %v5504 = vunpack.c.h.b16 %v1276
    %v5505 = vunpack.c.l.b16 %v1277
    %v5506 = vunpack.c.h.b16 %v1277
    %v5507 = vunpack.c.l.b16 %v1278
    %v5508 = vunpack.c.h.b16 %v1278
    %v5509 = vunpack.c.l.b16 %v1279
    %v5510 = vunpack.c.h.b16 %v1279
    %v5511 = vunpack.c.l.b16 %v1280
    %v5512 = vunpack.c.h.b16 %v1280
    %v5513 = vunpack.c.l.b16 %v1281
    %v5514 = vunpack.c.h.b16 %v1281
    %v5515 = vunpack.c.l.b16 %v1282
    %v5516 = vunpack.c.h.b16 %v1282
    %v5517 = vunpack.c.l.b16 %v1283
    %v5518 = vunpack.c.h.b16 %v1283
    %v5519 = vunpack.c.l.b16 %v1284
    %v5520 = vunpack.c.h.b16 %v1284
    %v5521 = vunpack.c.l.b16 %v1285
    %v5522 = vunpack.c.h.b16 %v1285
    %v5523 = vunpack.c.l.b16 %v1286
    %v5524 = vunpack.c.h.b16 %v1286
    %v5525 = vunpack.c.l.b16 %v1287
    %v5526 = vunpack.c.h.b16 %v1287
    %v5527 = vunpack.c.l.b16 %v1288
    %v5528 = vunpack.c.h.b16 %v1288
    %v5529 = vunpack.c.l.b16 %v1289
    %v5530 = vunpack.c.h.b16 %v1289
    %v5531 = vunpack.c.l.b16 %v1290
    %v5532 = vunpack.c.h.b16 %v1290
    %v5533 = vunpack.c.l.b16 %v1291
    %v5534 = vunpack.c.h.b16 %v1291
    %v5535 = vunpack.c.l.b16 %v1292
    %v5536 = vunpack.c.h.b16 %v1292
    %v5537 = vunpack.c.l.b16 %v1293
    %v5538 = vunpack.c.h.b16 %v1293
    %v5539 = vunpack.c.l.b16 %v1294
    %v5540 = vunpack.c.h.b16 %v1294
    %v5541 = vunpack.c.l.b16 %v1295
    %v5542 = vunpack.c.h.b16 %v1295
    %v5543 = vunpack.c.l.b16 %v1296
    %v5544 = vunpack.c.h.b16 %v1296
    %v5545 = vunpack.c.l.b16 %v1297
    %v5546 = vunpack.c.h.b16 %v1297
    %v5547 = vunpack.c.l.b16 %v1298
    %v5548 = vunpack.c.h.b16 %v1298
    %v5549 = vunpack.c.l.b16 %v1299
    %v5550 = vunpack.c.h.b16 %v1299
    %v5551 = vunpack.c.l.b16 %v1300
    %v5552 = vunpack.c.h.b16 %v1300
    %v5553 = vunpack.c.l.b16 %v1301
    %v5554 = vunpack.c.h.b16 %v1301
    %v5555 = vunpack.c.l.b16 %v1302
    %v5556 = vunpack.c.h.b16 %v1302
    %v5557 = vunpack.c.l.b16 %v1303
    %v5558 = vunpack.c.h.b16 %v1303
    %v5559 = vunpack.c.l.b16 %v1304
    %v5560 = vunpack.c.h.b16 %v1304
    %v5561 = vunpack.c.l.b16 %v1305
    %v5562 = vunpack.c.h.b16 %v1305
    %v5563 = vunpack.c.l.b16 %v1306
    %v5564 = vunpack.c.h.b16 %v1306
    %v5565 = vunpack.c.l.b16 %v1307
    %v5566 = vunpack.c.h.b16 %v1307
    %v5567 = vunpack.c.l.b16 %v1308
    %v5568 = vunpack.c.h.b16 %v1308
    %v5569 = vunpack.c.l.b16 %v1309
    %v5570 = vunpack.c.h.b16 %v1309
    %v5571 = vunpack.c.l.b16 %v1310
    %v5572 = vunpack.c.h.b16 %v1310
    %v5573 = vunpack.c.l.b16 %v1311
    %v5574 = vunpack.c.h.b16 %v1311
    %v5575 = vunpack.c.l.b16 %v1312
    %v5576 = vunpack.c.h.b16 %v1312
    %v5577 = vunpack.c.l.b16 %v1313
    %v5578 = vunpack.c.h.b16 %v1313
    %v5579 = vunpack.c.l.b16 %v1314
    %v5580 = vunpack.c.h.b16 %v1314
    %v5581 = vunpack.c.l.b16 %v1315
    %v5582 = vunpack.c.h.b16 %v1315
    %v5583 = vunpack.c.l.b16 %v1316
    %v5584 = vunpack.c.h.b16 %v1316
    %v5585 = vunpack.c.l.b16 %v1317
    %v5586 = vunpack.c.h.b16 %v1317
    %v5587 = vunpack.c.l.b16 %v1318
    %v5588 = vunpack.c.h.b16 %v1318
    %v5589 = vunpack.c.l.b16 %v1319
    %v5590 = vunpack.c.h.b16 %v1319
    %v5591 = vunpack.c.l.b16 %v1320
    %v5592 = vunpack.c.h.b16 %v1320
    %v5593 = vunpack.c.l.b16 %v1321
    %v5594 = vunpack.c.h.b16 %v1321
    %v5595 = vunpack.c.l.b16 %v1322
    %v5596 = vunpack.c.h.b16 %v1322
    %v5597 = vunpack.c.l.b16 %v1323
    %v5598 = vunpack.c.h.b16 %v1323
    %v5599 = vunpack.c.l.b16 %v1324
    %v5600 = vunpack.c.h.b16 %v1324
    %v5601 = vunpack.c.l.b16 %v1325
    %v5602 = vunpack.c.h.b16 %v1325
    %v5603 = vunpack.c.l.b16 %v1326
    %v5604 = vunpack.c.h.b16 %v1326
    %v5605 = vunpack.c.l.b16 %v1327
    %v5606 = vunpack.c.h.b16 %v1327
    %v5607 = vunpack.c.l.b16 %v1328
    %v5608 = vunpack.c.h.b16 %v1328
    %v5609 = vunpack.c.l.b16 %v1329
    %v5610 = vunpack.c.h.b16 %v1329
    %v5611 = vunpack.c.l.b16 %v1330
    %v5612 = vunpack.c.h.b16 %v1330
    %v5613 = vunpack.c.l.b16 %v1331
    %v5614 = vunpack.c.h.b16 %v1331
    %v5615 = vunpack.c.l.b16 %v1332
    %v5616 = vunpack.c.h.b16 %v1332
    %v5617 = vunpack.c.l.b16 %v1333
    %v5618 = vunpack.c.h.b16 %v1333
    %v5619 = vunpack.c.l.b16 %v1334
    %v5620 = vunpack.c.h.b16 %v1334
    %v5621 = vunpack.c.l.b16 %v1335
    %v5622 = vunpack.c.h.b16 %v1335
    %v5623 = vunpack.c.l.b16 %v1336
    %v5624 = vunpack.c.h.b16 %v1336
    %v5625 = vunpack.c.l.b16 %v1337
    %v5626 = vunpack.c.h.b16 %v1337
    %v5627 = vunpack.c.l.b16 %v1338
    %v5628 = vunpack.c.h.b16 %v1338
    %v5629 = vunpack.c.l.b16 %v1339
    %v5630 = vunpack.c.h.b16 %v1339
    %v5631 = vunpack.c.l.b16 %v1340
    %v5632 = vunpack.c.h.b16 %v1340
    %v5633 = vunpack.c.l.b16 %v1341
    %v5634 = vunpack.c.h.b16 %v1341
    %v5635 = vunpack.c.l.b16 %v1342
    %v5636 = vunpack.c.h.b16 %v1342
    %v5637 = vunpack.c.l.b16 %v1343
    %v5638 = vunpack.c.h.b16 %v1343
    %v5639 = vunpack.c.l.b16 %v1344
    %v5640 = vunpack.c.h.b16 %v1344
    %v5641 = vunpack.c.l.b16 %v1345
    %v5642 = vunpack.c.h.b16 %v1345
    %v5643 = vunpack.c.l.b16 %v1346
    %v5644 = vunpack.c.h.b16 %v1346
    %v5645 = vunpack.c.l.b16 %v1347
    %v5646 = vunpack.c.h.b16 %v1347
    %v5647 = vunpack.c.l.b16 %v1348
    %v5648 = vunpack.c.h.b16 %v1348
    %v5649 = vunpack.c.l.b16 %v1349
    %v5650 = vunpack.c.h.b16 %v1349
    %v5651 = vunpack.c.l.b16 %v1350
    %v5652 = vunpack.c.h.b16 %v1350
    %v5653 = vunpack.c.l.b16 %v1351
    %v5654 = vunpack.c.h.b16 %v1351
    %v5655 = vunpack.c.l.b16 %v1352
    %v5656 = vunpack.c.h.b16 %v1352
    %v5657 = vunpack.c.l.b16 %v1353
    %v5658 = vunpack.c.h.b16 %v1353
    %v5659 = vunpack.c.l.b16 %v1354
    %v5660 = vunpack.c.h.b16 %v1354
    %v5661 = vunpack.c.l.b16 %v1355
    %v5662 = vunpack.c.h.b16 %v1355
    %v5663 = vunpack.c.l.b16 %v1356
    %v5664 = vunpack.c.h.b16 %v1356
    %v5665 = vunpack.c.l.b16 %v1357
    %v5666 = vunpack.c.h.b16 %v1357
    %v5667 = vunpack.c.l.b16 %v1358
    %v5668 = vunpack.c.h.b16 %v1358
    %v5669 = vunpack.c.l.b16 %v1359
    %v5670 = vunpack.c.h.b16 %v1359
    %v5671 = vunpack.c.l.b16 %v1360
    %v5672 = vunpack.c.h.b16 %v1360
    %v5673 = vunpack.c.l.b16 %v1361
    %v5674 = vunpack.c.h.b16 %v1361
    %v5675 = vunpack.c.l.b16 %v1362
    %v5676 = vunpack.c.h.b16 %v1362
    %v5677 = vunpack.c.l.b16 %v1363
    %v5678 = vunpack.c.h.b16 %v1363
    %v5679 = vunpack.c.l.b16 %v1364
    %v5680 = vunpack.c.h.b16 %v1364
    %v5681 = vunpack.c.l.b16 %v1365
    %v5682 = vunpack.c.h.b16 %v1365
    %v5683 = vunpack.c.l.b16 %v1366
    %v5684 = vunpack.c.h.b16 %v1366
    %v5685 = vunpack.c.l.b16 %v1367
    %v5686 = vunpack.c.h.b16 %v1367
    %v5687 = vunpack.c.l.b16 %v1368
    %v5688 = vunpack.c.h.b16 %v1368
    %v5689 = vunpack.c.l.b16 %v1369
    %v5690 = vunpack.c.h.b16 %v1369
    %v5691 = vunpack.c.l.b16 %v1370
    %v5692 = vunpack.c.h.b16 %v1370
    %v5693 = vunpack.c.l.b16 %v1371
    %v5694 = vunpack.c.h.b16 %v1371
    %v5695 = vunpack.c.l.b16 %v1372
    %v5696 = vunpack.c.h.b16 %v1372
    %v5697 = vunpack.c.l.b16 %v1373
    %v5698 = vunpack.c.h.b16 %v1373
    %v5699 = vunpack.c.l.b16 %v1374
    %v5700 = vunpack.c.h.b16 %v1374
    %v5701 = vunpack.c.l.b16 %v1375
    %v5702 = vunpack.c.h.b16 %v1375
    %v5703 = vunpack.c.l.b16 %v1376
    %v5704 = vunpack.c.h.b16 %v1376
    %v5705 = vunpack.c.l.b16 %v1377
    %v5706 = vunpack.c.h.b16 %v1377
    %v5707 = vunpack.c.l.b16 %v1378
    %v5708 = vunpack.c.h.b16 %v1378
    %v5709 = vunpack.c.l.b16 %v1379
    %v5710 = vunpack.c.h.b16 %v1379
    %v5711 = vunpack.c.l.b16 %v1380
    %v5712 = vunpack.c.h.b16 %v1380
    %v5713 = vunpack.c.l.b16 %v1381
    %v5714 = vunpack.c.h.b16 %v1381
    %v5715 = vunpack.c.l.b16 %v1382
    %v5716 = vunpack.c.h.b16 %v1382
    %v5717 = vunpack.c.l.b16 %v1383
    %v5718 = vunpack.c.h.b16 %v1383
    %v5719 = vunpack.c.l.b16 %v1384
    %v5720 = vunpack.c.h.b16 %v1384
    %v5721 = vunpack.c.l.b16 %v1385
    %v5722 = vunpack.c.h.b16 %v1385
    %v5723 = vunpack.c.l.b16 %v1386
    %v5724 = vunpack.c.h.b16 %v1386
    %v5725 = vunpack.c.l.b16 %v1387
    %v5726 = vunpack.c.h.b16 %v1387
    %v5727 = vunpack.c.l.b16 %v1388
    %v5728 = vunpack.c.h.b16 %v1388
    %v5729 = vunpack.c.l.b16 %v1389
    %v5730 = vunpack.c.h.b16 %v1389
    %v5731 = vunpack.c.l.b16 %v1390
    %v5732 = vunpack.c.h.b16 %v1390
    %v5733 = vunpack.c.l.b16 %v1391
    %v5734 = vunpack.c.h.b16 %v1391
    %v5735 = vunpack.c.l.b16 %v1392
    %v5736 = vunpack.c.h.b16 %v1392
    %v5737 = vunpack.c.l.b16 %v1393
    %v5738 = vunpack.c.h.b16 %v1393
    %v5739 = vunpack.c.l.b16 %v1394
    %v5740 = vunpack.c.h.b16 %v1394
    %v5741 = vunpack.c.l.b16 %v1395
    %v5742 = vunpack.c.h.b16 %v1395
    %v5743 = vunpack.c.l.b16 %v1396
    %v5744 = vunpack.c.h.b16 %v1396
    %v5745 = vunpack.c.l.b16 %v1397
    %v5746 = vunpack.c.h.b16 %v1397
    %v5747 = vunpack.c.l.b16 %v1398
    %v5748 = vunpack.c.h.b16 %v1398
    %v5749 = vunpack.c.l.b16 %v1399
    %v5750 = vunpack.c.h.b16 %v1399
    %v5751 = vunpack.c.l.b16 %v1400
    %v5752 = vunpack.c.h.b16 %v1400
    %v5753 = vunpack.c.l.b16 %v1401
    %v5754 = vunpack.c.h.b16 %v1401
    %v5755 = vunpack.c.l.b16 %v1402
    %v5756 = vunpack.c.h.b16 %v1402
    %v5757 = vunpack.c.l.b16 %v1403
    %v5758 = vunpack.c.h.b16 %v1403
    %v5759 = vunpack.c.l.b16 %v1404
    %v5760 = vunpack.c.h.b16 %v1404
    %v5761 = vunpack.c.l.b16 %v1405
    %v5762 = vunpack.c.h.b16 %v1405
    %v5763 = vunpack.c.l.b16 %v1406
    %v5764 = vunpack.c.h.b16 %v1406
    %v5765 = vunpack.c.l.b16 %v1407
    %v5766 = vunpack.c.h.b16 %v1407
    %v5767 = vunpack.c.l.b16 %v1408
    %v5768 = vunpack.c.h.b16 %v1408
    %v5769 = vunpack.c.l.b16 %v1409
    %v5770 = vunpack.c.h.b16 %v1409
    %v5771 = vunpack.c.l.b16 %v1410
    %v5772 = vunpack.c.h.b16 %v1410
    %v5773 = vunpack.c.l.b16 %v1411
    %v5774 = vunpack.c.h.b16 %v1411
    %v5775 = vunpack.c.l.b16 %v1412
    %v5776 = vunpack.c.h.b16 %v1412
    %v5777 = vunpack.c.l.b16 %v1413
    %v5778 = vunpack.c.h.b16 %v1413
    %v5779 = vunpack.c.l.b16 %v1414
    %v5780 = vunpack.c.h.b16 %v1414
    %v5781 = vunpack.c.l.b16 %v1415
    %v5782 = vunpack.c.h.b16 %v1415
    %v5783 = vunpack.c.l.b16 %v1416
    %v5784 = vunpack.c.h.b16 %v1416
    %v5785 = vunpack.c.l.b16 %v1417
    %v5786 = vunpack.c.h.b16 %v1417
    %v5787 = vunpack.c.l.b16 %v1418
    %v5788 = vunpack.c.h.b16 %v1418
    %v5789 = vunpack.c.l.b16 %v1419
    %v5790 = vunpack.c.h.b16 %v1419
    %v5791 = vunpack.c.l.b16 %v1420
    %v5792 = vunpack.c.h.b16 %v1420
    %v5793 = vunpack.c.l.b16 %v1421
    %v5794 = vunpack.c.h.b16 %v1421
    %v5795 = vunpack.c.l.b16 %v1422
    %v5796 = vunpack.c.h.b16 %v1422
    %v5797 = vunpack.c.l.b16 %v1423
    %v5798 = vunpack.c.h.b16 %v1423
    %v5799 = vunpack.c.l.b16 %v1424
    %v5800 = vunpack.c.h.b16 %v1424
    %v5801 = vunpack.c.l.b16 %v1425
    %v5802 = vunpack.c.h.b16 %v1425
    %v5803 = vunpack.c.l.b16 %v1426
    %v5804 = vunpack.c.h.b16 %v1426
    %v5805 = vunpack.c.l.b16 %v1427
    %v5806 = vunpack.c.h.b16 %v1427
    %v5807 = vunpack.c.l.b16 %v1428
    %v5808 = vunpack.c.h.b16 %v1428
    %v5809 = vunpack.c.l.b16 %v1429
    %v5810 = vunpack.c.h.b16 %v1429
    %v5811 = vunpack.c.l.b16 %v1430
    %v5812 = vunpack.c.h.b16 %v1430
    %v5813 = vunpack.c.l.b16 %v1431
    %v5814 = vunpack.c.h.b16 %v1431
    %v5815 = vunpack.c.l.b16 %v1432
    %v5816 = vunpack.c.h.b16 %v1432
    %v5817 = vunpack.c.l.b16 %v1433
    %v5818 = vunpack.c.h.b16 %v1433
    %v5819 = vunpack.c.l.b16 %v1434
    %v5820 = vunpack.c.h.b16 %v1434
    %v5821 = vunpack.c.l.b16 %v1435
    %v5822 = vunpack.c.h.b16 %v1435
    %v5823 = vunpack.c.l.b16 %v1436
    %v5824 = vunpack.c.h.b16 %v1436
    %v5825 = vunpack.c.l.b16 %v1437
    %v5826 = vunpack.c.h.b16 %v1437
    %v5827 = vunpack.c.l.b16 %v1438
    %v5828 = vunpack.c.h.b16 %v1438
    %v5829 = vunpack.c.l.b16 %v1439
    %v5830 = vunpack.c.h.b16 %v1439
    %v5831 = vunpack.c.l.b16 %v1440
    %v5832 = vunpack.c.h.b16 %v1440
    %v5833 = vunpack.c.l.b16 %v1441
    %v5834 = vunpack.c.h.b16 %v1441
    %v5835 = vunpack.c.l.b16 %v1442
    %v5836 = vunpack.c.h.b16 %v1442
    %v5837 = vunpack.c.l.b16 %v1443
    %v5838 = vunpack.c.h.b16 %v1443
    %v5839 = vunpack.c.l.b16 %v1444
    %v5840 = vunpack.c.h.b16 %v1444
    %v5841 = vunpack.c.l.b16 %v1445
    %v5842 = vunpack.c.h.b16 %v1445
    %v5843 = vunpack.c.l.b16 %v1446
    %v5844 = vunpack.c.h.b16 %v1446
    %v5845 = vunpack.c.l.b16 %v1447
    %v5846 = vunpack.c.h.b16 %v1447
    %v5847 = vunpack.c.l.b16 %v1448
    %v5848 = vunpack.c.h.b16 %v1448
    %v5849 = vunpack.c.l.b16 %v1449
    %v5850 = vunpack.c.h.b16 %v1449
    %v5851 = vunpack.c.l.b16 %v1450
    %v5852 = vunpack.c.h.b16 %v1450
    %v5853 = vunpack.c.l.b16 %v1451
    %v5854 = vunpack.c.h.b16 %v1451
    %v5855 = vunpack.c.l.b16 %v1452
    %v5856 = vunpack.c.h.b16 %v1452
    %v5857 = vunpack.c.l.b16 %v1453
    %v5858 = vunpack.c.h.b16 %v1453
    %v5859 = vunpack.c.l.b16 %v1454
    %v5860 = vunpack.c.h.b16 %v1454
    %v5861 = vunpack.c.l.b16 %v1455
    %v5862 = vunpack.c.h.b16 %v1455
    %v5863 = vunpack.c.l.b16 %v1456
    %v5864 = vunpack.c.h.b16 %v1456
    %v5865 = vunpack.c.l.b16 %v1457
    %v5866 = vunpack.c.h.b16 %v1457
    %v5867 = vunpack.c.l.b16 %v1458
    %v5868 = vunpack.c.h.b16 %v1458
    %v5869 = vunpack.c.l.b16 %v1459
    %v5870 = vunpack.c.h.b16 %v1459
    %v5871 = vunpack.c.l.b16 %v1460
    %v5872 = vunpack.c.h.b16 %v1460
    %v5873 = vunpack.c.l.b16 %v1461
    %v5874 = vunpack.c.h.b16 %v1461
    %v5875 = vunpack.c.l.b16 %v1462
    %v5876 = vunpack.c.h.b16 %v1462
    %v5877 = vunpack.c.l.b16 %v1463
    %v5878 = vunpack.c.h.b16 %v1463
    %v5879 = vunpack.c.l.b16 %v1464
    %v5880 = vunpack.c.h.b16 %v1464
    %v5881 = vunpack.c.l.b16 %v1465
    %v5882 = vunpack.c.h.b16 %v1465
    %v5883 = vunpack.c.l.b16 %v1466
    %v5884 = vunpack.c.h.b16 %v1466
    %v5885 = vunpack.c.l.b16 %v1467
    %v5886 = vunpack.c.h.b16 %v1467
    %v5887 = vunpack.c.l.b16 %v1468
    %v5888 = vunpack.c.h.b16 %v1468
    %v5889 = vunpack.c.l.b16 %v1469
    %v5890 = vunpack.c.h.b16 %v1469
    %v5891 = vunpack.c.l.b16 %v1470
    %v5892 = vunpack.c.h.b16 %v1470
    %v5893 = vunpack.c.l.b16 %v1471
    %v5894 = vunpack.c.h.b16 %v1471
    %v5895 = vunpack.c.l.b16 %v1472
    %v5896 = vunpack.c.h.b16 %v1472
    %v5897 = vunpack.c.l.b16 %v1473
    %v5898 = vunpack.c.h.b16 %v1473
    %v5899 = vunpack.c.l.b16 %v1474
    %v5900 = vunpack.c.h.b16 %v1474
    %v5901 = vunpack.c.l.b16 %v1475
    %v5902 = vunpack.c.h.b16 %v1475
    %v5903 = vunpack.c.l.b16 %v1476
    %v5904 = vunpack.c.h.b16 %v1476
    %v5905 = vunpack.c.l.b16 %v1477
    %v5906 = vunpack.c.h.b16 %v1477
    %v5907 = vunpack.c.l.b16 %v1478
    %v5908 = vunpack.c.h.b16 %v1478
    %v5909 = vunpack.c.l.b16 %v1479
    %v5910 = vunpack.c.h.b16 %v1479
    %v5911 = vunpack.c.l.b16 %v1480
    %v5912 = vunpack.c.h.b16 %v1480
    %v5913 = vunpack.c.l.b16 %v1481
    %v5914 = vunpack.c.h.b16 %v1481
    %v5915 = vunpack.c.l.b16 %v1482
    %v5916 = vunpack.c.h.b16 %v1482
    %v5917 = vunpack.c.l.b16 %v1483
    %v5918 = vunpack.c.h.b16 %v1483
    %v5919 = vunpack.c.l.b16 %v1484
    %v5920 = vunpack.c.h.b16 %v1484
    %v5921 = vunpack.c.l.b16 %v1485
    %v5922 = vunpack.c.h.b16 %v1485
    %v5923 = vunpack.c.l.b16 %v1486
    %v5924 = vunpack.c.h.b16 %v1486
    %v5925 = vunpack.c.l.b16 %v1487
    %v5926 = vunpack.c.h.b16 %v1487
    %v5927 = vunpack.c.l.b16 %v1488
    %v5928 = vunpack.c.h.b16 %v1488
    %v5929 = vunpack.c.l.b16 %v1489
    %v5930 = vunpack.c.h.b16 %v1489
    %v5931 = vunpack.c.l.b16 %v1490
    %v5932 = vunpack.c.h.b16 %v1490
    %v5933 = vunpack.c.l.b16 %v1491
    %v5934 = vunpack.c.h.b16 %v1491
    %v5935 = vunpack.c.l.b16 %v1492
    %v5936 = vunpack.c.h.b16 %v1492
    %v5937 = vunpack.c.l.b16 %v1493
    %v5938 = vunpack.c.h.b16 %v1493
    %v5939 = vunpack.c.l.b16 %v1494
    %v5940 = vunpack.c.h.b16 %v1494
    %v5941 = vunpack.c.l.b16 %v1495
    %v5942 = vunpack.c.h.b16 %v1495
    %v5943 = vunpack.c.l.b16 %v1496
    %v5944 = vunpack.c.h.b16 %v1496
    %v5945 = vunpack.c.l.b16 %v1497
    %v5946 = vunpack.c.h.b16 %v1497
    %v5947 = vunpack.c.l.b16 %v1498
    %v5948 = vunpack.c.h.b16 %v1498
    %v5949 = vunpack.c.l.b16 %v1499
    %v5950 = vunpack.c.h.b16 %v1499
    %v5951 = vunpack.c.l.b16 %v1500
    %v5952 = vunpack.c.h.b16 %v1500
    %v5953 = vunpack.c.l.b16 %v1501
    %v5954 = vunpack.c.h.b16 %v1501
    %v5955 = vunpack.c.l.b16 %v1502
    %v5956 = vunpack.c.h.b16 %v1502
    %v5957 = vunpack.c.l.b16 %v1503
    %v5958 = vunpack.c.h.b16 %v1503
    %v5959 = vunpack.c.l.b16 %v1504
    %v5960 = vunpack.c.h.b16 %v1504
    %v5961 = vunpack.c.l.b16 %v1505
    %v5962 = vunpack.c.h.b16 %v1505
    %v5963 = vunpack.c.l.b16 %v1506
    %v5964 = vunpack.c.h.b16 %v1506
    %v5965 = vunpack.c.l.b16 %v1507
    %v5966 = vunpack.c.h.b16 %v1507
    %v5967 = vunpack.c.l.b16 %v1508
    %v5968 = vunpack.c.h.b16 %v1508
    %v5969 = vunpack.c.l.b16 %v1509
    %v5970 = vunpack.c.h.b16 %v1509
    %v5971 = vunpack.c.l.b16 %v1510
    %v5972 = vunpack.c.h.b16 %v1510
    %v5973 = vunpack.c.l.b16 %v1511
    %v5974 = vunpack.c.h.b16 %v1511
    %v5975 = vunpack.c.l.b16 %v1512
    %v5976 = vunpack.c.h.b16 %v1512
    %v5977 = vunpack.c.l.b16 %v1513
    %v5978 = vunpack.c.h.b16 %v1513
    %v5979 = vunpack.c.l.b16 %v1514
    %v5980 = vunpack.c.h.b16 %v1514
    %v5981 = vunpack.c.l.b16 %v1515
    %v5982 = vunpack.c.h.b16 %v1515
    %v5983 = vunpack.c.l.b16 %v1516
    %v5984 = vunpack.c.h.b16 %v1516
    %v5985 = vunpack.c.l.b16 %v1517
    %v5986 = vunpack.c.h.b16 %v1517
    %v5987 = vunpack.c.l.b16 %v1518
    %v5988 = vunpack.c.h.b16 %v1518
    %v5989 = vunpack.c.l.b16 %v1519
    %v5990 = vunpack.c.h.b16 %v1519
    %v5991 = vunpack.c.l.b16 %v1520
    %v5992 = vunpack.c.h.b16 %v1520
    %v5993 = vunpack.c.l.b16 %v1521
    %v5994 = vunpack.c.h.b16 %v1521
    %v5995 = vunpack.c.l.b16 %v1522
    %v5996 = vunpack.c.h.b16 %v1522
    %v5997 = vunpack.c.l.b16 %v1523
    %v5998 = vunpack.c.h.b16 %v1523
    %v5999 = vunpack.c.l.b16 %v1524
    %v6000 = vunpack.c.h.b16 %v1524
    %v6001 = vunpack.c.l.b16 %v1525
    %v6002 = vunpack.c.h.b16 %v1525
    %v6003 = vunpack.c.l.b16 %v1526
    %v6004 = vunpack.c.h.b16 %v1526
    %v6005 = vunpack.c.l.b16 %v1527
    %v6006 = vunpack.c.h.b16 %v1527
    %v6007 = vunpack.c.l.b16 %v1528
    %v6008 = vunpack.c.h.b16 %v1528
    %v6009 = vunpack.c.l.b16 %v1529
    %v6010 = vunpack.c.h.b16 %v1529
    %v6011 = vunpack.c.l.b16 %v1530
    %v6012 = vunpack.c.h.b16 %v1530
    %v6013 = vunpack.c.l.b16 %v1531
    %v6014 = vunpack.c.h.b16 %v1531
    %v6015 = vunpack.c.l.b16 %v1532
    %v6016 = vunpack.c.h.b16 %v1532
    %v6017 = vunpack.c.l.b16 %v1533
    %v6018 = vunpack.c.h.b16 %v1533
    %v6019 = vunpack.c.l.b16 %v1534
    %v6020 = vunpack.c.h.b16 %v1534
    %v6021 = vunpack.c.l.b16 %v1535
    %v6022 = vunpack.c.h.b16 %v1535
    %v6023 = vunpack.c.l.b16 %v1536
    %v6024 = vunpack.c.h.b16 %v1536
    %v6025 = vunpack.c.l.b16 %v1537
    %v6026 = vunpack.c.h.b16 %v1537
    %v6027 = vunpack.c.l.b16 %v1538
    %v6028 = vunpack.c.h.b16 %v1538
    %v6029 = vunpack.c.l.b16 %v1539
    %v6030 = vunpack.c.h.b16 %v1539
    %v6031 = vunpack.c.l.b16 %v1540
    %v6032 = vunpack.c.h.b16 %v1540
    %v6033 = vunpack.c.l.b16 %v1541
    %v6034 = vunpack.c.h.b16 %v1541
    %v6035 = vunpack.c.l.b16 %v1542
    %v6036 = vunpack.c.h.b16 %v1542
    %v6037 = vunpack.c.l.b16 %v1543
    %v6038 = vunpack.c.h.b16 %v1543
    %v6039 = vunpack.c.l.b16 %v1544
    %v6040 = vunpack.c.h.b16 %v1544
    %v6041 = vunpack.c.l.b16 %v1545
    %v6042 = vunpack.c.h.b16 %v1545
    %v6043 = vunpack.c.l.b16 %v1546
    %v6044 = vunpack.c.h.b16 %v1546
    %v6045 = vunpack.c.l.b16 %v1547
    %v6046 = vunpack.c.h.b16 %v1547
    %v6047 = vunpack.c.l.b16 %v1548
    %v6048 = vunpack.c.h.b16 %v1548
    %v6049 = vunpack.c.l.b16 %v1549
    %v6050 = vunpack.c.h.b16 %v1549
    %v6051 = vunpack.c.l.b16 %v1550
    %v6052 = vunpack.c.h.b16 %v1550
    %v6053 = vunpack.c.l.b16 %v1551
    %v6054 = vunpack.c.h.b16 %v1551
    %v6055 = vunpack.c.l.b16 %v1552
    %v6056 = vunpack.c.h.b16 %v1552
    %v6057 = vunpack.c.l.b16 %v1553
    %v6058 = vunpack.c.h.b16 %v1553
    %v6059 = vunpack.c.l.b16 %v1554
    %v6060 = vunpack.c.h.b16 %v1554
    %v6061 = vunpack.c.l.b16 %v1555
    %v6062 = vunpack.c.h.b16 %v1555
    %v6063 = vunpack.c.l.b16 %v1556
    %v6064 = vunpack.c.h.b16 %v1556
    %v6065 = vunpack.c.l.b16 %v1557
    %v6066 = vunpack.c.h.b16 %v1557
    %v6067 = vunpack.c.l.b16 %v1558
    %v6068 = vunpack.c.h.b16 %v1558
    %v6069 = vunpack.c.l.b16 %v1559
    %v6070 = vunpack.c.h.b16 %v1559
    %v6071 = vunpack.c.l.b16 %v1560
    %v6072 = vunpack.c.h.b16 %v1560
    %v6073 = vunpack.c.l.b16 %v1561
    %v6074 = vunpack.c.h.b16 %v1561
    %v6075 = vunpack.c.l.b16 %v1562
    %v6076 = vunpack.c.h.b16 %v1562
    %v6077 = vunpack.c.l.b16 %v1563
    %v6078 = vunpack.c.h.b16 %v1563
    %v6079 = vunpack.c.l.b16 %v1564
    %v6080 = vunpack.c.h.b16 %v1564
    %v6081 = vunpack.c.l.b16 %v1565
    %v6082 = vunpack.c.h.b16 %v1565
    %v6083 = vunpack.c.l.b16 %v1566
    %v6084 = vunpack.c.h.b16 %v1566
    %v6085 = vunpack.c.l.b16 %v1567
    %v6086 = vunpack.c.h.b16 %v1567
    %v6087 = vunpack.c.l.b16 %v1568
    %v6088 = vunpack.c.h.b16 %v1568
    %v6089 = vunpack.c.l.b16 %v1569
    %v6090 = vunpack.c.h.b16 %v1569
    %v6091 = vunpack.c.l.b16 %v1570
    %v6092 = vunpack.c.h.b16 %v1570
    %v6093 = vunpack.c.l.b16 %v1571
    %v6094 = vunpack.c.h.b16 %v1571
    %v6095 = vunpack.c.l.b16 %v1572
    %v6096 = vunpack.c.h.b16 %v1572
    %v6097 = vunpack.c.l.b16 %v1573
    %v6098 = vunpack.c.h.b16 %v1573
    %v6099 = vunpack.c.l.b16 %v1574
    %v6100 = vunpack.c.h.b16 %v1574
    %v6101 = vunpack.c.l.b16 %v1575
    %v6102 = vunpack.c.h.b16 %v1575
    %v6103 = vunpack.c.l.b16 %v1576
    %v6104 = vunpack.c.h.b16 %v1576
    %v6105 = vunpack.c.l.b16 %v1577
    %v6106 = vunpack.c.h.b16 %v1577
    %v6107 = vunpack.c.l.b16 %v1578
    %v6108 = vunpack.c.h.b16 %v1578
    %v6109 = vunpack.c.l.b16 %v1579
    %v6110 = vunpack.c.h.b16 %v1579
    %v6111 = vunpack.c.l.b16 %v1580
    %v6112 = vunpack.c.h.b16 %v1580
    %v6113 = vunpack.c.l.b16 %v1581
    %v6114 = vunpack.c.h.b16 %v1581
    %v6115 = vunpack.c.l.b16 %v1582
    %v6116 = vunpack.c.h.b16 %v1582
    %v6117 = vunpack.c.l.b16 %v1583
    %v6118 = vunpack.c.h.b16 %v1583
    %v6119 = vunpack.c.l.b16 %v1584
    %v6120 = vunpack.c.h.b16 %v1584
    %v6121 = vunpack.c.l.b16 %v1585
    %v6122 = vunpack.c.h.b16 %v1585
    %v6123 = vunpack.c.l.b16 %v1586
    %v6124 = vunpack.c.h.b16 %v1586
    %v6125 = vunpack.c.l.b16 %v1587
    %v6126 = vunpack.c.h.b16 %v1587
    %v6127 = vunpack.c.l.b16 %v1588
    %v6128 = vunpack.c.h.b16 %v1588
    %v6129 = vunpack.c.l.b16 %v1589
    %v6130 = vunpack.c.h.b16 %v1589
    %v6131 = vunpack.c.l.b16 %v1590
    %v6132 = vunpack.c.h.b16 %v1590
    %v6133 = vunpack.c.l.b16 %v1591
    %v6134 = vunpack.c.h.b16 %v1591
    %v6135 = vunpack.c.l.b16 %v1592
    %v6136 = vunpack.c.h.b16 %v1592
    %v6137 = vunpack.c.l.b16 %v1593
    %v6138 = vunpack.c.h.b16 %v1593
    %v6139 = vunpack.c.l.b16 %v1594
    %v6140 = vunpack.c.h.b16 %v1594
    %v6141 = vunpack.c.l.b16 %v1595
    %v6142 = vunpack.c.h.b16 %v1595
    %v6143 = vunpack.c.l.b16 %v1596
    %v6144 = vunpack.c.h.b16 %v1596
    %v6145 = vunpack.c.l.b16 %v1597
    %v6146 = vunpack.c.h.b16 %v1597
    %v6147 = vunpack.c.l.b16 %v1598
    %v6148 = vunpack.c.h.b16 %v1598
    %v6149 = vunpack.c.l.b16 %v1599
    %v6150 = vunpack.c.h.b16 %v1599
    %v6151 = vunpack.c.l.b16 %v1600
    %v6152 = vunpack.c.h.b16 %v1600
    %v6153 = vunpack.c.l.b16 %v1601
    %v6154 = vunpack.c.h.b16 %v1601
    %v6155 = vunpack.c.l.b16 %v1602
    %v6156 = vunpack.c.h.b16 %v1602
    %v6157 = vunpack.c.l.b16 %v1603
    %v6158 = vunpack.c.h.b16 %v1603
    %v6159 = vunpack.c.l.b16 %v1604
    %v6160 = vunpack.c.h.b16 %v1604
    %v6161 = vunpack.c.l.b16 %v1605
    %v6162 = vunpack.c.h.b16 %v1605
    %v6163 = vunpack.c.l.b16 %v1606
    %v6164 = vunpack.c.h.b16 %v1606
    %v6165 = vunpack.c.l.b16 %v1607
    %v6166 = vunpack.c.h.b16 %v1607
    %v6167 = vunpack.c.l.b16 %v1608
    %v6168 = vunpack.c.h.b16 %v1608
    %v6169 = vunpack.c.l.b16 %v1609
    %v6170 = vunpack.c.h.b16 %v1609
    %v6171 = vunpack.c.l.b16 %v1610
    %v6172 = vunpack.c.h.b16 %v1610
    %v6173 = vunpack.c.l.b16 %v1611
    %v6174 = vunpack.c.h.b16 %v1611
    %v6175 = vunpack.c.l.b16 %v1612
    %v6176 = vunpack.c.h.b16 %v1612
    %v6177 = vunpack.c.l.b16 %v1613
    %v6178 = vunpack.c.h.b16 %v1613
    %v6179 = vunpack.c.l.b16 %v1614
    %v6180 = vunpack.c.h.b16 %v1614
    %v6181 = vunpack.c.l.b16 %v1615
    %v6182 = vunpack.c.h.b16 %v1615
    %v6183 = vunpack.c.l.b16 %v1616
    %v6184 = vunpack.c.h.b16 %v1616
    %v6185 = vunpack.c.l.b16 %v1617
    %v6186 = vunpack.c.h.b16 %v1617
    %v6187 = vunpack.c.l.b16 %v1618
    %v6188 = vunpack.c.h.b16 %v1618
    %v6189 = vunpack.c.l.b16 %v1619
    %v6190 = vunpack.c.h.b16 %v1619
    %v6191 = vunpack.c.l.b16 %v1620
    %v6192 = vunpack.c.h.b16 %v1620
    %v6193 = vunpack.c.l.b16 %v1621
    %v6194 = vunpack.c.h.b16 %v1621
    %v6195 = vunpack.c.l.b16 %v1622
    %v6196 = vunpack.c.h.b16 %v1622
    %v6197 = vunpack.c.l.b16 %v1623
    %v6198 = vunpack.c.h.b16 %v1623
    %v6199 = vunpack.c.l.b16 %v1624
    %v6200 = vunpack.c.h.b16 %v1624
    %v6201 = vunpack.c.l.b16 %v1625
    %v6202 = vunpack.c.h.b16 %v1625
    %v6203 = vunpack.c.l.b16 %v1626
    %v6204 = vunpack.c.h.b16 %v1626
    %v6205 = vunpack.c.l.b16 %v1627
    %v6206 = vunpack.c.h.b16 %v1627
    %v6207 = vunpack.c.l.b16 %v1628
    %v6208 = vunpack.c.h.b16 %v1628
    %v6209 = vunpack.c.l.b16 %v1629
    %v6210 = vunpack.c.h.b16 %v1629
    %v6211 = vunpack.c.l.b16 %v1630
    %v6212 = vunpack.c.h.b16 %v1630
    %v6213 = vunpack.c.l.b16 %v1631
    %v6214 = vunpack.c.h.b16 %v1631
    %v6215 = vunpack.c.l.b16 %v1632
    %v6216 = vunpack.c.h.b16 %v1632
    %v6217 = vunpack.c.l.b16 %v1633
    %v6218 = vunpack.c.h.b16 %v1633
    %v6219 = vunpack.c.l.b16 %v1634
    %v6220 = vunpack.c.h.b16 %v1634
    %v6221 = vunpack.c.l.b16 %v1635
    %v6222 = vunpack.c.h.b16 %v1635
    %v6223 = vunpack.c.l.b16 %v1636
    %v6224 = vunpack.c.h.b16 %v1636
    %v6225 = vunpack.c.l.b16 %v1637
    %v6226 = vunpack.c.h.b16 %v1637
    %v6227 = vunpack.c.l.b16 %v1638
    %v6228 = vunpack.c.h.b16 %v1638
    %v6229 = vunpack.c.l.b16 %v1639
    %v6230 = vunpack.c.h.b16 %v1639
    %v6231 = vunpack.c.l.b16 %v1640
    %v6232 = vunpack.c.h.b16 %v1640
    %v6233 = vunpack.c.l.b16 %v1641
    %v6234 = vunpack.c.h.b16 %v1641
    %v6235 = vunpack.c.l.b16 %v1642
    %v6236 = vunpack.c.h.b16 %v1642
    %v6237 = vunpack.c.l.b16 %v1643
    %v6238 = vunpack.c.h.b16 %v1643
    %v6239 = vunpack.c.l.b16 %v1644
    %v6240 = vunpack.c.h.b16 %v1644
    %v6241 = vunpack.c.l.b16 %v1645
    %v6242 = vunpack.c.h.b16 %v1645
    %v6243 = vunpack.c.l.b16 %v1646
    %v6244 = vunpack.c.h.b16 %v1646
    %v6245 = vunpack.c.l.b16 %v1647
    %v6246 = vunpack.c.h.b16 %v1647
    %v6247 = vunpack.c.l.b16 %v1648
    %v6248 = vunpack.c.h.b16 %v1648
    %v6249 = vunpack.c.l.b16 %v1649
    %v6250 = vunpack.c.h.b16 %v1649
    %v6251 = vunpack.c.l.b16 %v1650
    %v6252 = vunpack.c.h.b16 %v1650
    %v6253 = vunpack.c.l.b16 %v1651
    %v6254 = vunpack.c.h.b16 %v1651
    %v6255 = vunpack.c.l.b16 %v1652
    %v6256 = vunpack.c.h.b16 %v1652
    %v6257 = vunpack.c.l.b16 %v1653
    %v6258 = vunpack.c.h.b16 %v1653
    %v6259 = vunpack.c.l.b16 %v1654
    %v6260 = vunpack.c.h.b16 %v1654
    %v6261 = vunpack.c.l.b16 %v1655
    %v6262 = vunpack.c.h.b16 %v1655
    %v6263 = vunpack.c.l.b16 %v1656
    %v6264 = vunpack.c.h.b16 %v1656
    %v6265 = vunpack.c.l.b16 %v1657
    %v6266 = vunpack.c.h.b16 %v1657
    %v6267 = vunpack.c.l.b16 %v1658
    %v6268 = vunpack.c.h.b16 %v1658
    %v6269 = vunpack.c.l.b16 %v1659
    %v6270 = vunpack.c.h.b16 %v1659
    %v6271 = vunpack.c.l.b16 %v1660
    %v6272 = vunpack.c.h.b16 %v1660
    %v6273 = vunpack.c.l.b16 %v1661
    %v6274 = vunpack.c.h.b16 %v1661
    %v6275 = vunpack.c.l.b16 %v1662
    %v6276 = vunpack.c.h.b16 %v1662
    %v6277 = vunpack.c.l.b16 %v1663
    %v6278 = vunpack.c.h.b16 %v1663
    %v6279 = vunpack.c.l.b16 %v1664
    %v6280 = vunpack.c.h.b16 %v1664
    %v6281 = vunpack.c.l.b16 %v1665
    %v6282 = vunpack.c.h.b16 %v1665
    %v6283 = vunpack.c.l.b16 %v1666
    %v6284 = vunpack.c.h.b16 %v1666
    %v6285 = vunpack.c.l.b16 %v1667
    %v6286 = vunpack.c.h.b16 %v1667
    %v6287 = vunpack.c.l.b16 %v1668
    %v6288 = vunpack.c.h.b16 %v1668
    %v6289 = vunpack.c.l.b16 %v1669
    %v6290 = vunpack.c.h.b16 %v1669
    %v6291 = vunpack.c.l.b16 %v1670
    %v6292 = vunpack.c.h.b16 %v1670
    %v6293 = vunpack.c.l.b16 %v1671
    %v6294 = vunpack.c.h.b16 %v1671
    %v6295 = vunpack.c.l.b16 %v1672
    %v6296 = vunpack.c.h.b16 %v1672
    %v6297 = vunpack.c.l.b16 %v1673
    %v6298 = vunpack.c.h.b16 %v1673
    %v6299 = vunpack.c.l.b16 %v1674
    %v6300 = vunpack.c.h.b16 %v1674
    %v6301 = vunpack.c.l.b16 %v1675
    %v6302 = vunpack.c.h.b16 %v1675
    %v6303 = vunpack.c.l.b16 %v1676
    %v6304 = vunpack.c.h.b16 %v1676
    %v6305 = vunpack.c.l.b16 %v1677
    %v6306 = vunpack.c.h.b16 %v1677
    %v6307 = vunpack.c.l.b16 %v1678
    %v6308 = vunpack.c.h.b16 %v1678
    %v6309 = vunpack.c.l.b16 %v1679
    %v6310 = vunpack.c.h.b16 %v1679
    %v6311 = vunpack.c.l.b16 %v1680
    %v6312 = vunpack.c.h.b16 %v1680
    %v6313 = vunpack.c.l.b16 %v1681
    %v6314 = vunpack.c.h.b16 %v1681
    %v6315 = vunpack.c.l.b16 %v1682
    %v6316 = vunpack.c.h.b16 %v1682
    %v6317 = vunpack.c.l.b16 %v1683
    %v6318 = vunpack.c.h.b16 %v1683
    %v6319 = vunpack.c.l.b16 %v1684
    %v6320 = vunpack.c.h.b16 %v1684
    %v6321 = vunpack.c.l.b16 %v1685
    %v6322 = vunpack.c.h.b16 %v1685
    %v6323 = vunpack.c.l.b16 %v1686
    %v6324 = vunpack.c.h.b16 %v1686
    %v6325 = vunpack.c.l.b16 %v1687
    %v6326 = vunpack.c.h.b16 %v1687
    %v6327 = vunpack.c.l.b16 %v1688
    %v6328 = vunpack.c.h.b16 %v1688
    %v6329 = vunpack.c.l.b16 %v1689
    %v6330 = vunpack.c.h.b16 %v1689
    %v6331 = vunpack.c.l.b16 %v1690
    %v6332 = vunpack.c.h.b16 %v1690
    %v6333 = vunpack.c.l.b16 %v1691
    %v6334 = vunpack.c.h.b16 %v1691
    %v6335 = vunpack.c.l.b16 %v1692
    %v6336 = vunpack.c.h.b16 %v1692
    %v6337 = vunpack.c.l.b16 %v1693
    %v6338 = vunpack.c.h.b16 %v1693
    %v6339 = vunpack.c.l.b16 %v1694
    %v6340 = vunpack.c.h.b16 %v1694
    %v6341 = vunpack.c.l.b16 %v1695
    %v6342 = vunpack.c.h.b16 %v1695
    %v6343 = vunpack.c.l.b16 %v1696
    %v6344 = vunpack.c.h.b16 %v1696
    %v6345 = vunpack.c.l.b16 %v1697
    %v6346 = vunpack.c.h.b16 %v1697
    %v6347 = vunpack.c.l.b16 %v1698
    %v6348 = vunpack.c.h.b16 %v1698
    %v6349 = vpack.c.b16 %v3285, %v3277
    %v6350 = vpack.c.b16 %v3286, %v3278
    %v6351 = vpack.c.b16 %v3287, %v3279
    %v6352 = vpack.c.b16 %v3288, %v3280
    %v6353 = vpack.c.b16 %v3289, %v3281
    %v6354 = vpack.c.b16 %v3290, %v3282
    %v6355 = vpack.c.b16 %v3291, %v3283
    %v6356 = vpack.c.b16 %v3292, %v3284
    %v6357 = vpack.c.b16 %v3301, %v3293
    %v6358 = vpack.c.b16 %v3302, %v3294
    %v6359 = vpack.c.b16 %v3303, %v3295
    %v6360 = vpack.c.b16 %v3304, %v3296
    %v6361 = vpack.c.b16 %v3305, %v3297
    %v6362 = vpack.c.b16 %v3306, %v3298
    %v6363 = vpack.c.b16 %v3307, %v3299
    %v6364 = vpack.c.b16 %v3308, %v3300
    %v6365 = vpack.c.b16 %v3317, %v3309
    %v6366 = vpack.c.b16 %v3318, %v3310
    %v6367 = vpack.c.b16 %v3319, %v3311
    %v6368 = vpack.c.b16 %v3320, %v3312
    %v6369 = vpack.c.b16 %v3321, %v3313
    %v6370 = vpack.c.b16 %v3322, %v3314
    %v6371 = vpack.c.b16 %v3323, %v3315
    %v6372 = vpack.c.b16 %v3324, %v3316
    %v6373 = vpack.c.b16 %v3333, %v3325
    %v6374 = vpack.c.b16 %v3334, %v3326
    %v6375 = vpack.c.b16 %v3335, %v3327
    %v6376 = vpack.c.b16 %v3336, %v3328
    %v6377 = vpack.c.b16 %v3337, %v3329
    %v6378 = vpack.c.b16 %v3338, %v3330
    %v6379 = vpack.c.b16 %v3339, %v3331
    %v6380 = vpack.c.b16 %v3340, %v3332
    %v6381 = vpack.c.b16 %v3349, %v3341
    %v6382 = vpack.c.b16 %v3350, %v3342
    %v6383 = vpack.c.b16 %v3351, %v3343
    %v6384 = vpack.c.b16 %v3352, %v3344
    %v6385 = vpack.c.b16 %v3353, %v3345
    %v6386 = vpack.c.b16 %v3354, %v3346
    %v6387 = vpack.c.b16 %v3355, %v3347
    %v6388 = vpack.c.b16 %v3356, %v3348
    %v6389 = vpack.c.b16 %v3365, %v3357
    %v6390 = vpack.c.b16 %v3366, %v3358
    %v6391 = vpack.c.b16 %v3367, %v3359
    %v6392 = vpack.c.b16 %v3368, %v3360
    %v6393 = vpack.c.b16 %v3369, %v3361
    %v6394 = vpack.c.b16 %v3370, %v3362
    %v6395 = vpack.c.b16 %v3371, %v3363
    %v6396 = vpack.c.b16 %v3372, %v3364
    %v6397 = vpack.c.b16 %v3381, %v3373
    %v6398 = vpack.c.b16 %v3382, %v3374
    %v6399 = vpack.c.b16 %v3383, %v3375
    %v6400 = vpack.c.b16 %v3384, %v3376
    %v6401 = vpack.c.b16 %v3385, %v3377
    %v6402 = vpack.c.b16 %v3386, %v3378
    %v6403 = vpack.c.b16 %v3387, %v3379
    %v6404 = vpack.c.b16 %v3388, %v3380
    %v6405 = vpack.c.b16 %v3397, %v3389
    %v6406 = vpack.c.b16 %v3398, %v3390
    %v6407 = vpack.c.b16 %v3399, %v3391
    %v6408 = vpack.c.b16 %v3400, %v3392
    %v6409 = vpack.c.b16 %v3401, %v3393
    %v6410 = vpack.c.b16 %v3402, %v3394
    %v6411 = vpack.c.b16 %v3403, %v3395
    %v6412 = vpack.c.b16 %v3404, %v3396
    %v6413 = vpack.c.b16 %v3413, %v3405
    %v6414 = vpack.c.b16 %v3414, %v3406
    %v6415 = vpack.c.b16 %v3415, %v3407
    %v6416 = vpack.c.b16 %v3416, %v3408
    %v6417 = vpack.c.b16 %v3417, %v3409
    %v6418 = vpack.c.b16 %v3418, %v3410
    %v6419 = vpack.c.b16 %v3419, %v3411
    %v6420 = vpack.c.b16 %v3420, %v3412
    %v6421 = vpack.c.b16 %v3429, %v3421
    %v6422 = vpack.c.b16 %v3430, %v3422
    %v6423 = vpack.c.b16 %v3431, %v3423
    %v6424 = vpack.c.b16 %v3432, %v3424
    %v6425 = vpack.c.b16 %v3433, %v3425
    %v6426 = vpack.c.b16 %v3434, %v3426
    %v6427 = vpack.c.b16 %v3435, %v3427
    %v6428 = vpack.c.b16 %v3436, %v3428
    %v6429 = vpack.c.b16 %v3445, %v3437
    %v6430 = vpack.c.b16 %v3446, %v3438
    %v6431 = vpack.c.b16 %v3447, %v3439
    %v6432 = vpack.c.b16 %v3448, %v3440
    %v6433 = vpack.c.b16 %v3449, %v3441
    %v6434 = vpack.c.b16 %v3450, %v3442
    %v6435 = vpack.c.b16 %v3451, %v3443
    %v6436 = vpack.c.b16 %v3452, %v3444
    %v6437 = vpack.c.b16 %v3461, %v3453
    %v6438 = vpack.c.b16 %v3462, %v3454
    %v6439 = vpack.c.b16 %v3463, %v3455
    %v6440 = vpack.c.b16 %v3464, %v3456
    %v6441 = vpack.c.b16 %v3465, %v3457
    %v6442 = vpack.c.b16 %v3466, %v3458
    %v6443 = vpack.c.b16 %v3467, %v3459
    %v6444 = vpack.c.b16 %v3468, %v3460
    %v6445 = vpack.c.b16 %v3477, %v3469
    %v6446 = vpack.c.b16 %v3478, %v3470
    %v6447 = vpack.c.b16 %v3479, %v3471
    %v6448 = vpack.c.b16 %v3480, %v3472
    %v6449 = vpack.c.b16 %v3481, %v3473
    %v6450 = vpack.c.b16 %v3482, %v3474
    %v6451 = vpack.c.b16 %v3483, %v3475
    %v6452 = vpack.c.b16 %v3484, %v3476
    %v6453 = vpack.c.b16 %v3493, %v3485
    %v6454 = vpack.c.b16 %v3494, %v3486
    %v6455 = vpack.c.b16 %v3495, %v3487
    %v6456 = vpack.c.b16 %v3496, %v3488
    %v6457 = vpack.c.b16 %v3497, %v3489
    %v6458 = vpack.c.b16 %v3498, %v3490
    %v6459 = vpack.c.b16 %v3499, %v3491
    %v6460 = vpack.c.b16 %v3500, %v3492
    %v6461 = vpack.c.b16 %v3509, %v3501
    %v6462 = vpack.c.b16 %v3510, %v3502
    %v6463 = vpack.c.b16 %v3511, %v3503
    %v6464 = vpack.c.b16 %v3512, %v3504
    %v6465 = vpack.c.b16 %v3513, %v3505
    %v6466 = vpack.c.b16 %v3514, %v3506
    %v6467 = vpack.c.b16 %v3515, %v3507
    %v6468 = vpack.c.b16 %v3516, %v3508
    %v6469 = vpack.c.b16 %v3525, %v3517
    %v6470 = vpack.c.b16 %v3526, %v3518
    %v6471 = vpack.c.b16 %v3527, %v3519
    %v6472 = vpack.c.b16 %v3528, %v3520
    %v6473 = vpack.c.b16 %v3529, %v3521
    %v6474 = vpack.c.b16 %v3530, %v3522
    %v6475 = vpack.c.b16 %v3531, %v3523
    %v6476 = vpack.c.b16 %v3532, %v3524
    %v6477 = vpack.c.b16 %v3541, %v3533
    %v6478 = vpack.c.b16 %v3542, %v3534
    %v6479 = vpack.c.b16 %v3543, %v3535
    %v6480 = vpack.c.b16 %v3544, %v3536
    %v6481 = vpack.c.b16 %v3545, %v3537
    %v6482 = vpack.c.b16 %v3546, %v3538
    %v6483 = vpack.c.b16 %v3547, %v3539
    %v6484 = vpack.c.b16 %v3548, %v3540
    %v6485 = vpack.c.b16 %v3557, %v3549
    %v6486 = vpack.c.b16 %v3558, %v3550
    %v6487 = vpack.c.b16 %v3559, %v3551
    %v6488 = vpack.c.b16 %v3560, %v3552
    %v6489 = vpack.c.b16 %v3561, %v3553
    %v6490 = vpack.c.b16 %v3562, %v3554
    %v6491 = vpack.c.b16 %v3563, %v3555
    %v6492 = vpack.c.b16 %v3564, %v3556
    %v6493 = vpack.c.b16 %v3573, %v3565
    %v6494 = vpack.c.b16 %v3574, %v3566
    %v6495 = vpack.c.b16 %v3575, %v3567
    %v6496 = vpack.c.b16 %v3576, %v3568
    %v6497 = vpack.c.b16 %v3577, %v3569
    %v6498 = vpack.c.b16 %v3578, %v3570
    %v6499 = vpack.c.b16 %v3579, %v3571
    %v6500 = vpack.c.b16 %v3580, %v3572
    %v6501 = vpack.c.b16 %v3589, %v3581
    %v6502 = vpack.c.b16 %v3590, %v3582
    %v6503 = vpack.c.b16 %v3591, %v3583
    %v6504 = vpack.c.b16 %v3592, %v3584
    %v6505 = vpack.c.b16 %v3593, %v3585
    %v6506 = vpack.c.b16 %v3594, %v3586
    %v6507 = vpack.c.b16 %v3595, %v3587
    %v6508 = vpack.c.b16 %v3596, %v3588
    %v6509 = vpack.c.b16 %v3605, %v3597
    %v6510 = vpack.c.b16 %v3606, %v3598
    %v6511 = vpack.c.b16 %v3607, %v3599
    %v6512 = vpack.c.b16 %v3608, %v3600
    %v6513 = vpack.c.b16 %v3609, %v3601
    %v6514 = vpack.c.b16 %v3610, %v3602
    %v6515 = vpack.c.b16 %v3611, %v3603
    %v6516 = vpack.c.b16 %v3612, %v3604
    %v6517 = vpack.c.b16 %v3621, %v3613
    %v6518 = vpack.c.b16 %v3622, %v3614
    %v6519 = vpack.c.b16 %v3623, %v3615
    %v6520 = vpack.c.b16 %v3624, %v3616
    %v6521 = vpack.c.b16 %v3625, %v3617
    %v6522 = vpack.c.b16 %v3626, %v3618
    %v6523 = vpack.c.b16 %v3627, %v3619
    %v6524 = vpack.c.b16 %v3628, %v3620
    %v6525 = vpack.c.b16 %v3637, %v3629
    %v6526 = vpack.c.b16 %v3638, %v3630
    %v6527 = vpack.c.b16 %v3639, %v3631
    %v6528 = vpack.c.b16 %v3640, %v3632
    %v6529 = vpack.c.b16 %v3641, %v3633
    %v6530 = vpack.c.b16 %v3642, %v3634
    %v6531 = vpack.c.b16 %v3643, %v3635
    %v6532 = vpack.c.b16 %v3644, %v3636
    %v6533 = vpack.c.b16 %v3653, %v3645
    %v6534 = vpack.c.b16 %v3654, %v3646
    %v6535 = vpack.c.b16 %v3655, %v3647
    %v6536 = vpack.c.b16 %v3656, %v3648
    %v6537 = vpack.c.b16 %v3657, %v3649
    %v6538 = vpack.c.b16 %v3658, %v3650
    %v6539 = vpack.c.b16 %v3659, %v3651
    %v6540 = vpack.c.b16 %v3660, %v3652
    %v6541 = vpack.c.b16 %v3669, %v3661
    %v6542 = vpack.c.b16 %v3670, %v3662
    %v6543 = vpack.c.b16 %v3671, %v3663
    %v6544 = vpack.c.b16 %v3672, %v3664
    %v6545 = vpack.c.b16 %v3673, %v3665
    %v6546 = vpack.c.b16 %v3674, %v3666
    %v6547 = vpack.c.b16 %v3675, %v3667
    %v6548 = vpack.c.b16 %v3676, %v3668
    %v6549 = vpack.c.b16 %v3685, %v3677
    %v6550 = vpack.c.b16 %v3686, %v3678
    %v6551 = vpack.c.b16 %v3687, %v3679
    %v6552 = vpack.c.b16 %v3688, %v3680
    %v6553 = vpack.c.b16 %v3689, %v3681
    %v6554 = vpack.c.b16 %v3690, %v3682
    %v6555 = vpack.c.b16 %v3691, %v3683
    %v6556 = vpack.c.b16 %v3692, %v3684
    %v6557 = vpack.c.b16 %v3701, %v3693
    %v6558 = vpack.c.b16 %v3702, %v3694
    %v6559 = vpack.c.b16 %v3703, %v3695
    %v6560 = vpack.c.b16 %v3704, %v3696
    %v6561 = vpack.c.b16 %v3705, %v3697
    %v6562 = vpack.c.b16 %v3706, %v3698
    %v6563 = vpack.c.b16 %v3707, %v3699
    %v6564 = vpack.c.b16 %v3708, %v3700
    %v6565 = vpack.c.b16 %v3717, %v3709
    %v6566 = vpack.c.b16 %v3718, %v3710
    %v6567 = vpack.c.b16 %v3719, %v3711
    %v6568 = vpack.c.b16 %v3720, %v3712
    %v6569 = vpack.c.b16 %v3721, %v3713
    %v6570 = vpack.c.b16 %v3722, %v3714
    %v6571 = vpack.c.b16 %v3723, %v3715
    %v6572 = vpack.c.b16 %v3724, %v3716
    %v6573 = vpack.c.b16 %v3733, %v3725
    %v6574 = vpack.c.b16 %v3734, %v3726
    %v6575 = vpack.c.b16 %v3735, %v3727
    %v6576 = vpack.c.b16 %v3736, %v3728
    %v6577 = vpack.c.b16 %v3737, %v3729
    %v6578 = vpack.c.b16 %v3738, %v3730
    %v6579 = vpack.c.b16 %v3739, %v3731
    %v6580 = vpack.c.b16 %v3740, %v3732
    %v6581 = vpack.c.b16 %v3749, %v3741
    %v6582 = vpack.c.b16 %v3750, %v3742
    %v6583 = vpack.c.b16 %v3751, %v3743
    %v6584 = vpack.c.b16 %v3752, %v3744
    %v6585 = vpack.c.b16 %v3753, %v3745
    %v6586 = vpack.c.b16 %v3754, %v3746
    %v6587 = vpack.c.b16 %v3755, %v3747
    %v6588 = vpack.c.b16 %v3756, %v3748
    %v6589 = vpack.c.b16 %v3765, %v3757
    %v6590 = vpack.c.b16 %v3766, %v3758
    %v6591 = vpack.c.b16 %v3767, %v3759
    %v6592 = vpack.c.b16 %v3768, %v3760
    %v6593 = vpack.c.b16 %v3769, %v3761
    %v6594 = vpack.c.b16 %v3770, %v3762
    %v6595 = vpack.c.b16 %v3771, %v3763
    %v6596 = vpack.c.b16 %v3772, %v3764
    %v6597 = vpack.c.b16 %v3781, %v3773
    %v6598 = vpack.c.b16 %v3782, %v3774
    %v6599 = vpack.c.b16 %v3783, %v3775
    %v6600 = vpack.c.b16 %v3784, %v3776
    %v6601 = vpack.c.b16 %v3785, %v3777
    %v6602 = vpack.c.b16 %v3786, %v3778
    %v6603 = vpack.c.b16 %v3787, %v3779
    %v6604 = vpack.c.b16 %v3788, %v3780
    %v6605 = vpack.c.b16 %v3797, %v3789
    %v6606 = vpack.c.b16 %v3798, %v3790
    %v6607 = vpack.c.b16 %v3799, %v3791
    %v6608 = vpack.c.b16 %v3800, %v3792
    %v6609 = vpack.c.b16 %v3801, %v3793
    %v6610 = vpack.c.b16 %v3802, %v3794
    %v6611 = vpack.c.b16 %v3803, %v3795
    %v6612 = vpack.c.b16 %v3804, %v3796
    %v6613 = vpack.c.b16 %v3813, %v3805
    %v6614 = vpack.c.b16 %v3814, %v3806
    %v6615 = vpack.c.b16 %v3815, %v3807
    %v6616 = vpack.c.b16 %v3816, %v3808
    %v6617 = vpack.c.b16 %v3817, %v3809
    %v6618 = vpack.c.b16 %v3818, %v3810
    %v6619 = vpack.c.b16 %v3819, %v3811
    %v6620 = vpack.c.b16 %v3820, %v3812
    %v6621 = vpack.c.b16 %v3829, %v3821
    %v6622 = vpack.c.b16 %v3830, %v3822
    %v6623 = vpack.c.b16 %v3831, %v3823
    %v6624 = vpack.c.b16 %v3832, %v3824
    %v6625 = vpack.c.b16 %v3833, %v3825
    %v6626 = vpack.c.b16 %v3834, %v3826
    %v6627 = vpack.c.b16 %v3835, %v3827
    %v6628 = vpack.c.b16 %v3836, %v3828
    %v6629 = vpack.c.b16 %v3845, %v3837
    %v6630 = vpack.c.b16 %v3846, %v3838
    %v6631 = vpack.c.b16 %v3847, %v3839
    %v6632 = vpack.c.b16 %v3848, %v3840
    %v6633 = vpack.c.b16 %v3849, %v3841
    %v6634 = vpack.c.b16 %v3850, %v3842
    %v6635 = vpack.c.b16 %v3851, %v3843
    %v6636 = vpack.c.b16 %v3852, %v3844
    %v6637 = vpack.c.b16 %v3861, %v3853
    %v6638 = vpack.c.b16 %v3862, %v3854
    %v6639 = vpack.c.b16 %v3863, %v3855
    %v6640 = vpack.c.b16 %v3864, %v3856
    %v6641 = vpack.c.b16 %v3865, %v3857
    %v6642 = vpack.c.b16 %v3866, %v3858
    %v6643 = vpack.c.b16 %v3867, %v3859
    %v6644 = vpack.c.b16 %v3868, %v3860
    %v6645 = vpack.c.b16 %v3877, %v3869
    %v6646 = vpack.c.b16 %v3878, %v3870
    %v6647 = vpack.c.b16 %v3879, %v3871
    %v6648 = vpack.c.b16 %v3880, %v3872
    %v6649 = vpack.c.b16 %v3881, %v3873
    %v6650 = vpack.c.b16 %v3882, %v3874
    %v6651 = vpack.c.b16 %v3883, %v3875
    %v6652 = vpack.c.b16 %v3884, %v3876
    %v6653 = vpack.c.b16 %v3893, %v3885
    %v6654 = vpack.c.b16 %v3894, %v3886
    %v6655 = vpack.c.b16 %v3895, %v3887
    %v6656 = vpack.c.b16 %v3896, %v3888
    %v6657 = vpack.c.b16 %v3897, %v3889
    %v6658 = vpack.c.b16 %v3898, %v3890
    %v6659 = vpack.c.b16 %v3899, %v3891
    %v6660 = vpack.c.b16 %v3900, %v3892
    %v6661 = vpack.c.b16 %v3909, %v3901
    %v6662 = vpack.c.b16 %v3910, %v3902
    %v6663 = vpack.c.b16 %v3911, %v3903
    %v6664 = vpack.c.b16 %v3912, %v3904
    %v6665 = vpack.c.b16 %v3913, %v3905
    %v6666 = vpack.c.b16 %v3914, %v3906
    %v6667 = vpack.c.b16 %v3915, %v3907
    %v6668 = vpack.c.b16 %v3916, %v3908
    %v6669 = vpack.c.b16 %v3925, %v3917
    %v6670 = vpack.c.b16 %v3926, %v3918
    %v6671 = vpack.c.b16 %v3927, %v3919
    %v6672 = vpack.c.b16 %v3928, %v3920
    %v6673 = vpack.c.b16 %v3929, %v3921
    %v6674 = vpack.c.b16 %v3930, %v3922
    %v6675 = vpack.c.b16 %v3931, %v3923
    %v6676 = vpack.c.b16 %v3932, %v3924
    %v6677 = vpack.c.b16 %v3941, %v3933
    %v6678 = vpack.c.b16 %v3942, %v3934
    %v6679 = vpack.c.b16 %v3943, %v3935
    %v6680 = vpack.c.b16 %v3944, %v3936
    %v6681 = vpack.c.b16 %v3945, %v3937
    %v6682 = vpack.c.b16 %v3946, %v3938
    %v6683 = vpack.c.b16 %v3947, %v3939
    %v6684 = vpack.c.b16 %v3948, %v3940
    %v6685 = vpack.c.b16 %v3957, %v3949
    %v6686 = vpack.c.b16 %v3958, %v3950
    %v6687 = vpack.c.b16 %v3959, %v3951
    %v6688 = vpack.c.b16 %v3960, %v3952
    %v6689 = vpack.c.b16 %v3961, %v3953
    %v6690 = vpack.c.b16 %v3962, %v3954
    %v6691 = vpack.c.b16 %v3963, %v3955
    %v6692 = vpack.c.b16 %v3964, %v3956
    %v6693 = vpack.c.b16 %v3973, %v3965
    %v6694 = vpack.c.b16 %v3974, %v3966
    %v6695 = vpack.c.b16 %v3975, %v3967
    %v6696 = vpack.c.b16 %v3976, %v3968
    %v6697 = vpack.c.b16 %v3977, %v3969
    %v6698 = vpack.c.b16 %v3978, %v3970
    %v6699 = vpack.c.b16 %v3979, %v3971
    %v6700 = vpack.c.b16 %v3980, %v3972
    %v6701 = vpack.c.b16 %v3989, %v3981
    %v6702 = vpack.c.b16 %v3990, %v3982
    %v6703 = vpack.c.b16 %v3991, %v3983
    %v6704 = vpack.c.b16 %v3992, %v3984
    %v6705 = vpack.c.b16 %v3993, %v3985
    %v6706 = vpack.c.b16 %v3994, %v3986
    %v6707 = vpack.c.b16 %v3995, %v3987
    %v6708 = vpack.c.b16 %v3996, %v3988
    %v6709 = vpack.c.b16 %v4005, %v3997
    %v6710 = vpack.c.b16 %v4006, %v3998
    %v6711 = vpack.c.b16 %v4007, %v3999
    %v6712 = vpack.c.b16 %v4008, %v4000
    %v6713 = vpack.c.b16 %v4009, %v4001
    %v6714 = vpack.c.b16 %v4010, %v4002
    %v6715 = vpack.c.b16 %v4011, %v4003
    %v6716 = vpack.c.b16 %v4012, %v4004
    %v6717 = vpack.c.b16 %v4021, %v4013
    %v6718 = vpack.c.b16 %v4022, %v4014
    %v6719 = vpack.c.b16 %v4023, %v4015
    %v6720 = vpack.c.b16 %v4024, %v4016
    %v6721 = vpack.c.b16 %v4025, %v4017
    %v6722 = vpack.c.b16 %v4026, %v4018
    %v6723 = vpack.c.b16 %v4027, %v4019
    %v6724 = vpack.c.b16 %v4028, %v4020
    %v6725 = vpack.c.b16 %v4037, %v4029
    %v6726 = vpack.c.b16 %v4038, %v4030
    %v6727 = vpack.c.b16 %v4039, %v4031
    %v6728 = vpack.c.b16 %v4040, %v4032
    %v6729 = vpack.c.b16 %v4041, %v4033
    %v6730 = vpack.c.b16 %v4042, %v4034
    %v6731 = vpack.c.b16 %v4043, %v4035
    %v6732 = vpack.c.b16 %v4044, %v4036
    %v6733 = vpack.c.b16 %v4053, %v4045
    %v6734 = vpack.c.b16 %v4054, %v4046
    %v6735 = vpack.c.b16 %v4055, %v4047
    %v6736 = vpack.c.b16 %v4056, %v4048
    %v6737 = vpack.c.b16 %v4057, %v4049
    %v6738 = vpack.c.b16 %v4058, %v4050
    %v6739 = vpack.c.b16 %v4059, %v4051
    %v6740 = vpack.c.b16 %v4060, %v4052
    %v6741 = vpack.c.b16 %v4069, %v4061
    %v6742 = vpack.c.b16 %v4070, %v4062
    %v6743 = vpack.c.b16 %v4071, %v4063
    %v6744 = vpack.c.b16 %v4072, %v4064
    %v6745 = vpack.c.b16 %v4073, %v4065
    %v6746 = vpack.c.b16 %v4074, %v4066
    %v6747 = vpack.c.b16 %v4075, %v4067
    %v6748 = vpack.c.b16 %v4076, %v4068
    %v6749 = vpack.c.b16 %v4085, %v4077
    %v6750 = vpack.c.b16 %v4086, %v4078
    %v6751 = vpack.c.b16 %v4087, %v4079
    %v6752 = vpack.c.b16 %v4088, %v4080
    %v6753 = vpack.c.b16 %v4089, %v4081
    %v6754 = vpack.c.b16 %v4090, %v4082
    %v6755 = vpack.c.b16 %v4091, %v4083
    %v6756 = vpack.c.b16 %v4092, %v4084
    %v6757 = vpack.c.b16 %v4101, %v4093
    %v6758 = vpack.c.b16 %v4102, %v4094
    %v6759 = vpack.c.b16 %v4103, %v4095
    %v6760 = vpack.c.b16 %v4104, %v4096
    %v6761 = vpack.c.b16 %v4105, %v4097
    %v6762 = vpack.c.b16 %v4106, %v4098
    %v6763 = vpack.c.b16 %v4107, %v4099
    %v6764 = vpack.c.b16 %v4108, %v4100
    %v6765 = vpack.c.b16 %v4117, %v4109
    %v6766 = vpack.c.b16 %v4118, %v4110
    %v6767 = vpack.c.b16 %v4119, %v4111
    %v6768 = vpack.c.b16 %v4120, %v4112
    %v6769 = vpack.c.b16 %v4121, %v4113
    %v6770 = vpack.c.b16 %v4122, %v4114
    %v6771 = vpack.c.b16 %v4123, %v4115
    %v6772 = vpack.c.b16 %v4124, %v4116
    %v6773 = vpack.c.b16 %v4133, %v4125
    %v6774 = vpack.c.b16 %v4134, %v4126
    %v6775 = vpack.c.b16 %v4135, %v4127
    %v6776 = vpack.c.b16 %v4136, %v4128
    %v6777 = vpack.c.b16 %v4137, %v4129
    %v6778 = vpack.c.b16 %v4138, %v4130
    %v6779 = vpack.c.b16 %v4139, %v4131
    %v6780 = vpack.c.b16 %v4140, %v4132
    %v6781 = vpack.c.b16 %v4149, %v4141
    %v6782 = vpack.c.b16 %v4150, %v4142
    %v6783 = vpack.c.b16 %v4151, %v4143
    %v6784 = vpack.c.b16 %v4152, %v4144
    %v6785 = vpack.c.b16 %v4153, %v4145
    %v6786 = vpack.c.b16 %v4154, %v4146
    %v6787 = vpack.c.b16 %v4155, %v4147
    %v6788 = vpack.c.b16 %v4156, %v4148
    %v6789 = vpack.c.b16 %v4165, %v4157
    %v6790 = vpack.c.b16 %v4166, %v4158
    %v6791 = vpack.c.b16 %v4167, %v4159
    %v6792 = vpack.c.b16 %v4168, %v4160
    %v6793 = vpack.c.b16 %v4169, %v4161
    %v6794 = vpack.c.b16 %v4170, %v4162
    %v6795 = vpack.c.b16 %v4171, %v4163
    %v6796 = vpack.c.b16 %v4172, %v4164
    %v6797 = vpack.c.b16 %v4181, %v4173
    %v6798 = vpack.c.b16 %v4182, %v4174
    %v6799 = vpack.c.b16 %v4183, %v4175
    %v6800 = vpack.c.b16 %v4184, %v4176
    %v6801 = vpack.c.b16 %v4185, %v4177
    %v6802 = vpack.c.b16 %v4186, %v4178
    %v6803 = vpack.c.b16 %v4187, %v4179
    %v6804 = vpack.c.b16 %v4188, %v4180
    %v6805 = vpack.c.b16 %v4197, %v4189
    %v6806 = vpack.c.b16 %v4198, %v4190
    %v6807 = vpack.c.b16 %v4199, %v4191
    %v6808 = vpack.c.b16 %v4200, %v4192
    %v6809 = vpack.c.b16 %v4201, %v4193
    %v6810 = vpack.c.b16 %v4202, %v4194
    %v6811 = vpack.c.b16 %v4203, %v4195
    %v6812 = vpack.c.b16 %v4204, %v4196
    %v6813 = vpack.c.b16 %v4213, %v4205
    %v6814 = vpack.c.b16 %v4214, %v4206
    %v6815 = vpack.c.b16 %v4215, %v4207
    %v6816 = vpack.c.b16 %v4216, %v4208
    %v6817 = vpack.c.b16 %v4217, %v4209
    %v6818 = vpack.c.b16 %v4218, %v4210
    %v6819 = vpack.c.b16 %v4219, %v4211
    %v6820 = vpack.c.b16 %v4220, %v4212
    %v6821 = vpack.c.b16 %v4229, %v4221
    %v6822 = vpack.c.b16 %v4230, %v4222
    %v6823 = vpack.c.b16 %v4231, %v4223
    %v6824 = vpack.c.b16 %v4232, %v4224
    %v6825 = vpack.c.b16 %v4233, %v4225
    %v6826 = vpack.c.b16 %v4234, %v4226
    %v6827 = vpack.c.b16 %v4235, %v4227
    %v6828 = vpack.c.b16 %v4236, %v4228
    %v6829 = vpack.c.b16 %v4245, %v4237
    %v6830 = vpack.c.b16 %v4246, %v4238
    %v6831 = vpack.c.b16 %v4247, %v4239
    %v6832 = vpack.c.b16 %v4248, %v4240
    %v6833 = vpack.c.b16 %v4249, %v4241
    %v6834 = vpack.c.b16 %v4250, %v4242
    %v6835 = vpack.c.b16 %v4251, %v4243
    %v6836 = vpack.c.b16 %v4252, %v4244
    %v6837 = vpack.c.b16 %v4261, %v4253
    %v6838 = vpack.c.b16 %v4262, %v4254
    %v6839 = vpack.c.b16 %v4263, %v4255
    %v6840 = vpack.c.b16 %v4264, %v4256
    %v6841 = vpack.c.b16 %v4265, %v4257
    %v6842 = vpack.c.b16 %v4266, %v4258
    %v6843 = vpack.c.b16 %v4267, %v4259
    %v6844 = vpack.c.b16 %v4268, %v4260
    %v6845 = vpack.c.b16 %v4277, %v4269
    %v6846 = vpack.c.b16 %v4278, %v4270
    %v6847 = vpack.c.b16 %v4279, %v4271
    %v6848 = vpack.c.b16 %v4280, %v4272
    %v6849 = vpack.c.b16 %v4281, %v4273
    %v6850 = vpack.c.b16 %v4282, %v4274
    %v6851 = vpack.c.b16 %v4283, %v4275
    %v6852 = vpack.c.b16 %v4284, %v4276
    %v6853 = vpack.c.b16 %v4293, %v4285
    %v6854 = vpack.c.b16 %v4294, %v4286
    %v6855 = vpack.c.b16 %v4295, %v4287
    %v6856 = vpack.c.b16 %v4296, %v4288
    %v6857 = vpack.c.b16 %v4297, %v4289
    %v6858 = vpack.c.b16 %v4298, %v4290
    %v6859 = vpack.c.b16 %v4299, %v4291
    %v6860 = vpack.c.b16 %v4300, %v4292
    %v6861 = vpack.c.b16 %v4309, %v4301
    %v6862 = vpack.c.b16 %v4310, %v4302
    %v6863 = vpack.c.b16 %v4311, %v4303
    %v6864 = vpack.c.b16 %v4312, %v4304
    %v6865 = vpack.c.b16 %v4313, %v4305
    %v6866 = vpack.c.b16 %v4314, %v4306
    %v6867 = vpack.c.b16 %v4315, %v4307
    %v6868 = vpack.c.b16 %v4316, %v4308
    %v6869 = vpack.c.b16 %v4325, %v4317
    %v6870 = vpack.c.b16 %v4326, %v4318
    %v6871 = vpack.c.b16 %v4327, %v4319
    %v6872 = vpack.c.b16 %v4328, %v4320
    %v6873 = vpack.c.b16 %v4329, %v4321
    %v6874 = vpack.c.b16 %v4330, %v4322
    %v6875 = vpack.c.b16 %v4331, %v4323
    %v6876 = vpack.c.b16 %v4332, %v4324
    %v6877 = vpack.c.b16 %v4341, %v4333
    %v6878 = vpack.c.b16 %v4342, %v4334
    %v6879 = vpack.c.b16 %v4343, %v4335
    %v6880 = vpack.c.b16 %v4344, %v4336
    %v6881 = vpack.c.b16 %v4345, %v4337
    %v6882 = vpack.c.b16 %v4346, %v4338
    %v6883 = vpack.c.b16 %v4347, %v4339
    %v6884 = vpack.c.b16 %v4348, %v4340
    %v6885 = vpack.c.b16 %v4357, %v4349
    %v6886 = vpack.c.b16 %v4358, %v4350
    %v6887 = vpack.c.b16 %v4359, %v4351
    %v6888 = vpack.c.b16 %v4360, %v4352
    %v6889 = vpack.c.b16 %v4361, %v4353
    %v6890 = vpack.c.b16 %v4362, %v4354
    %v6891 = vpack.c.b16 %v4363, %v4355
    %v6892 = vpack.c.b16 %v4364, %v4356
    %v6893 = vpack.c.b16 %v4373, %v4365
    %v6894 = vpack.c.b16 %v4374, %v4366
    %v6895 = vpack.c.b16 %v4375, %v4367
    %v6896 = vpack.c.b16 %v4376, %v4368
    %v6897 = vpack.c.b16 %v4377, %v4369
    %v6898 = vpack.c.b16 %v4378, %v4370
    %v6899 = vpack.c.b16 %v4379, %v4371
    %v6900 = vpack.c.b16 %v4380, %v4372
    %v6901 = vpack.c.b16 %v4389, %v4381
    %v6902 = vpack.c.b16 %v4390, %v4382
    %v6903 = vpack.c.b16 %v4391, %v4383
    %v6904 = vpack.c.b16 %v4392, %v4384
    %v6905 = vpack.c.b16 %v4393, %v4385
    %v6906 = vpack.c.b16 %v4394, %v4386
    %v6907 = vpack.c.b16 %v4395, %v4387
    %v6908 = vpack.c.b16 %v4396, %v4388
    %v6909 = vpack.c.b16 %v4405, %v4397
    %v6910 = vpack.c.b16 %v4406, %v4398
    %v6911 = vpack.c.b16 %v4407, %v4399
    %v6912 = vpack.c.b16 %v4408, %v4400
    %v6913 = vpack.c.b16 %v4409, %v4401
    %v6914 = vpack.c.b16 %v4410, %v4402
    %v6915 = vpack.c.b16 %v4411, %v4403
    %v6916 = vpack.c.b16 %v4412, %v4404
    %v6917 = vpack.c.b16 %v4421, %v4413
    %v6918 = vpack.c.b16 %v4422, %v4414
    %v6919 = vpack.c.b16 %v4423, %v4415
    %v6920 = vpack.c.b16 %v4424, %v4416
    %v6921 = vpack.c.b16 %v4425, %v4417
    %v6922 = vpack.c.b16 %v4426, %v4418
    %v6923 = vpack.c.b16 %v4427, %v4419
    %v6924 = vpack.c.b16 %v4428, %v4420
    %v6925 = vpack.c.b16 %v4437, %v4429
    %v6926 = vpack.c.b16 %v4438, %v4430
    %v6927 = vpack.c.b16 %v4439, %v4431
    %v6928 = vpack.c.b16 %v4440, %v4432
    %v6929 = vpack.c.b16 %v4441, %v4433
    %v6930 = vpack.c.b16 %v4442, %v4434
    %v6931 = vpack.c.b16 %v4443, %v4435
    %v6932 = vpack.c.b16 %v4444, %v4436
    %v6933 = vpack.c.b16 %v4453, %v4445
    %v6934 = vpack.c.b16 %v4454, %v4446
    %v6935 = vpack.c.b16 %v4455, %v4447
    %v6936 = vpack.c.b16 %v4456, %v4448
    %v6937 = vpack.c.b16 %v4457, %v4449
    %v6938 = vpack.c.b16 %v4458, %v4450
    %v6939 = vpack.c.b16 %v4459, %v4451
    %v6940 = vpack.c.b16 %v4460, %v4452
    %v6941 = vpack.c.b16 %v4469, %v4461
    %v6942 = vpack.c.b16 %v4470, %v4462
    %v6943 = vpack.c.b16 %v4471, %v4463
    %v6944 = vpack.c.b16 %v4472, %v4464
    %v6945 = vpack.c.b16 %v4473, %v4465
    %v6946 = vpack.c.b16 %v4474, %v4466
    %v6947 = vpack.c.b16 %v4475, %v4467
    %v6948 = vpack.c.b16 %v4476, %v4468
    %v6949 = vpack.c.b16 %v4485, %v4477
    %v6950 = vpack.c.b16 %v4486, %v4478
    %v6951 = vpack.c.b16 %v4487, %v4479
    %v6952 = vpack.c.b16 %v4488, %v4480
    %v6953 = vpack.c.b16 %v4489, %v4481
    %v6954 = vpack.c.b16 %v4490, %v4482
    %v6955 = vpack.c.b16 %v4491, %v4483
    %v6956 = vpack.c.b16 %v4492, %v4484
    %v6957 = vpack.c.b16 %v4501, %v4493
    %v6958 = vpack.c.b16 %v4502, %v4494
    %v6959 = vpack.c.b16 %v4503, %v4495
    %v6960 = vpack.c.b16 %v4504, %v4496
    %v6961 = vpack.c.b16 %v4505, %v4497
    %v6962 = vpack.c.b16 %v4506, %v4498
    %v6963 = vpack.c.b16 %v4507, %v4499
    %v6964 = vpack.c.b16 %v4508, %v4500
    %v6965 = vpack.c.b16 %v4517, %v4509
    %v6966 = vpack.c.b16 %v4518, %v4510
    %v6967 = vpack.c.b16 %v4519, %v4511
    %v6968 = vpack.c.b16 %v4520, %v4512
    %v6969 = vpack.c.b16 %v4521, %v4513
    %v6970 = vpack.c.b16 %v4522, %v4514
    %v6971 = vpack.c.b16 %v4523, %v4515
    %v6972 = vpack.c.b16 %v4524, %v4516
    %v6973 = vpack.c.b16 %v4533, %v4525
    %v6974 = vpack.c.b16 %v4534, %v4526
    %v6975 = vpack.c.b16 %v4535, %v4527
    %v6976 = vpack.c.b16 %v4536, %v4528
    %v6977 = vpack.c.b16 %v4537, %v4529
    %v6978 = vpack.c.b16 %v4538, %v4530
    %v6979 = vpack.c.b16 %v4539, %v4531
    %v6980 = vpack.c.b16 %v4540, %v4532
    %v6981 = vpack.c.b16 %v4549, %v4541
    %v6982 = vpack.c.b16 %v4550, %v4542
    %v6983 = vpack.c.b16 %v4551, %v4543
    %v6984 = vpack.c.b16 %v4552, %v4544
    %v6985 = vpack.c.b16 %v4553, %v4545
    %v6986 = vpack.c.b16 %v4554, %v4546
    %v6987 = vpack.c.b16 %v4555, %v4547
    %v6988 = vpack.c.b16 %v4556, %v4548
    %v6989 = vpack.c.b16 %v4565, %v4557
    %v6990 = vpack.c.b16 %v4566, %v4558
    %v6991 = vpack.c.b16 %v4567, %v4559
    %v6992 = vpack.c.b16 %v4568, %v4560
    %v6993 = vpack.c.b16 %v4569, %v4561
    %v6994 = vpack.c.b16 %v4570, %v4562
    %v6995 = vpack.c.b16 %v4571, %v4563
    %v6996 = vpack.c.b16 %v4572, %v4564
    %v6997 = vpack.c.b16 %v4581, %v4573
    %v6998 = vpack.c.b16 %v4582, %v4574
    %v6999 = vpack.c.b16 %v4583, %v4575
    %v7000 = vpack.c.b16 %v4584, %v4576
    %v7001 = vpack.c.b16 %v4585, %v4577
    %v7002 = vpack.c.b16 %v4586, %v4578
    %v7003 = vpack.c.b16 %v4587, %v4579
    %v7004 = vpack.c.b16 %v4588, %v4580
    %v7005 = vpack.c.b16 %v4597, %v4589
    %v7006 = vpack.c.b16 %v4598, %v4590
    %v7007 = vpack.c.b16 %v4599, %v4591
    %v7008 = vpack.c.b16 %v4600, %v4592
    %v7009 = vpack.c.b16 %v4601, %v4593
    %v7010 = vpack.c.b16 %v4602, %v4594
    %v7011 = vpack.c.b16 %v4603, %v4595
    %v7012 = vpack.c.b16 %v4604, %v4596
    %v7013 = vpack.c.b16 %v4613, %v4605
    %v7014 = vpack.c.b16 %v4614, %v4606
    %v7015 = vpack.c.b16 %v4615, %v4607
    %v7016 = vpack.c.b16 %v4616, %v4608
    %v7017 = vpack.c.b16 %v4617, %v4609
    %v7018 = vpack.c.b16 %v4618, %v4610
    %v7019 = vpack.c.b16 %v4619, %v4611
    %v7020 = vpack.c.b16 %v4620, %v4612
    %v7021 = vpack.c.b16 %v4629, %v4621
    %v7022 = vpack.c.b16 %v4630, %v4622
    %v7023 = vpack.c.b16 %v4631, %v4623
    %v7024 = vpack.c.b16 %v4632, %v4624
    %v7025 = vpack.c.b16 %v4633, %v4625
    %v7026 = vpack.c.b16 %v4634, %v4626
    %v7027 = vpack.c.b16 %v4635, %v4627
    %v7028 = vpack.c.b16 %v4636, %v4628
    %v7029 = vpack.c.b16 %v4645, %v4637
    %v7030 = vpack.c.b16 %v4646, %v4638
    %v7031 = vpack.c.b16 %v4647, %v4639
    %v7032 = vpack.c.b16 %v4648, %v4640
    %v7033 = vpack.c.b16 %v4649, %v4641
    %v7034 = vpack.c.b16 %v4650, %v4642
    %v7035 = vpack.c.b16 %v4651, %v4643
    %v7036 = vpack.c.b16 %v4652, %v4644
    %v7037 = vpack.c.b16 %v4661, %v4653
    %v7038 = vpack.c.b16 %v4662, %v4654
    %v7039 = vpack.c.b16 %v4663, %v4655
    %v7040 = vpack.c.b16 %v4664, %v4656
    %v7041 = vpack.c.b16 %v4665, %v4657
    %v7042 = vpack.c.b16 %v4666, %v4658
    %v7043 = vpack.c.b16 %v4667, %v4659
    %v7044 = vpack.c.b16 %v4668, %v4660
    %v7045 = vpack.c.b16 %v4677, %v4669
    %v7046 = vpack.c.b16 %v4678, %v4670
    %v7047 = vpack.c.b16 %v4679, %v4671
    %v7048 = vpack.c.b16 %v4680, %v4672
    %v7049 = vpack.c.b16 %v4681, %v4673
    %v7050 = vpack.c.b16 %v4682, %v4674
    %v7051 = vpack.c.b16 %v4683, %v4675
    %v7052 = vpack.c.b16 %v4684, %v4676
    %v7053 = vpack.c.b16 %v4693, %v4685
    %v7054 = vpack.c.b16 %v4694, %v4686
    %v7055 = vpack.c.b16 %v4695, %v4687
    %v7056 = vpack.c.b16 %v4696, %v4688
    %v7057 = vpack.c.b16 %v4697, %v4689
    %v7058 = vpack.c.b16 %v4698, %v4690
    %v7059 = vpack.c.b16 %v4699, %v4691
    %v7060 = vpack.c.b16 %v4700, %v4692
    %v7061 = vpack.c.b16 %v4709, %v4701
    %v7062 = vpack.c.b16 %v4710, %v4702
    %v7063 = vpack.c.b16 %v4711, %v4703
    %v7064 = vpack.c.b16 %v4712, %v4704
    %v7065 = vpack.c.b16 %v4713, %v4705
    %v7066 = vpack.c.b16 %v4714, %v4706
    %v7067 = vpack.c.b16 %v4715, %v4707
    %v7068 = vpack.c.b16 %v4716, %v4708
    %v7069 = vpack.c.b16 %v4725, %v4717
    %v7070 = vpack.c.b16 %v4726, %v4718
    %v7071 = vpack.c.b16 %v4727, %v4719
    %v7072 = vpack.c.b16 %v4728, %v4720
    %v7073 = vpack.c.b16 %v4729, %v4721
    %v7074 = vpack.c.b16 %v4730, %v4722
    %v7075 = vpack.c.b16 %v4731, %v4723
    %v7076 = vpack.c.b16 %v4732, %v4724
    %v7077 = vpack.c.b16 %v4741, %v4733
    %v7078 = vpack.c.b16 %v4742, %v4734
    %v7079 = vpack.c.b16 %v4743, %v4735
    %v7080 = vpack.c.b16 %v4744, %v4736
    %v7081 = vpack.c.b16 %v4745, %v4737
    %v7082 = vpack.c.b16 %v4746, %v4738
    %v7083 = vpack.c.b16 %v4747, %v4739
    %v7084 = vpack.c.b16 %v4748, %v4740
    %v7085 = vpack.c.b16 %v4757, %v4749
    %v7086 = vpack.c.b16 %v4758, %v4750
    %v7087 = vpack.c.b16 %v4759, %v4751
    %v7088 = vpack.c.b16 %v4760, %v4752
    %v7089 = vpack.c.b16 %v4761, %v4753
    %v7090 = vpack.c.b16 %v4762, %v4754
    %v7091 = vpack.c.b16 %v4763, %v4755
    %v7092 = vpack.c.b16 %v4764, %v4756
    %v7093 = vpack.c.b16 %v4773, %v4765
    %v7094 = vpack.c.b16 %v4774, %v4766
    %v7095 = vpack.c.b16 %v4775, %v4767
    %v7096 = vpack.c.b16 %v4776, %v4768
    %v7097 = vpack.c.b16 %v4777, %v4769
    %v7098 = vpack.c.b16 %v4778, %v4770
    %v7099 = vpack.c.b16 %v4779, %v4771
    %v7100 = vpack.c.b16 %v4780, %v4772
    %v7101 = vpack.c.b16 %v4789, %v4781
    %v7102 = vpack.c.b16 %v4790, %v4782
    %v7103 = vpack.c.b16 %v4791, %v4783
    %v7104 = vpack.c.b16 %v4792, %v4784
    %v7105 = vpack.c.b16 %v4793, %v4785
    %v7106 = vpack.c.b16 %v4794, %v4786
    %v7107 = vpack.c.b16 %v4795, %v4787
    %v7108 = vpack.c.b16 %v4796, %v4788
    %v7109 = vpack.c.b16 %v4805, %v4797
    %v7110 = vpack.c.b16 %v4806, %v4798
    %v7111 = vpack.c.b16 %v4807, %v4799
    %v7112 = vpack.c.b16 %v4808, %v4800
    %v7113 = vpack.c.b16 %v4809, %v4801
    %v7114 = vpack.c.b16 %v4810, %v4802
    %v7115 = vpack.c.b16 %v4811, %v4803
    %v7116 = vpack.c.b16 %v4812, %v4804
    %v7117 = vpack.c.b16 %v4821, %v4813
    %v7118 = vpack.c.b16 %v4822, %v4814
    %v7119 = vpack.c.b16 %v4823, %v4815
    %v7120 = vpack.c.b16 %v4824, %v4816
    %v7121 = vpack.c.b16 %v4825, %v4817
    %v7122 = vpack.c.b16 %v4826, %v4818
    %v7123 = vpack.c.b16 %v4827, %v4819
    %v7124 = vpack.c.b16 %v4828, %v4820
    %v7125 = vpack.c.b16 %v4837, %v4829
    %v7126 = vpack.c.b16 %v4838, %v4830
    %v7127 = vpack.c.b16 %v4839, %v4831
    %v7128 = vpack.c.b16 %v4840, %v4832
    %v7129 = vpack.c.b16 %v4841, %v4833
    %v7130 = vpack.c.b16 %v4842, %v4834
    %v7131 = vpack.c.b16 %v4843, %v4835
    %v7132 = vpack.c.b16 %v4844, %v4836
    %v7133 = vpack.c.b16 %v4853, %v4845
    %v7134 = vpack.c.b16 %v4854, %v4846
    %v7135 = vpack.c.b16 %v4855, %v4847
    %v7136 = vpack.c.b16 %v4856, %v4848
    %v7137 = vpack.c.b16 %v4857, %v4849
    %v7138 = vpack.c.b16 %v4858, %v4850
    %v7139 = vpack.c.b16 %v4859, %v4851
    %v7140 = vpack.c.b16 %v4860, %v4852
    %v7141 = vpack.c.b16 %v4869, %v4861
    %v7142 = vpack.c.b16 %v4870, %v4862
    %v7143 = vpack.c.b16 %v4871, %v4863
    %v7144 = vpack.c.b16 %v4872, %v4864
    %v7145 = vpack.c.b16 %v4873, %v4865
    %v7146 = vpack.c.b16 %v4874, %v4866
    %v7147 = vpack.c.b16 %v4875, %v4867
    %v7148 = vpack.c.b16 %v4876, %v4868
    %v7149 = vpack.c.b16 %v4885, %v4877
    %v7150 = vpack.c.b16 %v4886, %v4878
    %v7151 = vpack.c.b16 %v4887, %v4879
    %v7152 = vpack.c.b16 %v4888, %v4880
    %v7153 = vpack.c.b16 %v4889, %v4881
    %v7154 = vpack.c.b16 %v4890, %v4882
    %v7155 = vpack.c.b16 %v4891, %v4883
    %v7156 = vpack.c.b16 %v4892, %v4884
    %v7157 = vpack.c.b16 %v4901, %v4893
    %v7158 = vpack.c.b16 %v4902, %v4894
    %v7159 = vpack.c.b16 %v4903, %v4895
    %v7160 = vpack.c.b16 %v4904, %v4896
    %v7161 = vpack.c.b16 %v4905, %v4897
    %v7162 = vpack.c.b16 %v4906, %v4898
    %v7163 = vpack.c.b16 %v4907, %v4899
    %v7164 = vpack.c.b16 %v4908, %v4900
    %v7165 = vpack.c.b16 %v4917, %v4909
    %v7166 = vpack.c.b16 %v4918, %v4910
    %v7167 = vpack.c.b16 %v4919, %v4911
    %v7168 = vpack.c.b16 %v4920, %v4912
    %v7169 = vpack.c.b16 %v4921, %v4913
    %v7170 = vpack.c.b16 %v4922, %v4914
    %v7171 = vpack.c.b16 %v4923, %v4915
    %v7172 = vpack.c.b16 %v4924, %v4916
    %v7173 = vpack.c.b16 %v4933, %v4925
    %v7174 = vpack.c.b16 %v4934, %v4926
    %v7175 = vpack.c.b16 %v4935, %v4927
    %v7176 = vpack.c.b16 %v4936, %v4928
    %v7177 = vpack.c.b16 %v4937, %v4929
    %v7178 = vpack.c.b16 %v4938, %v4930
    %v7179 = vpack.c.b16 %v4939, %v4931
    %v7180 = vpack.c.b16 %v4940, %v4932
    %v7181 = vpack.c.b16 %v4949, %v4941
    %v7182 = vpack.c.b16 %v4950, %v4942
    %v7183 = vpack.c.b16 %v4951, %v4943
    %v7184 = vpack.c.b16 %v4952, %v4944
    %v7185 = vpack.c.b16 %v4953, %v4945
    %v7186 = vpack.c.b16 %v4954, %v4946
    %v7187 = vpack.c.b16 %v4955, %v4947
    %v7188 = vpack.c.b16 %v4956, %v4948
    %v7189 = vpack.c.b16 %v4965, %v4957
    %v7190 = vpack.c.b16 %v4966, %v4958
    %v7191 = vpack.c.b16 %v4967, %v4959
    %v7192 = vpack.c.b16 %v4968, %v4960
    %v7193 = vpack.c.b16 %v4969, %v4961
    %v7194 = vpack.c.b16 %v4970, %v4962
    %v7195 = vpack.c.b16 %v4971, %v4963
    %v7196 = vpack.c.b16 %v4972, %v4964
    %v7197 = vpack.c.b16 %v4981, %v4973
    %v7198 = vpack.c.b16 %v4982, %v4974
    %v7199 = vpack.c.b16 %v4983, %v4975
    %v7200 = vpack.c.b16 %v4984, %v4976
    %v7201 = vpack.c.b16 %v4985, %v4977
    %v7202 = vpack.c.b16 %v4986, %v4978
    %v7203 = vpack.c.b16 %v4987, %v4979
    %v7204 = vpack.c.b16 %v4988, %v4980
    %v7205 = vpack.c.b16 %v4997, %v4989
    %v7206 = vpack.c.b16 %v4998, %v4990
    %v7207 = vpack.c.b16 %v4999, %v4991
    %v7208 = vpack.c.b16 %v5000, %v4992
    %v7209 = vpack.c.b16 %v5001, %v4993
    %v7210 = vpack.c.b16 %v5002, %v4994
    %v7211 = vpack.c.b16 %v5003, %v4995
    %v7212 = vpack.c.b16 %v5004, %v4996
    %v7213 = vpack.c.b16 %v5013, %v5005
    %v7214 = vpack.c.b16 %v5014, %v5006
    %v7215 = vpack.c.b16 %v5015, %v5007
    %v7216 = vpack.c.b16 %v5016, %v5008
    %v7217 = vpack.c.b16 %v5017, %v5009
    %v7218 = vpack.c.b16 %v5018, %v5010
    %v7219 = vpack.c.b16 %v5019, %v5011
    %v7220 = vpack.c.b16 %v5020, %v5012
    %v7221 = vpack.c.b16 %v5029, %v5021
    %v7222 = vpack.c.b16 %v5030, %v5022
    %v7223 = vpack.c.b16 %v5031, %v5023
    %v7224 = vpack.c.b16 %v5032, %v5024
    %v7225 = vpack.c.b16 %v5033, %v5025
    %v7226 = vpack.c.b16 %v5034, %v5026
    %v7227 = vpack.c.b16 %v5035, %v5027
    %v7228 = vpack.c.b16 %v5036, %v5028
    %v7229 = vpack.c.b16 %v5045, %v5037
    %v7230 = vpack.c.b16 %v5046, %v5038
    %v7231 = vpack.c.b16 %v5047, %v5039
    %v7232 = vpack.c.b16 %v5048, %v5040
    %v7233 = vpack.c.b16 %v5049, %v5041
    %v7234 = vpack.c.b16 %v5050, %v5042
    %v7235 = vpack.c.b16 %v5051, %v5043
    %v7236 = vpack.c.b16 %v5052, %v5044
    %v7237 = vpack.c.b16 %v5061, %v5053
    %v7238 = vpack.c.b16 %v5062, %v5054
    %v7239 = vpack.c.b16 %v5063, %v5055
    %v7240 = vpack.c.b16 %v5064, %v5056
    %v7241 = vpack.c.b16 %v5065, %v5057
    %v7242 = vpack.c.b16 %v5066, %v5058
    %v7243 = vpack.c.b16 %v5067, %v5059
    %v7244 = vpack.c.b16 %v5068, %v5060
    %v7245 = vpack.c.b16 %v5077, %v5069
    %v7246 = vpack.c.b16 %v5078, %v5070
    %v7247 = vpack.c.b16 %v5079, %v5071
    %v7248 = vpack.c.b16 %v5080, %v5072
    %v7249 = vpack.c.b16 %v5081, %v5073
    %v7250 = vpack.c.b16 %v5082, %v5074
    %v7251 = vpack.c.b16 %v5083, %v5075
    %v7252 = vpack.c.b16 %v5084, %v5076
    %v7253 = vpack.c.b16 %v5093, %v5085
    %v7254 = vpack.c.b16 %v5094, %v5086
    %v7255 = vpack.c.b16 %v5095, %v5087
    %v7256 = vpack.c.b16 %v5096, %v5088
    %v7257 = vpack.c.b16 %v5097, %v5089
    %v7258 = vpack.c.b16 %v5098, %v5090
    %v7259 = vpack.c.b16 %v5099, %v5091
    %v7260 = vpack.c.b16 %v5100, %v5092
    %v7261 = vpack.c.b16 %v5109, %v5101
    %v7262 = vpack.c.b16 %v5110, %v5102
    %v7263 = vpack.c.b16 %v5111, %v5103
    %v7264 = vpack.c.b16 %v5112, %v5104
    %v7265 = vpack.c.b16 %v5113, %v5105
    %v7266 = vpack.c.b16 %v5114, %v5106
    %v7267 = vpack.c.b16 %v5115, %v5107
    %v7268 = vpack.c.b16 %v5116, %v5108
    %v7269 = vpack.c.b16 %v5125, %v5117
    %v7270 = vpack.c.b16 %v5126, %v5118
    %v7271 = vpack.c.b16 %v5127, %v5119
    %v7272 = vpack.c.b16 %v5128, %v5120
    %v7273 = vpack.c.b16 %v5129, %v5121
    %v7274 = vpack.c.b16 %v5130, %v5122
    %v7275 = vpack.c.b16 %v5131, %v5123
    %v7276 = vpack.c.b16 %v5132, %v5124
    %v7277 = vpack.c.b16 %v5141, %v5133
    %v7278 = vpack.c.b16 %v5142, %v5134
    %v7279 = vpack.c.b16 %v5143, %v5135
    %v7280 = vpack.c.b16 %v5144, %v5136
    %v7281 = vpack.c.b16 %v5145, %v5137
    %v7282 = vpack.c.b16 %v5146, %v5138
    %v7283 = vpack.c.b16 %v5147, %v5139
    %v7284 = vpack.c.b16 %v5148, %v5140
    %v7285 = vpack.c.b16 %v5157, %v5149
    %v7286 = vpack.c.b16 %v5158, %v5150
    %v7287 = vpack.c.b16 %v5159, %v5151
    %v7288 = vpack.c.b16 %v5160, %v5152
    %v7289 = vpack.c.b16 %v5161, %v5153
    %v7290 = vpack.c.b16 %v5162, %v5154
    %v7291 = vpack.c.b16 %v5163, %v5155
    %v7292 = vpack.c.b16 %v5164, %v5156
    %v7293 = vpack.c.b16 %v5173, %v5165
    %v7294 = vpack.c.b16 %v5174, %v5166
    %v7295 = vpack.c.b16 %v5175, %v5167
    %v7296 = vpack.c.b16 %v5176, %v5168
    %v7297 = vpack.c.b16 %v5177, %v5169
    %v7298 = vpack.c.b16 %v5178, %v5170
    %v7299 = vpack.c.b16 %v5179, %v5171
    %v7300 = vpack.c.b16 %v5180, %v5172
    %v7301 = vpack.c.b16 %v5189, %v5181
    %v7302 = vpack.c.b16 %v5190, %v5182
    %v7303 = vpack.c.b16 %v5191, %v5183
    %v7304 = vpack.c.b16 %v5192, %v5184
    %v7305 = vpack.c.b16 %v5193, %v5185
    %v7306 = vpack.c.b16 %v5194, %v5186
    %v7307 = vpack.c.b16 %v5195, %v5187
    %v7308 = vpack.c.b16 %v5196, %v5188
    %v7309 = vpack.c.b16 %v5205, %v5197
    %v7310 = vpack.c.b16 %v5206, %v5198
    %v7311 = vpack.c.b16 %v5207, %v5199
    %v7312 = vpack.c.b16 %v5208, %v5200
    %v7313 = vpack.c.b16 %v5209, %v5201
    %v7314 = vpack.c.b16 %v5210, %v5202
    %v7315 = vpack.c.b16 %v5211, %v5203
    %v7316 = vpack.c.b16 %v5212, %v5204
    %v7317 = vpack.c.b16 %v5221, %v5213
    %v7318 = vpack.c.b16 %v5222, %v5214
    %v7319 = vpack.c.b16 %v5223, %v5215
    %v7320 = vpack.c.b16 %v5224, %v5216
    %v7321 = vpack.c.b16 %v5225, %v5217
    %v7322 = vpack.c.b16 %v5226, %v5218
    %v7323 = vpack.c.b16 %v5227, %v5219
    %v7324 = vpack.c.b16 %v5228, %v5220
    %v7325 = vpack.c.b16 %v5237, %v5229
    %v7326 = vpack.c.b16 %v5238, %v5230
    %v7327 = vpack.c.b16 %v5239, %v5231
    %v7328 = vpack.c.b16 %v5240, %v5232
    %v7329 = vpack.c.b16 %v5241, %v5233
    %v7330 = vpack.c.b16 %v5242, %v5234
    %v7331 = vpack.c.b16 %v5243, %v5235
    %v7332 = vpack.c.b16 %v5244, %v5236
    %v7333 = vpack.c.b16 %v5253, %v5245
    %v7334 = vpack.c.b16 %v5254, %v5246
    %v7335 = vpack.c.b16 %v5255, %v5247
    %v7336 = vpack.c.b16 %v5256, %v5248
    %v7337 = vpack.c.b16 %v5257, %v5249
    %v7338 = vpack.c.b16 %v5258, %v5250
    %v7339 = vpack.c.b16 %v5259, %v5251
    %v7340 = vpack.c.b16 %v5260, %v5252
    %v7341 = vpack.c.b16 %v5269, %v5261
    %v7342 = vpack.c.b16 %v5270, %v5262
    %v7343 = vpack.c.b16 %v5271, %v5263
    %v7344 = vpack.c.b16 %v5272, %v5264
    %v7345 = vpack.c.b16 %v5273, %v5265
    %v7346 = vpack.c.b16 %v5274, %v5266
    %v7347 = vpack.c.b16 %v5275, %v5267
    %v7348 = vpack.c.b16 %v5276, %v5268
    %v7349 = vpack.c.b16 %v5285, %v5277
    %v7350 = vpack.c.b16 %v5286, %v5278
    %v7351 = vpack.c.b16 %v5287, %v5279
    %v7352 = vpack.c.b16 %v5288, %v5280
    %v7353 = vpack.c.b16 %v5289, %v5281
    %v7354 = vpack.c.b16 %v5290, %v5282
    %v7355 = vpack.c.b16 %v5291, %v5283
    %v7356 = vpack.c.b16 %v5292, %v5284
    %v7357 = vpack.c.b16 %v5301, %v5293
    %v7358 = vpack.c.b16 %v5302, %v5294
    %v7359 = vpack.c.b16 %v5303, %v5295
    %v7360 = vpack.c.b16 %v5304, %v5296
    %v7361 = vpack.c.b16 %v5305, %v5297
    %v7362 = vpack.c.b16 %v5306, %v5298
    %v7363 = vpack.c.b16 %v5307, %v5299
    %v7364 = vpack.c.b16 %v5308, %v5300
    %v7365 = vpack.c.b16 %v5317, %v5309
    %v7366 = vpack.c.b16 %v5318, %v5310
    %v7367 = vpack.c.b16 %v5319, %v5311
    %v7368 = vpack.c.b16 %v5320, %v5312
    %v7369 = vpack.c.b16 %v5321, %v5313
    %v7370 = vpack.c.b16 %v5322, %v5314
    %v7371 = vpack.c.b16 %v5323, %v5315
    %v7372 = vpack.c.b16 %v5324, %v5316
    %v7373 = vpack.c.b16 %v5333, %v5325
    %v7374 = vpack.c.b16 %v5334, %v5326
    %v7375 = vpack.c.b16 %v5335, %v5327
    %v7376 = vpack.c.b16 %v5336, %v5328
    %v7377 = vpack.c.b16 %v5337, %v5329
    %v7378 = vpack.c.b16 %v5338, %v5330
    %v7379 = vpack.c.b16 %v5339, %v5331
    %v7380 = vpack.c.b16 %v5340, %v5332
    %v7381 = vpack.c.b16 %v5349, %v5341
    %v7382 = vpack.c.b16 %v5350, %v5342
    %v7383 = vpack.c.b16 %v5351, %v5343
    %v7384 = vpack.c.b16 %v5352, %v5344
    %v7385 = vpack.c.b16 %v5353, %v5345
    %v7386 = vpack.c.b16 %v5354, %v5346
    %v7387 = vpack.c.b16 %v5355, %v5347
    %v7388 = vpack.c.b16 %v5356, %v5348
    %v7389 = vpack.c.b16 %v5365, %v5357
    %v7390 = vpack.c.b16 %v5366, %v5358
    %v7391 = vpack.c.b16 %v5367, %v5359
    %v7392 = vpack.c.b16 %v5368, %v5360
    %v7393 = vpack.c.b16 %v5369, %v5361
    %v7394 = vpack.c.b16 %v5370, %v5362
    %v7395 = vpack.c.b16 %v5371, %v5363
    %v7396 = vpack.c.b16 %v5372, %v5364
    %v7397 = vpack.c.b16 %v5381, %v5373
    %v7398 = vpack.c.b16 %v5382, %v5374
    %v7399 = vpack.c.b16 %v5383, %v5375
    %v7400 = vpack.c.b16 %v5384, %v5376
    %v7401 = vpack.c.b16 %v5385, %v5377
    %v7402 = vpack.c.b16 %v5386, %v5378
    %v7403 = vpack.c.b16 %v5387, %v5379
    %v7404 = vpack.c.b16 %v5388, %v5380
    %v7405 = vpack.c.b16 %v5397, %v5389
    %v7406 = vpack.c.b16 %v5398, %v5390
    %v7407 = vpack.c.b16 %v5399, %v5391
    %v7408 = vpack.c.b16 %v5400, %v5392
    %v7409 = vpack.c.b16 %v5401, %v5393
    %v7410 = vpack.c.b16 %v5402, %v5394
    %v7411 = vpack.c.b16 %v5403, %v5395
    %v7412 = vpack.c.b16 %v5404, %v5396
    %v7413 = vpack.c.b16 %v5413, %v5405
    %v7414 = vpack.c.b16 %v5414, %v5406
    %v7415 = vpack.c.b16 %v5415, %v5407
    %v7416 = vpack.c.b16 %v5416, %v5408
    %v7417 = vpack.c.b16 %v5417, %v5409
    %v7418 = vpack.c.b16 %v5418, %v5410
    %v7419 = vpack.c.b16 %v5419, %v5411
    %v7420 = vpack.c.b16 %v5420, %v5412
    %v7421 = vpack.c.b16 %v5429, %v5421
    %v7422 = vpack.c.b16 %v5430, %v5422
    %v7423 = vpack.c.b16 %v5431, %v5423
    %v7424 = vpack.c.b16 %v5432, %v5424
    %v7425 = vpack.c.b16 %v5433, %v5425
    %v7426 = vpack.c.b16 %v5434, %v5426
    %v7427 = vpack.c.b16 %v5435, %v5427
    %v7428 = vpack.c.b16 %v5436, %v5428
    %v7429 = vpack.c.b16 %v5445, %v5437
    %v7430 = vpack.c.b16 %v5446, %v5438
    %v7431 = vpack.c.b16 %v5447, %v5439
    %v7432 = vpack.c.b16 %v5448, %v5440
    %v7433 = vpack.c.b16 %v5449, %v5441
    %v7434 = vpack.c.b16 %v5450, %v5442
    %v7435 = vpack.c.b16 %v5451, %v5443
    %v7436 = vpack.c.b16 %v5452, %v5444
    %v7437 = vpack.c.b16 %v5461, %v5453
    %v7438 = vpack.c.b16 %v5462, %v5454
    %v7439 = vpack.c.b16 %v5463, %v5455
    %v7440 = vpack.c.b16 %v5464, %v5456
    %v7441 = vpack.c.b16 %v5465, %v5457
    %v7442 = vpack.c.b16 %v5466, %v5458
    %v7443 = vpack.c.b16 %v5467, %v5459
    %v7444 = vpack.c.b16 %v5468, %v5460
    %v7445 = vpack.c.b16 %v5477, %v5469
    %v7446 = vpack.c.b16 %v5478, %v5470
    %v7447 = vpack.c.b16 %v5479, %v5471
    %v7448 = vpack.c.b16 %v5480, %v5472
    %v7449 = vpack.c.b16 %v5481, %v5473
    %v7450 = vpack.c.b16 %v5482, %v5474
    %v7451 = vpack.c.b16 %v5483, %v5475
    %v7452 = vpack.c.b16 %v5484, %v5476
    %v7453 = vpack.c.b16 %v5493, %v5485
    %v7454 = vpack.c.b16 %v5494, %v5486
    %v7455 = vpack.c.b16 %v5495, %v5487
    %v7456 = vpack.c.b16 %v5496, %v5488
    %v7457 = vpack.c.b16 %v5497, %v5489
    %v7458 = vpack.c.b16 %v5498, %v5490
    %v7459 = vpack.c.b16 %v5499, %v5491
    %v7460 = vpack.c.b16 %v5500, %v5492
    %v7461 = vpack.c.b16 %v5509, %v5501
    %v7462 = vpack.c.b16 %v5510, %v5502
    %v7463 = vpack.c.b16 %v5511, %v5503
    %v7464 = vpack.c.b16 %v5512, %v5504
    %v7465 = vpack.c.b16 %v5513, %v5505
    %v7466 = vpack.c.b16 %v5514, %v5506
    %v7467 = vpack.c.b16 %v5515, %v5507
    %v7468 = vpack.c.b16 %v5516, %v5508
    %v7469 = vpack.c.b16 %v5525, %v5517
    %v7470 = vpack.c.b16 %v5526, %v5518
    %v7471 = vpack.c.b16 %v5527, %v5519
    %v7472 = vpack.c.b16 %v5528, %v5520
    %v7473 = vpack.c.b16 %v5529, %v5521
    %v7474 = vpack.c.b16 %v5530, %v5522
    %v7475 = vpack.c.b16 %v5531, %v5523
    %v7476 = vpack.c.b16 %v5532, %v5524
    %v7477 = vpack.c.b16 %v5541, %v5533
    %v7478 = vpack.c.b16 %v5542, %v5534
    %v7479 = vpack.c.b16 %v5543, %v5535
    %v7480 = vpack.c.b16 %v5544, %v5536
    %v7481 = vpack.c.b16 %v5545, %v5537
    %v7482 = vpack.c.b16 %v5546, %v5538
    %v7483 = vpack.c.b16 %v5547, %v5539
    %v7484 = vpack.c.b16 %v5548, %v5540
    %v7485 = vpack.c.b16 %v5557, %v5549
    %v7486 = vpack.c.b16 %v5558, %v5550
    %v7487 = vpack.c.b16 %v5559, %v5551
    %v7488 = vpack.c.b16 %v5560, %v5552
    %v7489 = vpack.c.b16 %v5561, %v5553
    %v7490 = vpack.c.b16 %v5562, %v5554
    %v7491 = vpack.c.b16 %v5563, %v5555
    %v7492 = vpack.c.b16 %v5564, %v5556
    %v7493 = vpack.c.b16 %v5573, %v5565
    %v7494 = vpack.c.b16 %v5574, %v5566
    %v7495 = vpack.c.b16 %v5575, %v5567
    %v7496 = vpack.c.b16 %v5576, %v5568
    %v7497 = vpack.c.b16 %v5577, %v5569
    %v7498 = vpack.c.b16 %v5578, %v5570
    %v7499 = vpack.c.b16 %v5579, %v5571
    %v7500 = vpack.c.b16 %v5580, %v5572
    %v7501 = vpack.c.b16 %v5589, %v5581
    %v7502 = vpack.c.b16 %v5590, %v5582
    %v7503 = vpack.c.b16 %v5591, %v5583
    %v7504 = vpack.c.b16 %v5592, %v5584
    %v7505 = vpack.c.b16 %v5593, %v5585
    %v7506 = vpack.c.b16 %v5594, %v5586
    %v7507 = vpack.c.b16 %v5595, %v5587
    %v7508 = vpack.c.b16 %v5596, %v5588
    %v7509 = vpack.c.b16 %v5605, %v5597
    %v7510 = vpack.c.b16 %v5606, %v5598
    %v7511 = vpack.c.b16 %v5607, %v5599
    %v7512 = vpack.c.b16 %v5608, %v5600
    %v7513 = vpack.c.b16 %v5609, %v5601
    %v7514 = vpack.c.b16 %v5610, %v5602
    %v7515 = vpack.c.b16 %v5611, %v5603
    %v7516 = vpack.c.b16 %v5612, %v5604
    %v7517 = vpack.c.b16 %v5621, %v5613
    %v7518 = vpack.c.b16 %v5622, %v5614
    %v7519 = vpack.c.b16 %v5623, %v5615
    %v7520 = vpack.c.b16 %v5624, %v5616
    %v7521 = vpack.c.b16 %v5625, %v5617
    %v7522 = vpack.c.b16 %v5626, %v5618
    %v7523 = vpack.c.b16 %v5627, %v5619
    %v7524 = vpack.c.b16 %v5628, %v5620
    %v7525 = vpack.c.b16 %v5637, %v5629
    %v7526 = vpack.c.b16 %v5638, %v5630
    %v7527 = vpack.c.b16 %v5639, %v5631
    %v7528 = vpack.c.b16 %v5640, %v5632
    %v7529 = vpack.c.b16 %v5641, %v5633
    %v7530 = vpack.c.b16 %v5642, %v5634
    %v7531 = vpack.c.b16 %v5643, %v5635
    %v7532 = vpack.c.b16 %v5644, %v5636
    %v7533 = vpack.c.b16 %v5653, %v5645
    %v7534 = vpack.c.b16 %v5654, %v5646
    %v7535 = vpack.c.b16 %v5655, %v5647
    %v7536 = vpack.c.b16 %v5656, %v5648
    %v7537 = vpack.c.b16 %v5657, %v5649
    %v7538 = vpack.c.b16 %v5658, %v5650
    %v7539 = vpack.c.b16 %v5659, %v5651
    %v7540 = vpack.c.b16 %v5660, %v5652
    %v7541 = vpack.c.b16 %v5669, %v5661
    %v7542 = vpack.c.b16 %v5670, %v5662
    %v7543 = vpack.c.b16 %v5671, %v5663
    %v7544 = vpack.c.b16 %v5672, %v5664
    %v7545 = vpack.c.b16 %v5673, %v5665
    %v7546 = vpack.c.b16 %v5674, %v5666
    %v7547 = vpack.c.b16 %v5675, %v5667
    %v7548 = vpack.c.b16 %v5676, %v5668
    %v7549 = vpack.c.b16 %v5685, %v5677
    %v7550 = vpack.c.b16 %v5686, %v5678
    %v7551 = vpack.c.b16 %v5687, %v5679
    %v7552 = vpack.c.b16 %v5688, %v5680
    %v7553 = vpack.c.b16 %v5689, %v5681
    %v7554 = vpack.c.b16 %v5690, %v5682
    %v7555 = vpack.c.b16 %v5691, %v5683
    %v7556 = vpack.c.b16 %v5692, %v5684
    %v7557 = vpack.c.b16 %v5701, %v5693
    %v7558 = vpack.c.b16 %v5702, %v5694
    %v7559 = vpack.c.b16 %v5703, %v5695
    %v7560 = vpack.c.b16 %v5704, %v5696
    %v7561 = vpack.c.b16 %v5705, %v5697
    %v7562 = vpack.c.b16 %v5706, %v5698
    %v7563 = vpack.c.b16 %v5707, %v5699
    %v7564 = vpack.c.b16 %v5708, %v5700
    %v7565 = vpack.c.b16 %v5717, %v5709
    %v7566 = vpack.c.b16 %v5718, %v5710
    %v7567 = vpack.c.b16 %v5719, %v5711
    %v7568 = vpack.c.b16 %v5720, %v5712
    %v7569 = vpack.c.b16 %v5721, %v5713
    %v7570 = vpack.c.b16 %v5722, %v5714
    %v7571 = vpack.c.b16 %v5723, %v5715
    %v7572 = vpack.c.b16 %v5724, %v5716
    %v7573 = vpack.c.b16 %v5733, %v5725
    %v7574 = vpack.c.b16 %v5734, %v5726
    %v7575 = vpack.c.b16 %v5735, %v5727
    %v7576 = vpack.c.b16 %v5736, %v5728
    %v7577 = vpack.c.b16 %v5737, %v5729
    %v7578 = vpack.c.b16 %v5738, %v5730
    %v7579 = vpack.c.b16 %v5739, %v5731
    %v7580 = vpack.c.b16 %v5740, %v5732
    %v7581 = vpack.c.b16 %v5749, %v5741
    %v7582 = vpack.c.b16 %v5750, %v5742
    %v7583 = vpack.c.b16 %v5751, %v5743
    %v7584 = vpack.c.b16 %v5752, %v5744
    %v7585 = vpack.c.b16 %v5753, %v5745
    %v7586 = vpack.c.b16 %v5754, %v5746
    %v7587 = vpack.c.b16 %v5755, %v5747
    %v7588 = vpack.c.b16 %v5756, %v5748
    %v7589 = vpack.c.b16 %v5765, %v5757
    %v7590 = vpack.c.b16 %v5766, %v5758
    %v7591 = vpack.c.b16 %v5767, %v5759
    %v7592 = vpack.c.b16 %v5768, %v5760
    %v7593 = vpack.c.b16 %v5769, %v5761
    %v7594 = vpack.c.b16 %v5770, %v5762
    %v7595 = vpack.c.b16 %v5771, %v5763
    %v7596 = vpack.c.b16 %v5772, %v5764
    %v7597 = vpack.c.b16 %v5781, %v5773
    %v7598 = vpack.c.b16 %v5782, %v5774
    %v7599 = vpack.c.b16 %v5783, %v5775
    %v7600 = vpack.c.b16 %v5784, %v5776
    %v7601 = vpack.c.b16 %v5785, %v5777
    %v7602 = vpack.c.b16 %v5786, %v5778
    %v7603 = vpack.c.b16 %v5787, %v5779
    %v7604 = vpack.c.b16 %v5788, %v5780
    %v7605 = vpack.c.b16 %v5797, %v5789
    %v7606 = vpack.c.b16 %v5798, %v5790
    %v7607 = vpack.c.b16 %v5799, %v5791
    %v7608 = vpack.c.b16 %v5800, %v5792
    %v7609 = vpack.c.b16 %v5801, %v5793
    %v7610 = vpack.c.b16 %v5802, %v5794
    %v7611 = vpack.c.b16 %v5803, %v5795
    %v7612 = vpack.c.b16 %v5804, %v5796
    %v7613 = vpack.c.b16 %v5813, %v5805
    %v7614 = vpack.c.b16 %v5814, %v5806
    %v7615 = vpack.c.b16 %v5815, %v5807
    %v7616 = vpack.c.b16 %v5816, %v5808
    %v7617 = vpack.c.b16 %v5817, %v5809
    %v7618 = vpack.c.b16 %v5818, %v5810
    %v7619 = vpack.c.b16 %v5819, %v5811
    %v7620 = vpack.c.b16 %v5820, %v5812
    %v7621 = vpack.c.b16 %v5829, %v5821
    %v7622 = vpack.c.b16 %v5830, %v5822
    %v7623 = vpack.c.b16 %v5831, %v5823
    %v7624 = vpack.c.b16 %v5832, %v5824
    %v7625 = vpack.c.b16 %v5833, %v5825
    %v7626 = vpack.c.b16 %v5834, %v5826
    %v7627 = vpack.c.b16 %v5835, %v5827
    %v7628 = vpack.c.b16 %v5836, %v5828
    %v7629 = vpack.c.b16 %v5845, %v5837
    %v7630 = vpack.c.b16 %v5846, %v5838
    %v7631 = vpack.c.b16 %v5847, %v5839
    %v7632 = vpack.c.b16 %v5848, %v5840
    %v7633 = vpack.c.b16 %v5849, %v5841
    %v7634 = vpack.c.b16 %v5850, %v5842
    %v7635 = vpack.c.b16 %v5851, %v5843
    %v7636 = vpack.c.b16 %v5852, %v5844
    %v7637 = vpack.c.b16 %v5861, %v5853
    %v7638 = vpack.c.b16 %v5862, %v5854
    %v7639 = vpack.c.b16 %v5863, %v5855
    %v7640 = vpack.c.b16 %v5864, %v5856
    %v7641 = vpack.c.b16 %v5865, %v5857
    %v7642 = vpack.c.b16 %v5866, %v5858
    %v7643 = vpack.c.b16 %v5867, %v5859
    %v7644 = vpack.c.b16 %v5868, %v5860
    %v7645 = vpack.c.b16 %v5877, %v5869
    %v7646 = vpack.c.b16 %v5878, %v5870
    %v7647 = vpack.c.b16 %v5879, %v5871
    %v7648 = vpack.c.b16 %v5880, %v5872
    %v7649 = vpack.c.b16 %v5881, %v5873
    %v7650 = vpack.c.b16 %v5882, %v5874
    %v7651 = vpack.c.b16 %v5883, %v5875
    %v7652 = vpack.c.b16 %v5884, %v5876
    %v7653 = vpack.c.b16 %v5893, %v5885
    %v7654 = vpack.c.b16 %v5894, %v5886
    %v7655 = vpack.c.b16 %v5895, %v5887
    %v7656 = vpack.c.b16 %v5896, %v5888
    %v7657 = vpack.c.b16 %v5897, %v5889
    %v7658 = vpack.c.b16 %v5898, %v5890
    %v7659 = vpack.c.b16 %v5899, %v5891
    %v7660 = vpack.c.b16 %v5900, %v5892
    %v7661 = vpack.c.b16 %v5909, %v5901
    %v7662 = vpack.c.b16 %v5910, %v5902
    %v7663 = vpack.c.b16 %v5911, %v5903
    %v7664 = vpack.c.b16 %v5912, %v5904
    %v7665 = vpack.c.b16 %v5913, %v5905
    %v7666 = vpack.c.b16 %v5914, %v5906
    %v7667 = vpack.c.b16 %v5915, %v5907
    %v7668 = vpack.c.b16 %v5916, %v5908
    %v7669 = vpack.c.b16 %v5925, %v5917
    %v7670 = vpack.c.b16 %v5926, %v5918
    %v7671 = vpack.c.b16 %v5927, %v5919
    %v7672 = vpack.c.b16 %v5928, %v5920
    %v7673 = vpack.c.b16 %v5929, %v5921
    %v7674 = vpack.c.b16 %v5930, %v5922
    %v7675 = vpack.c.b16 %v5931, %v5923
    %v7676 = vpack.c.b16 %v5932, %v5924
    %v7677 = vpack.c.b16 %v5941, %v5933
    %v7678 = vpack.c.b16 %v5942, %v5934
    %v7679 = vpack.c.b16 %v5943, %v5935
    %v7680 = vpack.c.b16 %v5944, %v5936
    %v7681 = vpack.c.b16 %v5945, %v5937
    %v7682 = vpack.c.b16 %v5946, %v5938
    %v7683 = vpack.c.b16 %v5947, %v5939
    %v7684 = vpack.c.b16 %v5948, %v5940
    %v7685 = vpack.c.b16 %v5957, %v5949
    %v7686 = vpack.c.b16 %v5958, %v5950
    %v7687 = vpack.c.b16 %v5959, %v5951
    %v7688 = vpack.c.b16 %v5960, %v5952
    %v7689 = vpack.c.b16 %v5961, %v5953
    %v7690 = vpack.c.b16 %v5962, %v5954
    %v7691 = vpack.c.b16 %v5963, %v5955
    %v7692 = vpack.c.b16 %v5964, %v5956
    %v7693 = vpack.c.b16 %v5973, %v5965
    %v7694 = vpack.c.b16 %v5974, %v5966
    %v7695 = vpack.c.b16 %v5975, %v5967
    %v7696 = vpack.c.b16 %v5976, %v5968
    %v7697 = vpack.c.b16 %v5977, %v5969
    %v7698 = vpack.c.b16 %v5978, %v5970
    %v7699 = vpack.c.b16 %v5979, %v5971
    %v7700 = vpack.c.b16 %v5980, %v5972
    %v7701 = vpack.c.b16 %v5989, %v5981
    %v7702 = vpack.c.b16 %v5990, %v5982
    %v7703 = vpack.c.b16 %v5991, %v5983
    %v7704 = vpack.c.b16 %v5992, %v5984
    %v7705 = vpack.c.b16 %v5993, %v5985
    %v7706 = vpack.c.b16 %v5994, %v5986
    %v7707 = vpack.c.b16 %v5995, %v5987
    %v7708 = vpack.c.b16 %v5996, %v5988
    %v7709 = vpack.c.b16 %v6005, %v5997
    %v7710 = vpack.c.b16 %v6006, %v5998
    %v7711 = vpack.c.b16 %v6007, %v5999
    %v7712 = vpack.c.b16 %v6008, %v6000
    %v7713 = vpack.c.b16 %v6009, %v6001
    %v7714 = vpack.c.b16 %v6010, %v6002
    %v7715 = vpack.c.b16 %v6011, %v6003
    %v7716 = vpack.c.b16 %v6012, %v6004
    %v7717 = vpack.c.b16 %v6021, %v6013
    %v7718 = vpack.c.b16 %v6022, %v6014
    %v7719 = vpack.c.b16 %v6023, %v6015
    %v7720 = vpack.c.b16 %v6024, %v6016
    %v7721 = vpack.c.b16 %v6025, %v6017
    %v7722 = vpack.c.b16 %v6026, %v6018
    %v7723 = vpack.c.b16 %v6027, %v6019
    %v7724 = vpack.c.b16 %v6028, %v6020
    %v7725 = vpack.c.b16 %v6037, %v6029
    %v7726 = vpack.c.b16 %v6038, %v6030
    %v7727 = vpack.c.b16 %v6039, %v6031
    %v7728 = vpack.c.b16 %v6040, %v6032
    %v7729 = vpack.c.b16 %v6041, %v6033
    %v7730 = vpack.c.b16 %v6042, %v6034
    %v7731 = vpack.c.b16 %v6043, %v6035
    %v7732 = vpack.c.b16 %v6044, %v6036
    %v7733 = vpack.c.b16 %v6053, %v6045
    %v7734 = vpack.c.b16 %v6054, %v6046
    %v7735 = vpack.c.b16 %v6055, %v6047
    %v7736 = vpack.c.b16 %v6056, %v6048
    %v7737 = vpack.c.b16 %v6057, %v6049
    %v7738 = vpack.c.b16 %v6058, %v6050
    %v7739 = vpack.c.b16 %v6059, %v6051
    %v7740 = vpack.c.b16 %v6060, %v6052
    %v7741 = vpack.c.b16 %v6069, %v6061
    %v7742 = vpack.c.b16 %v6070, %v6062
    %v7743 = vpack.c.b16 %v6071, %v6063
    %v7744 = vpack.c.b16 %v6072, %v6064
    %v7745 = vpack.c.b16 %v6073, %v6065
    %v7746 = vpack.c.b16 %v6074, %v6066
    %v7747 = vpack.c.b16 %v6075, %v6067
    %v7748 = vpack.c.b16 %v6076, %v6068
    %v7749 = vpack.c.b16 %v6085, %v6077
    %v7750 = vpack.c.b16 %v6086, %v6078
    %v7751 = vpack.c.b16 %v6087, %v6079
    %v7752 = vpack.c.b16 %v6088, %v6080
    %v7753 = vpack.c.b16 %v6089, %v6081
    %v7754 = vpack.c.b16 %v6090, %v6082
    %v7755 = vpack.c.b16 %v6091, %v6083
    %v7756 = vpack.c.b16 %v6092, %v6084
    %v7757 = vpack.c.b16 %v6101, %v6093
    %v7758 = vpack.c.b16 %v6102, %v6094
    %v7759 = vpack.c.b16 %v6103, %v6095
    %v7760 = vpack.c.b16 %v6104, %v6096
    %v7761 = vpack.c.b16 %v6105, %v6097
    %v7762 = vpack.c.b16 %v6106, %v6098
    %v7763 = vpack.c.b16 %v6107, %v6099
    %v7764 = vpack.c.b16 %v6108, %v6100
    %v7765 = vpack.c.b16 %v6117, %v6109
    %v7766 = vpack.c.b16 %v6118, %v6110
    %v7767 = vpack.c.b16 %v6119, %v6111
    %v7768 = vpack.c.b16 %v6120, %v6112
    %v7769 = vpack.c.b16 %v6121, %v6113
    %v7770 = vpack.c.b16 %v6122, %v6114
    %v7771 = vpack.c.b16 %v6123, %v6115
    %v7772 = vpack.c.b16 %v6124, %v6116
    %v7773 = vpack.c.b16 %v6133, %v6125
    %v7774 = vpack.c.b16 %v6134, %v6126
    %v7775 = vpack.c.b16 %v6135, %v6127
    %v7776 = vpack.c.b16 %v6136, %v6128
    %v7777 = vpack.c.b16 %v6137, %v6129
    %v7778 = vpack.c.b16 %v6138, %v6130
    %v7779 = vpack.c.b16 %v6139, %v6131
    %v7780 = vpack.c.b16 %v6140, %v6132
    %v7781 = vpack.c.b16 %v6149, %v6141
    %v7782 = vpack.c.b16 %v6150, %v6142
    %v7783 = vpack.c.b16 %v6151, %v6143
    %v7784 = vpack.c.b16 %v6152, %v6144
    %v7785 = vpack.c.b16 %v6153, %v6145
    %v7786 = vpack.c.b16 %v6154, %v6146
    %v7787 = vpack.c.b16 %v6155, %v6147
    %v7788 = vpack.c.b16 %v6156, %v6148
    %v7789 = vpack.c.b16 %v6165, %v6157
    %v7790 = vpack.c.b16 %v6166, %v6158
    %v7791 = vpack.c.b16 %v6167, %v6159
    %v7792 = vpack.c.b16 %v6168, %v6160
    %v7793 = vpack.c.b16 %v6169, %v6161
    %v7794 = vpack.c.b16 %v6170, %v6162
    %v7795 = vpack.c.b16 %v6171, %v6163
    %v7796 = vpack.c.b16 %v6172, %v6164
    %v7797 = vpack.c.b16 %v6181, %v6173
    %v7798 = vpack.c.b16 %v6182, %v6174
    %v7799 = vpack.c.b16 %v6183, %v6175
    %v7800 = vpack.c.b16 %v6184, %v6176
    %v7801 = vpack.c.b16 %v6185, %v6177
    %v7802 = vpack.c.b16 %v6186, %v6178
    %v7803 = vpack.c.b16 %v6187, %v6179
    %v7804 = vpack.c.b16 %v6188, %v6180
    %v7805 = vpack.c.b16 %v6197, %v6189
    %v7806 = vpack.c.b16 %v6198, %v6190
    %v7807 = vpack.c.b16 %v6199, %v6191
    %v7808 = vpack.c.b16 %v6200, %v6192
    %v7809 = vpack.c.b16 %v6201, %v6193
    %v7810 = vpack.c.b16 %v6202, %v6194
    %v7811 = vpack.c.b16 %v6203, %v6195
    %v7812 = vpack.c.b16 %v6204, %v6196
    %v7813 = vpack.c.b16 %v6213, %v6205
    %v7814 = vpack.c.b16 %v6214, %v6206
    %v7815 = vpack.c.b16 %v6215, %v6207
    %v7816 = vpack.c.b16 %v6216, %v6208
    %v7817 = vpack.c.b16 %v6217, %v6209
    %v7818 = vpack.c.b16 %v6218, %v6210
    %v7819 = vpack.c.b16 %v6219, %v6211
    %v7820 = vpack.c.b16 %v6220, %v6212
    %v7821 = vpack.c.b16 %v6229, %v6221
    %v7822 = vpack.c.b16 %v6230, %v6222
    %v7823 = vpack.c.b16 %v6231, %v6223
    %v7824 = vpack.c.b16 %v6232, %v6224
    %v7825 = vpack.c.b16 %v6233, %v6225
    %v7826 = vpack.c.b16 %v6234, %v6226
    %v7827 = vpack.c.b16 %v6235, %v6227
    %v7828 = vpack.c.b16 %v6236, %v6228
    %v7829 = vpack.c.b16 %v6245, %v6237
    %v7830 = vpack.c.b16 %v6246, %v6238
    %v7831 = vpack.c.b16 %v6247, %v6239
    %v7832 = vpack.c.b16 %v6248, %v6240
    %v7833 = vpack.c.b16 %v6249, %v6241
    %v7834 = vpack.c.b16 %v6250, %v6242
    %v7835 = vpack.c.b16 %v6251, %v6243
    %v7836 = vpack.c.b16 %v6252, %v6244
    %v7837 = vpack.c.b16 %v6261, %v6253
    %v7838 = vpack.c.b16 %v6262, %v6254
    %v7839 = vpack.c.b16 %v6263, %v6255
    %v7840 = vpack.c.b16 %v6264, %v6256
    %v7841 = vpack.c.b16 %v6265, %v6257
    %v7842 = vpack.c.b16 %v6266, %v6258
    %v7843 = vpack.c.b16 %v6267, %v6259
    %v7844 = vpack.c.b16 %v6268, %v6260
    %v7845 = vpack.c.b16 %v6277, %v6269
    %v7846 = vpack.c.b16 %v6278, %v6270
    %v7847 = vpack.c.b16 %v6279, %v6271
    %v7848 = vpack.c.b16 %v6280, %v6272
    %v7849 = vpack.c.b16 %v6281, %v6273
    %v7850 = vpack.c.b16 %v6282, %v6274
    %v7851 = vpack.c.b16 %v6283, %v6275
    %v7852 = vpack.c.b16 %v6284, %v6276
    %v7853 = vpack.c.b16 %v6293, %v6285
    %v7854 = vpack.c.b16 %v6294, %v6286
    %v7855 = vpack.c.b16 %v6295, %v6287
    %v7856 = vpack.c.b16 %v6296, %v6288
    %v7857 = vpack.c.b16 %v6297, %v6289
    %v7858 = vpack.c.b16 %v6298, %v6290
    %v7859 = vpack.c.b16 %v6299, %v6291
    %v7860 = vpack.c.b16 %v6300, %v6292
    %v7861 = vpack.c.b16 %v6309, %v6301
    %v7862 = vpack.c.b16 %v6310, %v6302
    %v7863 = vpack.c.b16 %v6311, %v6303
    %v7864 = vpack.c.b16 %v6312, %v6304
    %v7865 = vpack.c.b16 %v6313, %v6305
    %v7866 = vpack.c.b16 %v6314, %v6306
    %v7867 = vpack.c.b16 %v6315, %v6307
    %v7868 = vpack.c.b16 %v6316, %v6308
    %v7869 = vpack.c.b16 %v6325, %v6317
    %v7870 = vpack.c.b16 %v6326, %v6318
    %v7871 = vpack.c.b16 %v6327, %v6319
    %v7872 = vpack.c.b16 %v6328, %v6320
    %v7873 = vpack.c.b16 %v6329, %v6321
    %v7874 = vpack.c.b16 %v6330, %v6322
    %v7875 = vpack.c.b16 %v6331, %v6323
    %v7876 = vpack.c.b16 %v6332, %v6324
    %v7877 = vpack.c.b16 %v6341, %v6333
    %v7878 = vpack.c.b16 %v6342, %v6334
    %v7879 = vpack.c.b16 %v6343, %v6335
    %v7880 = vpack.c.b16 %v6344, %v6336
    %v7881 = vpack.c.b16 %v6345, %v6337
    %v7882 = vpack.c.b16 %v6346, %v6338
    %v7883 = vpack.c.b16 %v6347, %v6339
    %v7884 = vpack.c.b16 %v6348, %v6340
    %9421 = vmatprep.subr.bf16.mxu0 %v6350
    %9422 = vmatpush1.bf16.msra.mxu0 %v6349
    %9423 = vmatprep.subr.bf16.mxu0 %v6358
    %9424 = vmatpush1.bf16.msra.mxu0 %v6357
    %9425 = vmatprep.subr.bf16.mxu0 %v6366
    %9426 = vmatpush1.bf16.msra.mxu0 %v6365
    %9427 = vmatprep.subr.bf16.mxu0 %v6374
    %9428 = vmatpush1.bf16.msra.mxu0 %v6373
    %9429 = vmatprep.subr.bf16.mxu0 %v6382
    %9430 = vmatpush1.bf16.msra.mxu0 %v6381
    %9431 = vmatprep.subr.bf16.mxu0 %v6390
    %9432 = vmatpush1.bf16.msra.mxu0 %v6389
    %9433 = vmatprep.subr.bf16.mxu0 %v6398
    %9434 = vmatpush1.bf16.msra.mxu0 %v6397
    %9435 = vmatprep.subr.bf16.mxu0 %v6406
    %9436 = vmatpush1.bf16.msra.mxu0 %v6405
    %9437 = vmatprep.subr.bf16.mxu0 %v6414
    %9438 = vmatpush1.bf16.msra.mxu0 %v6413
    %9439 = vmatprep.subr.bf16.mxu0 %v6422
    %9440 = vmatpush1.bf16.msra.mxu0 %v6421
    %9441 = vmatprep.subr.bf16.mxu0 %v6430
    %9442 = vmatpush1.bf16.msra.mxu0 %v6429
    %9443 = vmatprep.subr.bf16.mxu0 %v6438
    %9444 = vmatpush1.bf16.msra.mxu0 %v6437
    %9445 = vmatprep.subr.bf16.mxu0 %v6446
    %9446 = vmatpush1.bf16.msra.mxu0 %v6445
    %9447 = vmatprep.subr.bf16.mxu0 %v6454
    %9448 = vmatpush1.bf16.msra.mxu0 %v6453
    %9449 = vmatprep.subr.bf16.mxu0 %v6462
    %9450 = vmatpush1.bf16.msra.mxu0 %v6461
    %9451 = vmatprep.subr.bf16.mxu0 %v6470
    %9452 = vmatpush1.bf16.msra.mxu0 %v6469
    %9453 = vmatprep.mubr.bf16.mxu0 %v140
    %9454 = vmatmul.mubr.bf16.gmra.mrb[0].mxu0 %v139
    %v9455 = vpop.f32.mrb[0].mxu0
    %v9456 = vadd.f32 %v1704, %v9455
    %v9457 = vpop.f32.mrb[0].mxu0
    %v9458 = vadd.f32 %v1708, %v9457
    %v9459 = vpop.f32.mrb[0].mxu0
    %v9460 = vpop.f32.mrb[0].mxu0
    %9461 = vdwg.mxu0
    %9462 = vmatprep.subr.bf16.mxu0 %v6478
    %9463 = vmatpush1.bf16.msra.mxu0 %v6477
    %9464 = vmatprep.subr.bf16.mxu0 %v6486
    %9465 = vmatpush1.bf16.msra.mxu0 %v6485
    %9466 = vmatprep.subr.bf16.mxu0 %v6494
    %9467 = vmatpush1.bf16.msra.mxu0 %v6493
    %9468 = vmatprep.subr.bf16.mxu0 %v6502
    %9469 = vmatpush1.bf16.msra.mxu0 %v6501
    %9470 = vmatprep.subr.bf16.mxu0 %v6510
    %9471 = vmatpush1.bf16.msra.mxu0 %v6509
    %9472 = vmatprep.subr.bf16.mxu0 %v6518
    %9473 = vmatpush1.bf16.msra.mxu0 %v6517
    %9474 = vmatprep.subr.bf16.mxu0 %v6526
    %9475 = vmatpush1.bf16.msra.mxu0 %v6525
    %9476 = vmatprep.subr.bf16.mxu0 %v6534
    %9477 = vmatpush1.bf16.msra.mxu0 %v6533
    %9478 = vmatprep.subr.bf16.mxu0 %v6542
    %9479 = vmatpush1.bf16.msra.mxu0 %v6541
    %9480 = vmatprep.subr.bf16.mxu0 %v6550
    %9481 = vmatpush1.bf16.msra.mxu0 %v6549
    %9482 = vmatprep.subr.bf16.mxu0 %v6558
    %9483 = vmatpush1.bf16.msra.mxu0 %v6557
    %9484 = vmatprep.subr.bf16.mxu0 %v6566
    %9485 = vmatpush1.bf16.msra.mxu0 %v6565
    %9486 = vmatprep.subr.bf16.mxu0 %v6574
    %9487 = vmatpush1.bf16.msra.mxu0 %v6573
    %9488 = vmatprep.subr.bf16.mxu0 %v6582
    %9489 = vmatpush1.bf16.msra.mxu0 %v6581
    %9490 = vmatprep.subr.bf16.mxu0 %v6590
    %9491 = vmatpush1.bf16.msra.mxu0 %v6589
    %9492 = vmatprep.subr.bf16.mxu0 %v6598
    %9493 = vmatpush1.bf16.msra.mxu0 %v6597
    %9494 = vmatprep.mubr.bf16.mxu0 %v142
    %9495 = vmatmul.mubr.bf16.gmra.mrb[0].mxu0 %v141
    %v9496 = vpop.f32.mrb[0].mxu0
    %v9497 = vadd.f32 %v9456, %v9496
    %v9498 = vpop.f32.mrb[0].mxu0
    %v9499 = vadd.f32 %v9458, %v9498
    %v9500 = vpop.f32.mrb[0].mxu0
    %v9501 = vpop.f32.mrb[0].mxu0
    %9502 = vdwg.mxu0
    %9503 = vmatprep.subr.bf16.mxu0 %v6606
    %9504 = vmatpush1.bf16.msra.mxu0 %v6605
    %9505 = vmatprep.subr.bf16.mxu0 %v6614
    %9506 = vmatpush1.bf16.msra.mxu0 %v6613
    %9507 = vmatprep.subr.bf16.mxu0 %v6622
    %9508 = vmatpush1.bf16.msra.mxu0 %v6621
    %9509 = vmatprep.subr.bf16.mxu0 %v6630
    %9510 = vmatpush1.bf16.msra.mxu0 %v6629
    %9511 = vmatprep.subr.bf16.mxu0 %v6638
    %9512 = vmatpush1.bf16.msra.mxu0 %v6637
    %9513 = vmatprep.subr.bf16.mxu0 %v6646
    %9514 = vmatpush1.bf16.msra.mxu0 %v6645
    %9515 = vmatprep.subr.bf16.mxu0 %v6654
    %9516 = vmatpush1.bf16.msra.mxu0 %v6653
    %9517 = vmatprep.subr.bf16.mxu0 %v6662
    %9518 = vmatpush1.bf16.msra.mxu0 %v6661
    %9519 = vmatprep.subr.bf16.mxu0 %v6670
    %9520 = vmatpush1.bf16.msra.mxu0 %v6669
    %9521 = vmatprep.subr.bf16.mxu0 %v6678
    %9522 = vmatpush1.bf16.msra.mxu0 %v6677
    %9523 = vmatprep.subr.bf16.mxu0 %v6686
    %9524 = vmatpush1.bf16.msra.mxu0 %v6685
    %9525 = vmatprep.subr.bf16.mxu0 %v6694
    %9526 = vmatpush1.bf16.msra.mxu0 %v6693
    %9527 = vmatprep.subr.bf16.mxu0 %v6702
    %9528 = vmatpush1.bf16.msra.mxu0 %v6701
    %9529 = vmatprep.subr.bf16.mxu0 %v6710
    %9530 = vmatpush1.bf16.msra.mxu0 %v6709
    %9531 = vmatprep.subr.bf16.mxu0 %v6718
    %9532 = vmatpush1.bf16.msra.mxu0 %v6717
    %9533 = vmatprep.subr.bf16.mxu0 %v6726
    %9534 = vmatpush1.bf16.msra.mxu0 %v6725
    %9535 = vmatprep.mubr.bf16.mxu0 %v144
    %9536 = vmatmul.mubr.bf16.gmra.mrb[0].mxu0 %v143
    %v9537 = vpop.f32.mrb[0].mxu0
    %v9538 = vadd.f32 %v9497, %v9537
    %v9539 = vpop.f32.mrb[0].mxu0
    %v9540 = vadd.f32 %v9499, %v9539
    %v9541 = vpop.f32.mrb[0].mxu0
    %v9542 = vpop.f32.mrb[0].mxu0
    %9543 = vdwg.mxu0
    %9544 = vmatprep.subr.bf16.mxu0 %v6734
    %9545 = vmatpush1.bf16.msra.mxu0 %v6733
    %9546 = vmatprep.subr.bf16.mxu0 %v6742
    %9547 = vmatpush1.bf16.msra.mxu0 %v6741
    %9548 = vmatprep.subr.bf16.mxu0 %v6750
    %9549 = vmatpush1.bf16.msra.mxu0 %v6749
    %9550 = vmatprep.subr.bf16.mxu0 %v6758
    %9551 = vmatpush1.bf16.msra.mxu0 %v6757
    %9552 = vmatprep.subr.bf16.mxu0 %v6766
    %9553 = vmatpush1.bf16.msra.mxu0 %v6765
    %9554 = vmatprep.subr.bf16.mxu0 %v6774
    %9555 = vmatpush1.bf16.msra.mxu0 %v6773
    %9556 = vmatprep.subr.bf16.mxu0 %v6782
    %9557 = vmatpush1.bf16.msra.mxu0 %v6781
    %9558 = vmatprep.subr.bf16.mxu0 %v6790
    %9559 = vmatpush1.bf16.msra.mxu0 %v6789
    %9560 = vmatprep.subr.bf16.mxu0 %v6798
    %9561 = vmatpush1.bf16.msra.mxu0 %v6797
    %9562 = vmatprep.subr.bf16.mxu0 %v6806
    %9563 = vmatpush1.bf16.msra.mxu0 %v6805
    %9564 = vmatprep.subr.bf16.mxu0 %v6814
    %9565 = vmatpush1.bf16.msra.mxu0 %v6813
    %9566 = vmatprep.subr.bf16.mxu0 %v6822
    %9567 = vmatpush1.bf16.msra.mxu0 %v6821
    %9568 = vmatprep.subr.bf16.mxu0 %v6830
    %9569 = vmatpush1.bf16.msra.mxu0 %v6829
    %9570 = vmatprep.subr.bf16.mxu0 %v6838
    %9571 = vmatpush1.bf16.msra.mxu0 %v6837
    %9572 = vmatprep.subr.bf16.mxu0 %v6846
    %9573 = vmatpush1.bf16.msra.mxu0 %v6845
    %9574 = vmatprep.subr.bf16.mxu0 %v6854
    %9575 = vmatpush1.bf16.msra.mxu0 %v6853
    %9576 = vmatprep.mubr.bf16.mxu0 %v146
    %9577 = vmatmul.mubr.bf16.gmra.mrb[0].mxu0 %v145
    %v9578 = vpop.f32.mrb[0].mxu0
    %v9579 = vadd.f32 %v9538, %v9578
    %v9580 = vpop.f32.mrb[0].mxu0
    %v9581 = vadd.f32 %v9540, %v9580
    %v9582 = vpop.f32.mrb[0].mxu0
    %v9583 = vpop.f32.mrb[0].mxu0
    %9584 = vdwg.mxu0
    %9585 = vmatprep.subr.bf16.mxu0 %v6862
    %9586 = vmatpush1.bf16.msra.mxu0 %v6861
    %9587 = vmatprep.subr.bf16.mxu0 %v6870
    %9588 = vmatpush1.bf16.msra.mxu0 %v6869
    %9589 = vmatprep.subr.bf16.mxu0 %v6878
    %9590 = vmatpush1.bf16.msra.mxu0 %v6877
    %9591 = vmatprep.subr.bf16.mxu0 %v6886
    %9592 = vmatpush1.bf16.msra.mxu0 %v6885
    %9593 = vmatprep.subr.bf16.mxu0 %v6894
    %9594 = vmatpush1.bf16.msra.mxu0 %v6893
    %9595 = vmatprep.subr.bf16.mxu0 %v6902
    %9596 = vmatpush1.bf16.msra.mxu0 %v6901
    %9597 = vmatprep.subr.bf16.mxu0 %v6910
    %9598 = vmatpush1.bf16.msra.mxu0 %v6909
    %9599 = vmatprep.subr.bf16.mxu0 %v6918
    %9600 = vmatpush1.bf16.msra.mxu0 %v6917
    %9601 = vmatprep.subr.bf16.mxu0 %v6926
    %9602 = vmatpush1.bf16.msra.mxu0 %v6925
    %9603 = vmatprep.subr.bf16.mxu0 %v6934
    %9604 = vmatpush1.bf16.msra.mxu0 %v6933
    %9605 = vmatprep.subr.bf16.mxu0 %v6942
    %9606 = vmatpush1.bf16.msra.mxu0 %v6941
    %9607 = vmatprep.subr.bf16.mxu0 %v6950
    %9608 = vmatpush1.bf16.msra.mxu0 %v6949
    %9609 = vmatprep.subr.bf16.mxu0 %v6958
    %9610 = vmatpush1.bf16.msra.mxu0 %v6957
    %9611 = vmatprep.subr.bf16.mxu0 %v6966
    %9612 = vmatpush1.bf16.msra.mxu0 %v6965
    %9613 = vmatprep.subr.bf16.mxu0 %v6974
    %9614 = vmatpush1.bf16.msra.mxu0 %v6973
    %9615 = vmatprep.subr.bf16.mxu0 %v6982
    %9616 = vmatpush1.bf16.msra.mxu0 %v6981
    %9617 = vmatprep.mubr.bf16.mxu0 %v148
    %9618 = vmatmul.mubr.bf16.gmra.mrb[0].mxu0 %v147
    %v9619 = vpop.f32.mrb[0].mxu0
    %v9620 = vadd.f32 %v9579, %v9619
    %v9621 = vpop.f32.mrb[0].mxu0
    %v9622 = vadd.f32 %v9581, %v9621
    %v9623 = vpop.f32.mrb[0].mxu0
    %v9624 = vpop.f32.mrb[0].mxu0
    %9625 = vdwg.mxu0
    %9626 = vmatprep.subr.bf16.mxu0 %v6990
    %9627 = vmatpush1.bf16.msra.mxu0 %v6989
    %9628 = vmatprep.subr.bf16.mxu0 %v6998
    %9629 = vmatpush1.bf16.msra.mxu0 %v6997
    %9630 = vmatprep.subr.bf16.mxu0 %v7006
    %9631 = vmatpush1.bf16.msra.mxu0 %v7005
    %9632 = vmatprep.subr.bf16.mxu0 %v7014
    %9633 = vmatpush1.bf16.msra.mxu0 %v7013
    %9634 = vmatprep.subr.bf16.mxu0 %v7022
    %9635 = vmatpush1.bf16.msra.mxu0 %v7021
    %9636 = vmatprep.subr.bf16.mxu0 %v7030
    %9637 = vmatpush1.bf16.msra.mxu0 %v7029
    %9638 = vmatprep.subr.bf16.mxu0 %v7038
    %9639 = vmatpush1.bf16.msra.mxu0 %v7037
    %9640 = vmatprep.subr.bf16.mxu0 %v7046
    %9641 = vmatpush1.bf16.msra.mxu0 %v7045
    %9642 = vmatprep.subr.bf16.mxu0 %v7054
    %9643 = vmatpush1.bf16.msra.mxu0 %v7053
    %9644 = vmatprep.subr.bf16.mxu0 %v7062
    %9645 = vmatpush1.bf16.msra.mxu0 %v7061
    %9646 = vmatprep.subr.bf16.mxu0 %v7070
    %9647 = vmatpush1.bf16.msra.mxu0 %v7069
    %9648 = vmatprep.subr.bf16.mxu0 %v7078
    %9649 = vmatpush1.bf16.msra.mxu0 %v7077
    %9650 = vmatprep.subr.bf16.mxu0 %v7086
    %9651 = vmatpush1.bf16.msra.mxu0 %v7085
    %9652 = vmatprep.subr.bf16.mxu0 %v7094
    %9653 = vmatpush1.bf16.msra.mxu0 %v7093
    %9654 = vmatprep.subr.bf16.mxu0 %v7102
    %9655 = vmatpush1.bf16.msra.mxu0 %v7101
    %9656 = vmatprep.subr.bf16.mxu0 %v7110
    %9657 = vmatpush1.bf16.msra.mxu0 %v7109
    %9658 = vmatprep.mubr.bf16.mxu0 %v150
    %9659 = vmatmul.mubr.bf16.gmra.mrb[0].mxu0 %v149
    %v9660 = vpop.f32.mrb[0].mxu0
    %v9661 = vadd.f32 %v9620, %v9660
    %v9662 = vpop.f32.mrb[0].mxu0
    %v9663 = vadd.f32 %v9622, %v9662
    %v9664 = vpop.f32.mrb[0].mxu0
    %v9665 = vpop.f32.mrb[0].mxu0
    %9666 = vdwg.mxu0
    %9667 = vmatprep.subr.bf16.mxu0 %v7118
    %9668 = vmatpush1.bf16.msra.mxu0 %v7117
    %9669 = vmatprep.subr.bf16.mxu0 %v7126
    %9670 = vmatpush1.bf16.msra.mxu0 %v7125
    %9671 = vmatprep.subr.bf16.mxu0 %v7134
    %9672 = vmatpush1.bf16.msra.mxu0 %v7133
    %9673 = vmatprep.subr.bf16.mxu0 %v7142
    %9674 = vmatpush1.bf16.msra.mxu0 %v7141
    %9675 = vmatprep.subr.bf16.mxu0 %v7150
    %9676 = vmatpush1.bf16.msra.mxu0 %v7149
    %9677 = vmatprep.subr.bf16.mxu0 %v7158
    %9678 = vmatpush1.bf16.msra.mxu0 %v7157
    %9679 = vmatprep.subr.bf16.mxu0 %v7166
    %9680 = vmatpush1.bf16.msra.mxu0 %v7165
    %9681 = vmatprep.subr.bf16.mxu0 %v7174
    %9682 = vmatpush1.bf16.msra.mxu0 %v7173
    %9683 = vmatprep.subr.bf16.mxu0 %v7182
    %9684 = vmatpush1.bf16.msra.mxu0 %v7181
    %9685 = vmatprep.subr.bf16.mxu0 %v7190
    %9686 = vmatpush1.bf16.msra.mxu0 %v7189
    %9687 = vmatprep.subr.bf16.mxu0 %v7198
    %9688 = vmatpush1.bf16.msra.mxu0 %v7197
    %9689 = vmatprep.subr.bf16.mxu0 %v7206
    %9690 = vmatpush1.bf16.msra.mxu0 %v7205
    %9691 = vmatprep.subr.bf16.mxu0 %v7214
    %9692 = vmatpush1.bf16.msra.mxu0 %v7213
    %9693 = vmatprep.subr.bf16.mxu0 %v7222
    %9694 = vmatpush1.bf16.msra.mxu0 %v7221
    %9695 = vmatprep.subr.bf16.mxu0 %v7230
    %9696 = vmatpush1.bf16.msra.mxu0 %v7229
    %9697 = vmatprep.subr.bf16.mxu0 %v7238
    %9698 = vmatpush1.bf16.msra.mxu0 %v7237
    %9699 = vmatprep.mubr.bf16.mxu0 %v152
    %9700 = vmatmul.mubr.bf16.gmra.mrb[0].mxu0 %v151
    %v9701 = vpop.f32.mrb[0].mxu0
    %v9702 = vadd.f32 %v9661, %v9701
    %v9703 = vpop.f32.mrb[0].mxu0
    %v9704 = vadd.f32 %v9663, %v9703
    %v9705 = vpop.f32.mrb[0].mxu0
    %v9706 = vpop.f32.mrb[0].mxu0
    %9707 = vdwg.mxu0
    %9708 = vmatprep.subr.bf16.mxu0 %v7246
    %9709 = vmatpush1.bf16.msra.mxu0 %v7245
    %9710 = vmatprep.subr.bf16.mxu0 %v7254
    %9711 = vmatpush1.bf16.msra.mxu0 %v7253
    %9712 = vmatprep.subr.bf16.mxu0 %v7262
    %9713 = vmatpush1.bf16.msra.mxu0 %v7261
    %9714 = vmatprep.subr.bf16.mxu0 %v7270
    %9715 = vmatpush1.bf16.msra.mxu0 %v7269
    %9716 = vmatprep.subr.bf16.mxu0 %v7278
    %9717 = vmatpush1.bf16.msra.mxu0 %v7277
    %9718 = vmatprep.subr.bf16.mxu0 %v7286
    %9719 = vmatpush1.bf16.msra.mxu0 %v7285
    %9720 = vmatprep.subr.bf16.mxu0 %v7294
    %9721 = vmatpush1.bf16.msra.mxu0 %v7293
    %9722 = vmatprep.subr.bf16.mxu0 %v7302
    %9723 = vmatpush1.bf16.msra.mxu0 %v7301
    %9724 = vmatprep.subr.bf16.mxu0 %v7310
    %9725 = vmatpush1.bf16.msra.mxu0 %v7309
    %9726 = vmatprep.subr.bf16.mxu0 %v7318
    %9727 = vmatpush1.bf16.msra.mxu0 %v7317
    %9728 = vmatprep.subr.bf16.mxu0 %v7326
    %9729 = vmatpush1.bf16.msra.mxu0 %v7325
    %9730 = vmatprep.subr.bf16.mxu0 %v7334
    %9731 = vmatpush1.bf16.msra.mxu0 %v7333
    %9732 = vmatprep.subr.bf16.mxu0 %v7342
    %9733 = vmatpush1.bf16.msra.mxu0 %v7341
    %9734 = vmatprep.subr.bf16.mxu0 %v7350
    %9735 = vmatpush1.bf16.msra.mxu0 %v7349
    %9736 = vmatprep.subr.bf16.mxu0 %v7358
    %9737 = vmatpush1.bf16.msra.mxu0 %v7357
    %9738 = vmatprep.subr.bf16.mxu0 %v7366
    %9739 = vmatpush1.bf16.msra.mxu0 %v7365
    %9740 = vmatprep.mubr.bf16.mxu0 %v154
    %9741 = vmatmul.mubr.bf16.gmra.mrb[0].mxu0 %v153
    %v9742 = vpop.f32.mrb[0].mxu0
    %v9743 = vadd.f32 %v9702, %v9742
    %v9744 = vpop.f32.mrb[0].mxu0
    %v9745 = vadd.f32 %v9704, %v9744
    %v9746 = vpop.f32.mrb[0].mxu0
    %v9747 = vpop.f32.mrb[0].mxu0
    %9748 = vdwg.mxu0
    %9749 = vmatprep.subr.bf16.mxu0 %v7374
    %9750 = vmatpush1.bf16.msra.mxu0 %v7373
    %9751 = vmatprep.subr.bf16.mxu0 %v7382
    %9752 = vmatpush1.bf16.msra.mxu0 %v7381
    %9753 = vmatprep.subr.bf16.mxu0 %v7390
    %9754 = vmatpush1.bf16.msra.mxu0 %v7389
    %9755 = vmatprep.subr.bf16.mxu0 %v7398
    %9756 = vmatpush1.bf16.msra.mxu0 %v7397
    %9757 = vmatprep.subr.bf16.mxu0 %v7406
    %9758 = vmatpush1.bf16.msra.mxu0 %v7405
    %9759 = vmatprep.subr.bf16.mxu0 %v7414
    %9760 = vmatpush1.bf16.msra.mxu0 %v7413
    %9761 = vmatprep.subr.bf16.mxu0 %v7422
    %9762 = vmatpush1.bf16.msra.mxu0 %v7421
    %9763 = vmatprep.subr.bf16.mxu0 %v7430
    %9764 = vmatpush1.bf16.msra.mxu0 %v7429
    %9765 = vmatprep.subr.bf16.mxu0 %v7438
    %9766 = vmatpush1.bf16.msra.mxu0 %v7437
    %9767 = vmatprep.subr.bf16.mxu0 %v7446
    %9768 = vmatpush1.bf16.msra.mxu0 %v7445
    %9769 = vmatprep.subr.bf16.mxu0 %v7454
    %9770 = vmatpush1.bf16.msra.mxu0 %v7453
    %9771 = vmatprep.subr.bf16.mxu0 %v7462
    %9772 = vmatpush1.bf16.msra.mxu0 %v7461
    %9773 = vmatprep.subr.bf16.mxu0 %v7470
    %9774 = vmatpush1.bf16.msra.mxu0 %v7469
    %9775 = vmatprep.subr.bf16.mxu0 %v7478
    %9776 = vmatpush1.bf16.msra.mxu0 %v7477
    %9777 = vmatprep.subr.bf16.mxu0 %v7486
    %9778 = vmatpush1.bf16.msra.mxu0 %v7485
    %9779 = vmatprep.subr.bf16.mxu0 %v7494
    %9780 = vmatpush1.bf16.msra.mxu0 %v7493
    %9781 = vmatprep.mubr.bf16.mxu0 %v156
    %9782 = vmatmul.mubr.bf16.gmra.mrb[0].mxu0 %v155
    %v9783 = vpop.f32.mrb[0].mxu0
    %v9784 = vadd.f32 %v9743, %v9783
    %v9785 = vpop.f32.mrb[0].mxu0
    %v9786 = vadd.f32 %v9745, %v9785
    %v9787 = vpop.f32.mrb[0].mxu0
    %v9788 = vpop.f32.mrb[0].mxu0
    %9789 = vdwg.mxu0
    %9790 = vmatprep.subr.bf16.mxu0 %v7502
    %9791 = vmatpush1.bf16.msra.mxu0 %v7501
    %9792 = vmatprep.subr.bf16.mxu0 %v7510
    %9793 = vmatpush1.bf16.msra.mxu0 %v7509
    %9794 = vmatprep.subr.bf16.mxu0 %v7518
    %9795 = vmatpush1.bf16.msra.mxu0 %v7517
    %9796 = vmatprep.subr.bf16.mxu0 %v7526
    %9797 = vmatpush1.bf16.msra.mxu0 %v7525
    %9798 = vmatprep.subr.bf16.mxu0 %v7534
    %9799 = vmatpush1.bf16.msra.mxu0 %v7533
    %9800 = vmatprep.subr.bf16.mxu0 %v7542
    %9801 = vmatpush1.bf16.msra.mxu0 %v7541
    %9802 = vmatprep.subr.bf16.mxu0 %v7550
    %9803 = vmatpush1.bf16.msra.mxu0 %v7549
    %9804 = vmatprep.subr.bf16.mxu0 %v7558
    %9805 = vmatpush1.bf16.msra.mxu0 %v7557
    %9806 = vmatprep.subr.bf16.mxu0 %v7566
    %9807 = vmatpush1.bf16.msra.mxu0 %v7565
    %9808 = vmatprep.subr.bf16.mxu0 %v7574
    %9809 = vmatpush1.bf16.msra.mxu0 %v7573
    %9810 = vmatprep.subr.bf16.mxu0 %v7582
    %9811 = vmatpush1.bf16.msra.mxu0 %v7581
    %9812 = vmatprep.subr.bf16.mxu0 %v7590
    %9813 = vmatpush1.bf16.msra.mxu0 %v7589
    %9814 = vmatprep.subr.bf16.mxu0 %v7598
    %9815 = vmatpush1.bf16.msra.mxu0 %v7597
    %9816 = vmatprep.subr.bf16.mxu0 %v7606
    %9817 = vmatpush1.bf16.msra.mxu0 %v7605
    %9818 = vmatprep.subr.bf16.mxu0 %v7614
    %9819 = vmatpush1.bf16.msra.mxu0 %v7613
    %9820 = vmatprep.subr.bf16.mxu0 %v7622
    %9821 = vmatpush1.bf16.msra.mxu0 %v7621
    %9822 = vmatprep.mubr.bf16.mxu0 %v158
    %9823 = vmatmul.mubr.bf16.gmra.mrb[0].mxu0 %v157
    %v9824 = vpop.f32.mrb[0].mxu0
    %v9825 = vadd.f32 %v9784, %v9824
    %v9826 = vpop.f32.mrb[0].mxu0
    %v9827 = vadd.f32 %v9786, %v9826
    %v9828 = vpop.f32.mrb[0].mxu0
    %v9829 = vpop.f32.mrb[0].mxu0
    %9830 = vdwg.mxu0
    %9831 = vmatprep.subr.bf16.mxu0 %v7630
    %9832 = vmatpush1.bf16.msra.mxu0 %v7629
    %9833 = vmatprep.subr.bf16.mxu0 %v7638
    %9834 = vmatpush1.bf16.msra.mxu0 %v7637
    %9835 = vmatprep.subr.bf16.mxu0 %v7646
    %9836 = vmatpush1.bf16.msra.mxu0 %v7645
    %9837 = vmatprep.subr.bf16.mxu0 %v7654
    %9838 = vmatpush1.bf16.msra.mxu0 %v7653
    %9839 = vmatprep.subr.bf16.mxu0 %v7662
    %9840 = vmatpush1.bf16.msra.mxu0 %v7661
    %9841 = vmatprep.subr.bf16.mxu0 %v7670
    %9842 = vmatpush1.bf16.msra.mxu0 %v7669
    %9843 = vmatprep.subr.bf16.mxu0 %v7678
    %9844 = vmatpush1.bf16.msra.mxu0 %v7677
    %9845 = vmatprep.subr.bf16.mxu0 %v7686
    %9846 = vmatpush1.bf16.msra.mxu0 %v7685
    %9847 = vmatprep.subr.bf16.mxu0 %v7694
    %9848 = vmatpush1.bf16.msra.mxu0 %v7693
    %9849 = vmatprep.subr.bf16.mxu0 %v7702
    %9850 = vmatpush1.bf16.msra.mxu0 %v7701
    %9851 = vmatprep.subr.bf16.mxu0 %v7710
    %9852 = vmatpush1.bf16.msra.mxu0 %v7709
    %9853 = vmatprep.subr.bf16.mxu0 %v7718
    %9854 = vmatpush1.bf16.msra.mxu0 %v7717
    %9855 = vmatprep.subr.bf16.mxu0 %v7726
    %9856 = vmatpush1.bf16.msra.mxu0 %v7725
    %9857 = vmatprep.subr.bf16.mxu0 %v7734
    %9858 = vmatpush1.bf16.msra.mxu0 %v7733
    %9859 = vmatprep.subr.bf16.mxu0 %v7742
    %9860 = vmatpush1.bf16.msra.mxu0 %v7741
    %9861 = vmatprep.subr.bf16.mxu0 %v7750
    %9862 = vmatpush1.bf16.msra.mxu0 %v7749
    %9863 = vmatprep.mubr.bf16.mxu0 %v160
    %9864 = vmatmul.mubr.bf16.gmra.mrb[0].mxu0 %v159
    %v9865 = vpop.f32.mrb[0].mxu0
    %v9866 = vadd.f32 %v9825, %v9865
    %v9867 = vpop.f32.mrb[0].mxu0
    %v9868 = vadd.f32 %v9827, %v9867
    %v9869 = vpop.f32.mrb[0].mxu0
    %v9870 = vpop.f32.mrb[0].mxu0
    %9871 = vdwg.mxu0
    %9872 = vmatprep.subr.bf16.mxu0 %v7758
    %9873 = vmatpush1.bf16.msra.mxu0 %v7757
    %9874 = vmatprep.subr.bf16.mxu0 %v7766
    %9875 = vmatpush1.bf16.msra.mxu0 %v7765
    %9876 = vmatprep.subr.bf16.mxu0 %v7774
    %9877 = vmatpush1.bf16.msra.mxu0 %v7773
    %9878 = vmatprep.subr.bf16.mxu0 %v7782
    %9879 = vmatpush1.bf16.msra.mxu0 %v7781
    %9880 = vmatprep.subr.bf16.mxu0 %v7790
    %9881 = vmatpush1.bf16.msra.mxu0 %v7789
    %9882 = vmatprep.subr.bf16.mxu0 %v7798
    %9883 = vmatpush1.bf16.msra.mxu0 %v7797
    %9884 = vmatprep.subr.bf16.mxu0 %v7806
    %9885 = vmatpush1.bf16.msra.mxu0 %v7805
    %9886 = vmatprep.subr.bf16.mxu0 %v7814
    %9887 = vmatpush1.bf16.msra.mxu0 %v7813
    %9888 = vmatprep.subr.bf16.mxu0 %v7822
    %9889 = vmatpush1.bf16.msra.mxu0 %v7821
    %9890 = vmatprep.subr.bf16.mxu0 %v7830
    %9891 = vmatpush1.bf16.msra.mxu0 %v7829
    %9892 = vmatprep.subr.bf16.mxu0 %v7838
    %9893 = vmatpush1.bf16.msra.mxu0 %v7837
    %9894 = vmatprep.subr.bf16.mxu0 %v7846
    %9895 = vmatpush1.bf16.msra.mxu0 %v7845
    %9896 = vmatprep.subr.bf16.mxu0 %v7854
    %9897 = vmatpush1.bf16.msra.mxu0 %v7853
    %9898 = vmatprep.subr.bf16.mxu0 %v7862
    %9899 = vmatpush1.bf16.msra.mxu0 %v7861
    %9900 = vmatprep.subr.bf16.mxu0 %v7870
    %9901 = vmatpush1.bf16.msra.mxu0 %v7869
    %9902 = vmatprep.subr.bf16.mxu0 %v7878
    %9903 = vmatpush1.bf16.msra.mxu0 %v7877
    %9904 = vmatprep.mubr.bf16.mxu0 %v162
    %9905 = vmatmul.mubr.bf16.gmra.mrb[0].mxu0 %v161
    %v9906 = vpop.f32.mrb[0].mxu0
    %v9907 = vadd.f32 %v9866, %v9906
    %v9908 = vpop.f32.mrb[0].mxu0
    %v9909 = vadd.f32 %v9868, %v9908
    %v9910 = vpop.f32.mrb[0].mxu0
    %v9911 = vpop.f32.mrb[0].mxu0
    %9912 = vdwg.mxu0
    %9913 = vmatprep.subr.bf16.mxu0 %v6352
    %9914 = vmatpush1.bf16.msra.mxu0 %v6351
    %9915 = vmatprep.subr.bf16.mxu0 %v6360
    %9916 = vmatpush1.bf16.msra.mxu0 %v6359
    %9917 = vmatprep.subr.bf16.mxu0 %v6368
    %9918 = vmatpush1.bf16.msra.mxu0 %v6367
    %9919 = vmatprep.subr.bf16.mxu0 %v6376
    %9920 = vmatpush1.bf16.msra.mxu0 %v6375
    %9921 = vmatprep.subr.bf16.mxu0 %v6384
    %9922 = vmatpush1.bf16.msra.mxu0 %v6383
    %9923 = vmatprep.subr.bf16.mxu0 %v6392
    %9924 = vmatpush1.bf16.msra.mxu0 %v6391
    %9925 = vmatprep.subr.bf16.mxu0 %v6400
    %9926 = vmatpush1.bf16.msra.mxu0 %v6399
    %9927 = vmatprep.subr.bf16.mxu0 %v6408
    %9928 = vmatpush1.bf16.msra.mxu0 %v6407
    %9929 = vmatprep.subr.bf16.mxu0 %v6416
    %9930 = vmatpush1.bf16.msra.mxu0 %v6415
    %9931 = vmatprep.subr.bf16.mxu0 %v6424
    %9932 = vmatpush1.bf16.msra.mxu0 %v6423
    %9933 = vmatprep.subr.bf16.mxu0 %v6432
    %9934 = vmatpush1.bf16.msra.mxu0 %v6431
    %9935 = vmatprep.subr.bf16.mxu0 %v6440
    %9936 = vmatpush1.bf16.msra.mxu0 %v6439
    %9937 = vmatprep.subr.bf16.mxu0 %v6448
    %9938 = vmatpush1.bf16.msra.mxu0 %v6447
    %9939 = vmatprep.subr.bf16.mxu0 %v6456
    %9940 = vmatpush1.bf16.msra.mxu0 %v6455
    %9941 = vmatprep.subr.bf16.mxu0 %v6464
    %9942 = vmatpush1.bf16.msra.mxu0 %v6463
    %9943 = vmatprep.subr.bf16.mxu0 %v6472
    %9944 = vmatpush1.bf16.msra.mxu0 %v6471
    %9945 = vmatprep.mubr.bf16.mxu0 %v140
    %9946 = vmatmul.mubr.bf16.gmra.mrb[0].mxu0 %v139
    %v9947 = vpop.f32.mrb[0].mxu0
    %v9948 = vadd.f32 %v1712, %v9947
    %v9949 = vpop.f32.mrb[0].mxu0
    %v9950 = vadd.f32 %v1716, %v9949
    %v9951 = vpop.f32.mrb[0].mxu0
    %v9952 = vpop.f32.mrb[0].mxu0
    %9953 = vdwg.mxu0
    %9954 = vmatprep.subr.bf16.mxu0 %v6480
    %9955 = vmatpush1.bf16.msra.mxu0 %v6479
    %9956 = vmatprep.subr.bf16.mxu0 %v6488
    %9957 = vmatpush1.bf16.msra.mxu0 %v6487
    %9958 = vmatprep.subr.bf16.mxu0 %v6496
    %9959 = vmatpush1.bf16.msra.mxu0 %v6495
    %9960 = vmatprep.subr.bf16.mxu0 %v6504
    %9961 = vmatpush1.bf16.msra.mxu0 %v6503
    %9962 = vmatprep.subr.bf16.mxu0 %v6512
    %9963 = vmatpush1.bf16.msra.mxu0 %v6511
    %9964 = vmatprep.subr.bf16.mxu0 %v6520
    %9965 = vmatpush1.bf16.msra.mxu0 %v6519
    %9966 = vmatprep.subr.bf16.mxu0 %v6528
    %9967 = vmatpush1.bf16.msra.mxu0 %v6527
    %9968 = vmatprep.subr.bf16.mxu0 %v6536
    %9969 = vmatpush1.bf16.msra.mxu0 %v6535
    %9970 = vmatprep.subr.bf16.mxu0 %v6544
    %9971 = vmatpush1.bf16.msra.mxu0 %v6543
    %9972 = vmatprep.subr.bf16.mxu0 %v6552
    %9973 = vmatpush1.bf16.msra.mxu0 %v6551
    %9974 = vmatprep.subr.bf16.mxu0 %v6560
    %9975 = vmatpush1.bf16.msra.mxu0 %v6559
    %9976 = vmatprep.subr.bf16.mxu0 %v6568
    %9977 = vmatpush1.bf16.msra.mxu0 %v6567
    %9978 = vmatprep.subr.bf16.mxu0 %v6576
    %9979 = vmatpush1.bf16.msra.mxu0 %v6575
    %9980 = vmatprep.subr.bf16.mxu0 %v6584
    %9981 = vmatpush1.bf16.msra.mxu0 %v6583
    %9982 = vmatprep.subr.bf16.mxu0 %v6592
    %9983 = vmatpush1.bf16.msra.mxu0 %v6591
    %9984 = vmatprep.subr.bf16.mxu0 %v6600
    %9985 = vmatpush1.bf16.msra.mxu0 %v6599
    %9986 = vmatprep.mubr.bf16.mxu0 %v142
    %9987 = vmatmul.mubr.bf16.gmra.mrb[0].mxu0 %v141
    %v9988 = vpop.f32.mrb[0].mxu0
    %v9989 = vadd.f32 %v9948, %v9988
    %v9990 = vpop.f32.mrb[0].mxu0
    %v9991 = vadd.f32 %v9950, %v9990
    %v9992 = vpop.f32.mrb[0].mxu0
    %v9993 = vpop.f32.mrb[0].mxu0
    %9994 = vdwg.mxu0
    %9995 = vmatprep.subr.bf16.mxu0 %v6608
    %9996 = vmatpush1.bf16.msra.mxu0 %v6607
    %9997 = vmatprep.subr.bf16.mxu0 %v6616
    %9998 = vmatpush1.bf16.msra.mxu0 %v6615
    %9999 = vmatprep.subr.bf16.mxu0 %v6624
    %10000 = vmatpush1.bf16.msra.mxu0 %v6623
    %10001 = vmatprep.subr.bf16.mxu0 %v6632
    %10002 = vmatpush1.bf16.msra.mxu0 %v6631
    %10003 = vmatprep.subr.bf16.mxu0 %v6640
    %10004 = vmatpush1.bf16.msra.mxu0 %v6639
    %10005 = vmatprep.subr.bf16.mxu0 %v6648
    %10006 = vmatpush1.bf16.msra.mxu0 %v6647
    %10007 = vmatprep.subr.bf16.mxu0 %v6656
    %10008 = vmatpush1.bf16.msra.mxu0 %v6655
    %10009 = vmatprep.subr.bf16.mxu0 %v6664
    %10010 = vmatpush1.bf16.msra.mxu0 %v6663
    %10011 = vmatprep.subr.bf16.mxu0 %v6672
    %10012 = vmatpush1.bf16.msra.mxu0 %v6671
    %10013 = vmatprep.subr.bf16.mxu0 %v6680
    %10014 = vmatpush1.bf16.msra.mxu0 %v6679
    %10015 = vmatprep.subr.bf16.mxu0 %v6688
    %10016 = vmatpush1.bf16.msra.mxu0 %v6687
    %10017 = vmatprep.subr.bf16.mxu0 %v6696
    %10018 = vmatpush1.bf16.msra.mxu0 %v6695
    %10019 = vmatprep.subr.bf16.mxu0 %v6704
    %10020 = vmatpush1.bf16.msra.mxu0 %v6703
    %10021 = vmatprep.subr.bf16.mxu0 %v6712
    %10022 = vmatpush1.bf16.msra.mxu0 %v6711
    %10023 = vmatprep.subr.bf16.mxu0 %v6720
    %10024 = vmatpush1.bf16.msra.mxu0 %v6719
    %10025 = vmatprep.subr.bf16.mxu0 %v6728
    %10026 = vmatpush1.bf16.msra.mxu0 %v6727
    %10027 = vmatprep.mubr.bf16.mxu0 %v144
    %10028 = vmatmul.mubr.bf16.gmra.mrb[0].mxu0 %v143
    %v10029 = vpop.f32.mrb[0].mxu0
    %v10030 = vadd.f32 %v9989, %v10029
    %v10031 = vpop.f32.mrb[0].mxu0
    %v10032 = vadd.f32 %v9991, %v10031
    %v10033 = vpop.f32.mrb[0].mxu0
    %v10034 = vpop.f32.mrb[0].mxu0
    %10035 = vdwg.mxu0
    %10036 = vmatprep.subr.bf16.mxu0 %v6736
    %10037 = vmatpush1.bf16.msra.mxu0 %v6735
    %10038 = vmatprep.subr.bf16.mxu0 %v6744
    %10039 = vmatpush1.bf16.msra.mxu0 %v6743
    %10040 = vmatprep.subr.bf16.mxu0 %v6752
    %10041 = vmatpush1.bf16.msra.mxu0 %v6751
    %10042 = vmatprep.subr.bf16.mxu0 %v6760
    %10043 = vmatpush1.bf16.msra.mxu0 %v6759
    %10044 = vmatprep.subr.bf16.mxu0 %v6768
    %10045 = vmatpush1.bf16.msra.mxu0 %v6767
    %10046 = vmatprep.subr.bf16.mxu0 %v6776
    %10047 = vmatpush1.bf16.msra.mxu0 %v6775
    %10048 = vmatprep.subr.bf16.mxu0 %v6784
    %10049 = vmatpush1.bf16.msra.mxu0 %v6783
    %10050 = vmatprep.subr.bf16.mxu0 %v6792
    %10051 = vmatpush1.bf16.msra.mxu0 %v6791
    %10052 = vmatprep.subr.bf16.mxu0 %v6800
    %10053 = vmatpush1.bf16.msra.mxu0 %v6799
    %10054 = vmatprep.subr.bf16.mxu0 %v6808
    %10055 = vmatpush1.bf16.msra.mxu0 %v6807
    %10056 = vmatprep.subr.bf16.mxu0 %v6816
    %10057 = vmatpush1.bf16.msra.mxu0 %v6815
    %10058 = vmatprep.subr.bf16.mxu0 %v6824
    %10059 = vmatpush1.bf16.msra.mxu0 %v6823
    %10060 = vmatprep.subr.bf16.mxu0 %v6832
    %10061 = vmatpush1.bf16.msra.mxu0 %v6831
    %10062 = vmatprep.subr.bf16.mxu0 %v6840
    %10063 = vmatpush1.bf16.msra.mxu0 %v6839
    %10064 = vmatprep.subr.bf16.mxu0 %v6848
    %10065 = vmatpush1.bf16.msra.mxu0 %v6847
    %10066 = vmatprep.subr.bf16.mxu0 %v6856
    %10067 = vmatpush1.bf16.msra.mxu0 %v6855
    %10068 = vmatprep.mubr.bf16.mxu0 %v146
    %10069 = vmatmul.mubr.bf16.gmra.mrb[0].mxu0 %v145
    %v10070 = vpop.f32.mrb[0].mxu0
    %v10071 = vadd.f32 %v10030, %v10070
    %v10072 = vpop.f32.mrb[0].mxu0
    %v10073 = vadd.f32 %v10032, %v10072
    %v10074 = vpop.f32.mrb[0].mxu0
    %v10075 = vpop.f32.mrb[0].mxu0
    %10076 = vdwg.mxu0
    %10077 = vmatprep.subr.bf16.mxu0 %v6864
    %10078 = vmatpush1.bf16.msra.mxu0 %v6863
    %10079 = vmatprep.subr.bf16.mxu0 %v6872
    %10080 = vmatpush1.bf16.msra.mxu0 %v6871
    %10081 = vmatprep.subr.bf16.mxu0 %v6880
    %10082 = vmatpush1.bf16.msra.mxu0 %v6879
    %10083 = vmatprep.subr.bf16.mxu0 %v6888
    %10084 = vmatpush1.bf16.msra.mxu0 %v6887
    %10085 = vmatprep.subr.bf16.mxu0 %v6896
    %10086 = vmatpush1.bf16.msra.mxu0 %v6895
    %10087 = vmatprep.subr.bf16.mxu0 %v6904
    %10088 = vmatpush1.bf16.msra.mxu0 %v6903
    %10089 = vmatprep.subr.bf16.mxu0 %v6912
    %10090 = vmatpush1.bf16.msra.mxu0 %v6911
    %10091 = vmatprep.subr.bf16.mxu0 %v6920
    %10092 = vmatpush1.bf16.msra.mxu0 %v6919
    %10093 = vmatprep.subr.bf16.mxu0 %v6928
    %10094 = vmatpush1.bf16.msra.mxu0 %v6927
    %10095 = vmatprep.subr.bf16.mxu0 %v6936
    %10096 = vmatpush1.bf16.msra.mxu0 %v6935
    %10097 = vmatprep.subr.bf16.mxu0 %v6944
    %10098 = vmatpush1.bf16.msra.mxu0 %v6943
    %10099 = vmatprep.subr.bf16.mxu0 %v6952
    %10100 = vmatpush1.bf16.msra.mxu0 %v6951
    %10101 = vmatprep.subr.bf16.mxu0 %v6960
    %10102 = vmatpush1.bf16.msra.mxu0 %v6959
    %10103 = vmatprep.subr.bf16.mxu0 %v6968
    %10104 = vmatpush1.bf16.msra.mxu0 %v6967
    %10105 = vmatprep.subr.bf16.mxu0 %v6976
    %10106 = vmatpush1.bf16.msra.mxu0 %v6975
    %10107 = vmatprep.subr.bf16.mxu0 %v6984
    %10108 = vmatpush1.bf16.msra.mxu0 %v6983
    %10109 = vmatprep.mubr.bf16.mxu0 %v148
    %10110 = vmatmul.mubr.bf16.gmra.mrb[0].mxu0 %v147
    %v10111 = vpop.f32.mrb[0].mxu0
    %v10112 = vadd.f32 %v10071, %v10111
    %v10113 = vpop.f32.mrb[0].mxu0
    %v10114 = vadd.f32 %v10073, %v10113
    %v10115 = vpop.f32.mrb[0].mxu0
    %v10116 = vpop.f32.mrb[0].mxu0
    %10117 = vdwg.mxu0
    %10118 = vmatprep.subr.bf16.mxu0 %v6992
    %10119 = vmatpush1.bf16.msra.mxu0 %v6991
    %10120 = vmatprep.subr.bf16.mxu0 %v7000
    %10121 = vmatpush1.bf16.msra.mxu0 %v6999
    %10122 = vmatprep.subr.bf16.mxu0 %v7008
    %10123 = vmatpush1.bf16.msra.mxu0 %v7007
    %10124 = vmatprep.subr.bf16.mxu0 %v7016
    %10125 = vmatpush1.bf16.msra.mxu0 %v7015
    %10126 = vmatprep.subr.bf16.mxu0 %v7024
    %10127 = vmatpush1.bf16.msra.mxu0 %v7023
    %10128 = vmatprep.subr.bf16.mxu0 %v7032
    %10129 = vmatpush1.bf16.msra.mxu0 %v7031
    %10130 = vmatprep.subr.bf16.mxu0 %v7040
    %10131 = vmatpush1.bf16.msra.mxu0 %v7039
    %10132 = vmatprep.subr.bf16.mxu0 %v7048
    %10133 = vmatpush1.bf16.msra.mxu0 %v7047
    %10134 = vmatprep.subr.bf16.mxu0 %v7056
    %10135 = vmatpush1.bf16.msra.mxu0 %v7055
    %10136 = vmatprep.subr.bf16.mxu0 %v7064
    %10137 = vmatpush1.bf16.msra.mxu0 %v7063
    %10138 = vmatprep.subr.bf16.mxu0 %v7072
    %10139 = vmatpush1.bf16.msra.mxu0 %v7071
    %10140 = vmatprep.subr.bf16.mxu0 %v7080
    %10141 = vmatpush1.bf16.msra.mxu0 %v7079
    %10142 = vmatprep.subr.bf16.mxu0 %v7088
    %10143 = vmatpush1.bf16.msra.mxu0 %v7087
    %10144 = vmatprep.subr.bf16.mxu0 %v7096
    %10145 = vmatpush1.bf16.msra.mxu0 %v7095
    %10146 = vmatprep.subr.bf16.mxu0 %v7104
    %10147 = vmatpush1.bf16.msra.mxu0 %v7103
    %10148 = vmatprep.subr.bf16.mxu0 %v7112
    %10149 = vmatpush1.bf16.msra.mxu0 %v7111
    %10150 = vmatprep.mubr.bf16.mxu0 %v150
    %10151 = vmatmul.mubr.bf16.gmra.mrb[0].mxu0 %v149
    %v10152 = vpop.f32.mrb[0].mxu0
    %v10153 = vadd.f32 %v10112, %v10152
    %v10154 = vpop.f32.mrb[0].mxu0
    %v10155 = vadd.f32 %v10114, %v10154
    %v10156 = vpop.f32.mrb[0].mxu0
    %v10157 = vpop.f32.mrb[0].mxu0
    %10158 = vdwg.mxu0
    %10159 = vmatprep.subr.bf16.mxu0 %v7120
    %10160 = vmatpush1.bf16.msra.mxu0 %v7119
    %10161 = vmatprep.subr.bf16.mxu0 %v7128
    %10162 = vmatpush1.bf16.msra.mxu0 %v7127
    %10163 = vmatprep.subr.bf16.mxu0 %v7136
    %10164 = vmatpush1.bf16.msra.mxu0 %v7135
    %10165 = vmatprep.subr.bf16.mxu0 %v7144
    %10166 = vmatpush1.bf16.msra.mxu0 %v7143
    %10167 = vmatprep.subr.bf16.mxu0 %v7152
    %10168 = vmatpush1.bf16.msra.mxu0 %v7151
    %10169 = vmatprep.subr.bf16.mxu0 %v7160
    %10170 = vmatpush1.bf16.msra.mxu0 %v7159
    %10171 = vmatprep.subr.bf16.mxu0 %v7168
    %10172 = vmatpush1.bf16.msra.mxu0 %v7167
    %10173 = vmatprep.subr.bf16.mxu0 %v7176
    %10174 = vmatpush1.bf16.msra.mxu0 %v7175
    %10175 = vmatprep.subr.bf16.mxu0 %v7184
    %10176 = vmatpush1.bf16.msra.mxu0 %v7183
    %10177 = vmatprep.subr.bf16.mxu0 %v7192
    %10178 = vmatpush1.bf16.msra.mxu0 %v7191
    %10179 = vmatprep.subr.bf16.mxu0 %v7200
    %10180 = vmatpush1.bf16.msra.mxu0 %v7199
    %10181 = vmatprep.subr.bf16.mxu0 %v7208
    %10182 = vmatpush1.bf16.msra.mxu0 %v7207
    %10183 = vmatprep.subr.bf16.mxu0 %v7216
    %10184 = vmatpush1.bf16.msra.mxu0 %v7215
    %10185 = vmatprep.subr.bf16.mxu0 %v7224
    %10186 = vmatpush1.bf16.msra.mxu0 %v7223
    %10187 = vmatprep.subr.bf16.mxu0 %v7232
    %10188 = vmatpush1.bf16.msra.mxu0 %v7231
    %10189 = vmatprep.subr.bf16.mxu0 %v7240
    %10190 = vmatpush1.bf16.msra.mxu0 %v7239
    %10191 = vmatprep.mubr.bf16.mxu0 %v152
    %10192 = vmatmul.mubr.bf16.gmra.mrb[0].mxu0 %v151
    %v10193 = vpop.f32.mrb[0].mxu0
    %v10194 = vadd.f32 %v10153, %v10193
    %v10195 = vpop.f32.mrb[0].mxu0
    %v10196 = vadd.f32 %v10155, %v10195
    %v10197 = vpop.f32.mrb[0].mxu0
    %v10198 = vpop.f32.mrb[0].mxu0
    %10199 = vdwg.mxu0
    %10200 = vmatprep.subr.bf16.mxu0 %v7248
    %10201 = vmatpush1.bf16.msra.mxu0 %v7247
    %10202 = vmatprep.subr.bf16.mxu0 %v7256
    %10203 = vmatpush1.bf16.msra.mxu0 %v7255
    %10204 = vmatprep.subr.bf16.mxu0 %v7264
    %10205 = vmatpush1.bf16.msra.mxu0 %v7263
    %10206 = vmatprep.subr.bf16.mxu0 %v7272
    %10207 = vmatpush1.bf16.msra.mxu0 %v7271
    %10208 = vmatprep.subr.bf16.mxu0 %v7280
    %10209 = vmatpush1.bf16.msra.mxu0 %v7279
    %10210 = vmatprep.subr.bf16.mxu0 %v7288
    %10211 = vmatpush1.bf16.msra.mxu0 %v7287
    %10212 = vmatprep.subr.bf16.mxu0 %v7296
    %10213 = vmatpush1.bf16.msra.mxu0 %v7295
    %10214 = vmatprep.subr.bf16.mxu0 %v7304
    %10215 = vmatpush1.bf16.msra.mxu0 %v7303
    %10216 = vmatprep.subr.bf16.mxu0 %v7312
    %10217 = vmatpush1.bf16.msra.mxu0 %v7311
    %10218 = vmatprep.subr.bf16.mxu0 %v7320
    %10219 = vmatpush1.bf16.msra.mxu0 %v7319
    %10220 = vmatprep.subr.bf16.mxu0 %v7328
    %10221 = vmatpush1.bf16.msra.mxu0 %v7327
    %10222 = vmatprep.subr.bf16.mxu0 %v7336
    %10223 = vmatpush1.bf16.msra.mxu0 %v7335
    %10224 = vmatprep.subr.bf16.mxu0 %v7344
    %10225 = vmatpush1.bf16.msra.mxu0 %v7343
    %10226 = vmatprep.subr.bf16.mxu0 %v7352
    %10227 = vmatpush1.bf16.msra.mxu0 %v7351
    %10228 = vmatprep.subr.bf16.mxu0 %v7360
    %10229 = vmatpush1.bf16.msra.mxu0 %v7359
    %10230 = vmatprep.subr.bf16.mxu0 %v7368
    %10231 = vmatpush1.bf16.msra.mxu0 %v7367
    %10232 = vmatprep.mubr.bf16.mxu0 %v154
    %10233 = vmatmul.mubr.bf16.gmra.mrb[0].mxu0 %v153
    %v10234 = vpop.f32.mrb[0].mxu0
    %v10235 = vadd.f32 %v10194, %v10234
    %v10236 = vpop.f32.mrb[0].mxu0
    %v10237 = vadd.f32 %v10196, %v10236
    %v10238 = vpop.f32.mrb[0].mxu0
    %v10239 = vpop.f32.mrb[0].mxu0
    %10240 = vdwg.mxu0
    %10241 = vmatprep.subr.bf16.mxu0 %v7376
    %10242 = vmatpush1.bf16.msra.mxu0 %v7375
    %10243 = vmatprep.subr.bf16.mxu0 %v7384
    %10244 = vmatpush1.bf16.msra.mxu0 %v7383
    %10245 = vmatprep.subr.bf16.mxu0 %v7392
    %10246 = vmatpush1.bf16.msra.mxu0 %v7391
    %10247 = vmatprep.subr.bf16.mxu0 %v7400
    %10248 = vmatpush1.bf16.msra.mxu0 %v7399
    %10249 = vmatprep.subr.bf16.mxu0 %v7408
    %10250 = vmatpush1.bf16.msra.mxu0 %v7407
    %10251 = vmatprep.subr.bf16.mxu0 %v7416
    %10252 = vmatpush1.bf16.msra.mxu0 %v7415
    %10253 = vmatprep.subr.bf16.mxu0 %v7424
    %10254 = vmatpush1.bf16.msra.mxu0 %v7423
    %10255 = vmatprep.subr.bf16.mxu0 %v7432
    %10256 = vmatpush1.bf16.msra.mxu0 %v7431
    %10257 = vmatprep.subr.bf16.mxu0 %v7440
    %10258 = vmatpush1.bf16.msra.mxu0 %v7439
    %10259 = vmatprep.subr.bf16.mxu0 %v7448
    %10260 = vmatpush1.bf16.msra.mxu0 %v7447
    %10261 = vmatprep.subr.bf16.mxu0 %v7456
    %10262 = vmatpush1.bf16.msra.mxu0 %v7455
    %10263 = vmatprep.subr.bf16.mxu0 %v7464
    %10264 = vmatpush1.bf16.msra.mxu0 %v7463
    %10265 = vmatprep.subr.bf16.mxu0 %v7472
    %10266 = vmatpush1.bf16.msra.mxu0 %v7471
    %10267 = vmatprep.subr.bf16.mxu0 %v7480
    %10268 = vmatpush1.bf16.msra.mxu0 %v7479
    %10269 = vmatprep.subr.bf16.mxu0 %v7488
    %10270 = vmatpush1.bf16.msra.mxu0 %v7487
    %10271 = vmatprep.subr.bf16.mxu0 %v7496
    %10272 = vmatpush1.bf16.msra.mxu0 %v7495
    %10273 = vmatprep.mubr.bf16.mxu0 %v156
    %10274 = vmatmul.mubr.bf16.gmra.mrb[0].mxu0 %v155
    %v10275 = vpop.f32.mrb[0].mxu0
    %v10276 = vadd.f32 %v10235, %v10275
    %v10277 = vpop.f32.mrb[0].mxu0
    %v10278 = vadd.f32 %v10237, %v10277
    %v10279 = vpop.f32.mrb[0].mxu0
    %v10280 = vpop.f32.mrb[0].mxu0
    %10281 = vdwg.mxu0
    %10282 = vmatprep.subr.bf16.mxu0 %v7504
    %10283 = vmatpush1.bf16.msra.mxu0 %v7503
    %10284 = vmatprep.subr.bf16.mxu0 %v7512
    %10285 = vmatpush1.bf16.msra.mxu0 %v7511
    %10286 = vmatprep.subr.bf16.mxu0 %v7520
    %10287 = vmatpush1.bf16.msra.mxu0 %v7519
    %10288 = vmatprep.subr.bf16.mxu0 %v7528
    %10289 = vmatpush1.bf16.msra.mxu0 %v7527
    %10290 = vmatprep.subr.bf16.mxu0 %v7536
    %10291 = vmatpush1.bf16.msra.mxu0 %v7535
    %10292 = vmatprep.subr.bf16.mxu0 %v7544
    %10293 = vmatpush1.bf16.msra.mxu0 %v7543
    %10294 = vmatprep.subr.bf16.mxu0 %v7552
    %10295 = vmatpush1.bf16.msra.mxu0 %v7551
    %10296 = vmatprep.subr.bf16.mxu0 %v7560
    %10297 = vmatpush1.bf16.msra.mxu0 %v7559
    %10298 = vmatprep.subr.bf16.mxu0 %v7568
    %10299 = vmatpush1.bf16.msra.mxu0 %v7567
    %10300 = vmatprep.subr.bf16.mxu0 %v7576
    %10301 = vmatpush1.bf16.msra.mxu0 %v7575
    %10302 = vmatprep.subr.bf16.mxu0 %v7584
    %10303 = vmatpush1.bf16.msra.mxu0 %v7583
    %10304 = vmatprep.subr.bf16.mxu0 %v7592
    %10305 = vmatpush1.bf16.msra.mxu0 %v7591
    %10306 = vmatprep.subr.bf16.mxu0 %v7600
    %10307 = vmatpush1.bf16.msra.mxu0 %v7599
    %10308 = vmatprep.subr.bf16.mxu0 %v7608
    %10309 = vmatpush1.bf16.msra.mxu0 %v7607
    %10310 = vmatprep.subr.bf16.mxu0 %v7616
    %10311 = vmatpush1.bf16.msra.mxu0 %v7615
    %10312 = vmatprep.subr.bf16.mxu0 %v7624
    %10313 = vmatpush1.bf16.msra.mxu0 %v7623
    %10314 = vmatprep.mubr.bf16.mxu0 %v158
    %10315 = vmatmul.mubr.bf16.gmra.mrb[0].mxu0 %v157
    %v10316 = vpop.f32.mrb[0].mxu0
    %v10317 = vadd.f32 %v10276, %v10316
    %v10318 = vpop.f32.mrb[0].mxu0
    %v10319 = vadd.f32 %v10278, %v10318
    %v10320 = vpop.f32.mrb[0].mxu0
    %v10321 = vpop.f32.mrb[0].mxu0
    %10322 = vdwg.mxu0
    %10323 = vmatprep.subr.bf16.mxu0 %v7632
    %10324 = vmatpush1.bf16.msra.mxu0 %v7631
    %10325 = vmatprep.subr.bf16.mxu0 %v7640
    %10326 = vmatpush1.bf16.msra.mxu0 %v7639
    %10327 = vmatprep.subr.bf16.mxu0 %v7648
    %10328 = vmatpush1.bf16.msra.mxu0 %v7647
    %10329 = vmatprep.subr.bf16.mxu0 %v7656
    %10330 = vmatpush1.bf16.msra.mxu0 %v7655
    %10331 = vmatprep.subr.bf16.mxu0 %v7664
    %10332 = vmatpush1.bf16.msra.mxu0 %v7663
    %10333 = vmatprep.subr.bf16.mxu0 %v7672
    %10334 = vmatpush1.bf16.msra.mxu0 %v7671
    %10335 = vmatprep.subr.bf16.mxu0 %v7680
    %10336 = vmatpush1.bf16.msra.mxu0 %v7679
    %10337 = vmatprep.subr.bf16.mxu0 %v7688
    %10338 = vmatpush1.bf16.msra.mxu0 %v7687
    %10339 = vmatprep.subr.bf16.mxu0 %v7696
    %10340 = vmatpush1.bf16.msra.mxu0 %v7695
    %10341 = vmatprep.subr.bf16.mxu0 %v7704
    %10342 = vmatpush1.bf16.msra.mxu0 %v7703
    %10343 = vmatprep.subr.bf16.mxu0 %v7712
    %10344 = vmatpush1.bf16.msra.mxu0 %v7711
    %10345 = vmatprep.subr.bf16.mxu0 %v7720
    %10346 = vmatpush1.bf16.msra.mxu0 %v7719
    %10347 = vmatprep.subr.bf16.mxu0 %v7728
    %10348 = vmatpush1.bf16.msra.mxu0 %v7727
    %10349 = vmatprep.subr.bf16.mxu0 %v7736
    %10350 = vmatpush1.bf16.msra.mxu0 %v7735
    %10351 = vmatprep.subr.bf16.mxu0 %v7744
    %10352 = vmatpush1.bf16.msra.mxu0 %v7743
    %10353 = vmatprep.subr.bf16.mxu0 %v7752
    %10354 = vmatpush1.bf16.msra.mxu0 %v7751
    %10355 = vmatprep.mubr.bf16.mxu0 %v160
    %10356 = vmatmul.mubr.bf16.gmra.mrb[0].mxu0 %v159
    %v10357 = vpop.f32.mrb[0].mxu0
    %v10358 = vadd.f32 %v10317, %v10357
    %v10359 = vpop.f32.mrb[0].mxu0
    %v10360 = vadd.f32 %v10319, %v10359
    %v10361 = vpop.f32.mrb[0].mxu0
    %v10362 = vpop.f32.mrb[0].mxu0
    %10363 = vdwg.mxu0
    %10364 = vmatprep.subr.bf16.mxu0 %v7760
    %10365 = vmatpush1.bf16.msra.mxu0 %v7759
    %10366 = vmatprep.subr.bf16.mxu0 %v7768
    %10367 = vmatpush1.bf16.msra.mxu0 %v7767
    %10368 = vmatprep.subr.bf16.mxu0 %v7776
    %10369 = vmatpush1.bf16.msra.mxu0 %v7775
    %10370 = vmatprep.subr.bf16.mxu0 %v7784
    %10371 = vmatpush1.bf16.msra.mxu0 %v7783
    %10372 = vmatprep.subr.bf16.mxu0 %v7792
    %10373 = vmatpush1.bf16.msra.mxu0 %v7791
    %10374 = vmatprep.subr.bf16.mxu0 %v7800
    %10375 = vmatpush1.bf16.msra.mxu0 %v7799
    %10376 = vmatprep.subr.bf16.mxu0 %v7808
    %10377 = vmatpush1.bf16.msra.mxu0 %v7807
    %10378 = vmatprep.subr.bf16.mxu0 %v7816
    %10379 = vmatpush1.bf16.msra.mxu0 %v7815
    %10380 = vmatprep.subr.bf16.mxu0 %v7824
    %10381 = vmatpush1.bf16.msra.mxu0 %v7823
    %10382 = vmatprep.subr.bf16.mxu0 %v7832
    %10383 = vmatpush1.bf16.msra.mxu0 %v7831
    %10384 = vmatprep.subr.bf16.mxu0 %v7840
    %10385 = vmatpush1.bf16.msra.mxu0 %v7839
    %10386 = vmatprep.subr.bf16.mxu0 %v7848
    %10387 = vmatpush1.bf16.msra.mxu0 %v7847
    %10388 = vmatprep.subr.bf16.mxu0 %v7856
    %10389 = vmatpush1.bf16.msra.mxu0 %v7855
    %10390 = vmatprep.subr.bf16.mxu0 %v7864
    %10391 = vmatpush1.bf16.msra.mxu0 %v7863
    %10392 = vmatprep.subr.bf16.mxu0 %v7872
    %10393 = vmatpush1.bf16.msra.mxu0 %v7871
    %10394 = vmatprep.subr.bf16.mxu0 %v7880
    %10395 = vmatpush1.bf16.msra.mxu0 %v7879
    %10396 = vmatprep.mubr.bf16.mxu0 %v162
    %10397 = vmatmul.mubr.bf16.gmra.mrb[0].mxu0 %v161
    %v10398 = vpop.f32.mrb[0].mxu0
    %v10399 = vadd.f32 %v10358, %v10398
    %v10400 = vpop.f32.mrb[0].mxu0
    %v10401 = vadd.f32 %v10360, %v10400
    %v10402 = vpop.f32.mrb[0].mxu0
    %v10403 = vpop.f32.mrb[0].mxu0
    %10404 = vdwg.mxu0
    %10405 = vmatprep.subr.bf16.mxu0 %v6354
    %10406 = vmatpush1.bf16.msra.mxu0 %v6353
    %10407 = vmatprep.subr.bf16.mxu0 %v6362
    %10408 = vmatpush1.bf16.msra.mxu0 %v6361
    %10409 = vmatprep.subr.bf16.mxu0 %v6370
    %10410 = vmatpush1.bf16.msra.mxu0 %v6369
    %10411 = vmatprep.subr.bf16.mxu0 %v6378
    %10412 = vmatpush1.bf16.msra.mxu0 %v6377
    %10413 = vmatprep.subr.bf16.mxu0 %v6386
    %10414 = vmatpush1.bf16.msra.mxu0 %v6385
    %10415 = vmatprep.subr.bf16.mxu0 %v6394
    %10416 = vmatpush1.bf16.msra.mxu0 %v6393
    %10417 = vmatprep.subr.bf16.mxu0 %v6402
    %10418 = vmatpush1.bf16.msra.mxu0 %v6401
    %10419 = vmatprep.subr.bf16.mxu0 %v6410
    %10420 = vmatpush1.bf16.msra.mxu0 %v6409
    %10421 = vmatprep.subr.bf16.mxu0 %v6418
    %10422 = vmatpush1.bf16.msra.mxu0 %v6417
    %10423 = vmatprep.subr.bf16.mxu0 %v6426
    %10424 = vmatpush1.bf16.msra.mxu0 %v6425
    %10425 = vmatprep.subr.bf16.mxu0 %v6434
    %10426 = vmatpush1.bf16.msra.mxu0 %v6433
    %10427 = vmatprep.subr.bf16.mxu0 %v6442
    %10428 = vmatpush1.bf16.msra.mxu0 %v6441
    %10429 = vmatprep.subr.bf16.mxu0 %v6450
    %10430 = vmatpush1.bf16.msra.mxu0 %v6449
    %10431 = vmatprep.subr.bf16.mxu0 %v6458
    %10432 = vmatpush1.bf16.msra.mxu0 %v6457
    %10433 = vmatprep.subr.bf16.mxu0 %v6466
    %10434 = vmatpush1.bf16.msra.mxu0 %v6465
    %10435 = vmatprep.subr.bf16.mxu0 %v6474
    %10436 = vmatpush1.bf16.msra.mxu0 %v6473
    %10437 = vmatprep.mubr.bf16.mxu0 %v140
    %10438 = vmatmul.mubr.bf16.gmra.mrb[0].mxu0 %v139
    %v10439 = vpop.f32.mrb[0].mxu0
    %v10440 = vadd.f32 %v1720, %v10439
    %v10441 = vpop.f32.mrb[0].mxu0
    %v10442 = vadd.f32 %v1724, %v10441
    %v10443 = vpop.f32.mrb[0].mxu0
    %v10444 = vpop.f32.mrb[0].mxu0
    %10445 = vdwg.mxu0
    %10446 = vmatprep.subr.bf16.mxu0 %v6482
    %10447 = vmatpush1.bf16.msra.mxu0 %v6481
    %10448 = vmatprep.subr.bf16.mxu0 %v6490
    %10449 = vmatpush1.bf16.msra.mxu0 %v6489
    %10450 = vmatprep.subr.bf16.mxu0 %v6498
    %10451 = vmatpush1.bf16.msra.mxu0 %v6497
    %10452 = vmatprep.subr.bf16.mxu0 %v6506
    %10453 = vmatpush1.bf16.msra.mxu0 %v6505
    %10454 = vmatprep.subr.bf16.mxu0 %v6514
    %10455 = vmatpush1.bf16.msra.mxu0 %v6513
    %10456 = vmatprep.subr.bf16.mxu0 %v6522
    %10457 = vmatpush1.bf16.msra.mxu0 %v6521
    %10458 = vmatprep.subr.bf16.mxu0 %v6530
    %10459 = vmatpush1.bf16.msra.mxu0 %v6529
    %10460 = vmatprep.subr.bf16.mxu0 %v6538
    %10461 = vmatpush1.bf16.msra.mxu0 %v6537
    %10462 = vmatprep.subr.bf16.mxu0 %v6546
    %10463 = vmatpush1.bf16.msra.mxu0 %v6545
    %10464 = vmatprep.subr.bf16.mxu0 %v6554
    %10465 = vmatpush1.bf16.msra.mxu0 %v6553
    %10466 = vmatprep.subr.bf16.mxu0 %v6562
    %10467 = vmatpush1.bf16.msra.mxu0 %v6561
    %10468 = vmatprep.subr.bf16.mxu0 %v6570
    %10469 = vmatpush1.bf16.msra.mxu0 %v6569
    %10470 = vmatprep.subr.bf16.mxu0 %v6578
    %10471 = vmatpush1.bf16.msra.mxu0 %v6577
    %10472 = vmatprep.subr.bf16.mxu0 %v6586
    %10473 = vmatpush1.bf16.msra.mxu0 %v6585
    %10474 = vmatprep.subr.bf16.mxu0 %v6594
    %10475 = vmatpush1.bf16.msra.mxu0 %v6593
    %10476 = vmatprep.subr.bf16.mxu0 %v6602
    %10477 = vmatpush1.bf16.msra.mxu0 %v6601
    %10478 = vmatprep.mubr.bf16.mxu0 %v142
    %10479 = vmatmul.mubr.bf16.gmra.mrb[0].mxu0 %v141
    %v10480 = vpop.f32.mrb[0].mxu0
    %v10481 = vadd.f32 %v10440, %v10480
    %v10482 = vpop.f32.mrb[0].mxu0
    %v10483 = vadd.f32 %v10442, %v10482
    %v10484 = vpop.f32.mrb[0].mxu0
    %v10485 = vpop.f32.mrb[0].mxu0
    %10486 = vdwg.mxu0
    %10487 = vmatprep.subr.bf16.mxu0 %v6610
    %10488 = vmatpush1.bf16.msra.mxu0 %v6609
    %10489 = vmatprep.subr.bf16.mxu0 %v6618
    %10490 = vmatpush1.bf16.msra.mxu0 %v6617
    %10491 = vmatprep.subr.bf16.mxu0 %v6626
    %10492 = vmatpush1.bf16.msra.mxu0 %v6625
    %10493 = vmatprep.subr.bf16.mxu0 %v6634
    %10494 = vmatpush1.bf16.msra.mxu0 %v6633
    %10495 = vmatprep.subr.bf16.mxu0 %v6642
    %10496 = vmatpush1.bf16.msra.mxu0 %v6641
    %10497 = vmatprep.subr.bf16.mxu0 %v6650
    %10498 = vmatpush1.bf16.msra.mxu0 %v6649
    %10499 = vmatprep.subr.bf16.mxu0 %v6658
    %10500 = vmatpush1.bf16.msra.mxu0 %v6657
    %10501 = vmatprep.subr.bf16.mxu0 %v6666
    %10502 = vmatpush1.bf16.msra.mxu0 %v6665
    %10503 = vmatprep.subr.bf16.mxu0 %v6674
    %10504 = vmatpush1.bf16.msra.mxu0 %v6673
    %10505 = vmatprep.subr.bf16.mxu0 %v6682
    %10506 = vmatpush1.bf16.msra.mxu0 %v6681
    %10507 = vmatprep.subr.bf16.mxu0 %v6690
    %10508 = vmatpush1.bf16.msra.mxu0 %v6689
    %10509 = vmatprep.subr.bf16.mxu0 %v6698
    %10510 = vmatpush1.bf16.msra.mxu0 %v6697
    %10511 = vmatprep.subr.bf16.mxu0 %v6706
    %10512 = vmatpush1.bf16.msra.mxu0 %v6705
    %10513 = vmatprep.subr.bf16.mxu0 %v6714
    %10514 = vmatpush1.bf16.msra.mxu0 %v6713
    %10515 = vmatprep.subr.bf16.mxu0 %v6722
    %10516 = vmatpush1.bf16.msra.mxu0 %v6721
    %10517 = vmatprep.subr.bf16.mxu0 %v6730
    %10518 = vmatpush1.bf16.msra.mxu0 %v6729
    %10519 = vmatprep.mubr.bf16.mxu0 %v144
    %10520 = vmatmul.mubr.bf16.gmra.mrb[0].mxu0 %v143
    %v10521 = vpop.f32.mrb[0].mxu0
    %v10522 = vadd.f32 %v10481, %v10521
    %v10523 = vpop.f32.mrb[0].mxu0
    %v10524 = vadd.f32 %v10483, %v10523
    %v10525 = vpop.f32.mrb[0].mxu0
    %v10526 = vpop.f32.mrb[0].mxu0
    %10527 = vdwg.mxu0
    %10528 = vmatprep.subr.bf16.mxu0 %v6738
    %10529 = vmatpush1.bf16.msra.mxu0 %v6737
    %10530 = vmatprep.subr.bf16.mxu0 %v6746
    %10531 = vmatpush1.bf16.msra.mxu0 %v6745
    %10532 = vmatprep.subr.bf16.mxu0 %v6754
    %10533 = vmatpush1.bf16.msra.mxu0 %v6753
    %10534 = vmatprep.subr.bf16.mxu0 %v6762
    %10535 = vmatpush1.bf16.msra.mxu0 %v6761
    %10536 = vmatprep.subr.bf16.mxu0 %v6770
    %10537 = vmatpush1.bf16.msra.mxu0 %v6769
    %10538 = vmatprep.subr.bf16.mxu0 %v6778
    %10539 = vmatpush1.bf16.msra.mxu0 %v6777
    %10540 = vmatprep.subr.bf16.mxu0 %v6786
    %10541 = vmatpush1.bf16.msra.mxu0 %v6785
    %10542 = vmatprep.subr.bf16.mxu0 %v6794
    %10543 = vmatpush1.bf16.msra.mxu0 %v6793
    %10544 = vmatprep.subr.bf16.mxu0 %v6802
    %10545 = vmatpush1.bf16.msra.mxu0 %v6801
    %10546 = vmatprep.subr.bf16.mxu0 %v6810
    %10547 = vmatpush1.bf16.msra.mxu0 %v6809
    %10548 = vmatprep.subr.bf16.mxu0 %v6818
    %10549 = vmatpush1.bf16.msra.mxu0 %v6817
    %10550 = vmatprep.subr.bf16.mxu0 %v6826
    %10551 = vmatpush1.bf16.msra.mxu0 %v6825
    %10552 = vmatprep.subr.bf16.mxu0 %v6834
    %10553 = vmatpush1.bf16.msra.mxu0 %v6833
    %10554 = vmatprep.subr.bf16.mxu0 %v6842
    %10555 = vmatpush1.bf16.msra.mxu0 %v6841
    %10556 = vmatprep.subr.bf16.mxu0 %v6850
    %10557 = vmatpush1.bf16.msra.mxu0 %v6849
    %10558 = vmatprep.subr.bf16.mxu0 %v6858
    %10559 = vmatpush1.bf16.msra.mxu0 %v6857
    %10560 = vmatprep.mubr.bf16.mxu0 %v146
    %10561 = vmatmul.mubr.bf16.gmra.mrb[0].mxu0 %v145
    %v10562 = vpop.f32.mrb[0].mxu0
    %v10563 = vadd.f32 %v10522, %v10562
    %v10564 = vpop.f32.mrb[0].mxu0
    %v10565 = vadd.f32 %v10524, %v10564
    %v10566 = vpop.f32.mrb[0].mxu0
    %v10567 = vpop.f32.mrb[0].mxu0
    %10568 = vdwg.mxu0
    %10569 = vmatprep.subr.bf16.mxu0 %v6866
    %10570 = vmatpush1.bf16.msra.mxu0 %v6865
    %10571 = vmatprep.subr.bf16.mxu0 %v6874
    %10572 = vmatpush1.bf16.msra.mxu0 %v6873
    %10573 = vmatprep.subr.bf16.mxu0 %v6882
    %10574 = vmatpush1.bf16.msra.mxu0 %v6881
    %10575 = vmatprep.subr.bf16.mxu0 %v6890
    %10576 = vmatpush1.bf16.msra.mxu0 %v6889
    %10577 = vmatprep.subr.bf16.mxu0 %v6898
    %10578 = vmatpush1.bf16.msra.mxu0 %v6897
    %10579 = vmatprep.subr.bf16.mxu0 %v6906
    %10580 = vmatpush1.bf16.msra.mxu0 %v6905
    %10581 = vmatprep.subr.bf16.mxu0 %v6914
    %10582 = vmatpush1.bf16.msra.mxu0 %v6913
    %10583 = vmatprep.subr.bf16.mxu0 %v6922
    %10584 = vmatpush1.bf16.msra.mxu0 %v6921
    %10585 = vmatprep.subr.bf16.mxu0 %v6930
    %10586 = vmatpush1.bf16.msra.mxu0 %v6929
    %10587 = vmatprep.subr.bf16.mxu0 %v6938
    %10588 = vmatpush1.bf16.msra.mxu0 %v6937
    %10589 = vmatprep.subr.bf16.mxu0 %v6946
    %10590 = vmatpush1.bf16.msra.mxu0 %v6945
    %10591 = vmatprep.subr.bf16.mxu0 %v6954
    %10592 = vmatpush1.bf16.msra.mxu0 %v6953
    %10593 = vmatprep.subr.bf16.mxu0 %v6962
    %10594 = vmatpush1.bf16.msra.mxu0 %v6961
    %10595 = vmatprep.subr.bf16.mxu0 %v6970
    %10596 = vmatpush1.bf16.msra.mxu0 %v6969
    %10597 = vmatprep.subr.bf16.mxu0 %v6978
    %10598 = vmatpush1.bf16.msra.mxu0 %v6977
    %10599 = vmatprep.subr.bf16.mxu0 %v6986
    %10600 = vmatpush1.bf16.msra.mxu0 %v6985
    %10601 = vmatprep.mubr.bf16.mxu0 %v148
    %10602 = vmatmul.mubr.bf16.gmra.mrb[0].mxu0 %v147
    %v10603 = vpop.f32.mrb[0].mxu0
    %v10604 = vadd.f32 %v10563, %v10603
    %v10605 = vpop.f32.mrb[0].mxu0
    %v10606 = vadd.f32 %v10565, %v10605
    %v10607 = vpop.f32.mrb[0].mxu0
    %v10608 = vpop.f32.mrb[0].mxu0
    %10609 = vdwg.mxu0
    %10610 = vmatprep.subr.bf16.mxu0 %v6994
    %10611 = vmatpush1.bf16.msra.mxu0 %v6993
    %10612 = vmatprep.subr.bf16.mxu0 %v7002
    %10613 = vmatpush1.bf16.msra.mxu0 %v7001
    %10614 = vmatprep.subr.bf16.mxu0 %v7010
    %10615 = vmatpush1.bf16.msra.mxu0 %v7009
    %10616 = vmatprep.subr.bf16.mxu0 %v7018
    %10617 = vmatpush1.bf16.msra.mxu0 %v7017
    %10618 = vmatprep.subr.bf16.mxu0 %v7026
    %10619 = vmatpush1.bf16.msra.mxu0 %v7025
    %10620 = vmatprep.subr.bf16.mxu0 %v7034
    %10621 = vmatpush1.bf16.msra.mxu0 %v7033
    %10622 = vmatprep.subr.bf16.mxu0 %v7042
    %10623 = vmatpush1.bf16.msra.mxu0 %v7041
    %10624 = vmatprep.subr.bf16.mxu0 %v7050
    %10625 = vmatpush1.bf16.msra.mxu0 %v7049
    %10626 = vmatprep.subr.bf16.mxu0 %v7058
    %10627 = vmatpush1.bf16.msra.mxu0 %v7057
    %10628 = vmatprep.subr.bf16.mxu0 %v7066
    %10629 = vmatpush1.bf16.msra.mxu0 %v7065
    %10630 = vmatprep.subr.bf16.mxu0 %v7074
    %10631 = vmatpush1.bf16.msra.mxu0 %v7073
    %10632 = vmatprep.subr.bf16.mxu0 %v7082
    %10633 = vmatpush1.bf16.msra.mxu0 %v7081
    %10634 = vmatprep.subr.bf16.mxu0 %v7090
    %10635 = vmatpush1.bf16.msra.mxu0 %v7089
    %10636 = vmatprep.subr.bf16.mxu0 %v7098
    %10637 = vmatpush1.bf16.msra.mxu0 %v7097
    %10638 = vmatprep.subr.bf16.mxu0 %v7106
    %10639 = vmatpush1.bf16.msra.mxu0 %v7105
    %10640 = vmatprep.subr.bf16.mxu0 %v7114
    %10641 = vmatpush1.bf16.msra.mxu0 %v7113
    %10642 = vmatprep.mubr.bf16.mxu0 %v150
    %10643 = vmatmul.mubr.bf16.gmra.mrb[0].mxu0 %v149
    %v10644 = vpop.f32.mrb[0].mxu0
    %v10645 = vadd.f32 %v10604, %v10644
    %v10646 = vpop.f32.mrb[0].mxu0
    %v10647 = vadd.f32 %v10606, %v10646
    %v10648 = vpop.f32.mrb[0].mxu0
    %v10649 = vpop.f32.mrb[0].mxu0
    %10650 = vdwg.mxu0
    %10651 = vmatprep.subr.bf16.mxu0 %v7122
    %10652 = vmatpush1.bf16.msra.mxu0 %v7121
    %10653 = vmatprep.subr.bf16.mxu0 %v7130
    %10654 = vmatpush1.bf16.msra.mxu0 %v7129
    %10655 = vmatprep.subr.bf16.mxu0 %v7138
    %10656 = vmatpush1.bf16.msra.mxu0 %v7137
    %10657 = vmatprep.subr.bf16.mxu0 %v7146
    %10658 = vmatpush1.bf16.msra.mxu0 %v7145
    %10659 = vmatprep.subr.bf16.mxu0 %v7154
    %10660 = vmatpush1.bf16.msra.mxu0 %v7153
    %10661 = vmatprep.subr.bf16.mxu0 %v7162
    %10662 = vmatpush1.bf16.msra.mxu0 %v7161
    %10663 = vmatprep.subr.bf16.mxu0 %v7170
    %10664 = vmatpush1.bf16.msra.mxu0 %v7169
    %10665 = vmatprep.subr.bf16.mxu0 %v7178
    %10666 = vmatpush1.bf16.msra.mxu0 %v7177
    %10667 = vmatprep.subr.bf16.mxu0 %v7186
    %10668 = vmatpush1.bf16.msra.mxu0 %v7185
    %10669 = vmatprep.subr.bf16.mxu0 %v7194
    %10670 = vmatpush1.bf16.msra.mxu0 %v7193
    %10671 = vmatprep.subr.bf16.mxu0 %v7202
    %10672 = vmatpush1.bf16.msra.mxu0 %v7201
    %10673 = vmatprep.subr.bf16.mxu0 %v7210
    %10674 = vmatpush1.bf16.msra.mxu0 %v7209
    %10675 = vmatprep.subr.bf16.mxu0 %v7218
    %10676 = vmatpush1.bf16.msra.mxu0 %v7217
    %10677 = vmatprep.subr.bf16.mxu0 %v7226
    %10678 = vmatpush1.bf16.msra.mxu0 %v7225
    %10679 = vmatprep.subr.bf16.mxu0 %v7234
    %10680 = vmatpush1.bf16.msra.mxu0 %v7233
    %10681 = vmatprep.subr.bf16.mxu0 %v7242
    %10682 = vmatpush1.bf16.msra.mxu0 %v7241
    %10683 = vmatprep.mubr.bf16.mxu0 %v152
    %10684 = vmatmul.mubr.bf16.gmra.mrb[0].mxu0 %v151
    %v10685 = vpop.f32.mrb[0].mxu0
    %v10686 = vadd.f32 %v10645, %v10685
    %v10687 = vpop.f32.mrb[0].mxu0
    %v10688 = vadd.f32 %v10647, %v10687
    %v10689 = vpop.f32.mrb[0].mxu0
    %v10690 = vpop.f32.mrb[0].mxu0
    %10691 = vdwg.mxu0
    %10692 = vmatprep.subr.bf16.mxu0 %v7250
    %10693 = vmatpush1.bf16.msra.mxu0 %v7249
    %10694 = vmatprep.subr.bf16.mxu0 %v7258
    %10695 = vmatpush1.bf16.msra.mxu0 %v7257
    %10696 = vmatprep.subr.bf16.mxu0 %v7266
    %10697 = vmatpush1.bf16.msra.mxu0 %v7265
    %10698 = vmatprep.subr.bf16.mxu0 %v7274
    %10699 = vmatpush1.bf16.msra.mxu0 %v7273
    %10700 = vmatprep.subr.bf16.mxu0 %v7282
    %10701 = vmatpush1.bf16.msra.mxu0 %v7281
    %10702 = vmatprep.subr.bf16.mxu0 %v7290
    %10703 = vmatpush1.bf16.msra.mxu0 %v7289
    %10704 = vmatprep.subr.bf16.mxu0 %v7298
    %10705 = vmatpush1.bf16.msra.mxu0 %v7297
    %10706 = vmatprep.subr.bf16.mxu0 %v7306
    %10707 = vmatpush1.bf16.msra.mxu0 %v7305
    %10708 = vmatprep.subr.bf16.mxu0 %v7314
    %10709 = vmatpush1.bf16.msra.mxu0 %v7313
    %10710 = vmatprep.subr.bf16.mxu0 %v7322
    %10711 = vmatpush1.bf16.msra.mxu0 %v7321
    %10712 = vmatprep.subr.bf16.mxu0 %v7330
    %10713 = vmatpush1.bf16.msra.mxu0 %v7329
    %10714 = vmatprep.subr.bf16.mxu0 %v7338
    %10715 = vmatpush1.bf16.msra.mxu0 %v7337
    %10716 = vmatprep.subr.bf16.mxu0 %v7346
    %10717 = vmatpush1.bf16.msra.mxu0 %v7345
    %10718 = vmatprep.subr.bf16.mxu0 %v7354
    %10719 = vmatpush1.bf16.msra.mxu0 %v7353
    %10720 = vmatprep.subr.bf16.mxu0 %v7362
    %10721 = vmatpush1.bf16.msra.mxu0 %v7361
    %10722 = vmatprep.subr.bf16.mxu0 %v7370
    %10723 = vmatpush1.bf16.msra.mxu0 %v7369
    %10724 = vmatprep.mubr.bf16.mxu0 %v154
    %10725 = vmatmul.mubr.bf16.gmra.mrb[0].mxu0 %v153
    %v10726 = vpop.f32.mrb[0].mxu0
    %v10727 = vadd.f32 %v10686, %v10726
    %v10728 = vpop.f32.mrb[0].mxu0
    %v10729 = vadd.f32 %v10688, %v10728
    %v10730 = vpop.f32.mrb[0].mxu0
    %v10731 = vpop.f32.mrb[0].mxu0
    %10732 = vdwg.mxu0
    %10733 = vmatprep.subr.bf16.mxu0 %v7378
    %10734 = vmatpush1.bf16.msra.mxu0 %v7377
    %10735 = vmatprep.subr.bf16.mxu0 %v7386
    %10736 = vmatpush1.bf16.msra.mxu0 %v7385
    %10737 = vmatprep.subr.bf16.mxu0 %v7394
    %10738 = vmatpush1.bf16.msra.mxu0 %v7393
    %10739 = vmatprep.subr.bf16.mxu0 %v7402
    %10740 = vmatpush1.bf16.msra.mxu0 %v7401
    %10741 = vmatprep.subr.bf16.mxu0 %v7410
    %10742 = vmatpush1.bf16.msra.mxu0 %v7409
    %10743 = vmatprep.subr.bf16.mxu0 %v7418
    %10744 = vmatpush1.bf16.msra.mxu0 %v7417
    %10745 = vmatprep.subr.bf16.mxu0 %v7426
    %10746 = vmatpush1.bf16.msra.mxu0 %v7425
    %10747 = vmatprep.subr.bf16.mxu0 %v7434
    %10748 = vmatpush1.bf16.msra.mxu0 %v7433
    %10749 = vmatprep.subr.bf16.mxu0 %v7442
    %10750 = vmatpush1.bf16.msra.mxu0 %v7441
    %10751 = vmatprep.subr.bf16.mxu0 %v7450
    %10752 = vmatpush1.bf16.msra.mxu0 %v7449
    %10753 = vmatprep.subr.bf16.mxu0 %v7458
    %10754 = vmatpush1.bf16.msra.mxu0 %v7457
    %10755 = vmatprep.subr.bf16.mxu0 %v7466
    %10756 = vmatpush1.bf16.msra.mxu0 %v7465
    %10757 = vmatprep.subr.bf16.mxu0 %v7474
    %10758 = vmatpush1.bf16.msra.mxu0 %v7473
    %10759 = vmatprep.subr.bf16.mxu0 %v7482
    %10760 = vmatpush1.bf16.msra.mxu0 %v7481
    %10761 = vmatprep.subr.bf16.mxu0 %v7490
    %10762 = vmatpush1.bf16.msra.mxu0 %v7489
    %10763 = vmatprep.subr.bf16.mxu0 %v7498
    %10764 = vmatpush1.bf16.msra.mxu0 %v7497
    %10765 = vmatprep.mubr.bf16.mxu0 %v156
    %10766 = vmatmul.mubr.bf16.gmra.mrb[0].mxu0 %v155
    %v10767 = vpop.f32.mrb[0].mxu0
    %v10768 = vadd.f32 %v10727, %v10767
    %v10769 = vpop.f32.mrb[0].mxu0
    %v10770 = vadd.f32 %v10729, %v10769
    %v10771 = vpop.f32.mrb[0].mxu0
    %v10772 = vpop.f32.mrb[0].mxu0
    %10773 = vdwg.mxu0
    %10774 = vmatprep.subr.bf16.mxu0 %v7506
    %10775 = vmatpush1.bf16.msra.mxu0 %v7505
    %10776 = vmatprep.subr.bf16.mxu0 %v7514
    %10777 = vmatpush1.bf16.msra.mxu0 %v7513
    %10778 = vmatprep.subr.bf16.mxu0 %v7522
    %10779 = vmatpush1.bf16.msra.mxu0 %v7521
    %10780 = vmatprep.subr.bf16.mxu0 %v7530
    %10781 = vmatpush1.bf16.msra.mxu0 %v7529
    %10782 = vmatprep.subr.bf16.mxu0 %v7538
    %10783 = vmatpush1.bf16.msra.mxu0 %v7537
    %10784 = vmatprep.subr.bf16.mxu0 %v7546
    %10785 = vmatpush1.bf16.msra.mxu0 %v7545
    %10786 = vmatprep.subr.bf16.mxu0 %v7554
    %10787 = vmatpush1.bf16.msra.mxu0 %v7553
    %10788 = vmatprep.subr.bf16.mxu0 %v7562
    %10789 = vmatpush1.bf16.msra.mxu0 %v7561
    %10790 = vmatprep.subr.bf16.mxu0 %v7570
    %10791 = vmatpush1.bf16.msra.mxu0 %v7569
    %10792 = vmatprep.subr.bf16.mxu0 %v7578
    %10793 = vmatpush1.bf16.msra.mxu0 %v7577
    %10794 = vmatprep.subr.bf16.mxu0 %v7586
    %10795 = vmatpush1.bf16.msra.mxu0 %v7585
    %10796 = vmatprep.subr.bf16.mxu0 %v7594
    %10797 = vmatpush1.bf16.msra.mxu0 %v7593
    %10798 = vmatprep.subr.bf16.mxu0 %v7602
    %10799 = vmatpush1.bf16.msra.mxu0 %v7601
    %10800 = vmatprep.subr.bf16.mxu0 %v7610
    %10801 = vmatpush1.bf16.msra.mxu0 %v7609
    %10802 = vmatprep.subr.bf16.mxu0 %v7618
    %10803 = vmatpush1.bf16.msra.mxu0 %v7617
    %10804 = vmatprep.subr.bf16.mxu0 %v7626
    %10805 = vmatpush1.bf16.msra.mxu0 %v7625
    %10806 = vmatprep.mubr.bf16.mxu0 %v158
    %10807 = vmatmul.mubr.bf16.gmra.mrb[0].mxu0 %v157
    %v10808 = vpop.f32.mrb[0].mxu0
    %v10809 = vadd.f32 %v10768, %v10808
    %v10810 = vpop.f32.mrb[0].mxu0
    %v10811 = vadd.f32 %v10770, %v10810
    %v10812 = vpop.f32.mrb[0].mxu0
    %v10813 = vpop.f32.mrb[0].mxu0
    %10814 = vdwg.mxu0
    %10815 = vmatprep.subr.bf16.mxu0 %v7634
    %10816 = vmatpush1.bf16.msra.mxu0 %v7633
    %10817 = vmatprep.subr.bf16.mxu0 %v7642
    %10818 = vmatpush1.bf16.msra.mxu0 %v7641
    %10819 = vmatprep.subr.bf16.mxu0 %v7650
    %10820 = vmatpush1.bf16.msra.mxu0 %v7649
    %10821 = vmatprep.subr.bf16.mxu0 %v7658
    %10822 = vmatpush1.bf16.msra.mxu0 %v7657
    %10823 = vmatprep.subr.bf16.mxu0 %v7666
    %10824 = vmatpush1.bf16.msra.mxu0 %v7665
    %10825 = vmatprep.subr.bf16.mxu0 %v7674
    %10826 = vmatpush1.bf16.msra.mxu0 %v7673
    %10827 = vmatprep.subr.bf16.mxu0 %v7682
    %10828 = vmatpush1.bf16.msra.mxu0 %v7681
    %10829 = vmatprep.subr.bf16.mxu0 %v7690
    %10830 = vmatpush1.bf16.msra.mxu0 %v7689
    %10831 = vmatprep.subr.bf16.mxu0 %v7698
    %10832 = vmatpush1.bf16.msra.mxu0 %v7697
    %10833 = vmatprep.subr.bf16.mxu0 %v7706
    %10834 = vmatpush1.bf16.msra.mxu0 %v7705
    %10835 = vmatprep.subr.bf16.mxu0 %v7714
    %10836 = vmatpush1.bf16.msra.mxu0 %v7713
    %10837 = vmatprep.subr.bf16.mxu0 %v7722
    %10838 = vmatpush1.bf16.msra.mxu0 %v7721
    %10839 = vmatprep.subr.bf16.mxu0 %v7730
    %10840 = vmatpush1.bf16.msra.mxu0 %v7729
    %10841 = vmatprep.subr.bf16.mxu0 %v7738
    %10842 = vmatpush1.bf16.msra.mxu0 %v7737
    %10843 = vmatprep.subr.bf16.mxu0 %v7746
    %10844 = vmatpush1.bf16.msra.mxu0 %v7745
    %10845 = vmatprep.subr.bf16.mxu0 %v7754
    %10846 = vmatpush1.bf16.msra.mxu0 %v7753
    %10847 = vmatprep.mubr.bf16.mxu0 %v160
    %10848 = vmatmul.mubr.bf16.gmra.mrb[0].mxu0 %v159
    %v10849 = vpop.f32.mrb[0].mxu0
    %v10850 = vadd.f32 %v10809, %v10849
    %v10851 = vpop.f32.mrb[0].mxu0
    %v10852 = vadd.f32 %v10811, %v10851
    %v10853 = vpop.f32.mrb[0].mxu0
    %v10854 = vpop.f32.mrb[0].mxu0
    %10855 = vdwg.mxu0
    %10856 = vmatprep.subr.bf16.mxu0 %v7762
    %10857 = vmatpush1.bf16.msra.mxu0 %v7761
    %10858 = vmatprep.subr.bf16.mxu0 %v7770
    %10859 = vmatpush1.bf16.msra.mxu0 %v7769
    %10860 = vmatprep.subr.bf16.mxu0 %v7778
    %10861 = vmatpush1.bf16.msra.mxu0 %v7777
    %10862 = vmatprep.subr.bf16.mxu0 %v7786
    %10863 = vmatpush1.bf16.msra.mxu0 %v7785
    %10864 = vmatprep.subr.bf16.mxu0 %v7794
    %10865 = vmatpush1.bf16.msra.mxu0 %v7793
    %10866 = vmatprep.subr.bf16.mxu0 %v7802
    %10867 = vmatpush1.bf16.msra.mxu0 %v7801
    %10868 = vmatprep.subr.bf16.mxu0 %v7810
    %10869 = vmatpush1.bf16.msra.mxu0 %v7809
    %10870 = vmatprep.subr.bf16.mxu0 %v7818
    %10871 = vmatpush1.bf16.msra.mxu0 %v7817
    %10872 = vmatprep.subr.bf16.mxu0 %v7826
    %10873 = vmatpush1.bf16.msra.mxu0 %v7825
    %10874 = vmatprep.subr.bf16.mxu0 %v7834
    %10875 = vmatpush1.bf16.msra.mxu0 %v7833
    %10876 = vmatprep.subr.bf16.mxu0 %v7842
    %10877 = vmatpush1.bf16.msra.mxu0 %v7841
    %10878 = vmatprep.subr.bf16.mxu0 %v7850
    %10879 = vmatpush1.bf16.msra.mxu0 %v7849
    %10880 = vmatprep.subr.bf16.mxu0 %v7858
    %10881 = vmatpush1.bf16.msra.mxu0 %v7857
    %10882 = vmatprep.subr.bf16.mxu0 %v7866
    %10883 = vmatpush1.bf16.msra.mxu0 %v7865
    %10884 = vmatprep.subr.bf16.mxu0 %v7874
    %10885 = vmatpush1.bf16.msra.mxu0 %v7873
    %10886 = vmatprep.subr.bf16.mxu0 %v7882
    %10887 = vmatpush1.bf16.msra.mxu0 %v7881
    %10888 = vmatprep.mubr.bf16.mxu0 %v162
    %10889 = vmatmul.mubr.bf16.gmra.mrb[0].mxu0 %v161
    %v10890 = vpop.f32.mrb[0].mxu0
    %v10891 = vadd.f32 %v10850, %v10890
    %v10892 = vpop.f32.mrb[0].mxu0
    %v10893 = vadd.f32 %v10852, %v10892
    %v10894 = vpop.f32.mrb[0].mxu0
    %v10895 = vpop.f32.mrb[0].mxu0
    %10896 = vdwg.mxu0
    %10897 = vmatprep.subr.bf16.mxu0 %v6356
    %10898 = vmatpush1.bf16.msra.mxu0 %v6355
    %10899 = vmatprep.subr.bf16.mxu0 %v6364
    %10900 = vmatpush1.bf16.msra.mxu0 %v6363
    %10901 = vmatprep.subr.bf16.mxu0 %v6372
    %10902 = vmatpush1.bf16.msra.mxu0 %v6371
    %10903 = vmatprep.subr.bf16.mxu0 %v6380
    %10904 = vmatpush1.bf16.msra.mxu0 %v6379
    %10905 = vmatprep.subr.bf16.mxu0 %v6388
    %10906 = vmatpush1.bf16.msra.mxu0 %v6387
    %10907 = vmatprep.subr.bf16.mxu0 %v6396
    %10908 = vmatpush1.bf16.msra.mxu0 %v6395
    %10909 = vmatprep.subr.bf16.mxu0 %v6404
    %10910 = vmatpush1.bf16.msra.mxu0 %v6403
    %10911 = vmatprep.subr.bf16.mxu0 %v6412
    %10912 = vmatpush1.bf16.msra.mxu0 %v6411
    %10913 = vmatprep.subr.bf16.mxu0 %v6420
    %10914 = vmatpush1.bf16.msra.mxu0 %v6419
    %10915 = vmatprep.subr.bf16.mxu0 %v6428
    %10916 = vmatpush1.bf16.msra.mxu0 %v6427
    %10917 = vmatprep.subr.bf16.mxu0 %v6436
    %10918 = vmatpush1.bf16.msra.mxu0 %v6435
    %10919 = vmatprep.subr.bf16.mxu0 %v6444
    %10920 = vmatpush1.bf16.msra.mxu0 %v6443
    %10921 = vmatprep.subr.bf16.mxu0 %v6452
    %10922 = vmatpush1.bf16.msra.mxu0 %v6451
    %10923 = vmatprep.subr.bf16.mxu0 %v6460
    %10924 = vmatpush1.bf16.msra.mxu0 %v6459
    %10925 = vmatprep.subr.bf16.mxu0 %v6468
    %10926 = vmatpush1.bf16.msra.mxu0 %v6467
    %10927 = vmatprep.subr.bf16.mxu0 %v6476
    %10928 = vmatpush1.bf16.msra.mxu0 %v6475
    %10929 = vmatprep.mubr.bf16.mxu0 %v140
    %10930 = vmatmul.mubr.bf16.gmra.mrb[0].mxu0 %v139
    %v10931 = vpop.f32.mrb[0].mxu0
    %v10932 = vadd.f32 %v1728, %v10931
    %v10933 = vpop.f32.mrb[0].mxu0
    %v10934 = vadd.f32 %v1732, %v10933
    %v10935 = vpop.f32.mrb[0].mxu0
    %v10936 = vpop.f32.mrb[0].mxu0
    %10937 = vdwg.mxu0
    %10938 = vmatprep.subr.bf16.mxu0 %v6484
    %10939 = vmatpush1.bf16.msra.mxu0 %v6483
    %10940 = vmatprep.subr.bf16.mxu0 %v6492
    %10941 = vmatpush1.bf16.msra.mxu0 %v6491
    %10942 = vmatprep.subr.bf16.mxu0 %v6500
    %10943 = vmatpush1.bf16.msra.mxu0 %v6499
    %10944 = vmatprep.subr.bf16.mxu0 %v6508
    %10945 = vmatpush1.bf16.msra.mxu0 %v6507
    %10946 = vmatprep.subr.bf16.mxu0 %v6516
    %10947 = vmatpush1.bf16.msra.mxu0 %v6515
    %10948 = vmatprep.subr.bf16.mxu0 %v6524
    %10949 = vmatpush1.bf16.msra.mxu0 %v6523
    %10950 = vmatprep.subr.bf16.mxu0 %v6532
    %10951 = vmatpush1.bf16.msra.mxu0 %v6531
    %10952 = vmatprep.subr.bf16.mxu0 %v6540
    %10953 = vmatpush1.bf16.msra.mxu0 %v6539
    %10954 = vmatprep.subr.bf16.mxu0 %v6548
    %10955 = vmatpush1.bf16.msra.mxu0 %v6547
    %10956 = vmatprep.subr.bf16.mxu0 %v6556
    %10957 = vmatpush1.bf16.msra.mxu0 %v6555
    %10958 = vmatprep.subr.bf16.mxu0 %v6564
    %10959 = vmatpush1.bf16.msra.mxu0 %v6563
    %10960 = vmatprep.subr.bf16.mxu0 %v6572
    %10961 = vmatpush1.bf16.msra.mxu0 %v6571
    %10962 = vmatprep.subr.bf16.mxu0 %v6580
    %10963 = vmatpush1.bf16.msra.mxu0 %v6579
    %10964 = vmatprep.subr.bf16.mxu0 %v6588
    %10965 = vmatpush1.bf16.msra.mxu0 %v6587
    %10966 = vmatprep.subr.bf16.mxu0 %v6596
    %10967 = vmatpush1.bf16.msra.mxu0 %v6595
    %10968 = vmatprep.subr.bf16.mxu0 %v6604
    %10969 = vmatpush1.bf16.msra.mxu0 %v6603
    %10970 = vmatprep.mubr.bf16.mxu0 %v142
    %10971 = vmatmul.mubr.bf16.gmra.mrb[0].mxu0 %v141
    %v10972 = vpop.f32.mrb[0].mxu0
    %v10973 = vadd.f32 %v10932, %v10972
    %v10974 = vpop.f32.mrb[0].mxu0
    %v10975 = vadd.f32 %v10934, %v10974
    %v10976 = vpop.f32.mrb[0].mxu0
    %v10977 = vpop.f32.mrb[0].mxu0
    %10978 = vdwg.mxu0
    %10979 = vmatprep.subr.bf16.mxu0 %v6612
    %10980 = vmatpush1.bf16.msra.mxu0 %v6611
    %10981 = vmatprep.subr.bf16.mxu0 %v6620
    %10982 = vmatpush1.bf16.msra.mxu0 %v6619
    %10983 = vmatprep.subr.bf16.mxu0 %v6628
    %10984 = vmatpush1.bf16.msra.mxu0 %v6627
    %10985 = vmatprep.subr.bf16.mxu0 %v6636
    %10986 = vmatpush1.bf16.msra.mxu0 %v6635
    %10987 = vmatprep.subr.bf16.mxu0 %v6644
    %10988 = vmatpush1.bf16.msra.mxu0 %v6643
    %10989 = vmatprep.subr.bf16.mxu0 %v6652
    %10990 = vmatpush1.bf16.msra.mxu0 %v6651
    %10991 = vmatprep.subr.bf16.mxu0 %v6660
    %10992 = vmatpush1.bf16.msra.mxu0 %v6659
    %10993 = vmatprep.subr.bf16.mxu0 %v6668
    %10994 = vmatpush1.bf16.msra.mxu0 %v6667
    %10995 = vmatprep.subr.bf16.mxu0 %v6676
    %10996 = vmatpush1.bf16.msra.mxu0 %v6675
    %10997 = vmatprep.subr.bf16.mxu0 %v6684
    %10998 = vmatpush1.bf16.msra.mxu0 %v6683
    %10999 = vmatprep.subr.bf16.mxu0 %v6692
    %11000 = vmatpush1.bf16.msra.mxu0 %v6691
    %11001 = vmatprep.subr.bf16.mxu0 %v6700
    %11002 = vmatpush1.bf16.msra.mxu0 %v6699
    %11003 = vmatprep.subr.bf16.mxu0 %v6708
    %11004 = vmatpush1.bf16.msra.mxu0 %v6707
    %11005 = vmatprep.subr.bf16.mxu0 %v6716
    %11006 = vmatpush1.bf16.msra.mxu0 %v6715
    %11007 = vmatprep.subr.bf16.mxu0 %v6724
    %11008 = vmatpush1.bf16.msra.mxu0 %v6723
    %11009 = vmatprep.subr.bf16.mxu0 %v6732
    %11010 = vmatpush1.bf16.msra.mxu0 %v6731
    %11011 = vmatprep.mubr.bf16.mxu0 %v144
    %11012 = vmatmul.mubr.bf16.gmra.mrb[0].mxu0 %v143
    %v11013 = vpop.f32.mrb[0].mxu0
    %v11014 = vadd.f32 %v10973, %v11013
    %v11015 = vpop.f32.mrb[0].mxu0
    %v11016 = vadd.f32 %v10975, %v11015
    %v11017 = vpop.f32.mrb[0].mxu0
    %v11018 = vpop.f32.mrb[0].mxu0
    %11019 = vdwg.mxu0
    %11020 = vmatprep.subr.bf16.mxu0 %v6740
    %11021 = vmatpush1.bf16.msra.mxu0 %v6739
    %11022 = vmatprep.subr.bf16.mxu0 %v6748
    %11023 = vmatpush1.bf16.msra.mxu0 %v6747
    %11024 = vmatprep.subr.bf16.mxu0 %v6756
    %11025 = vmatpush1.bf16.msra.mxu0 %v6755
    %11026 = vmatprep.subr.bf16.mxu0 %v6764
    %11027 = vmatpush1.bf16.msra.mxu0 %v6763
    %11028 = vmatprep.subr.bf16.mxu0 %v6772
    %11029 = vmatpush1.bf16.msra.mxu0 %v6771
    %11030 = vmatprep.subr.bf16.mxu0 %v6780
    %11031 = vmatpush1.bf16.msra.mxu0 %v6779
    %11032 = vmatprep.subr.bf16.mxu0 %v6788
    %11033 = vmatpush1.bf16.msra.mxu0 %v6787
    %11034 = vmatprep.subr.bf16.mxu0 %v6796
    %11035 = vmatpush1.bf16.msra.mxu0 %v6795
    %11036 = vmatprep.subr.bf16.mxu0 %v6804
    %11037 = vmatpush1.bf16.msra.mxu0 %v6803
    %11038 = vmatprep.subr.bf16.mxu0 %v6812
    %11039 = vmatpush1.bf16.msra.mxu0 %v6811
    %11040 = vmatprep.subr.bf16.mxu0 %v6820
    %11041 = vmatpush1.bf16.msra.mxu0 %v6819
    %11042 = vmatprep.subr.bf16.mxu0 %v6828
    %11043 = vmatpush1.bf16.msra.mxu0 %v6827
    %11044 = vmatprep.subr.bf16.mxu0 %v6836
    %11045 = vmatpush1.bf16.msra.mxu0 %v6835
    %11046 = vmatprep.subr.bf16.mxu0 %v6844
    %11047 = vmatpush1.bf16.msra.mxu0 %v6843
    %11048 = vmatprep.subr.bf16.mxu0 %v6852
    %11049 = vmatpush1.bf16.msra.mxu0 %v6851
    %11050 = vmatprep.subr.bf16.mxu0 %v6860
    %11051 = vmatpush1.bf16.msra.mxu0 %v6859
    %11052 = vmatprep.mubr.bf16.mxu0 %v146
    %11053 = vmatmul.mubr.bf16.gmra.mrb[0].mxu0 %v145
    %v11054 = vpop.f32.mrb[0].mxu0
    %v11055 = vadd.f32 %v11014, %v11054
    %v11056 = vpop.f32.mrb[0].mxu0
    %v11057 = vadd.f32 %v11016, %v11056
    %v11058 = vpop.f32.mrb[0].mxu0
    %v11059 = vpop.f32.mrb[0].mxu0
    %11060 = vdwg.mxu0
    %11061 = vmatprep.subr.bf16.mxu0 %v6868
    %11062 = vmatpush1.bf16.msra.mxu0 %v6867
    %11063 = vmatprep.subr.bf16.mxu0 %v6876
    %11064 = vmatpush1.bf16.msra.mxu0 %v6875
    %11065 = vmatprep.subr.bf16.mxu0 %v6884
    %11066 = vmatpush1.bf16.msra.mxu0 %v6883
    %11067 = vmatprep.subr.bf16.mxu0 %v6892
    %11068 = vmatpush1.bf16.msra.mxu0 %v6891
    %11069 = vmatprep.subr.bf16.mxu0 %v6900
    %11070 = vmatpush1.bf16.msra.mxu0 %v6899
    %11071 = vmatprep.subr.bf16.mxu0 %v6908
    %11072 = vmatpush1.bf16.msra.mxu0 %v6907
    %11073 = vmatprep.subr.bf16.mxu0 %v6916
    %11074 = vmatpush1.bf16.msra.mxu0 %v6915
    %11075 = vmatprep.subr.bf16.mxu0 %v6924
    %11076 = vmatpush1.bf16.msra.mxu0 %v6923
    %11077 = vmatprep.subr.bf16.mxu0 %v6932
    %11078 = vmatpush1.bf16.msra.mxu0 %v6931
    %11079 = vmatprep.subr.bf16.mxu0 %v6940
    %11080 = vmatpush1.bf16.msra.mxu0 %v6939
    %11081 = vmatprep.subr.bf16.mxu0 %v6948
    %11082 = vmatpush1.bf16.msra.mxu0 %v6947
    %11083 = vmatprep.subr.bf16.mxu0 %v6956
    %11084 = vmatpush1.bf16.msra.mxu0 %v6955
    %11085 = vmatprep.subr.bf16.mxu0 %v6964
    %11086 = vmatpush1.bf16.msra.mxu0 %v6963
    %11087 = vmatprep.subr.bf16.mxu0 %v6972
    %11088 = vmatpush1.bf16.msra.mxu0 %v6971
    %11089 = vmatprep.subr.bf16.mxu0 %v6980
    %11090 = vmatpush1.bf16.msra.mxu0 %v6979
    %11091 = vmatprep.subr.bf16.mxu0 %v6988
    %11092 = vmatpush1.bf16.msra.mxu0 %v6987
    %11093 = vmatprep.mubr.bf16.mxu0 %v148
    %11094 = vmatmul.mubr.bf16.gmra.mrb[0].mxu0 %v147
    %v11095 = vpop.f32.mrb[0].mxu0
    %v11096 = vadd.f32 %v11055, %v11095
    %v11097 = vpop.f32.mrb[0].mxu0
    %v11098 = vadd.f32 %v11057, %v11097
    %v11099 = vpop.f32.mrb[0].mxu0
    %v11100 = vpop.f32.mrb[0].mxu0
    %11101 = vdwg.mxu0
    %11102 = vmatprep.subr.bf16.mxu0 %v6996
    %11103 = vmatpush1.bf16.msra.mxu0 %v6995
    %11104 = vmatprep.subr.bf16.mxu0 %v7004
    %11105 = vmatpush1.bf16.msra.mxu0 %v7003
    %11106 = vmatprep.subr.bf16.mxu0 %v7012
    %11107 = vmatpush1.bf16.msra.mxu0 %v7011
    %11108 = vmatprep.subr.bf16.mxu0 %v7020
    %11109 = vmatpush1.bf16.msra.mxu0 %v7019
    %11110 = vmatprep.subr.bf16.mxu0 %v7028
    %11111 = vmatpush1.bf16.msra.mxu0 %v7027
    %11112 = vmatprep.subr.bf16.mxu0 %v7036
    %11113 = vmatpush1.bf16.msra.mxu0 %v7035
    %11114 = vmatprep.subr.bf16.mxu0 %v7044
    %11115 = vmatpush1.bf16.msra.mxu0 %v7043
    %11116 = vmatprep.subr.bf16.mxu0 %v7052
    %11117 = vmatpush1.bf16.msra.mxu0 %v7051
    %11118 = vmatprep.subr.bf16.mxu0 %v7060
    %11119 = vmatpush1.bf16.msra.mxu0 %v7059
    %11120 = vmatprep.subr.bf16.mxu0 %v7068
    %11121 = vmatpush1.bf16.msra.mxu0 %v7067
    %11122 = vmatprep.subr.bf16.mxu0 %v7076
    %11123 = vmatpush1.bf16.msra.mxu0 %v7075
    %11124 = vmatprep.subr.bf16.mxu0 %v7084
    %11125 = vmatpush1.bf16.msra.mxu0 %v7083
    %11126 = vmatprep.subr.bf16.mxu0 %v7092
    %11127 = vmatpush1.bf16.msra.mxu0 %v7091
    %11128 = vmatprep.subr.bf16.mxu0 %v7100
    %11129 = vmatpush1.bf16.msra.mxu0 %v7099
    %11130 = vmatprep.subr.bf16.mxu0 %v7108
    %11131 = vmatpush1.bf16.msra.mxu0 %v7107
    %11132 = vmatprep.subr.bf16.mxu0 %v7116
    %11133 = vmatpush1.bf16.msra.mxu0 %v7115
    %11134 = vmatprep.mubr.bf16.mxu0 %v150
    %11135 = vmatmul.mubr.bf16.gmra.mrb[0].mxu0 %v149
    %v11136 = vpop.f32.mrb[0].mxu0
    %v11137 = vadd.f32 %v11096, %v11136
    %v11138 = vpop.f32.mrb[0].mxu0
    %v11139 = vadd.f32 %v11098, %v11138
    %v11140 = vpop.f32.mrb[0].mxu0
    %v11141 = vpop.f32.mrb[0].mxu0
    %11142 = vdwg.mxu0
    %11143 = vmatprep.subr.bf16.mxu0 %v7124
    %11144 = vmatpush1.bf16.msra.mxu0 %v7123
    %11145 = vmatprep.subr.bf16.mxu0 %v7132
    %11146 = vmatpush1.bf16.msra.mxu0 %v7131
    %11147 = vmatprep.subr.bf16.mxu0 %v7140
    %11148 = vmatpush1.bf16.msra.mxu0 %v7139
    %11149 = vmatprep.subr.bf16.mxu0 %v7148
    %11150 = vmatpush1.bf16.msra.mxu0 %v7147
    %11151 = vmatprep.subr.bf16.mxu0 %v7156
    %11152 = vmatpush1.bf16.msra.mxu0 %v7155
    %11153 = vmatprep.subr.bf16.mxu0 %v7164
    %11154 = vmatpush1.bf16.msra.mxu0 %v7163
    %11155 = vmatprep.subr.bf16.mxu0 %v7172
    %11156 = vmatpush1.bf16.msra.mxu0 %v7171
    %11157 = vmatprep.subr.bf16.mxu0 %v7180
    %11158 = vmatpush1.bf16.msra.mxu0 %v7179
    %11159 = vmatprep.subr.bf16.mxu0 %v7188
    %11160 = vmatpush1.bf16.msra.mxu0 %v7187
    %11161 = vmatprep.subr.bf16.mxu0 %v7196
    %11162 = vmatpush1.bf16.msra.mxu0 %v7195
    %11163 = vmatprep.subr.bf16.mxu0 %v7204
    %11164 = vmatpush1.bf16.msra.mxu0 %v7203
    %11165 = vmatprep.subr.bf16.mxu0 %v7212
    %11166 = vmatpush1.bf16.msra.mxu0 %v7211
    %11167 = vmatprep.subr.bf16.mxu0 %v7220
    %11168 = vmatpush1.bf16.msra.mxu0 %v7219
    %11169 = vmatprep.subr.bf16.mxu0 %v7228
    %11170 = vmatpush1.bf16.msra.mxu0 %v7227
    %11171 = vmatprep.subr.bf16.mxu0 %v7236
    %11172 = vmatpush1.bf16.msra.mxu0 %v7235
    %11173 = vmatprep.subr.bf16.mxu0 %v7244
    %11174 = vmatpush1.bf16.msra.mxu0 %v7243
    %11175 = vmatprep.mubr.bf16.mxu0 %v152
    %11176 = vmatmul.mubr.bf16.gmra.mrb[0].mxu0 %v151
    %v11177 = vpop.f32.mrb[0].mxu0
    %v11178 = vadd.f32 %v11137, %v11177
    %v11179 = vpop.f32.mrb[0].mxu0
    %v11180 = vadd.f32 %v11139, %v11179
    %v11181 = vpop.f32.mrb[0].mxu0
    %v11182 = vpop.f32.mrb[0].mxu0
    %11183 = vdwg.mxu0
    %11184 = vmatprep.subr.bf16.mxu0 %v7252
    %11185 = vmatpush1.bf16.msra.mxu0 %v7251
    %11186 = vmatprep.subr.bf16.mxu0 %v7260
    %11187 = vmatpush1.bf16.msra.mxu0 %v7259
    %11188 = vmatprep.subr.bf16.mxu0 %v7268
    %11189 = vmatpush1.bf16.msra.mxu0 %v7267
    %11190 = vmatprep.subr.bf16.mxu0 %v7276
    %11191 = vmatpush1.bf16.msra.mxu0 %v7275
    %11192 = vmatprep.subr.bf16.mxu0 %v7284
    %11193 = vmatpush1.bf16.msra.mxu0 %v7283
    %11194 = vmatprep.subr.bf16.mxu0 %v7292
    %11195 = vmatpush1.bf16.msra.mxu0 %v7291
    %11196 = vmatprep.subr.bf16.mxu0 %v7300
    %11197 = vmatpush1.bf16.msra.mxu0 %v7299
    %11198 = vmatprep.subr.bf16.mxu0 %v7308
    %11199 = vmatpush1.bf16.msra.mxu0 %v7307
    %11200 = vmatprep.subr.bf16.mxu0 %v7316
    %11201 = vmatpush1.bf16.msra.mxu0 %v7315
    %11202 = vmatprep.subr.bf16.mxu0 %v7324
    %11203 = vmatpush1.bf16.msra.mxu0 %v7323
    %11204 = vmatprep.subr.bf16.mxu0 %v7332
    %11205 = vmatpush1.bf16.msra.mxu0 %v7331
    %11206 = vmatprep.subr.bf16.mxu0 %v7340
    %11207 = vmatpush1.bf16.msra.mxu0 %v7339
    %11208 = vmatprep.subr.bf16.mxu0 %v7348
    %11209 = vmatpush1.bf16.msra.mxu0 %v7347
    %11210 = vmatprep.subr.bf16.mxu0 %v7356
    %11211 = vmatpush1.bf16.msra.mxu0 %v7355
    %11212 = vmatprep.subr.bf16.mxu0 %v7364
    %11213 = vmatpush1.bf16.msra.mxu0 %v7363
    %11214 = vmatprep.subr.bf16.mxu0 %v7372
    %11215 = vmatpush1.bf16.msra.mxu0 %v7371
    %11216 = vmatprep.mubr.bf16.mxu0 %v154
    %11217 = vmatmul.mubr.bf16.gmra.mrb[0].mxu0 %v153
    %v11218 = vpop.f32.mrb[0].mxu0
    %v11219 = vadd.f32 %v11178, %v11218
    %v11220 = vpop.f32.mrb[0].mxu0
    %v11221 = vadd.f32 %v11180, %v11220
    %v11222 = vpop.f32.mrb[0].mxu0
    %v11223 = vpop.f32.mrb[0].mxu0
    %11224 = vdwg.mxu0
    %11225 = vmatprep.subr.bf16.mxu0 %v7380
    %11226 = vmatpush1.bf16.msra.mxu0 %v7379
    %11227 = vmatprep.subr.bf16.mxu0 %v7388
    %11228 = vmatpush1.bf16.msra.mxu0 %v7387
    %11229 = vmatprep.subr.bf16.mxu0 %v7396
    %11230 = vmatpush1.bf16.msra.mxu0 %v7395
    %11231 = vmatprep.subr.bf16.mxu0 %v7404
    %11232 = vmatpush1.bf16.msra.mxu0 %v7403
    %11233 = vmatprep.subr.bf16.mxu0 %v7412
    %11234 = vmatpush1.bf16.msra.mxu0 %v7411
    %11235 = vmatprep.subr.bf16.mxu0 %v7420
    %11236 = vmatpush1.bf16.msra.mxu0 %v7419
    %11237 = vmatprep.subr.bf16.mxu0 %v7428
    %11238 = vmatpush1.bf16.msra.mxu0 %v7427
    %11239 = vmatprep.subr.bf16.mxu0 %v7436
    %11240 = vmatpush1.bf16.msra.mxu0 %v7435
    %11241 = vmatprep.subr.bf16.mxu0 %v7444
    %11242 = vmatpush1.bf16.msra.mxu0 %v7443
    %11243 = vmatprep.subr.bf16.mxu0 %v7452
    %11244 = vmatpush1.bf16.msra.mxu0 %v7451
    %11245 = vmatprep.subr.bf16.mxu0 %v7460
    %11246 = vmatpush1.bf16.msra.mxu0 %v7459
    %11247 = vmatprep.subr.bf16.mxu0 %v7468
    %11248 = vmatpush1.bf16.msra.mxu0 %v7467
    %11249 = vmatprep.subr.bf16.mxu0 %v7476
    %11250 = vmatpush1.bf16.msra.mxu0 %v7475
    %11251 = vmatprep.subr.bf16.mxu0 %v7484
    %11252 = vmatpush1.bf16.msra.mxu0 %v7483
    %11253 = vmatprep.subr.bf16.mxu0 %v7492
    %11254 = vmatpush1.bf16.msra.mxu0 %v7491
    %11255 = vmatprep.subr.bf16.mxu0 %v7500
    %11256 = vmatpush1.bf16.msra.mxu0 %v7499
    %11257 = vmatprep.mubr.bf16.mxu0 %v156
    %11258 = vmatmul.mubr.bf16.gmra.mrb[0].mxu0 %v155
    %v11259 = vpop.f32.mrb[0].mxu0
    %v11260 = vadd.f32 %v11219, %v11259
    %v11261 = vpop.f32.mrb[0].mxu0
    %v11262 = vadd.f32 %v11221, %v11261
    %v11263 = vpop.f32.mrb[0].mxu0
    %v11264 = vpop.f32.mrb[0].mxu0
    %11265 = vdwg.mxu0
    %11266 = vmatprep.subr.bf16.mxu0 %v7508
    %11267 = vmatpush1.bf16.msra.mxu0 %v7507
    %11268 = vmatprep.subr.bf16.mxu0 %v7516
    %11269 = vmatpush1.bf16.msra.mxu0 %v7515
    %11270 = vmatprep.subr.bf16.mxu0 %v7524
    %11271 = vmatpush1.bf16.msra.mxu0 %v7523
    %11272 = vmatprep.subr.bf16.mxu0 %v7532
    %11273 = vmatpush1.bf16.msra.mxu0 %v7531
    %11274 = vmatprep.subr.bf16.mxu0 %v7540
    %11275 = vmatpush1.bf16.msra.mxu0 %v7539
    %11276 = vmatprep.subr.bf16.mxu0 %v7548
    %11277 = vmatpush1.bf16.msra.mxu0 %v7547
    %11278 = vmatprep.subr.bf16.mxu0 %v7556
    %11279 = vmatpush1.bf16.msra.mxu0 %v7555
    %11280 = vmatprep.subr.bf16.mxu0 %v7564
    %11281 = vmatpush1.bf16.msra.mxu0 %v7563
    %11282 = vmatprep.subr.bf16.mxu0 %v7572
    %11283 = vmatpush1.bf16.msra.mxu0 %v7571
    %11284 = vmatprep.subr.bf16.mxu0 %v7580
    %11285 = vmatpush1.bf16.msra.mxu0 %v7579
    %11286 = vmatprep.subr.bf16.mxu0 %v7588
    %11287 = vmatpush1.bf16.msra.mxu0 %v7587
    %11288 = vmatprep.subr.bf16.mxu0 %v7596
    %11289 = vmatpush1.bf16.msra.mxu0 %v7595
    %11290 = vmatprep.subr.bf16.mxu0 %v7604
    %11291 = vmatpush1.bf16.msra.mxu0 %v7603
    %11292 = vmatprep.subr.bf16.mxu0 %v7612
    %11293 = vmatpush1.bf16.msra.mxu0 %v7611
    %11294 = vmatprep.subr.bf16.mxu0 %v7620
    %11295 = vmatpush1.bf16.msra.mxu0 %v7619
    %11296 = vmatprep.subr.bf16.mxu0 %v7628
    %11297 = vmatpush1.bf16.msra.mxu0 %v7627
    %11298 = vmatprep.mubr.bf16.mxu0 %v158
    %11299 = vmatmul.mubr.bf16.gmra.mrb[0].mxu0 %v157
    %v11300 = vpop.f32.mrb[0].mxu0
    %v11301 = vadd.f32 %v11260, %v11300
    %v11302 = vpop.f32.mrb[0].mxu0
    %v11303 = vadd.f32 %v11262, %v11302
    %v11304 = vpop.f32.mrb[0].mxu0
    %v11305 = vpop.f32.mrb[0].mxu0
    %11306 = vdwg.mxu0
    %11307 = vmatprep.subr.bf16.mxu0 %v7636
    %11308 = vmatpush1.bf16.msra.mxu0 %v7635
    %11309 = vmatprep.subr.bf16.mxu0 %v7644
    %11310 = vmatpush1.bf16.msra.mxu0 %v7643
    %11311 = vmatprep.subr.bf16.mxu0 %v7652
    %11312 = vmatpush1.bf16.msra.mxu0 %v7651
    %11313 = vmatprep.subr.bf16.mxu0 %v7660
    %11314 = vmatpush1.bf16.msra.mxu0 %v7659
    %11315 = vmatprep.subr.bf16.mxu0 %v7668
    %11316 = vmatpush1.bf16.msra.mxu0 %v7667
    %11317 = vmatprep.subr.bf16.mxu0 %v7676
    %11318 = vmatpush1.bf16.msra.mxu0 %v7675
    %11319 = vmatprep.subr.bf16.mxu0 %v7684
    %11320 = vmatpush1.bf16.msra.mxu0 %v7683
    %11321 = vmatprep.subr.bf16.mxu0 %v7692
    %11322 = vmatpush1.bf16.msra.mxu0 %v7691
    %11323 = vmatprep.subr.bf16.mxu0 %v7700
    %11324 = vmatpush1.bf16.msra.mxu0 %v7699
    %11325 = vmatprep.subr.bf16.mxu0 %v7708
    %11326 = vmatpush1.bf16.msra.mxu0 %v7707
    %11327 = vmatprep.subr.bf16.mxu0 %v7716
    %11328 = vmatpush1.bf16.msra.mxu0 %v7715
    %11329 = vmatprep.subr.bf16.mxu0 %v7724
    %11330 = vmatpush1.bf16.msra.mxu0 %v7723
    %11331 = vmatprep.subr.bf16.mxu0 %v7732
    %11332 = vmatpush1.bf16.msra.mxu0 %v7731
    %11333 = vmatprep.subr.bf16.mxu0 %v7740
    %11334 = vmatpush1.bf16.msra.mxu0 %v7739
    %11335 = vmatprep.subr.bf16.mxu0 %v7748
    %11336 = vmatpush1.bf16.msra.mxu0 %v7747
    %11337 = vmatprep.subr.bf16.mxu0 %v7756
    %11338 = vmatpush1.bf16.msra.mxu0 %v7755
    %11339 = vmatprep.mubr.bf16.mxu0 %v160
    %11340 = vmatmul.mubr.bf16.gmra.mrb[0].mxu0 %v159
    %v11341 = vpop.f32.mrb[0].mxu0
    %v11342 = vadd.f32 %v11301, %v11341
    %v11343 = vpop.f32.mrb[0].mxu0
    %v11344 = vadd.f32 %v11303, %v11343
    %v11345 = vpop.f32.mrb[0].mxu0
    %v11346 = vpop.f32.mrb[0].mxu0
    %11347 = vdwg.mxu0
    %11348 = vmatprep.subr.bf16.mxu0 %v7764
    %11349 = vmatpush1.bf16.msra.mxu0 %v7763
    %11350 = vmatprep.subr.bf16.mxu0 %v7772
    %11351 = vmatpush1.bf16.msra.mxu0 %v7771
    %11352 = vmatprep.subr.bf16.mxu0 %v7780
    %11353 = vmatpush1.bf16.msra.mxu0 %v7779
    %11354 = vmatprep.subr.bf16.mxu0 %v7788
    %11355 = vmatpush1.bf16.msra.mxu0 %v7787
    %11356 = vmatprep.subr.bf16.mxu0 %v7796
    %11357 = vmatpush1.bf16.msra.mxu0 %v7795
    %11358 = vmatprep.subr.bf16.mxu0 %v7804
    %11359 = vmatpush1.bf16.msra.mxu0 %v7803
    %11360 = vmatprep.subr.bf16.mxu0 %v7812
    %11361 = vmatpush1.bf16.msra.mxu0 %v7811
    %11362 = vmatprep.subr.bf16.mxu0 %v7820
    %11363 = vmatpush1.bf16.msra.mxu0 %v7819
    %11364 = vmatprep.subr.bf16.mxu0 %v7828
    %11365 = vmatpush1.bf16.msra.mxu0 %v7827
    %11366 = vmatprep.subr.bf16.mxu0 %v7836
    %11367 = vmatpush1.bf16.msra.mxu0 %v7835
    %11368 = vmatprep.subr.bf16.mxu0 %v7844
    %11369 = vmatpush1.bf16.msra.mxu0 %v7843
    %11370 = vmatprep.subr.bf16.mxu0 %v7852
    %11371 = vmatpush1.bf16.msra.mxu0 %v7851
    %11372 = vmatprep.subr.bf16.mxu0 %v7860
    %11373 = vmatpush1.bf16.msra.mxu0 %v7859
    %11374 = vmatprep.subr.bf16.mxu0 %v7868
    %11375 = vmatpush1.bf16.msra.mxu0 %v7867
    %11376 = vmatprep.subr.bf16.mxu0 %v7876
    %11377 = vmatpush1.bf16.msra.mxu0 %v7875
    %11378 = vmatprep.subr.bf16.mxu0 %v7884
    %11379 = vmatpush1.bf16.msra.mxu0 %v7883
    %11380 = vmatprep.mubr.bf16.mxu0 %v162
    %11381 = vmatmul.mubr.bf16.gmra.mrb[0].mxu0 %v161
    %v11382 = vpop.f32.mrb[0].mxu0
    %v11383 = vadd.f32 %v11342, %v11382
    %v11384 = vpop.f32.mrb[0].mxu0
    %v11385 = vadd.f32 %v11344, %v11384
    %v11386 = vpop.f32.mrb[0].mxu0
    %v11387 = vpop.f32.mrb[0].mxu0
    %11388 = vdwg.mxu0
    %v11389 = vmul.f32 %v9907, 0.2
    %v11390 = vmul.f32 %v9909, 0.2
    %v11391 = vmul.f32 %v10399, 0.2
    %v11392 = vmul.f32 %v10401, 0.2
    %v11393 = vmul.f32 %v10891, 0.2
    %v11394 = vmul.f32 %v10893, 0.2
    %v11395 = vmul.f32 %v11383, 0.2
    %v11396 = vmul.f32 %v11385, 0.2
    %v11397 = vmax.f32 %v9907, %v11389
    %v11398 = vmax.f32 %v9909, %v11390
    %v11399 = vmax.f32 %v10399, %v11391
    %v11400 = vmax.f32 %v10401, %v11392
    %v11401 = vmax.f32 %v10891, %v11393
    %v11402 = vmax.f32 %v10893, %v11394
    %v11403 = vmax.f32 %v11383, %v11395
    %v11404 = vmax.f32 %v11385, %v11396
    %v11405 = vpack.c.bf16 %v11397, %v11397
    %v11406 = vpack.c.bf16 %v11398, %v11398
    %v11407 = vpack.c.bf16 %v11399, %v11399
    %v11408 = vpack.c.bf16 %v11400, %v11400
    %v11409 = vpack.c.bf16 %v11401, %v11401
    %v11410 = vpack.c.bf16 %v11402, %v11402
    %v11411 = vpack.c.bf16 %v11403, %v11403
    %v11412 = vpack.c.bf16 %v11404, %v11404
    %v11413 = vld [vmem:[#allocation8] sm:$0xff]
    %v11414 = vld [vmem:[#allocation8 + $0x8] sm:$0xff]
    %v11415 = vld [vmem:[#allocation8 + $0x10] sm:$0xff]
    %v11416 = vld [vmem:[#allocation8 + $0x18] sm:$0xff]
    %v11417 = vld [vmem:[#allocation8 + $0x20] sm:$0xff]
    %v11418 = vld [vmem:[#allocation8 + $0x28] sm:$0xff]
    %v11419 = vld [vmem:[#allocation8 + $0x30] sm:$0xff]
    %v11420 = vld [vmem:[#allocation8 + $0x38] sm:$0xff]
    %v11421 = vld [vmem:[#allocation8 + $0x40] sm:$0xff]
    %v11422 = vld [vmem:[#allocation8 + $0x48] sm:$0xff]
    %v11423 = vld [vmem:[#allocation8 + $0x50] sm:$0xff]
    %v11424 = vld [vmem:[#allocation8 + $0x58] sm:$0xff]
    %v11425 = vld [vmem:[#allocation8 + $0x60] sm:$0xff]
    %v11426 = vld [vmem:[#allocation8 + $0x68] sm:$0xff]
    %v11427 = vld [vmem:[#allocation8 + $0x70] sm:$0xff]
    %v11428 = vld [vmem:[#allocation8 + $0x78] sm:$0xff]
    %v11429 = vld [vmem:[#allocation8 + $0x80] sm:$0xff]
    %v11430 = vld [vmem:[#allocation8 + $0x88] sm:$0xff]
    %v11431 = vld [vmem:[#allocation8 + $0x90] sm:$0xff]
    %v11432 = vld [vmem:[#allocation8 + $0x98] sm:$0xff]
    %v11433 = vld [vmem:[#allocation8 + $0xa0] sm:$0xff]
    %v11434 = vld [vmem:[#allocation8 + $0xa8] sm:$0xff]
    %v11435 = vld [vmem:[#allocation8 + $0xb0] sm:$0xff]
    %v11436 = vld [vmem:[#allocation8 + $0xb8] sm:$0xff]
    %v11437 = vld [vmem:[#allocation8 + $0xc0] sm:$0xff]
    %v11438 = vld [vmem:[#allocation8 + $0xc8] sm:$0xff]
    %v11439 = vld [vmem:[#allocation8 + $0xd0] sm:$0xff]
    %v11440 = vld [vmem:[#allocation8 + $0xd8] sm:$0xff]
    %v11441 = vld [vmem:[#allocation8 + $0xe0] sm:$0xff]
    %v11442 = vld [vmem:[#allocation8 + $0xe8] sm:$0xff]
    %v11443 = vld [vmem:[#allocation8 + $0xf0] sm:$0xff]
    %v11444 = vld [vmem:[#allocation8 + $0xf8] sm:$0xff]
    %v11445 = vld [vmem:[#allocation8 + $0x100] sm:$0xff]
    %v11446 = vld [vmem:[#allocation8 + $0x108] sm:$0xff]
    %v11447 = vld [vmem:[#allocation8 + $0x110] sm:$0xff]
    %v11448 = vld [vmem:[#allocation8 + $0x118] sm:$0xff]
    %v11449 = vld [vmem:[#allocation8 + $0x120] sm:$0xff]
    %v11450 = vld [vmem:[#allocation8 + $0x128] sm:$0xff]
    %v11451 = vld [vmem:[#allocation8 + $0x130] sm:$0xff]
    %v11452 = vld [vmem:[#allocation8 + $0x138] sm:$0xff]
    %v11453 = vld [vmem:[#allocation8 + $0x140] sm:$0xff]
    %v11454 = vld [vmem:[#allocation8 + $0x148] sm:$0xff]
    %v11455 = vld [vmem:[#allocation8 + $0x150] sm:$0xff]
    %v11456 = vld [vmem:[#allocation8 + $0x158] sm:$0xff]
    %v11457 = vld [vmem:[#allocation8 + $0x160] sm:$0xff]
    %v11458 = vld [vmem:[#allocation8 + $0x168] sm:$0xff]
    %v11459 = vld [vmem:[#allocation8 + $0x170] sm:$0xff]
    %v11460 = vld [vmem:[#allocation8 + $0x178] sm:$0xff]
    %v11461 = vld [vmem:[#allocation8 + $0x180] sm:$0xff]
    %v11462 = vld [vmem:[#allocation8 + $0x188] sm:$0xff]
    %v11463 = vld [vmem:[#allocation8 + $0x190] sm:$0xff]
    %v11464 = vld [vmem:[#allocation8 + $0x198] sm:$0xff]
    %v11465 = vld [vmem:[#allocation8 + $0x1a0] sm:$0xff]
    %v11466 = vld [vmem:[#allocation8 + $0x1a8] sm:$0xff]
    %v11467 = vld [vmem:[#allocation8 + $0x1b0] sm:$0xff]
    %v11468 = vld [vmem:[#allocation8 + $0x1b8] sm:$0xff]
    %v11469 = vld [vmem:[#allocation8 + $0x1c0] sm:$0xff]
    %v11470 = vld [vmem:[#allocation8 + $0x1c8] sm:$0xff]
    %v11471 = vld [vmem:[#allocation8 + $0x1d0] sm:$0xff]
    %v11472 = vld [vmem:[#allocation8 + $0x1d8] sm:$0xff]
    %v11473 = vld [vmem:[#allocation8 + $0x1e0] sm:$0xff]
    %v11474 = vld [vmem:[#allocation8 + $0x1e8] sm:$0xff]
    %v11475 = vld [vmem:[#allocation8 + $0x1f0] sm:$0xff]
    %v11476 = vld [vmem:[#allocation8 + $0x1f8] sm:$0xff]
    %v11477 = vld [vmem:[#allocation8 + $0x200] sm:$0xff]
    %v11478 = vld [vmem:[#allocation8 + $0x208] sm:$0xff]
    %v11479 = vld [vmem:[#allocation8 + $0x210] sm:$0xff]
    %v11480 = vld [vmem:[#allocation8 + $0x218] sm:$0xff]
    %v11481 = vld [vmem:[#allocation8 + $0x220] sm:$0xff]
    %v11482 = vld [vmem:[#allocation8 + $0x228] sm:$0xff]
    %v11483 = vld [vmem:[#allocation8 + $0x230] sm:$0xff]
    %v11484 = vld [vmem:[#allocation8 + $0x238] sm:$0xff]
    %v11485 = vld [vmem:[#allocation8 + $0x240] sm:$0xff]
    %v11486 = vld [vmem:[#allocation8 + $0x248] sm:$0xff]
    %v11487 = vld [vmem:[#allocation8 + $0x250] sm:$0xff]
    %v11488 = vld [vmem:[#allocation8 + $0x258] sm:$0xff]
    %v11489 = vld [vmem:[#allocation8 + $0x260] sm:$0xff]
    %v11490 = vld [vmem:[#allocation8 + $0x268] sm:$0xff]
    %v11491 = vld [vmem:[#allocation8 + $0x270] sm:$0xff]
    %v11492 = vld [vmem:[#allocation8 + $0x278] sm:$0xff]
    %v11493 = vld [vmem:[#allocation8 + $0x280] sm:$0xff]
    %v11494 = vld [vmem:[#allocation8 + $0x288] sm:$0xff]
    %v11495 = vld [vmem:[#allocation8 + $0x290] sm:$0xff]
    %v11496 = vld [vmem:[#allocation8 + $0x298] sm:$0xff]
    %v11497 = vld [vmem:[#allocation8 + $0x2a0] sm:$0xff]
    %v11498 = vld [vmem:[#allocation8 + $0x2a8] sm:$0xff]
    %v11499 = vld [vmem:[#allocation8 + $0x2b0] sm:$0xff]
    %v11500 = vld [vmem:[#allocation8 + $0x2b8] sm:$0xff]
    %v11501 = vld [vmem:[#allocation8 + $0x2c0] sm:$0xff]
    %v11502 = vld [vmem:[#allocation8 + $0x2c8] sm:$0xff]
    %v11503 = vld [vmem:[#allocation8 + $0x2d0] sm:$0xff]
    %v11504 = vld [vmem:[#allocation8 + $0x2d8] sm:$0xff]
    %v11505 = vld [vmem:[#allocation8 + $0x2e0] sm:$0xff]
    %v11506 = vld [vmem:[#allocation8 + $0x2e8] sm:$0xff]
    %v11507 = vld [vmem:[#allocation8 + $0x2f0] sm:$0xff]
    %v11508 = vld [vmem:[#allocation8 + $0x2f8] sm:$0xff]
    %v11509 = vld [vmem:[#allocation8 + $0x300] sm:$0xff]
    %v11510 = vld [vmem:[#allocation8 + $0x308] sm:$0xff]
    %v11511 = vld [vmem:[#allocation8 + $0x310] sm:$0xff]
    %v11512 = vld [vmem:[#allocation8 + $0x318] sm:$0xff]
    %v11513 = vld [vmem:[#allocation8 + $0x320] sm:$0xff]
    %v11514 = vld [vmem:[#allocation8 + $0x328] sm:$0xff]
    %v11515 = vld [vmem:[#allocation8 + $0x330] sm:$0xff]
    %v11516 = vld [vmem:[#allocation8 + $0x338] sm:$0xff]
    %v11517 = vld [vmem:[#allocation8 + $0x340] sm:$0xff]
    %v11518 = vld [vmem:[#allocation8 + $0x348] sm:$0xff]
    %v11519 = vld [vmem:[#allocation8 + $0x350] sm:$0xff]
    %v11520 = vld [vmem:[#allocation8 + $0x358] sm:$0xff]
    %v11521 = vld [vmem:[#allocation8 + $0x360] sm:$0xff]
    %v11522 = vld [vmem:[#allocation8 + $0x368] sm:$0xff]
    %v11523 = vld [vmem:[#allocation8 + $0x370] sm:$0xff]
    %v11524 = vld [vmem:[#allocation8 + $0x378] sm:$0xff]
    %v11525 = vld [vmem:[#allocation8 + $0x380] sm:$0xff]
    %v11526 = vld [vmem:[#allocation8 + $0x388] sm:$0xff]
    %v11527 = vld [vmem:[#allocation8 + $0x390] sm:$0xff]
    %v11528 = vld [vmem:[#allocation8 + $0x398] sm:$0xff]
    %v11529 = vld [vmem:[#allocation8 + $0x3a0] sm:$0xff]
    %v11530 = vld [vmem:[#allocation8 + $0x3a8] sm:$0xff]
    %v11531 = vld [vmem:[#allocation8 + $0x3b0] sm:$0xff]
    %v11532 = vld [vmem:[#allocation8 + $0x3b8] sm:$0xff]
    %v11533 = vld [vmem:[#allocation8 + $0x3c0] sm:$0xff]
    %v11534 = vld [vmem:[#allocation8 + $0x3c8] sm:$0xff]
    %v11535 = vld [vmem:[#allocation8 + $0x3d0] sm:$0xff]
    %v11536 = vld [vmem:[#allocation8 + $0x3d8] sm:$0xff]
    %v11537 = vld [vmem:[#allocation8 + $0x3e0] sm:$0xff]
    %v11538 = vld [vmem:[#allocation8 + $0x3e8] sm:$0xff]
    %v11539 = vld [vmem:[#allocation8 + $0x3f0] sm:$0xff]
    %v11540 = vld [vmem:[#allocation8 + $0x3f8] sm:$0xff]
    %v11541 = vld [vmem:[#allocation8 + $0x400] sm:$0xff]
    %v11542 = vld [vmem:[#allocation8 + $0x408] sm:$0xff]
    %v11543 = vld [vmem:[#allocation8 + $0x410] sm:$0xff]
    %v11544 = vld [vmem:[#allocation8 + $0x418] sm:$0xff]
    %v11545 = vld [vmem:[#allocation8 + $0x420] sm:$0xff]
    %v11546 = vld [vmem:[#allocation8 + $0x428] sm:$0xff]
    %v11547 = vld [vmem:[#allocation8 + $0x430] sm:$0xff]
    %v11548 = vld [vmem:[#allocation8 + $0x438] sm:$0xff]
    %v11549 = vld [vmem:[#allocation8 + $0x440] sm:$0xff]
    %v11550 = vld [vmem:[#allocation8 + $0x448] sm:$0xff]
    %v11551 = vld [vmem:[#allocation8 + $0x450] sm:$0xff]
    %v11552 = vld [vmem:[#allocation8 + $0x458] sm:$0xff]
    %v11553 = vld [vmem:[#allocation8 + $0x460] sm:$0xff]
    %v11554 = vld [vmem:[#allocation8 + $0x468] sm:$0xff]
    %v11555 = vld [vmem:[#allocation8 + $0x470] sm:$0xff]
    %v11556 = vld [vmem:[#allocation8 + $0x478] sm:$0xff]
    %v11557 = vld [vmem:[#allocation8 + $0x480] sm:$0xff]
    %v11558 = vld [vmem:[#allocation8 + $0x488] sm:$0xff]
    %v11559 = vld [vmem:[#allocation8 + $0x490] sm:$0xff]
    %v11560 = vld [vmem:[#allocation8 + $0x498] sm:$0xff]
    %v11561 = vld [vmem:[#allocation8 + $0x4a0] sm:$0xff]
    %v11562 = vld [vmem:[#allocation8 + $0x4a8] sm:$0xff]
    %v11563 = vld [vmem:[#allocation8 + $0x4b0] sm:$0xff]
    %v11564 = vld [vmem:[#allocation8 + $0x4b8] sm:$0xff]
    %v11565 = vld [vmem:[#allocation8 + $0x4c0] sm:$0xff]
    %v11566 = vld [vmem:[#allocation8 + $0x4c8] sm:$0xff]
    %v11567 = vld [vmem:[#allocation8 + $0x4d0] sm:$0xff]
    %v11568 = vld [vmem:[#allocation8 + $0x4d8] sm:$0xff]
    %v11569 = vld [vmem:[#allocation8 + $0x4e0] sm:$0xff]
    %v11570 = vld [vmem:[#allocation8 + $0x4e8] sm:$0xff]
    %v11571 = vld [vmem:[#allocation8 + $0x4f0] sm:$0xff]
    %v11572 = vld [vmem:[#allocation8 + $0x4f8] sm:$0xff]
    %v11573 = vld [vmem:[#allocation8 + $0x500] sm:$0xff]
    %v11574 = vld [vmem:[#allocation8 + $0x508] sm:$0xff]
    %v11575 = vld [vmem:[#allocation8 + $0x510] sm:$0xff]
    %v11576 = vld [vmem:[#allocation8 + $0x518] sm:$0xff]
    %v11577 = vld [vmem:[#allocation8 + $0x520] sm:$0xff]
    %v11578 = vld [vmem:[#allocation8 + $0x528] sm:$0xff]
    %v11579 = vld [vmem:[#allocation8 + $0x530] sm:$0xff]
    %v11580 = vld [vmem:[#allocation8 + $0x538] sm:$0xff]
    %v11581 = vld [vmem:[#allocation8 + $0x540] sm:$0xff]
    %v11582 = vld [vmem:[#allocation8 + $0x548] sm:$0xff]
    %v11583 = vld [vmem:[#allocation8 + $0x550] sm:$0xff]
    %v11584 = vld [vmem:[#allocation8 + $0x558] sm:$0xff]
    %v11585 = vld [vmem:[#allocation8 + $0x560] sm:$0xff]
    %v11586 = vld [vmem:[#allocation8 + $0x568] sm:$0xff]
    %v11587 = vld [vmem:[#allocation8 + $0x570] sm:$0xff]
    %v11588 = vld [vmem:[#allocation8 + $0x578] sm:$0xff]
    %v11589 = vld [vmem:[#allocation8 + $0x580] sm:$0xff]
    %v11590 = vld [vmem:[#allocation8 + $0x588] sm:$0xff]
    %v11591 = vld [vmem:[#allocation8 + $0x590] sm:$0xff]
    %v11592 = vld [vmem:[#allocation8 + $0x598] sm:$0xff]
    %v11593 = vld [vmem:[#allocation8 + $0x5a0] sm:$0xff]
    %v11594 = vld [vmem:[#allocation8 + $0x5a8] sm:$0xff]
    %v11595 = vld [vmem:[#allocation8 + $0x5b0] sm:$0xff]
    %v11596 = vld [vmem:[#allocation8 + $0x5b8] sm:$0xff]
    %v11597 = vld [vmem:[#allocation8 + $0x5c0] sm:$0xff]
    %v11598 = vld [vmem:[#allocation8 + $0x5c8] sm:$0xff]
    %v11599 = vld [vmem:[#allocation8 + $0x5d0] sm:$0xff]
    %v11600 = vld [vmem:[#allocation8 + $0x5d8] sm:$0xff]
    %v11601 = vld [vmem:[#allocation8 + $0x5e0] sm:$0xff]
    %v11602 = vld [vmem:[#allocation8 + $0x5e8] sm:$0xff]
    %v11603 = vld [vmem:[#allocation8 + $0x5f0] sm:$0xff]
    %v11604 = vld [vmem:[#allocation8 + $0x5f8] sm:$0xff]
    %v11605 = vld [vmem:[#allocation8 + $0x600] sm:$0xff]
    %v11606 = vld [vmem:[#allocation8 + $0x608] sm:$0xff]
    %v11607 = vld [vmem:[#allocation8 + $0x610] sm:$0xff]
    %v11608 = vld [vmem:[#allocation8 + $0x618] sm:$0xff]
    %v11609 = vld [vmem:[#allocation8 + $0x620] sm:$0xff]
    %v11610 = vld [vmem:[#allocation8 + $0x628] sm:$0xff]
    %v11611 = vld [vmem:[#allocation8 + $0x630] sm:$0xff]
    %v11612 = vld [vmem:[#allocation8 + $0x638] sm:$0xff]
    %v11613 = vld [vmem:[#allocation8 + $0x640] sm:$0xff]
    %v11614 = vld [vmem:[#allocation8 + $0x648] sm:$0xff]
    %v11615 = vld [vmem:[#allocation8 + $0x650] sm:$0xff]
    %v11616 = vld [vmem:[#allocation8 + $0x658] sm:$0xff]
    %v11617 = vld [vmem:[#allocation8 + $0x660] sm:$0xff]
    %v11618 = vld [vmem:[#allocation8 + $0x668] sm:$0xff]
    %v11619 = vld [vmem:[#allocation8 + $0x670] sm:$0xff]
    %v11620 = vld [vmem:[#allocation8 + $0x678] sm:$0xff]
    %v11621 = vld [vmem:[#allocation8 + $0x680] sm:$0xff]
    %v11622 = vld [vmem:[#allocation8 + $0x688] sm:$0xff]
    %v11623 = vld [vmem:[#allocation8 + $0x690] sm:$0xff]
    %v11624 = vld [vmem:[#allocation8 + $0x698] sm:$0xff]
    %v11625 = vld [vmem:[#allocation8 + $0x6a0] sm:$0xff]
    %v11626 = vld [vmem:[#allocation8 + $0x6a8] sm:$0xff]
    %v11627 = vld [vmem:[#allocation8 + $0x6b0] sm:$0xff]
    %v11628 = vld [vmem:[#allocation8 + $0x6b8] sm:$0xff]
    %v11629 = vld [vmem:[#allocation8 + $0x6c0] sm:$0xff]
    %v11630 = vld [vmem:[#allocation8 + $0x6c8] sm:$0xff]
    %v11631 = vld [vmem:[#allocation8 + $0x6d0] sm:$0xff]
    %v11632 = vld [vmem:[#allocation8 + $0x6d8] sm:$0xff]
    %v11633 = vld [vmem:[#allocation8 + $0x6e0] sm:$0xff]
    %v11634 = vld [vmem:[#allocation8 + $0x6e8] sm:$0xff]
    %v11635 = vld [vmem:[#allocation8 + $0x6f0] sm:$0xff]
    %v11636 = vld [vmem:[#allocation8 + $0x6f8] sm:$0xff]
    %v11637 = vld [vmem:[#allocation8 + $0x700] sm:$0xff]
    %v11638 = vld [vmem:[#allocation8 + $0x708] sm:$0xff]
    %v11639 = vld [vmem:[#allocation8 + $0x710] sm:$0xff]
    %v11640 = vld [vmem:[#allocation8 + $0x718] sm:$0xff]
    %v11641 = vld [vmem:[#allocation8 + $0x720] sm:$0xff]
    %v11642 = vld [vmem:[#allocation8 + $0x728] sm:$0xff]
    %v11643 = vld [vmem:[#allocation8 + $0x730] sm:$0xff]
    %v11644 = vld [vmem:[#allocation8 + $0x738] sm:$0xff]
    %v11645 = vld [vmem:[#allocation8 + $0x740] sm:$0xff]
    %v11646 = vld [vmem:[#allocation8 + $0x748] sm:$0xff]
    %v11647 = vld [vmem:[#allocation8 + $0x750] sm:$0xff]
    %v11648 = vld [vmem:[#allocation8 + $0x758] sm:$0xff]
    %v11649 = vld [vmem:[#allocation8 + $0x760] sm:$0xff]
    %v11650 = vld [vmem:[#allocation8 + $0x768] sm:$0xff]
    %v11651 = vld [vmem:[#allocation8 + $0x770] sm:$0xff]
    %v11652 = vld [vmem:[#allocation8 + $0x778] sm:$0xff]
    %v11653 = vld [vmem:[#allocation8 + $0x780] sm:$0xff]
    %v11654 = vld [vmem:[#allocation8 + $0x788] sm:$0xff]
    %v11655 = vld [vmem:[#allocation8 + $0x790] sm:$0xff]
    %v11656 = vld [vmem:[#allocation8 + $0x798] sm:$0xff]
    %v11657 = vld [vmem:[#allocation8 + $0x7a0] sm:$0xff]
    %v11658 = vld [vmem:[#allocation8 + $0x7a8] sm:$0xff]
    %v11659 = vld [vmem:[#allocation8 + $0x7b0] sm:$0xff]
    %v11660 = vld [vmem:[#allocation8 + $0x7b8] sm:$0xff]
    %v11661 = vld [vmem:[#allocation8 + $0x7c0] sm:$0xff]
    %v11662 = vld [vmem:[#allocation8 + $0x7c8] sm:$0xff]
    %v11663 = vld [vmem:[#allocation8 + $0x7d0] sm:$0xff]
    %v11664 = vld [vmem:[#allocation8 + $0x7d8] sm:$0xff]
    %v11665 = vld [vmem:[#allocation8 + $0x7e0] sm:$0xff]
    %v11666 = vld [vmem:[#allocation8 + $0x7e8] sm:$0xff]
    %v11667 = vld [vmem:[#allocation8 + $0x7f0] sm:$0xff]
    %v11668 = vld [vmem:[#allocation8 + $0x7f8] sm:$0xff]
    %v11669 = vld [vmem:[#allocation10] sm:$0xf]
    %v11671 = vlaneseq
    %v11672 = vshrl.u32 %v11671, 7
    %v11673 = vsub.s32 0, %v11672
    %v11674 = vrot.slane %v11669, %v11673
    %v11675 = vlaneseq
    %v11676 = vshrl.u32 %v11675, 7
    %v11677 = vsub.s32 1, %v11676
    %v11678 = vrot.slane %v11669, %v11677
    %v11679 = vlaneseq
    %v11680 = vshrl.u32 %v11679, 7
    %v11681 = vsub.s32 2, %v11680
    %v11682 = vrot.slane %v11669, %v11681
    %v11683 = vlaneseq
    %v11684 = vshrl.u32 %v11683, 7
    %v11685 = vsub.s32 3, %v11684
    %v11686 = vrot.slane %v11669, %v11685
    %v11947 = vunpack.c.l.b16 %v11413
    %v11948 = vunpack.c.h.b16 %v11413
    %v11949 = vunpack.c.l.b16 %v11414
    %v11950 = vunpack.c.h.b16 %v11414
    %v11951 = vunpack.c.l.b16 %v11415
    %v11952 = vunpack.c.h.b16 %v11415
    %v11953 = vunpack.c.l.b16 %v11416
    %v11954 = vunpack.c.h.b16 %v11416
    %v11955 = vunpack.c.l.b16 %v11417
    %v11956 = vunpack.c.h.b16 %v11417
    %v11957 = vunpack.c.l.b16 %v11418
    %v11958 = vunpack.c.h.b16 %v11418
    %v11959 = vunpack.c.l.b16 %v11419
    %v11960 = vunpack.c.h.b16 %v11419
    %v11961 = vunpack.c.l.b16 %v11420
    %v11962 = vunpack.c.h.b16 %v11420
    %v11963 = vunpack.c.l.b16 %v11421
    %v11964 = vunpack.c.h.b16 %v11421
    %v11965 = vunpack.c.l.b16 %v11422
    %v11966 = vunpack.c.h.b16 %v11422
    %v11967 = vunpack.c.l.b16 %v11423
    %v11968 = vunpack.c.h.b16 %v11423
    %v11969 = vunpack.c.l.b16 %v11424
    %v11970 = vunpack.c.h.b16 %v11424
    %v11971 = vunpack.c.l.b16 %v11425
    %v11972 = vunpack.c.h.b16 %v11425
    %v11973 = vunpack.c.l.b16 %v11426
    %v11974 = vunpack.c.h.b16 %v11426
    %v11975 = vunpack.c.l.b16 %v11427
    %v11976 = vunpack.c.h.b16 %v11427
    %v11977 = vunpack.c.l.b16 %v11428
    %v11978 = vunpack.c.h.b16 %v11428
    %v11979 = vunpack.c.l.b16 %v11429
    %v11980 = vunpack.c.h.b16 %v11429
    %v11981 = vunpack.c.l.b16 %v11430
    %v11982 = vunpack.c.h.b16 %v11430
    %v11983 = vunpack.c.l.b16 %v11431
    %v11984 = vunpack.c.h.b16 %v11431
    %v11985 = vunpack.c.l.b16 %v11432
    %v11986 = vunpack.c.h.b16 %v11432
    %v11987 = vunpack.c.l.b16 %v11433
    %v11988 = vunpack.c.h.b16 %v11433
    %v11989 = vunpack.c.l.b16 %v11434
    %v11990 = vunpack.c.h.b16 %v11434
    %v11991 = vunpack.c.l.b16 %v11435
    %v11992 = vunpack.c.h.b16 %v11435
    %v11993 = vunpack.c.l.b16 %v11436
    %v11994 = vunpack.c.h.b16 %v11436
    %v11995 = vunpack.c.l.b16 %v11437
    %v11996 = vunpack.c.h.b16 %v11437
    %v11997 = vunpack.c.l.b16 %v11438
    %v11998 = vunpack.c.h.b16 %v11438
    %v11999 = vunpack.c.l.b16 %v11439
    %v12000 = vunpack.c.h.b16 %v11439
    %v12001 = vunpack.c.l.b16 %v11440
    %v12002 = vunpack.c.h.b16 %v11440
    %v12003 = vunpack.c.l.b16 %v11441
    %v12004 = vunpack.c.h.b16 %v11441
    %v12005 = vunpack.c.l.b16 %v11442
    %v12006 = vunpack.c.h.b16 %v11442
    %v12007 = vunpack.c.l.b16 %v11443
    %v12008 = vunpack.c.h.b16 %v11443
    %v12009 = vunpack.c.l.b16 %v11444
    %v12010 = vunpack.c.h.b16 %v11444
    %v12011 = vunpack.c.l.b16 %v11445
    %v12012 = vunpack.c.h.b16 %v11445
    %v12013 = vunpack.c.l.b16 %v11446
    %v12014 = vunpack.c.h.b16 %v11446
    %v12015 = vunpack.c.l.b16 %v11447
    %v12016 = vunpack.c.h.b16 %v11447
    %v12017 = vunpack.c.l.b16 %v11448
    %v12018 = vunpack.c.h.b16 %v11448
    %v12019 = vunpack.c.l.b16 %v11449
    %v12020 = vunpack.c.h.b16 %v11449
    %v12021 = vunpack.c.l.b16 %v11450
    %v12022 = vunpack.c.h.b16 %v11450
    %v12023 = vunpack.c.l.b16 %v11451
    %v12024 = vunpack.c.h.b16 %v11451
    %v12025 = vunpack.c.l.b16 %v11452
    %v12026 = vunpack.c.h.b16 %v11452
    %v12027 = vunpack.c.l.b16 %v11453
    %v12028 = vunpack.c.h.b16 %v11453
    %v12029 = vunpack.c.l.b16 %v11454
    %v12030 = vunpack.c.h.b16 %v11454
    %v12031 = vunpack.c.l.b16 %v11455
    %v12032 = vunpack.c.h.b16 %v11455
    %v12033 = vunpack.c.l.b16 %v11456
    %v12034 = vunpack.c.h.b16 %v11456
    %v12035 = vunpack.c.l.b16 %v11457
    %v12036 = vunpack.c.h.b16 %v11457
    %v12037 = vunpack.c.l.b16 %v11458
    %v12038 = vunpack.c.h.b16 %v11458
    %v12039 = vunpack.c.l.b16 %v11459
    %v12040 = vunpack.c.h.b16 %v11459
    %v12041 = vunpack.c.l.b16 %v11460
    %v12042 = vunpack.c.h.b16 %v11460
    %v12043 = vunpack.c.l.b16 %v11461
    %v12044 = vunpack.c.h.b16 %v11461
    %v12045 = vunpack.c.l.b16 %v11462
    %v12046 = vunpack.c.h.b16 %v11462
    %v12047 = vunpack.c.l.b16 %v11463
    %v12048 = vunpack.c.h.b16 %v11463
    %v12049 = vunpack.c.l.b16 %v11464
    %v12050 = vunpack.c.h.b16 %v11464
    %v12051 = vunpack.c.l.b16 %v11465
    %v12052 = vunpack.c.h.b16 %v11465
    %v12053 = vunpack.c.l.b16 %v11466
    %v12054 = vunpack.c.h.b16 %v11466
    %v12055 = vunpack.c.l.b16 %v11467
    %v12056 = vunpack.c.h.b16 %v11467
    %v12057 = vunpack.c.l.b16 %v11468
    %v12058 = vunpack.c.h.b16 %v11468
    %v12059 = vunpack.c.l.b16 %v11469
    %v12060 = vunpack.c.h.b16 %v11469
    %v12061 = vunpack.c.l.b16 %v11470
    %v12062 = vunpack.c.h.b16 %v11470
    %v12063 = vunpack.c.l.b16 %v11471
    %v12064 = vunpack.c.h.b16 %v11471
    %v12065 = vunpack.c.l.b16 %v11472
    %v12066 = vunpack.c.h.b16 %v11472
    %v12067 = vunpack.c.l.b16 %v11473
    %v12068 = vunpack.c.h.b16 %v11473
    %v12069 = vunpack.c.l.b16 %v11474
    %v12070 = vunpack.c.h.b16 %v11474
    %v12071 = vunpack.c.l.b16 %v11475
    %v12072 = vunpack.c.h.b16 %v11475
    %v12073 = vunpack.c.l.b16 %v11476
    %v12074 = vunpack.c.h.b16 %v11476
    %v12075 = vunpack.c.l.b16 %v11477
    %v12076 = vunpack.c.h.b16 %v11477
    %v12077 = vunpack.c.l.b16 %v11478
    %v12078 = vunpack.c.h.b16 %v11478
    %v12079 = vunpack.c.l.b16 %v11479
    %v12080 = vunpack.c.h.b16 %v11479
    %v12081 = vunpack.c.l.b16 %v11480
    %v12082 = vunpack.c.h.b16 %v11480
    %v12083 = vunpack.c.l.b16 %v11481
    %v12084 = vunpack.c.h.b16 %v11481
    %v12085 = vunpack.c.l.b16 %v11482
    %v12086 = vunpack.c.h.b16 %v11482
    %v12087 = vunpack.c.l.b16 %v11483
    %v12088 = vunpack.c.h.b16 %v11483
    %v12089 = vunpack.c.l.b16 %v11484
    %v12090 = vunpack.c.h.b16 %v11484
    %v12091 = vunpack.c.l.b16 %v11485
    %v12092 = vunpack.c.h.b16 %v11485
    %v12093 = vunpack.c.l.b16 %v11486
    %v12094 = vunpack.c.h.b16 %v11486
    %v12095 = vunpack.c.l.b16 %v11487
    %v12096 = vunpack.c.h.b16 %v11487
    %v12097 = vunpack.c.l.b16 %v11488
    %v12098 = vunpack.c.h.b16 %v11488
    %v12099 = vunpack.c.l.b16 %v11489
    %v12100 = vunpack.c.h.b16 %v11489
    %v12101 = vunpack.c.l.b16 %v11490
    %v12102 = vunpack.c.h.b16 %v11490
    %v12103 = vunpack.c.l.b16 %v11491
    %v12104 = vunpack.c.h.b16 %v11491
    %v12105 = vunpack.c.l.b16 %v11492
    %v12106 = vunpack.c.h.b16 %v11492
    %v12107 = vunpack.c.l.b16 %v11493
    %v12108 = vunpack.c.h.b16 %v11493
    %v12109 = vunpack.c.l.b16 %v11494
    %v12110 = vunpack.c.h.b16 %v11494
    %v12111 = vunpack.c.l.b16 %v11495
    %v12112 = vunpack.c.h.b16 %v11495
    %v12113 = vunpack.c.l.b16 %v11496
    %v12114 = vunpack.c.h.b16 %v11496
    %v12115 = vunpack.c.l.b16 %v11497
    %v12116 = vunpack.c.h.b16 %v11497
    %v12117 = vunpack.c.l.b16 %v11498
    %v12118 = vunpack.c.h.b16 %v11498
    %v12119 = vunpack.c.l.b16 %v11499
    %v12120 = vunpack.c.h.b16 %v11499
    %v12121 = vunpack.c.l.b16 %v11500
    %v12122 = vunpack.c.h.b16 %v11500
    %v12123 = vunpack.c.l.b16 %v11501
    %v12124 = vunpack.c.h.b16 %v11501
    %v12125 = vunpack.c.l.b16 %v11502
    %v12126 = vunpack.c.h.b16 %v11502
    %v12127 = vunpack.c.l.b16 %v11503
    %v12128 = vunpack.c.h.b16 %v11503
    %v12129 = vunpack.c.l.b16 %v11504
    %v12130 = vunpack.c.h.b16 %v11504
    %v12131 = vunpack.c.l.b16 %v11505
    %v12132 = vunpack.c.h.b16 %v11505
    %v12133 = vunpack.c.l.b16 %v11506
    %v12134 = vunpack.c.h.b16 %v11506
    %v12135 = vunpack.c.l.b16 %v11507
    %v12136 = vunpack.c.h.b16 %v11507
    %v12137 = vunpack.c.l.b16 %v11508
    %v12138 = vunpack.c.h.b16 %v11508
    %v12139 = vunpack.c.l.b16 %v11509
    %v12140 = vunpack.c.h.b16 %v11509
    %v12141 = vunpack.c.l.b16 %v11510
    %v12142 = vunpack.c.h.b16 %v11510
    %v12143 = vunpack.c.l.b16 %v11511
    %v12144 = vunpack.c.h.b16 %v11511
    %v12145 = vunpack.c.l.b16 %v11512
    %v12146 = vunpack.c.h.b16 %v11512
    %v12147 = vunpack.c.l.b16 %v11513
    %v12148 = vunpack.c.h.b16 %v11513
    %v12149 = vunpack.c.l.b16 %v11514
    %v12150 = vunpack.c.h.b16 %v11514
    %v12151 = vunpack.c.l.b16 %v11515
    %v12152 = vunpack.c.h.b16 %v11515
    %v12153 = vunpack.c.l.b16 %v11516
    %v12154 = vunpack.c.h.b16 %v11516
    %v12155 = vunpack.c.l.b16 %v11517
    %v12156 = vunpack.c.h.b16 %v11517
    %v12157 = vunpack.c.l.b16 %v11518
    %v12158 = vunpack.c.h.b16 %v11518
    %v12159 = vunpack.c.l.b16 %v11519
    %v12160 = vunpack.c.h.b16 %v11519
    %v12161 = vunpack.c.l.b16 %v11520
    %v12162 = vunpack.c.h.b16 %v11520
    %v12163 = vunpack.c.l.b16 %v11521
    %v12164 = vunpack.c.h.b16 %v11521
    %v12165 = vunpack.c.l.b16 %v11522
    %v12166 = vunpack.c.h.b16 %v11522
    %v12167 = vunpack.c.l.b16 %v11523
    %v12168 = vunpack.c.h.b16 %v11523
    %v12169 = vunpack.c.l.b16 %v11524
    %v12170 = vunpack.c.h.b16 %v11524
    %v12171 = vunpack.c.l.b16 %v11525
    %v12172 = vunpack.c.h.b16 %v11525
    %v12173 = vunpack.c.l.b16 %v11526
    %v12174 = vunpack.c.h.b16 %v11526
    %v12175 = vunpack.c.l.b16 %v11527
    %v12176 = vunpack.c.h.b16 %v11527
    %v12177 = vunpack.c.l.b16 %v11528
    %v12178 = vunpack.c.h.b16 %v11528
    %v12179 = vunpack.c.l.b16 %v11529
    %v12180 = vunpack.c.h.b16 %v11529
    %v12181 = vunpack.c.l.b16 %v11530
    %v12182 = vunpack.c.h.b16 %v11530
    %v12183 = vunpack.c.l.b16 %v11531
    %v12184 = vunpack.c.h.b16 %v11531
    %v12185 = vunpack.c.l.b16 %v11532
    %v12186 = vunpack.c.h.b16 %v11532
    %v12187 = vunpack.c.l.b16 %v11533
    %v12188 = vunpack.c.h.b16 %v11533
    %v12189 = vunpack.c.l.b16 %v11534
    %v12190 = vunpack.c.h.b16 %v11534
    %v12191 = vunpack.c.l.b16 %v11535
    %v12192 = vunpack.c.h.b16 %v11535
    %v12193 = vunpack.c.l.b16 %v11536
    %v12194 = vunpack.c.h.b16 %v11536
    %v12195 = vunpack.c.l.b16 %v11537
    %v12196 = vunpack.c.h.b16 %v11537
    %v12197 = vunpack.c.l.b16 %v11538
    %v12198 = vunpack.c.h.b16 %v11538
    %v12199 = vunpack.c.l.b16 %v11539
    %v12200 = vunpack.c.h.b16 %v11539
    %v12201 = vunpack.c.l.b16 %v11540
    %v12202 = vunpack.c.h.b16 %v11540
    %v12203 = vunpack.c.l.b16 %v11541
    %v12204 = vunpack.c.h.b16 %v11541
    %v12205 = vunpack.c.l.b16 %v11542
    %v12206 = vunpack.c.h.b16 %v11542
    %v12207 = vunpack.c.l.b16 %v11543
    %v12208 = vunpack.c.h.b16 %v11543
    %v12209 = vunpack.c.l.b16 %v11544
    %v12210 = vunpack.c.h.b16 %v11544
    %v12211 = vunpack.c.l.b16 %v11545
    %v12212 = vunpack.c.h.b16 %v11545
    %v12213 = vunpack.c.l.b16 %v11546
    %v12214 = vunpack.c.h.b16 %v11546
    %v12215 = vunpack.c.l.b16 %v11547
    %v12216 = vunpack.c.h.b16 %v11547
    %v12217 = vunpack.c.l.b16 %v11548
    %v12218 = vunpack.c.h.b16 %v11548
    %v12219 = vunpack.c.l.b16 %v11549
    %v12220 = vunpack.c.h.b16 %v11549
    %v12221 = vunpack.c.l.b16 %v11550
    %v12222 = vunpack.c.h.b16 %v11550
    %v12223 = vunpack.c.l.b16 %v11551
    %v12224 = vunpack.c.h.b16 %v11551
    %v12225 = vunpack.c.l.b16 %v11552
    %v12226 = vunpack.c.h.b16 %v11552
    %v12227 = vunpack.c.l.b16 %v11553
    %v12228 = vunpack.c.h.b16 %v11553
    %v12229 = vunpack.c.l.b16 %v11554
    %v12230 = vunpack.c.h.b16 %v11554
    %v12231 = vunpack.c.l.b16 %v11555
    %v12232 = vunpack.c.h.b16 %v11555
    %v12233 = vunpack.c.l.b16 %v11556
    %v12234 = vunpack.c.h.b16 %v11556
    %v12235 = vunpack.c.l.b16 %v11557
    %v12236 = vunpack.c.h.b16 %v11557
    %v12237 = vunpack.c.l.b16 %v11558
    %v12238 = vunpack.c.h.b16 %v11558
    %v12239 = vunpack.c.l.b16 %v11559
    %v12240 = vunpack.c.h.b16 %v11559
    %v12241 = vunpack.c.l.b16 %v11560
    %v12242 = vunpack.c.h.b16 %v11560
    %v12243 = vunpack.c.l.b16 %v11561
    %v12244 = vunpack.c.h.b16 %v11561
    %v12245 = vunpack.c.l.b16 %v11562
    %v12246 = vunpack.c.h.b16 %v11562
    %v12247 = vunpack.c.l.b16 %v11563
    %v12248 = vunpack.c.h.b16 %v11563
    %v12249 = vunpack.c.l.b16 %v11564
    %v12250 = vunpack.c.h.b16 %v11564
    %v12251 = vunpack.c.l.b16 %v11565
    %v12252 = vunpack.c.h.b16 %v11565
    %v12253 = vunpack.c.l.b16 %v11566
    %v12254 = vunpack.c.h.b16 %v11566
    %v12255 = vunpack.c.l.b16 %v11567
    %v12256 = vunpack.c.h.b16 %v11567
    %v12257 = vunpack.c.l.b16 %v11568
    %v12258 = vunpack.c.h.b16 %v11568
    %v12259 = vunpack.c.l.b16 %v11569
    %v12260 = vunpack.c.h.b16 %v11569
    %v12261 = vunpack.c.l.b16 %v11570
    %v12262 = vunpack.c.h.b16 %v11570
    %v12263 = vunpack.c.l.b16 %v11571
    %v12264 = vunpack.c.h.b16 %v11571
    %v12265 = vunpack.c.l.b16 %v11572
    %v12266 = vunpack.c.h.b16 %v11572
    %v12267 = vunpack.c.l.b16 %v11573
    %v12268 = vunpack.c.h.b16 %v11573
    %v12269 = vunpack.c.l.b16 %v11574
    %v12270 = vunpack.c.h.b16 %v11574
    %v12271 = vunpack.c.l.b16 %v11575
    %v12272 = vunpack.c.h.b16 %v11575
    %v12273 = vunpack.c.l.b16 %v11576
    %v12274 = vunpack.c.h.b16 %v11576
    %v12275 = vunpack.c.l.b16 %v11577
    %v12276 = vunpack.c.h.b16 %v11577
    %v12277 = vunpack.c.l.b16 %v11578
    %v12278 = vunpack.c.h.b16 %v11578
    %v12279 = vunpack.c.l.b16 %v11579
    %v12280 = vunpack.c.h.b16 %v11579
    %v12281 = vunpack.c.l.b16 %v11580
    %v12282 = vunpack.c.h.b16 %v11580
    %v12283 = vunpack.c.l.b16 %v11581
    %v12284 = vunpack.c.h.b16 %v11581
    %v12285 = vunpack.c.l.b16 %v11582
    %v12286 = vunpack.c.h.b16 %v11582
    %v12287 = vunpack.c.l.b16 %v11583
    %v12288 = vunpack.c.h.b16 %v11583
    %v12289 = vunpack.c.l.b16 %v11584
    %v12290 = vunpack.c.h.b16 %v11584
    %v12291 = vunpack.c.l.b16 %v11585
    %v12292 = vunpack.c.h.b16 %v11585
    %v12293 = vunpack.c.l.b16 %v11586
    %v12294 = vunpack.c.h.b16 %v11586
    %v12295 = vunpack.c.l.b16 %v11587
    %v12296 = vunpack.c.h.b16 %v11587
    %v12297 = vunpack.c.l.b16 %v11588
    %v12298 = vunpack.c.h.b16 %v11588
    %v12299 = vunpack.c.l.b16 %v11589
    %v12300 = vunpack.c.h.b16 %v11589
    %v12301 = vunpack.c.l.b16 %v11590
    %v12302 = vunpack.c.h.b16 %v11590
    %v12303 = vunpack.c.l.b16 %v11591
    %v12304 = vunpack.c.h.b16 %v11591
    %v12305 = vunpack.c.l.b16 %v11592
    %v12306 = vunpack.c.h.b16 %v11592
    %v12307 = vunpack.c.l.b16 %v11593
    %v12308 = vunpack.c.h.b16 %v11593
    %v12309 = vunpack.c.l.b16 %v11594
    %v12310 = vunpack.c.h.b16 %v11594
    %v12311 = vunpack.c.l.b16 %v11595
    %v12312 = vunpack.c.h.b16 %v11595
    %v12313 = vunpack.c.l.b16 %v11596
    %v12314 = vunpack.c.h.b16 %v11596
    %v12315 = vunpack.c.l.b16 %v11597
    %v12316 = vunpack.c.h.b16 %v11597
    %v12317 = vunpack.c.l.b16 %v11598
    %v12318 = vunpack.c.h.b16 %v11598
    %v12319 = vunpack.c.l.b16 %v11599
    %v12320 = vunpack.c.h.b16 %v11599
    %v12321 = vunpack.c.l.b16 %v11600
    %v12322 = vunpack.c.h.b16 %v11600
    %v12323 = vunpack.c.l.b16 %v11601
    %v12324 = vunpack.c.h.b16 %v11601
    %v12325 = vunpack.c.l.b16 %v11602
    %v12326 = vunpack.c.h.b16 %v11602
    %v12327 = vunpack.c.l.b16 %v11603
    %v12328 = vunpack.c.h.b16 %v11603
    %v12329 = vunpack.c.l.b16 %v11604
    %v12330 = vunpack.c.h.b16 %v11604
    %v12331 = vunpack.c.l.b16 %v11605
    %v12332 = vunpack.c.h.b16 %v11605
    %v12333 = vunpack.c.l.b16 %v11606
    %v12334 = vunpack.c.h.b16 %v11606
    %v12335 = vunpack.c.l.b16 %v11607
    %v12336 = vunpack.c.h.b16 %v11607
    %v12337 = vunpack.c.l.b16 %v11608
    %v12338 = vunpack.c.h.b16 %v11608
    %v12339 = vunpack.c.l.b16 %v11609
    %v12340 = vunpack.c.h.b16 %v11609
    %v12341 = vunpack.c.l.b16 %v11610
    %v12342 = vunpack.c.h.b16 %v11610
    %v12343 = vunpack.c.l.b16 %v11611
    %v12344 = vunpack.c.h.b16 %v11611
    %v12345 = vunpack.c.l.b16 %v11612
    %v12346 = vunpack.c.h.b16 %v11612
    %v12347 = vunpack.c.l.b16 %v11613
    %v12348 = vunpack.c.h.b16 %v11613
    %v12349 = vunpack.c.l.b16 %v11614
    %v12350 = vunpack.c.h.b16 %v11614
    %v12351 = vunpack.c.l.b16 %v11615
    %v12352 = vunpack.c.h.b16 %v11615
    %v12353 = vunpack.c.l.b16 %v11616
    %v12354 = vunpack.c.h.b16 %v11616
    %v12355 = vunpack.c.l.b16 %v11617
    %v12356 = vunpack.c.h.b16 %v11617
    %v12357 = vunpack.c.l.b16 %v11618
    %v12358 = vunpack.c.h.b16 %v11618
    %v12359 = vunpack.c.l.b16 %v11619
    %v12360 = vunpack.c.h.b16 %v11619
    %v12361 = vunpack.c.l.b16 %v11620
    %v12362 = vunpack.c.h.b16 %v11620
    %v12363 = vunpack.c.l.b16 %v11621
    %v12364 = vunpack.c.h.b16 %v11621
    %v12365 = vunpack.c.l.b16 %v11622
    %v12366 = vunpack.c.h.b16 %v11622
    %v12367 = vunpack.c.l.b16 %v11623
    %v12368 = vunpack.c.h.b16 %v11623
    %v12369 = vunpack.c.l.b16 %v11624
    %v12370 = vunpack.c.h.b16 %v11624
    %v12371 = vunpack.c.l.b16 %v11625
    %v12372 = vunpack.c.h.b16 %v11625
    %v12373 = vunpack.c.l.b16 %v11626
    %v12374 = vunpack.c.h.b16 %v11626
    %v12375 = vunpack.c.l.b16 %v11627
    %v12376 = vunpack.c.h.b16 %v11627
    %v12377 = vunpack.c.l.b16 %v11628
    %v12378 = vunpack.c.h.b16 %v11628
    %v12379 = vunpack.c.l.b16 %v11629
    %v12380 = vunpack.c.h.b16 %v11629
    %v12381 = vunpack.c.l.b16 %v11630
    %v12382 = vunpack.c.h.b16 %v11630
    %v12383 = vunpack.c.l.b16 %v11631
    %v12384 = vunpack.c.h.b16 %v11631
    %v12385 = vunpack.c.l.b16 %v11632
    %v12386 = vunpack.c.h.b16 %v11632
    %v12387 = vunpack.c.l.b16 %v11633
    %v12388 = vunpack.c.h.b16 %v11633
    %v12389 = vunpack.c.l.b16 %v11634
    %v12390 = vunpack.c.h.b16 %v11634
    %v12391 = vunpack.c.l.b16 %v11635
    %v12392 = vunpack.c.h.b16 %v11635
    %v12393 = vunpack.c.l.b16 %v11636
    %v12394 = vunpack.c.h.b16 %v11636
    %v12395 = vunpack.c.l.b16 %v11637
    %v12396 = vunpack.c.h.b16 %v11637
    %v12397 = vunpack.c.l.b16 %v11638
    %v12398 = vunpack.c.h.b16 %v11638
    %v12399 = vunpack.c.l.b16 %v11639
    %v12400 = vunpack.c.h.b16 %v11639
    %v12401 = vunpack.c.l.b16 %v11640
    %v12402 = vunpack.c.h.b16 %v11640
    %v12403 = vunpack.c.l.b16 %v11641
    %v12404 = vunpack.c.h.b16 %v11641
    %v12405 = vunpack.c.l.b16 %v11642
    %v12406 = vunpack.c.h.b16 %v11642
    %v12407 = vunpack.c.l.b16 %v11643
    %v12408 = vunpack.c.h.b16 %v11643
    %v12409 = vunpack.c.l.b16 %v11644
    %v12410 = vunpack.c.h.b16 %v11644
    %v12411 = vunpack.c.l.b16 %v11645
    %v12412 = vunpack.c.h.b16 %v11645
    %v12413 = vunpack.c.l.b16 %v11646
    %v12414 = vunpack.c.h.b16 %v11646
    %v12415 = vunpack.c.l.b16 %v11647
    %v12416 = vunpack.c.h.b16 %v11647
    %v12417 = vunpack.c.l.b16 %v11648
    %v12418 = vunpack.c.h.b16 %v11648
    %v12419 = vunpack.c.l.b16 %v11649
    %v12420 = vunpack.c.h.b16 %v11649
    %v12421 = vunpack.c.l.b16 %v11650
    %v12422 = vunpack.c.h.b16 %v11650
    %v12423 = vunpack.c.l.b16 %v11651
    %v12424 = vunpack.c.h.b16 %v11651
    %v12425 = vunpack.c.l.b16 %v11652
    %v12426 = vunpack.c.h.b16 %v11652
    %v12427 = vunpack.c.l.b16 %v11653
    %v12428 = vunpack.c.h.b16 %v11653
    %v12429 = vunpack.c.l.b16 %v11654
    %v12430 = vunpack.c.h.b16 %v11654
    %v12431 = vunpack.c.l.b16 %v11655
    %v12432 = vunpack.c.h.b16 %v11655
    %v12433 = vunpack.c.l.b16 %v11656
    %v12434 = vunpack.c.h.b16 %v11656
    %v12435 = vunpack.c.l.b16 %v11657
    %v12436 = vunpack.c.h.b16 %v11657
    %v12437 = vunpack.c.l.b16 %v11658
    %v12438 = vunpack.c.h.b16 %v11658
    %v12439 = vunpack.c.l.b16 %v11659
    %v12440 = vunpack.c.h.b16 %v11659
    %v12441 = vunpack.c.l.b16 %v11660
    %v12442 = vunpack.c.h.b16 %v11660
    %v12443 = vunpack.c.l.b16 %v11661
    %v12444 = vunpack.c.h.b16 %v11661
    %v12445 = vunpack.c.l.b16 %v11662
    %v12446 = vunpack.c.h.b16 %v11662
    %v12447 = vunpack.c.l.b16 %v11663
    %v12448 = vunpack.c.h.b16 %v11663
    %v12449 = vunpack.c.l.b16 %v11664
    %v12450 = vunpack.c.h.b16 %v11664
    %v12451 = vunpack.c.l.b16 %v11665
    %v12452 = vunpack.c.h.b16 %v11665
    %v12453 = vunpack.c.l.b16 %v11666
    %v12454 = vunpack.c.h.b16 %v11666
    %v12455 = vunpack.c.l.b16 %v11667
    %v12456 = vunpack.c.h.b16 %v11667
    %v12457 = vunpack.c.l.b16 %v11668
    %v12458 = vunpack.c.h.b16 %v11668
    %v12459 = vpack.c.b16 %v11951, %v11947
    %v12460 = vpack.c.b16 %v11952, %v11948
    %v12461 = vpack.c.b16 %v11953, %v11949
    %v12462 = vpack.c.b16 %v11954, %v11950
    %v12463 = vpack.c.b16 %v11959, %v11955
    %v12464 = vpack.c.b16 %v11960, %v11956
    %v12465 = vpack.c.b16 %v11961, %v11957
    %v12466 = vpack.c.b16 %v11962, %v11958
    %v12467 = vpack.c.b16 %v11967, %v11963
    %v12468 = vpack.c.b16 %v11968, %v11964
    %v12469 = vpack.c.b16 %v11969, %v11965
    %v12470 = vpack.c.b16 %v11970, %v11966
    %v12471 = vpack.c.b16 %v11975, %v11971
    %v12472 = vpack.c.b16 %v11976, %v11972
    %v12473 = vpack.c.b16 %v11977, %v11973
    %v12474 = vpack.c.b16 %v11978, %v11974
    %v12475 = vpack.c.b16 %v11983, %v11979
    %v12476 = vpack.c.b16 %v11984, %v11980
    %v12477 = vpack.c.b16 %v11985, %v11981
    %v12478 = vpack.c.b16 %v11986, %v11982
    %v12479 = vpack.c.b16 %v11991, %v11987
    %v12480 = vpack.c.b16 %v11992, %v11988
    %v12481 = vpack.c.b16 %v11993, %v11989
    %v12482 = vpack.c.b16 %v11994, %v11990
    %v12483 = vpack.c.b16 %v11999, %v11995
    %v12484 = vpack.c.b16 %v12000, %v11996
    %v12485 = vpack.c.b16 %v12001, %v11997
    %v12486 = vpack.c.b16 %v12002, %v11998
    %v12487 = vpack.c.b16 %v12007, %v12003
    %v12488 = vpack.c.b16 %v12008, %v12004
    %v12489 = vpack.c.b16 %v12009, %v12005
    %v12490 = vpack.c.b16 %v12010, %v12006
    %v12491 = vpack.c.b16 %v12015, %v12011
    %v12492 = vpack.c.b16 %v12016, %v12012
    %v12493 = vpack.c.b16 %v12017, %v12013
    %v12494 = vpack.c.b16 %v12018, %v12014
    %v12495 = vpack.c.b16 %v12023, %v12019
    %v12496 = vpack.c.b16 %v12024, %v12020
    %v12497 = vpack.c.b16 %v12025, %v12021
    %v12498 = vpack.c.b16 %v12026, %v12022
    %v12499 = vpack.c.b16 %v12031, %v12027
    %v12500 = vpack.c.b16 %v12032, %v12028
    %v12501 = vpack.c.b16 %v12033, %v12029
    %v12502 = vpack.c.b16 %v12034, %v12030
    %v12503 = vpack.c.b16 %v12039, %v12035
    %v12504 = vpack.c.b16 %v12040, %v12036
    %v12505 = vpack.c.b16 %v12041, %v12037
    %v12506 = vpack.c.b16 %v12042, %v12038
    %v12507 = vpack.c.b16 %v12047, %v12043
    %v12508 = vpack.c.b16 %v12048, %v12044
    %v12509 = vpack.c.b16 %v12049, %v12045
    %v12510 = vpack.c.b16 %v12050, %v12046
    %v12511 = vpack.c.b16 %v12055, %v12051
    %v12512 = vpack.c.b16 %v12056, %v12052
    %v12513 = vpack.c.b16 %v12057, %v12053
    %v12514 = vpack.c.b16 %v12058, %v12054
    %v12515 = vpack.c.b16 %v12063, %v12059
    %v12516 = vpack.c.b16 %v12064, %v12060
    %v12517 = vpack.c.b16 %v12065, %v12061
    %v12518 = vpack.c.b16 %v12066, %v12062
    %v12519 = vpack.c.b16 %v12071, %v12067
    %v12520 = vpack.c.b16 %v12072, %v12068
    %v12521 = vpack.c.b16 %v12073, %v12069
    %v12522 = vpack.c.b16 %v12074, %v12070
    %v12523 = vpack.c.b16 %v12079, %v12075
    %v12524 = vpack.c.b16 %v12080, %v12076
    %v12525 = vpack.c.b16 %v12081, %v12077
    %v12526 = vpack.c.b16 %v12082, %v12078
    %v12527 = vpack.c.b16 %v12087, %v12083
    %v12528 = vpack.c.b16 %v12088, %v12084
    %v12529 = vpack.c.b16 %v12089, %v12085
    %v12530 = vpack.c.b16 %v12090, %v12086
    %v12531 = vpack.c.b16 %v12095, %v12091
    %v12532 = vpack.c.b16 %v12096, %v12092
    %v12533 = vpack.c.b16 %v12097, %v12093
    %v12534 = vpack.c.b16 %v12098, %v12094
    %v12535 = vpack.c.b16 %v12103, %v12099
    %v12536 = vpack.c.b16 %v12104, %v12100
    %v12537 = vpack.c.b16 %v12105, %v12101
    %v12538 = vpack.c.b16 %v12106, %v12102
    %v12539 = vpack.c.b16 %v12111, %v12107
    %v12540 = vpack.c.b16 %v12112, %v12108
    %v12541 = vpack.c.b16 %v12113, %v12109
    %v12542 = vpack.c.b16 %v12114, %v12110
    %v12543 = vpack.c.b16 %v12119, %v12115
    %v12544 = vpack.c.b16 %v12120, %v12116
    %v12545 = vpack.c.b16 %v12121, %v12117
    %v12546 = vpack.c.b16 %v12122, %v12118
    %v12547 = vpack.c.b16 %v12127, %v12123
    %v12548 = vpack.c.b16 %v12128, %v12124
    %v12549 = vpack.c.b16 %v12129, %v12125
    %v12550 = vpack.c.b16 %v12130, %v12126
    %v12551 = vpack.c.b16 %v12135, %v12131
    %v12552 = vpack.c.b16 %v12136, %v12132
    %v12553 = vpack.c.b16 %v12137, %v12133
    %v12554 = vpack.c.b16 %v12138, %v12134
    %v12555 = vpack.c.b16 %v12143, %v12139
    %v12556 = vpack.c.b16 %v12144, %v12140
    %v12557 = vpack.c.b16 %v12145, %v12141
    %v12558 = vpack.c.b16 %v12146, %v12142
    %v12559 = vpack.c.b16 %v12151, %v12147
    %v12560 = vpack.c.b16 %v12152, %v12148
    %v12561 = vpack.c.b16 %v12153, %v12149
    %v12562 = vpack.c.b16 %v12154, %v12150
    %v12563 = vpack.c.b16 %v12159, %v12155
    %v12564 = vpack.c.b16 %v12160, %v12156
    %v12565 = vpack.c.b16 %v12161, %v12157
    %v12566 = vpack.c.b16 %v12162, %v12158
    %v12567 = vpack.c.b16 %v12167, %v12163
    %v12568 = vpack.c.b16 %v12168, %v12164
    %v12569 = vpack.c.b16 %v12169, %v12165
    %v12570 = vpack.c.b16 %v12170, %v12166
    %v12571 = vpack.c.b16 %v12175, %v12171
    %v12572 = vpack.c.b16 %v12176, %v12172
    %v12573 = vpack.c.b16 %v12177, %v12173
    %v12574 = vpack.c.b16 %v12178, %v12174
    %v12575 = vpack.c.b16 %v12183, %v12179
    %v12576 = vpack.c.b16 %v12184, %v12180
    %v12577 = vpack.c.b16 %v12185, %v12181
    %v12578 = vpack.c.b16 %v12186, %v12182
    %v12579 = vpack.c.b16 %v12191, %v12187
    %v12580 = vpack.c.b16 %v12192, %v12188
    %v12581 = vpack.c.b16 %v12193, %v12189
    %v12582 = vpack.c.b16 %v12194, %v12190
    %v12583 = vpack.c.b16 %v12199, %v12195
    %v12584 = vpack.c.b16 %v12200, %v12196
    %v12585 = vpack.c.b16 %v12201, %v12197
    %v12586 = vpack.c.b16 %v12202, %v12198
    %v12587 = vpack.c.b16 %v12207, %v12203
    %v12588 = vpack.c.b16 %v12208, %v12204
    %v12589 = vpack.c.b16 %v12209, %v12205
    %v12590 = vpack.c.b16 %v12210, %v12206
    %v12591 = vpack.c.b16 %v12215, %v12211
    %v12592 = vpack.c.b16 %v12216, %v12212
    %v12593 = vpack.c.b16 %v12217, %v12213
    %v12594 = vpack.c.b16 %v12218, %v12214
    %v12595 = vpack.c.b16 %v12223, %v12219
    %v12596 = vpack.c.b16 %v12224, %v12220
    %v12597 = vpack.c.b16 %v12225, %v12221
    %v12598 = vpack.c.b16 %v12226, %v12222
    %v12599 = vpack.c.b16 %v12231, %v12227
    %v12600 = vpack.c.b16 %v12232, %v12228
    %v12601 = vpack.c.b16 %v12233, %v12229
    %v12602 = vpack.c.b16 %v12234, %v12230
    %v12603 = vpack.c.b16 %v12239, %v12235
    %v12604 = vpack.c.b16 %v12240, %v12236
    %v12605 = vpack.c.b16 %v12241, %v12237
    %v12606 = vpack.c.b16 %v12242, %v12238
    %v12607 = vpack.c.b16 %v12247, %v12243
    %v12608 = vpack.c.b16 %v12248, %v12244
    %v12609 = vpack.c.b16 %v12249, %v12245
    %v12610 = vpack.c.b16 %v12250, %v12246
    %v12611 = vpack.c.b16 %v12255, %v12251
    %v12612 = vpack.c.b16 %v12256, %v12252
    %v12613 = vpack.c.b16 %v12257, %v12253
    %v12614 = vpack.c.b16 %v12258, %v12254
    %v12615 = vpack.c.b16 %v12263, %v12259
    %v12616 = vpack.c.b16 %v12264, %v12260
    %v12617 = vpack.c.b16 %v12265, %v12261
    %v12618 = vpack.c.b16 %v12266, %v12262
    %v12619 = vpack.c.b16 %v12271, %v12267
    %v12620 = vpack.c.b16 %v12272, %v12268
    %v12621 = vpack.c.b16 %v12273, %v12269
    %v12622 = vpack.c.b16 %v12274, %v12270
    %v12623 = vpack.c.b16 %v12279, %v12275
    %v12624 = vpack.c.b16 %v12280, %v12276
    %v12625 = vpack.c.b16 %v12281, %v12277
    %v12626 = vpack.c.b16 %v12282, %v12278
    %v12627 = vpack.c.b16 %v12287, %v12283
    %v12628 = vpack.c.b16 %v12288, %v12284
    %v12629 = vpack.c.b16 %v12289, %v12285
    %v12630 = vpack.c.b16 %v12290, %v12286
    %v12631 = vpack.c.b16 %v12295, %v12291
    %v12632 = vpack.c.b16 %v12296, %v12292
    %v12633 = vpack.c.b16 %v12297, %v12293
    %v12634 = vpack.c.b16 %v12298, %v12294
    %v12635 = vpack.c.b16 %v12303, %v12299
    %v12636 = vpack.c.b16 %v12304, %v12300
    %v12637 = vpack.c.b16 %v12305, %v12301
    %v12638 = vpack.c.b16 %v12306, %v12302
    %v12639 = vpack.c.b16 %v12311, %v12307
    %v12640 = vpack.c.b16 %v12312, %v12308
    %v12641 = vpack.c.b16 %v12313, %v12309
    %v12642 = vpack.c.b16 %v12314, %v12310
    %v12643 = vpack.c.b16 %v12319, %v12315
    %v12644 = vpack.c.b16 %v12320, %v12316
    %v12645 = vpack.c.b16 %v12321, %v12317
    %v12646 = vpack.c.b16 %v12322, %v12318
    %v12647 = vpack.c.b16 %v12327, %v12323
    %v12648 = vpack.c.b16 %v12328, %v12324
    %v12649 = vpack.c.b16 %v12329, %v12325
    %v12650 = vpack.c.b16 %v12330, %v12326
    %v12651 = vpack.c.b16 %v12335, %v12331
    %v12652 = vpack.c.b16 %v12336, %v12332
    %v12653 = vpack.c.b16 %v12337, %v12333
    %v12654 = vpack.c.b16 %v12338, %v12334
    %v12655 = vpack.c.b16 %v12343, %v12339
    %v12656 = vpack.c.b16 %v12344, %v12340
    %v12657 = vpack.c.b16 %v12345, %v12341
    %v12658 = vpack.c.b16 %v12346, %v12342
    %v12659 = vpack.c.b16 %v12351, %v12347
    %v12660 = vpack.c.b16 %v12352, %v12348
    %v12661 = vpack.c.b16 %v12353, %v12349
    %v12662 = vpack.c.b16 %v12354, %v12350
    %v12663 = vpack.c.b16 %v12359, %v12355
    %v12664 = vpack.c.b16 %v12360, %v12356
    %v12665 = vpack.c.b16 %v12361, %v12357
    %v12666 = vpack.c.b16 %v12362, %v12358
    %v12667 = vpack.c.b16 %v12367, %v12363
    %v12668 = vpack.c.b16 %v12368, %v12364
    %v12669 = vpack.c.b16 %v12369, %v12365
    %v12670 = vpack.c.b16 %v12370, %v12366
    %v12671 = vpack.c.b16 %v12375, %v12371
    %v12672 = vpack.c.b16 %v12376, %v12372
    %v12673 = vpack.c.b16 %v12377, %v12373
    %v12674 = vpack.c.b16 %v12378, %v12374
    %v12675 = vpack.c.b16 %v12383, %v12379
    %v12676 = vpack.c.b16 %v12384, %v12380
    %v12677 = vpack.c.b16 %v12385, %v12381
    %v12678 = vpack.c.b16 %v12386, %v12382
    %v12679 = vpack.c.b16 %v12391, %v12387
    %v12680 = vpack.c.b16 %v12392, %v12388
    %v12681 = vpack.c.b16 %v12393, %v12389
    %v12682 = vpack.c.b16 %v12394, %v12390
    %v12683 = vpack.c.b16 %v12399, %v12395
    %v12684 = vpack.c.b16 %v12400, %v12396
    %v12685 = vpack.c.b16 %v12401, %v12397
    %v12686 = vpack.c.b16 %v12402, %v12398
    %v12687 = vpack.c.b16 %v12407, %v12403
    %v12688 = vpack.c.b16 %v12408, %v12404
    %v12689 = vpack.c.b16 %v12409, %v12405
    %v12690 = vpack.c.b16 %v12410, %v12406
    %v12691 = vpack.c.b16 %v12415, %v12411
    %v12692 = vpack.c.b16 %v12416, %v12412
    %v12693 = vpack.c.b16 %v12417, %v12413
    %v12694 = vpack.c.b16 %v12418, %v12414
    %v12695 = vpack.c.b16 %v12423, %v12419
    %v12696 = vpack.c.b16 %v12424, %v12420
    %v12697 = vpack.c.b16 %v12425, %v12421
    %v12698 = vpack.c.b16 %v12426, %v12422
    %v12699 = vpack.c.b16 %v12431, %v12427
    %v12700 = vpack.c.b16 %v12432, %v12428
    %v12701 = vpack.c.b16 %v12433, %v12429
    %v12702 = vpack.c.b16 %v12434, %v12430
    %v12703 = vpack.c.b16 %v12439, %v12435
    %v12704 = vpack.c.b16 %v12440, %v12436
    %v12705 = vpack.c.b16 %v12441, %v12437
    %v12706 = vpack.c.b16 %v12442, %v12438
    %v12707 = vpack.c.b16 %v12447, %v12443
    %v12708 = vpack.c.b16 %v12448, %v12444
    %v12709 = vpack.c.b16 %v12449, %v12445
    %v12710 = vpack.c.b16 %v12450, %v12446
    %v12711 = vpack.c.b16 %v12455, %v12451
    %v12712 = vpack.c.b16 %v12456, %v12452
    %v12713 = vpack.c.b16 %v12457, %v12453
    %v12714 = vpack.c.b16 %v12458, %v12454
    %12971 = vmatprep.subr.bf16.mxu0 %v12460
    %12972 = vmatpush1.bf16.msra.mxu0 %v12459
    %12973 = vmatprep.subr.bf16.mxu0 %v12464
    %12974 = vmatpush1.bf16.msra.mxu0 %v12463
    %12975 = vmatprep.subr.bf16.mxu0 %v12468
    %12976 = vmatpush1.bf16.msra.mxu0 %v12467
    %12977 = vmatprep.subr.bf16.mxu0 %v12472
    %12978 = vmatpush1.bf16.msra.mxu0 %v12471
    %12979 = vmatprep.subr.bf16.mxu0 %v12476
    %12980 = vmatpush1.bf16.msra.mxu0 %v12475
    %12981 = vmatprep.subr.bf16.mxu0 %v12480
    %12982 = vmatpush1.bf16.msra.mxu0 %v12479
    %12983 = vmatprep.subr.bf16.mxu0 %v12484
    %12984 = vmatpush1.bf16.msra.mxu0 %v12483
    %12985 = vmatprep.subr.bf16.mxu0 %v12488
    %12986 = vmatpush1.bf16.msra.mxu0 %v12487
    %12987 = vmatprep.subr.bf16.mxu0 %v12492
    %12988 = vmatpush1.bf16.msra.mxu0 %v12491
    %12989 = vmatprep.subr.bf16.mxu0 %v12496
    %12990 = vmatpush1.bf16.msra.mxu0 %v12495
    %12991 = vmatprep.subr.bf16.mxu0 %v12500
    %12992 = vmatpush1.bf16.msra.mxu0 %v12499
    %12993 = vmatprep.subr.bf16.mxu0 %v12504
    %12994 = vmatpush1.bf16.msra.mxu0 %v12503
    %12995 = vmatprep.subr.bf16.mxu0 %v12508
    %12996 = vmatpush1.bf16.msra.mxu0 %v12507
    %12997 = vmatprep.subr.bf16.mxu0 %v12512
    %12998 = vmatpush1.bf16.msra.mxu0 %v12511
    %12999 = vmatprep.subr.bf16.mxu0 %v12516
    %13000 = vmatpush1.bf16.msra.mxu0 %v12515
    %13001 = vmatprep.subr.bf16.mxu0 %v12520
    %13002 = vmatpush1.bf16.msra.mxu0 %v12519
    %13003 = vmatprep.mubr.bf16.mxu0 %v11406
    %13004 = vmatmul.mubr.bf16.gmra.mrb[0].mxu0 %v11405
    %v13005 = vpop.f32.mrb[0].mxu0
    %v13006 = vadd.f32 %v11674, %v13005
    %v13007 = vpop.f32.mrb[0].mxu0
    %v13008 = vadd.f32 %v11678, %v13007
    %v13009 = vpop.f32.mrb[0].mxu0
    %v13010 = vpop.f32.mrb[0].mxu0
    %13011 = vdwg.mxu0
    %13012 = vmatprep.subr.bf16.mxu0 %v12524
    %13013 = vmatpush1.bf16.msra.mxu0 %v12523
    %13014 = vmatprep.subr.bf16.mxu0 %v12528
    %13015 = vmatpush1.bf16.msra.mxu0 %v12527
    %13016 = vmatprep.subr.bf16.mxu0 %v12532
    %13017 = vmatpush1.bf16.msra.mxu0 %v12531
    %13018 = vmatprep.subr.bf16.mxu0 %v12536
    %13019 = vmatpush1.bf16.msra.mxu0 %v12535
    %13020 = vmatprep.subr.bf16.mxu0 %v12540
    %13021 = vmatpush1.bf16.msra.mxu0 %v12539
    %13022 = vmatprep.subr.bf16.mxu0 %v12544
    %13023 = vmatpush1.bf16.msra.mxu0 %v12543
    %13024 = vmatprep.subr.bf16.mxu0 %v12548
    %13025 = vmatpush1.bf16.msra.mxu0 %v12547
    %13026 = vmatprep.subr.bf16.mxu0 %v12552
    %13027 = vmatpush1.bf16.msra.mxu0 %v12551
    %13028 = vmatprep.subr.bf16.mxu0 %v12556
    %13029 = vmatpush1.bf16.msra.mxu0 %v12555
    %13030 = vmatprep.subr.bf16.mxu0 %v12560
    %13031 = vmatpush1.bf16.msra.mxu0 %v12559
    %13032 = vmatprep.subr.bf16.mxu0 %v12564
    %13033 = vmatpush1.bf16.msra.mxu0 %v12563
    %13034 = vmatprep.subr.bf16.mxu0 %v12568
    %13035 = vmatpush1.bf16.msra.mxu0 %v12567
    %13036 = vmatprep.subr.bf16.mxu0 %v12572
    %13037 = vmatpush1.bf16.msra.mxu0 %v12571
    %13038 = vmatprep.subr.bf16.mxu0 %v12576
    %13039 = vmatpush1.bf16.msra.mxu0 %v12575
    %13040 = vmatprep.subr.bf16.mxu0 %v12580
    %13041 = vmatpush1.bf16.msra.mxu0 %v12579
    %13042 = vmatprep.subr.bf16.mxu0 %v12584
    %13043 = vmatpush1.bf16.msra.mxu0 %v12583
    %13044 = vmatprep.mubr.bf16.mxu0 %v11408
    %13045 = vmatmul.mubr.bf16.gmra.mrb[0].mxu0 %v11407
    %v13046 = vpop.f32.mrb[0].mxu0
    %v13047 = vadd.f32 %v13006, %v13046
    %v13048 = vpop.f32.mrb[0].mxu0
    %v13049 = vadd.f32 %v13008, %v13048
    %v13050 = vpop.f32.mrb[0].mxu0
    %v13051 = vpop.f32.mrb[0].mxu0
    %13052 = vdwg.mxu0
    %13053 = vmatprep.subr.bf16.mxu0 %v12588
    %13054 = vmatpush1.bf16.msra.mxu0 %v12587
    %13055 = vmatprep.subr.bf16.mxu0 %v12592
    %13056 = vmatpush1.bf16.msra.mxu0 %v12591
    %13057 = vmatprep.subr.bf16.mxu0 %v12596
    %13058 = vmatpush1.bf16.msra.mxu0 %v12595
    %13059 = vmatprep.subr.bf16.mxu0 %v12600
    %13060 = vmatpush1.bf16.msra.mxu0 %v12599
    %13061 = vmatprep.subr.bf16.mxu0 %v12604
    %13062 = vmatpush1.bf16.msra.mxu0 %v12603
    %13063 = vmatprep.subr.bf16.mxu0 %v12608
    %13064 = vmatpush1.bf16.msra.mxu0 %v12607
    %13065 = vmatprep.subr.bf16.mxu0 %v12612
    %13066 = vmatpush1.bf16.msra.mxu0 %v12611
    %13067 = vmatprep.subr.bf16.mxu0 %v12616
    %13068 = vmatpush1.bf16.msra.mxu0 %v12615
    %13069 = vmatprep.subr.bf16.mxu0 %v12620
    %13070 = vmatpush1.bf16.msra.mxu0 %v12619
    %13071 = vmatprep.subr.bf16.mxu0 %v12624
    %13072 = vmatpush1.bf16.msra.mxu0 %v12623
    %13073 = vmatprep.subr.bf16.mxu0 %v12628
    %13074 = vmatpush1.bf16.msra.mxu0 %v12627
    %13075 = vmatprep.subr.bf16.mxu0 %v12632
    %13076 = vmatpush1.bf16.msra.mxu0 %v12631
    %13077 = vmatprep.subr.bf16.mxu0 %v12636
    %13078 = vmatpush1.bf16.msra.mxu0 %v12635
    %13079 = vmatprep.subr.bf16.mxu0 %v12640
    %13080 = vmatpush1.bf16.msra.mxu0 %v12639
    %13081 = vmatprep.subr.bf16.mxu0 %v12644
    %13082 = vmatpush1.bf16.msra.mxu0 %v12643
    %13083 = vmatprep.subr.bf16.mxu0 %v12648
    %13084 = vmatpush1.bf16.msra.mxu0 %v12647
    %13085 = vmatprep.mubr.bf16.mxu0 %v11410
    %13086 = vmatmul.mubr.bf16.gmra.mrb[0].mxu0 %v11409
    %v13087 = vpop.f32.mrb[0].mxu0
    %v13088 = vadd.f32 %v13047, %v13087
    %v13089 = vpop.f32.mrb[0].mxu0
    %v13090 = vadd.f32 %v13049, %v13089
    %v13091 = vpop.f32.mrb[0].mxu0
    %v13092 = vpop.f32.mrb[0].mxu0
    %13093 = vdwg.mxu0
    %13094 = vmatprep.subr.bf16.mxu0 %v12652
    %13095 = vmatpush1.bf16.msra.mxu0 %v12651
    %13096 = vmatprep.subr.bf16.mxu0 %v12656
    %13097 = vmatpush1.bf16.msra.mxu0 %v12655
    %13098 = vmatprep.subr.bf16.mxu0 %v12660
    %13099 = vmatpush1.bf16.msra.mxu0 %v12659
    %13100 = vmatprep.subr.bf16.mxu0 %v12664
    %13101 = vmatpush1.bf16.msra.mxu0 %v12663
    %13102 = vmatprep.subr.bf16.mxu0 %v12668
    %13103 = vmatpush1.bf16.msra.mxu0 %v12667
    %13104 = vmatprep.subr.bf16.mxu0 %v12672
    %13105 = vmatpush1.bf16.msra.mxu0 %v12671
    %13106 = vmatprep.subr.bf16.mxu0 %v12676
    %13107 = vmatpush1.bf16.msra.mxu0 %v12675
    %13108 = vmatprep.subr.bf16.mxu0 %v12680
    %13109 = vmatpush1.bf16.msra.mxu0 %v12679
    %13110 = vmatprep.subr.bf16.mxu0 %v12684
    %13111 = vmatpush1.bf16.msra.mxu0 %v12683
    %13112 = vmatprep.subr.bf16.mxu0 %v12688
    %13113 = vmatpush1.bf16.msra.mxu0 %v12687
    %13114 = vmatprep.subr.bf16.mxu0 %v12692
    %13115 = vmatpush1.bf16.msra.mxu0 %v12691
    %13116 = vmatprep.subr.bf16.mxu0 %v12696
    %13117 = vmatpush1.bf16.msra.mxu0 %v12695
    %13118 = vmatprep.subr.bf16.mxu0 %v12700
    %13119 = vmatpush1.bf16.msra.mxu0 %v12699
    %13120 = vmatprep.subr.bf16.mxu0 %v12704
    %13121 = vmatpush1.bf16.msra.mxu0 %v12703
    %13122 = vmatprep.subr.bf16.mxu0 %v12708
    %13123 = vmatpush1.bf16.msra.mxu0 %v12707
    %13124 = vmatprep.subr.bf16.mxu0 %v12712
    %13125 = vmatpush1.bf16.msra.mxu0 %v12711
    %13126 = vmatprep.mubr.bf16.mxu0 %v11412
    %13127 = vmatmul.mubr.bf16.gmra.mrb[0].mxu0 %v11411
    %v13128 = vpop.f32.mrb[0].mxu0
    %v13129 = vadd.f32 %v13088, %v13128
    %v13130 = vpop.f32.mrb[0].mxu0
    %v13131 = vadd.f32 %v13090, %v13130
    %v13132 = vpop.f32.mrb[0].mxu0
    %v13133 = vpop.f32.mrb[0].mxu0
    %13134 = vdwg.mxu0
    %13135 = vmatprep.subr.bf16.mxu0 %v12462
    %13136 = vmatpush1.bf16.msra.mxu0 %v12461
    %13137 = vmatprep.subr.bf16.mxu0 %v12466
    %13138 = vmatpush1.bf16.msra.mxu0 %v12465
    %13139 = vmatprep.subr.bf16.mxu0 %v12470
    %13140 = vmatpush1.bf16.msra.mxu0 %v12469
    %13141 = vmatprep.subr.bf16.mxu0 %v12474
    %13142 = vmatpush1.bf16.msra.mxu0 %v12473
    %13143 = vmatprep.subr.bf16.mxu0 %v12478
    %13144 = vmatpush1.bf16.msra.mxu0 %v12477
    %13145 = vmatprep.subr.bf16.mxu0 %v12482
    %13146 = vmatpush1.bf16.msra.mxu0 %v12481
    %13147 = vmatprep.subr.bf16.mxu0 %v12486
    %13148 = vmatpush1.bf16.msra.mxu0 %v12485
    %13149 = vmatprep.subr.bf16.mxu0 %v12490
    %13150 = vmatpush1.bf16.msra.mxu0 %v12489
    %13151 = vmatprep.subr.bf16.mxu0 %v12494
    %13152 = vmatpush1.bf16.msra.mxu0 %v12493
    %13153 = vmatprep.subr.bf16.mxu0 %v12498
    %13154 = vmatpush1.bf16.msra.mxu0 %v12497
    %13155 = vmatprep.subr.bf16.mxu0 %v12502
    %13156 = vmatpush1.bf16.msra.mxu0 %v12501
    %13157 = vmatprep.subr.bf16.mxu0 %v12506
    %13158 = vmatpush1.bf16.msra.mxu0 %v12505
    %13159 = vmatprep.subr.bf16.mxu0 %v12510
    %13160 = vmatpush1.bf16.msra.mxu0 %v12509
    %13161 = vmatprep.subr.bf16.mxu0 %v12514
    %13162 = vmatpush1.bf16.msra.mxu0 %v12513
    %13163 = vmatprep.subr.bf16.mxu0 %v12518
    %13164 = vmatpush1.bf16.msra.mxu0 %v12517
    %13165 = vmatprep.subr.bf16.mxu0 %v12522
    %13166 = vmatpush1.bf16.msra.mxu0 %v12521
    %13167 = vmatprep.mubr.bf16.mxu0 %v11406
    %13168 = vmatmul.mubr.bf16.gmra.mrb[0].mxu0 %v11405
    %v13169 = vpop.f32.mrb[0].mxu0
    %v13170 = vadd.f32 %v11682, %v13169
    %v13171 = vpop.f32.mrb[0].mxu0
    %v13172 = vadd.f32 %v11686, %v13171
    %v13173 = vpop.f32.mrb[0].mxu0
    %v13174 = vpop.f32.mrb[0].mxu0
    %13175 = vdwg.mxu0
    %13176 = vmatprep.subr.bf16.mxu0 %v12526
    %13177 = vmatpush1.bf16.msra.mxu0 %v12525
    %13178 = vmatprep.subr.bf16.mxu0 %v12530
    %13179 = vmatpush1.bf16.msra.mxu0 %v12529
    %13180 = vmatprep.subr.bf16.mxu0 %v12534
    %13181 = vmatpush1.bf16.msra.mxu0 %v12533
    %13182 = vmatprep.subr.bf16.mxu0 %v12538
    %13183 = vmatpush1.bf16.msra.mxu0 %v12537
    %13184 = vmatprep.subr.bf16.mxu0 %v12542
    %13185 = vmatpush1.bf16.msra.mxu0 %v12541
    %13186 = vmatprep.subr.bf16.mxu0 %v12546
    %13187 = vmatpush1.bf16.msra.mxu0 %v12545
    %13188 = vmatprep.subr.bf16.mxu0 %v12550
    %13189 = vmatpush1.bf16.msra.mxu0 %v12549
    %13190 = vmatprep.subr.bf16.mxu0 %v12554
    %13191 = vmatpush1.bf16.msra.mxu0 %v12553
    %13192 = vmatprep.subr.bf16.mxu0 %v12558
    %13193 = vmatpush1.bf16.msra.mxu0 %v12557
    %13194 = vmatprep.subr.bf16.mxu0 %v12562
    %13195 = vmatpush1.bf16.msra.mxu0 %v12561
    %13196 = vmatprep.subr.bf16.mxu0 %v12566
    %13197 = vmatpush1.bf16.msra.mxu0 %v12565
    %13198 = vmatprep.subr.bf16.mxu0 %v12570
    %13199 = vmatpush1.bf16.msra.mxu0 %v12569
    %13200 = vmatprep.subr.bf16.mxu0 %v12574
    %13201 = vmatpush1.bf16.msra.mxu0 %v12573
    %13202 = vmatprep.subr.bf16.mxu0 %v12578
    %13203 = vmatpush1.bf16.msra.mxu0 %v12577
    %13204 = vmatprep.subr.bf16.mxu0 %v12582
    %13205 = vmatpush1.bf16.msra.mxu0 %v12581
    %13206 = vmatprep.subr.bf16.mxu0 %v12586
    %13207 = vmatpush1.bf16.msra.mxu0 %v12585
    %13208 = vmatprep.mubr.bf16.mxu0 %v11408
    %13209 = vmatmul.mubr.bf16.gmra.mrb[0].mxu0 %v11407
    %v13210 = vpop.f32.mrb[0].mxu0
    %v13211 = vadd.f32 %v13170, %v13210
    %v13212 = vpop.f32.mrb[0].mxu0
    %v13213 = vadd.f32 %v13172, %v13212
    %v13214 = vpop.f32.mrb[0].mxu0
    %v13215 = vpop.f32.mrb[0].mxu0
    %13216 = vdwg.mxu0
    %13217 = vmatprep.subr.bf16.mxu0 %v12590
    %13218 = vmatpush1.bf16.msra.mxu0 %v12589
    %13219 = vmatprep.subr.bf16.mxu0 %v12594
    %13220 = vmatpush1.bf16.msra.mxu0 %v12593
    %13221 = vmatprep.subr.bf16.mxu0 %v12598
    %13222 = vmatpush1.bf16.msra.mxu0 %v12597
    %13223 = vmatprep.subr.bf16.mxu0 %v12602
    %13224 = vmatpush1.bf16.msra.mxu0 %v12601
    %13225 = vmatprep.subr.bf16.mxu0 %v12606
    %13226 = vmatpush1.bf16.msra.mxu0 %v12605
    %13227 = vmatprep.subr.bf16.mxu0 %v12610
    %13228 = vmatpush1.bf16.msra.mxu0 %v12609
    %13229 = vmatprep.subr.bf16.mxu0 %v12614
    %13230 = vmatpush1.bf16.msra.mxu0 %v12613
    %13231 = vmatprep.subr.bf16.mxu0 %v12618
    %13232 = vmatpush1.bf16.msra.mxu0 %v12617
    %13233 = vmatprep.subr.bf16.mxu0 %v12622
    %13234 = vmatpush1.bf16.msra.mxu0 %v12621
    %13235 = vmatprep.subr.bf16.mxu0 %v12626
    %13236 = vmatpush1.bf16.msra.mxu0 %v12625
    %13237 = vmatprep.subr.bf16.mxu0 %v12630
    %13238 = vmatpush1.bf16.msra.mxu0 %v12629
    %13239 = vmatprep.subr.bf16.mxu0 %v12634
    %13240 = vmatpush1.bf16.msra.mxu0 %v12633
    %13241 = vmatprep.subr.bf16.mxu0 %v12638
    %13242 = vmatpush1.bf16.msra.mxu0 %v12637
    %13243 = vmatprep.subr.bf16.mxu0 %v12642
    %13244 = vmatpush1.bf16.msra.mxu0 %v12641
    %13245 = vmatprep.subr.bf16.mxu0 %v12646
    %13246 = vmatpush1.bf16.msra.mxu0 %v12645
    %13247 = vmatprep.subr.bf16.mxu0 %v12650
    %13248 = vmatpush1.bf16.msra.mxu0 %v12649
    %13249 = vmatprep.mubr.bf16.mxu0 %v11410
    %13250 = vmatmul.mubr.bf16.gmra.mrb[0].mxu0 %v11409
    %v13251 = vpop.f32.mrb[0].mxu0
    %v13252 = vadd.f32 %v13211, %v13251
    %v13253 = vpop.f32.mrb[0].mxu0
    %v13254 = vadd.f32 %v13213, %v13253
    %v13255 = vpop.f32.mrb[0].mxu0
    %v13256 = vpop.f32.mrb[0].mxu0
    %13257 = vdwg.mxu0
    %13258 = vmatprep.subr.bf16.mxu0 %v12654
    %13259 = vmatpush1.bf16.msra.mxu0 %v12653
    %13260 = vmatprep.subr.bf16.mxu0 %v12658
    %13261 = vmatpush1.bf16.msra.mxu0 %v12657
    %13262 = vmatprep.subr.bf16.mxu0 %v12662
    %13263 = vmatpush1.bf16.msra.mxu0 %v12661
    %13264 = vmatprep.subr.bf16.mxu0 %v12666
    %13265 = vmatpush1.bf16.msra.mxu0 %v12665
    %13266 = vmatprep.subr.bf16.mxu0 %v12670
    %13267 = vmatpush1.bf16.msra.mxu0 %v12669
    %13268 = vmatprep.subr.bf16.mxu0 %v12674
    %13269 = vmatpush1.bf16.msra.mxu0 %v12673
    %13270 = vmatprep.subr.bf16.mxu0 %v12678
    %13271 = vmatpush1.bf16.msra.mxu0 %v12677
    %13272 = vmatprep.subr.bf16.mxu0 %v12682
    %13273 = vmatpush1.bf16.msra.mxu0 %v12681
    %13274 = vmatprep.subr.bf16.mxu0 %v12686
    %13275 = vmatpush1.bf16.msra.mxu0 %v12685
    %13276 = vmatprep.subr.bf16.mxu0 %v12690
    %13277 = vmatpush1.bf16.msra.mxu0 %v12689
    %13278 = vmatprep.subr.bf16.mxu0 %v12694
    %13279 = vmatpush1.bf16.msra.mxu0 %v12693
    %13280 = vmatprep.subr.bf16.mxu0 %v12698
    %13281 = vmatpush1.bf16.msra.mxu0 %v12697
    %13282 = vmatprep.subr.bf16.mxu0 %v12702
    %13283 = vmatpush1.bf16.msra.mxu0 %v12701
    %13284 = vmatprep.subr.bf16.mxu0 %v12706
    %13285 = vmatpush1.bf16.msra.mxu0 %v12705
    %13286 = vmatprep.subr.bf16.mxu0 %v12710
    %13287 = vmatpush1.bf16.msra.mxu0 %v12709
    %13288 = vmatprep.subr.bf16.mxu0 %v12714
    %13289 = vmatpush1.bf16.msra.mxu0 %v12713
    %13290 = vmatprep.mubr.bf16.mxu0 %v11412
    %13291 = vmatmul.mubr.bf16.gmra.mrb[0].mxu0 %v11411
    %v13292 = vpop.f32.mrb[0].mxu0
    %v13293 = vadd.f32 %v13252, %v13292
    %v13294 = vpop.f32.mrb[0].mxu0
    %v13295 = vadd.f32 %v13254, %v13294
    %v13296 = vpop.f32.mrb[0].mxu0
    %v13297 = vpop.f32.mrb[0].mxu0
    %13298 = vdwg.mxu0
    %v13299 = vmul.f32 %v13129, 0.2
    %v13300 = vmul.f32 %v13131, 0.2
    %v13301 = vmul.f32 %v13293, 0.2
    %v13302 = vmul.f32 %v13295, 0.2
    %v13303 = vmax.f32 %v13129, %v13299
    %v13304 = vmax.f32 %v13131, %v13300
    %v13305 = vmax.f32 %v13293, %v13301
    %v13306 = vmax.f32 %v13295, %v13302
    %v13307 = vpack.c.bf16 %v13303, %v13303
    %v13308 = vpack.c.bf16 %v13304, %v13304
    %v13309 = vpack.c.bf16 %v13305, %v13305
    %v13310 = vpack.c.bf16 %v13306, %v13306
    %v13311 = vld [vmem:[#allocation11] sm:$0xf]
    %v13312 = vld [vmem:[#allocation11 + $0x4] sm:$0xf]
    %v13313 = vld [vmem:[#allocation11 + $0x8] sm:$0xf]
    %v13314 = vld [vmem:[#allocation11 + $0xc] sm:$0xf]
    %v13315 = vld [vmem:[#allocation11 + $0x10] sm:$0xf]
    %v13316 = vld [vmem:[#allocation11 + $0x14] sm:$0xf]
    %v13317 = vld [vmem:[#allocation11 + $0x18] sm:$0xf]
    %v13318 = vld [vmem:[#allocation11 + $0x1c] sm:$0xf]
    %v13319 = vld [vmem:[#allocation11 + $0x20] sm:$0xf]
    %v13320 = vld [vmem:[#allocation11 + $0x24] sm:$0xf]
    %v13321 = vld [vmem:[#allocation11 + $0x28] sm:$0xf]
    %v13322 = vld [vmem:[#allocation11 + $0x2c] sm:$0xf]
    %v13323 = vld [vmem:[#allocation11 + $0x30] sm:$0xf]
    %v13324 = vld [vmem:[#allocation11 + $0x34] sm:$0xf]
    %v13325 = vld [vmem:[#allocation11 + $0x38] sm:$0xf]
    %v13326 = vld [vmem:[#allocation11 + $0x3c] sm:$0xf]
    %v13327 = vld [vmem:[#allocation11 + $0x40] sm:$0xf]
    %v13328 = vld [vmem:[#allocation11 + $0x44] sm:$0xf]
    %v13329 = vld [vmem:[#allocation11 + $0x48] sm:$0xf]
    %v13330 = vld [vmem:[#allocation11 + $0x4c] sm:$0xf]
    %v13331 = vld [vmem:[#allocation11 + $0x50] sm:$0xf]
    %v13332 = vld [vmem:[#allocation11 + $0x54] sm:$0xf]
    %v13333 = vld [vmem:[#allocation11 + $0x58] sm:$0xf]
    %v13334 = vld [vmem:[#allocation11 + $0x5c] sm:$0xf]
    %v13335 = vld [vmem:[#allocation11 + $0x60] sm:$0xf]
    %v13336 = vld [vmem:[#allocation11 + $0x64] sm:$0xf]
    %v13337 = vld [vmem:[#allocation11 + $0x68] sm:$0xf]
    %v13338 = vld [vmem:[#allocation11 + $0x6c] sm:$0xf]
    %v13339 = vld [vmem:[#allocation11 + $0x70] sm:$0xf]
    %v13340 = vld [vmem:[#allocation11 + $0x74] sm:$0xf]
    %v13341 = vld [vmem:[#allocation11 + $0x78] sm:$0xf]
    %v13342 = vld [vmem:[#allocation11 + $0x7c] sm:$0xf]
    %v13343 = vld [vmem:[#allocation11 + $0x80] sm:$0xf]
    %v13344 = vld [vmem:[#allocation11 + $0x84] sm:$0xf]
    %v13345 = vld [vmem:[#allocation11 + $0x88] sm:$0xf]
    %v13346 = vld [vmem:[#allocation11 + $0x8c] sm:$0xf]
    %v13347 = vld [vmem:[#allocation11 + $0x90] sm:$0xf]
    %v13348 = vld [vmem:[#allocation11 + $0x94] sm:$0xf]
    %v13349 = vld [vmem:[#allocation11 + $0x98] sm:$0xf]
    %v13350 = vld [vmem:[#allocation11 + $0x9c] sm:$0xf]
    %v13351 = vld [vmem:[#allocation11 + $0xa0] sm:$0xf]
    %v13352 = vld [vmem:[#allocation11 + $0xa4] sm:$0xf]
    %v13353 = vld [vmem:[#allocation11 + $0xa8] sm:$0xf]
    %v13354 = vld [vmem:[#allocation11 + $0xac] sm:$0xf]
    %v13355 = vld [vmem:[#allocation11 + $0xb0] sm:$0xf]
    %v13356 = vld [vmem:[#allocation11 + $0xb4] sm:$0xf]
    %v13357 = vld [vmem:[#allocation11 + $0xb8] sm:$0xf]
    %v13358 = vld [vmem:[#allocation11 + $0xbc] sm:$0xf]
    %v13359 = vld [vmem:[#allocation11 + $0xc0] sm:$0xf]
    %v13360 = vld [vmem:[#allocation11 + $0xc4] sm:$0xf]
    %v13361 = vld [vmem:[#allocation11 + $0xc8] sm:$0xf]
    %v13362 = vld [vmem:[#allocation11 + $0xcc] sm:$0xf]
    %v13363 = vld [vmem:[#allocation11 + $0xd0] sm:$0xf]
    %v13364 = vld [vmem:[#allocation11 + $0xd4] sm:$0xf]
    %v13365 = vld [vmem:[#allocation11 + $0xd8] sm:$0xf]
    %v13366 = vld [vmem:[#allocation11 + $0xdc] sm:$0xf]
    %v13367 = vld [vmem:[#allocation11 + $0xe0] sm:$0xf]
    %v13368 = vld [vmem:[#allocation11 + $0xe4] sm:$0xf]
    %v13369 = vld [vmem:[#allocation11 + $0xe8] sm:$0xf]
    %v13370 = vld [vmem:[#allocation11 + $0xec] sm:$0xf]
    %v13371 = vld [vmem:[#allocation11 + $0xf0] sm:$0xf]
    %v13372 = vld [vmem:[#allocation11 + $0xf4] sm:$0xf]
    %v13373 = vld [vmem:[#allocation11 + $0xf8] sm:$0xf]
    %v13374 = vld [vmem:[#allocation11 + $0xfc] sm:$0xf]
    %v13375 = vld [vmem:[#allocation13] sm:$0x1]
    %v13377 = vlaneseq
    %v13378 = vshrl.u32 %v13377, 7
    %v13379 = vsub.s32 0, %v13378
    %v13380 = vrot.slane %v13375, %v13379
    %v13446 = vunpack.c.l.b16 %v13311
    %v13447 = vunpack.c.l.b16 %v13312
    %v13448 = vunpack.c.l.b16 %v13313
    %v13449 = vunpack.c.l.b16 %v13314
    %v13450 = vunpack.c.l.b16 %v13315
    %v13451 = vunpack.c.l.b16 %v13316
    %v13452 = vunpack.c.l.b16 %v13317
    %v13453 = vunpack.c.l.b16 %v13318
    %v13454 = vunpack.c.l.b16 %v13319
    %v13455 = vunpack.c.l.b16 %v13320
    %v13456 = vunpack.c.l.b16 %v13321
    %v13457 = vunpack.c.l.b16 %v13322
    %v13458 = vunpack.c.l.b16 %v13323
    %v13459 = vunpack.c.l.b16 %v13324
    %v13460 = vunpack.c.l.b16 %v13325
    %v13461 = vunpack.c.l.b16 %v13326
    %v13462 = vunpack.c.l.b16 %v13327
    %v13463 = vunpack.c.l.b16 %v13328
    %v13464 = vunpack.c.l.b16 %v13329
    %v13465 = vunpack.c.l.b16 %v13330
    %v13466 = vunpack.c.l.b16 %v13331
    %v13467 = vunpack.c.l.b16 %v13332
    %v13468 = vunpack.c.l.b16 %v13333
    %v13469 = vunpack.c.l.b16 %v13334
    %v13470 = vunpack.c.l.b16 %v13335
    %v13471 = vunpack.c.l.b16 %v13336
    %v13472 = vunpack.c.l.b16 %v13337
    %v13473 = vunpack.c.l.b16 %v13338
    %v13474 = vunpack.c.l.b16 %v13339
    %v13475 = vunpack.c.l.b16 %v13340
    %v13476 = vunpack.c.l.b16 %v13341
    %v13477 = vunpack.c.l.b16 %v13342
    %v13478 = vunpack.c.l.b16 %v13343
    %v13479 = vunpack.c.l.b16 %v13344
    %v13480 = vunpack.c.l.b16 %v13345
    %v13481 = vunpack.c.l.b16 %v13346
    %v13482 = vunpack.c.l.b16 %v13347
    %v13483 = vunpack.c.l.b16 %v13348
    %v13484 = vunpack.c.l.b16 %v13349
    %v13485 = vunpack.c.l.b16 %v13350
    %v13486 = vunpack.c.l.b16 %v13351
    %v13487 = vunpack.c.l.b16 %v13352
    %v13488 = vunpack.c.l.b16 %v13353
    %v13489 = vunpack.c.l.b16 %v13354
    %v13490 = vunpack.c.l.b16 %v13355
    %v13491 = vunpack.c.l.b16 %v13356
    %v13492 = vunpack.c.l.b16 %v13357
    %v13493 = vunpack.c.l.b16 %v13358
    %v13494 = vunpack.c.l.b16 %v13359
    %v13495 = vunpack.c.l.b16 %v13360
    %v13496 = vunpack.c.l.b16 %v13361
    %v13497 = vunpack.c.l.b16 %v13362
    %v13498 = vunpack.c.l.b16 %v13363
    %v13499 = vunpack.c.l.b16 %v13364
    %v13500 = vunpack.c.l.b16 %v13365
    %v13501 = vunpack.c.l.b16 %v13366
    %v13502 = vunpack.c.l.b16 %v13367
    %v13503 = vunpack.c.l.b16 %v13368
    %v13504 = vunpack.c.l.b16 %v13369
    %v13505 = vunpack.c.l.b16 %v13370
    %v13506 = vunpack.c.l.b16 %v13371
    %v13507 = vunpack.c.l.b16 %v13372
    %v13508 = vunpack.c.l.b16 %v13373
    %v13509 = vunpack.c.l.b16 %v13374
    %v13510 = vpack.c.b16 %v13447, %v13446
    %v13511 = vpack.c.b16 %v13449, %v13448
    %v13512 = vpack.c.b16 %v13451, %v13450
    %v13513 = vpack.c.b16 %v13453, %v13452
    %v13514 = vpack.c.b16 %v13455, %v13454
    %v13515 = vpack.c.b16 %v13457, %v13456
    %v13516 = vpack.c.b16 %v13459, %v13458
    %v13517 = vpack.c.b16 %v13461, %v13460
    %v13518 = vpack.c.b16 %v13463, %v13462
    %v13519 = vpack.c.b16 %v13465, %v13464
    %v13520 = vpack.c.b16 %v13467, %v13466
    %v13521 = vpack.c.b16 %v13469, %v13468
    %v13522 = vpack.c.b16 %v13471, %v13470
    %v13523 = vpack.c.b16 %v13473, %v13472
    %v13524 = vpack.c.b16 %v13475, %v13474
    %v13525 = vpack.c.b16 %v13477, %v13476
    %v13526 = vpack.c.b16 %v13479, %v13478
    %v13527 = vpack.c.b16 %v13481, %v13480
    %v13528 = vpack.c.b16 %v13483, %v13482
    %v13529 = vpack.c.b16 %v13485, %v13484
    %v13530 = vpack.c.b16 %v13487, %v13486
    %v13531 = vpack.c.b16 %v13489, %v13488
    %v13532 = vpack.c.b16 %v13491, %v13490
    %v13533 = vpack.c.b16 %v13493, %v13492
    %v13534 = vpack.c.b16 %v13495, %v13494
    %v13535 = vpack.c.b16 %v13497, %v13496
    %v13536 = vpack.c.b16 %v13499, %v13498
    %v13537 = vpack.c.b16 %v13501, %v13500
    %v13538 = vpack.c.b16 %v13503, %v13502
    %v13539 = vpack.c.b16 %v13505, %v13504
    %v13540 = vpack.c.b16 %v13507, %v13506
    %v13541 = vpack.c.b16 %v13509, %v13508
    %13574 = vmatprep.subr.bf16.mxu0 0
    %13575 = vmatpush1.bf16.msra.mxu0 %v13510
    %13576 = vmatprep.subr.bf16.mxu0 0
    %13577 = vmatpush1.bf16.msra.mxu0 %v13511
    %13578 = vmatprep.subr.bf16.mxu0 0
    %13579 = vmatpush1.bf16.msra.mxu0 %v13512
    %13580 = vmatprep.subr.bf16.mxu0 0
    %13581 = vmatpush1.bf16.msra.mxu0 %v13513
    %13582 = vmatprep.subr.bf16.mxu0 0
    %13583 = vmatpush1.bf16.msra.mxu0 %v13514
    %13584 = vmatprep.subr.bf16.mxu0 0
    %13585 = vmatpush1.bf16.msra.mxu0 %v13515
    %13586 = vmatprep.subr.bf16.mxu0 0
    %13587 = vmatpush1.bf16.msra.mxu0 %v13516
    %13588 = vmatprep.subr.bf16.mxu0 0
    %13589 = vmatpush1.bf16.msra.mxu0 %v13517
    %13590 = vmatprep.subr.bf16.mxu0 0
    %13591 = vmatpush1.bf16.msra.mxu0 %v13518
    %13592 = vmatprep.subr.bf16.mxu0 0
    %13593 = vmatpush1.bf16.msra.mxu0 %v13519
    %13594 = vmatprep.subr.bf16.mxu0 0
    %13595 = vmatpush1.bf16.msra.mxu0 %v13520
    %13596 = vmatprep.subr.bf16.mxu0 0
    %13597 = vmatpush1.bf16.msra.mxu0 %v13521
    %13598 = vmatprep.subr.bf16.mxu0 0
    %13599 = vmatpush1.bf16.msra.mxu0 %v13522
    %13600 = vmatprep.subr.bf16.mxu0 0
    %13601 = vmatpush1.bf16.msra.mxu0 %v13523
    %13602 = vmatprep.subr.bf16.mxu0 0
    %13603 = vmatpush1.bf16.msra.mxu0 %v13524
    %13604 = vmatprep.subr.bf16.mxu0 0
    %13605 = vmatpush1.bf16.msra.mxu0 %v13525
    %13606 = vmatprep.mubr.bf16.mxu0 %v13308
    %13607 = vmatmul.mubr.bf16.gmra.mrb[0].mxu0 %v13307
    %v13608 = vpop.f32.mrb[0].mxu0
    %v13609 = vadd.f32 %v13380, %v13608
    %v13610 = vpop.f32.mrb[0].mxu0
    %v13611 = vpop.f32.mrb[0].mxu0
    %v13612 = vpop.f32.mrb[0].mxu0
    %13613 = vdwg.mxu0
    %13614 = vmatprep.subr.bf16.mxu0 0
    %13615 = vmatpush1.bf16.msra.mxu0 %v13526
    %13616 = vmatprep.subr.bf16.mxu0 0
    %13617 = vmatpush1.bf16.msra.mxu0 %v13527
    %13618 = vmatprep.subr.bf16.mxu0 0
    %13619 = vmatpush1.bf16.msra.mxu0 %v13528
    %13620 = vmatprep.subr.bf16.mxu0 0
    %13621 = vmatpush1.bf16.msra.mxu0 %v13529
    %13622 = vmatprep.subr.bf16.mxu0 0
    %13623 = vmatpush1.bf16.msra.mxu0 %v13530
    %13624 = vmatprep.subr.bf16.mxu0 0
    %13625 = vmatpush1.bf16.msra.mxu0 %v13531
    %13626 = vmatprep.subr.bf16.mxu0 0
    %13627 = vmatpush1.bf16.msra.mxu0 %v13532
    %13628 = vmatprep.subr.bf16.mxu0 0
    %13629 = vmatpush1.bf16.msra.mxu0 %v13533
    %13630 = vmatprep.subr.bf16.mxu0 0
    %13631 = vmatpush1.bf16.msra.mxu0 %v13534
    %13632 = vmatprep.subr.bf16.mxu0 0
    %13633 = vmatpush1.bf16.msra.mxu0 %v13535
    %13634 = vmatprep.subr.bf16.mxu0 0
    %13635 = vmatpush1.bf16.msra.mxu0 %v13536
    %13636 = vmatprep.subr.bf16.mxu0 0
    %13637 = vmatpush1.bf16.msra.mxu0 %v13537
    %13638 = vmatprep.subr.bf16.mxu0 0
    %13639 = vmatpush1.bf16.msra.mxu0 %v13538
    %13640 = vmatprep.subr.bf16.mxu0 0
    %13641 = vmatpush1.bf16.msra.mxu0 %v13539
    %13642 = vmatprep.subr.bf16.mxu0 0
    %13643 = vmatpush1.bf16.msra.mxu0 %v13540
    %13644 = vmatprep.subr.bf16.mxu0 0
    %13645 = vmatpush1.bf16.msra.mxu0 %v13541
    %13646 = vmatprep.mubr.bf16.mxu0 %v13310
    %13647 = vmatmul.mubr.bf16.gmra.mrb[0].mxu0 %v13309
    %v13648 = vpop.f32.mrb[0].mxu0
    %v13649 = vadd.f32 %v13609, %v13648
    %v13650 = vpop.f32.mrb[0].mxu0
    %v13651 = vpop.f32.mrb[0].mxu0
    %v13652 = vpop.f32.mrb[0].mxu0
    %13653 = vdwg.mxu0
    %v13654 = vxor.u32 %v13649, 2147483648
    %v13655 = vmul.f32 %v13654, 1.442695
    %v13656 = vpow.pop %v13655
    %v13657 = vadd.f32 %v13656, 1.0
    %v13658 = vrcp.pop %v13657
    %v13659 = vmul.f32 1.0, %v13658
    %13660 = vst [vmem:[#allocation14] sm:$0xff] %v13659
    // Predicated region
    $region58: #{tpu_custom_call.1} parent=1 // pred_check
      _
    $region59: #{tpu_custom_call.1} parent=1 // pred_check_branch
      %13662 = sbr.rel (0) target = $region61
    $region60: #{tpu_custom_call.1} parent=1 // pred_region
      %s13664 = ssub.s32 128, 128
      %13665 = vsyncadd [#allocation4], %s13664
      %s13667 = sshll.u32 [#allocation14], 4
      %s13668 = int_to_ptr.vmem [resolvable:$true] %s13667
      %13670 = dma.vmem_to_hbm [thread:$0]  %s13668, 128, %s7, [#allocation4]
    $region61: #{tpu_custom_call.1} parent=1 // pred_fallthru
      _
    // Predicated region
    $region62: #{tpu_custom_call.1} parent=1 // pred_check
      _
    $region63: #{tpu_custom_call.1} parent=1 // pred_check_branch
      %13672 = sbr.rel (0) target = $region65
    $region64: #{tpu_custom_call.1} parent=1 // pred_region
      %13673 = dma.done [#allocation4], 128
    $region65: #{tpu_custom_call.1} parent=1 // pred_fallthru
      _
    %13674 = vsyncpa [#allocation3], 1
    %13675 = vsyncpa [#allocation6], 1
    %13676 = vsyncpa [#allocation9], 1
    %13677 = vsyncpa [#allocation12], 1
    %13678 = vsyncpa [#allocation4], 1

</llo_original>
